<compile_context>
chip_gen: v6e
topology: v6e:2x2x1
jax: 0.10.0
libtpu: 0.0.40
codegen_flags: <defaults>
</compile_context>

<pallas_src>
import functools

import jax
import jax.numpy as jnp
import numpy as np
from jax.experimental import pallas as pl
from jax.experimental.pallas import tpu as pltpu

_H0 = 16  # spatial input size required by this fused kernel (16x16 -> 4x4 feats)


# --------------------------- static geometry helpers ------------------------


def _stage_dims(batch):
    """Per conv stage: (padded width wp, padded flat rows R, conv output rows rv)."""
    dims = []
    h = _H0
    for _ in range(3):
        hp = h + 2
        r = batch * hp * hp
        rv = r - 2 * hp - 2
        dims.append((hp, r, rv))
        h = h // 2
    return tuple(dims)


def _pool_scatter_matrix(batch, h):
    """0/1 matrix: rows = next stage's zero-padded flat layout, cols = rows of
    the 4-way max of the current conv output.  Selects the 2x2-pool value and
    scatters it to the padded interior position (padding rows stay all-zero)."""
    hp = h + 2
    n_cols = batch * hp * hp - 3 * hp - 3
    h2 = h // 2
    hp2 = h2 + 2
    sel = np.zeros((batch * hp2 * hp2, n_cols), np.float32)
    for n in range(batch):
        for i in range(h2):
            for j in range(h2):
                r = n * hp2 * hp2 + (i + 1) * hp2 + (j + 1)
                q = n * hp * hp + (2 * i) * hp + (2 * j)
                sel[r, q] = 1.0
    return sel


def _feature_gather_matrix(batch):
    """0/1 matrix gathering conv3's valid 4x4 outputs into (N*16, 128) rows
    ordered (image n, position p = i*4 + j) -- n-major so the kernel can
    reshape to (N, 16*128) for a single long-K fc1 matmul."""
    hp = 6
    n_cols = batch * hp * hp - 2 * hp - 2
    sel = np.zeros((16 * batch, n_cols), np.float32)
    for n in range(batch):
        for i in range(4):
            for j in range(4):
                sel[n * 16 + i * 4 + j, n * hp * hp + i * hp + j] = 1.0
    return sel


# ------------------------------- fused kernel -------------------------------


def _fused_forward_kernel(x_ref, sel1_ref, sel2_ref, sel3_ref, smalls_ref,
                          w2_ref, w3_ref, fc2w_ref, fc1w_hbm_ref,
                          out_ref, fc1w_vmem, fc1_sem, *, batch, dims):
    f32 = jnp.float32
    bf16 = jnp.bfloat16
    (wp1, _, _), (wp2, _, rv2), (wp3, _, rv3) = dims

    # Kick off the fc1 weight DMA (largest HBM transfer) so it overlaps the
    # conv1-3 / pooling compute below; waited on right before first use.
    fc1_copy = pltpu.make_async_copy(fc1w_hbm_ref, fc1w_vmem, fc1_sem)
    fc1_copy.start()

    c1 = w2_ref.shape[1]        # 32
    c2 = w2_ref.shape[2]        # 64
    c3 = w3_ref.shape[2]        # 128
    hid = fc2w_ref.shape[0]     # 512
    n_pad = fc2w_ref.shape[1]   # 128 (100 real outputs, lane padded)

    smalls = smalls_ref[...]
    w1 = smalls[0:9, 0:c1]            # conv1 taps (Cin=1) -> (9, 32)
    b1 = smalls[9:10, 0:c1]
    b2 = smalls[10:11, 0:c2]
    b3 = smalls[11:12, 0:c3]
    fc1b = smalls[12:13, 0:hid]
    fc2b = smalls[13:14, 0:n_pad]

    def conv3x3_relu(p_flat, wp, rv, taps_ref, bias):
        # p_flat: (R, Cin) zero-padded flat activation (rows = (n, y, x)); the
        # (di, dj) window is the contiguous row slice shifted by di*wp + dj and
        # each tap is one (rv, Cin) x (Cin, Cout) MXU matmul.
        acc = None
        for di in range(3):
            for dj in range(3):
                k = di * 3 + dj
                s = di * wp + dj
                win = p_flat[s:s + rv, :]
                term = jnp.dot(win, taps_ref[k].astype(f32),
                               preferred_element_type=f32)
                acc = term if acc is None else acc + term
        return jnp.maximum(acc + bias, 0.0)

    def maxpool2x2_to_padded(y, wp, sel_ref):
        # 2x2/stride-2 max pool + scatter into the next stage's zero-padded
        # flat layout via a constant 0/1 selection matmul (exact in bf16).
        n_rows = y.shape[0] - wp - 1
        m = jnp.maximum(
            jnp.maximum(y[0:n_rows, :], y[1:n_rows + 1, :]),
            jnp.maximum(y[wp:wp + n_rows, :], y[wp + 1:wp + 1 + n_rows, :]))
        return jnp.dot(sel_ref[...], m.astype(bf16), preferred_element_type=f32)

    # conv1 (1 -> 32) + ReLU: one MXU matmul over the wrapper-side im2col.
    y1 = jnp.maximum(jnp.dot(x_ref[...], w1, preferred_element_type=f32) + b1, 0.0)
    p2 = maxpool2x2_to_padded(y1, wp1, sel1_ref)

    # conv2 (32 -> 64) + ReLU + MaxPool(2)
    y2 = conv3x3_relu(p2, wp2, rv2, w2_ref, b2)
    p3 = maxpool2x2_to_padded(y2, wp2, sel2_ref)

    # conv3 (64 -> 128) + ReLU.  AdaptiveAvgPool2d((4, 4)) is the identity here.
    y3 = conv3x3_relu(p3, wp3, rv3, w3_ref, b3)

    # Gather conv3's valid 4x4x128 features (rows ordered (n, p)) and lay them
    # out as a single (N, 2048) LHS for one long-K fc1 matmul.
    feat = jnp.dot(sel3_ref[...], y3.astype(bf16), preferred_element_type=f32)
    feat = feat.reshape(batch, 16 * c3)

    # fc1 + ReLU (wait for the overlapped weight DMA right before first use).
    fc1_copy.wait()
    hidden = jnp.dot(feat.astype(bf16), fc1w_vmem[...],
                     preferred_element_type=f32)
    hidden = jnp.maximum(hidden + fc1b, 0.0)

    # fc2 + Sigmoid.  Output columns are lane-padded to 128.
    logits = jnp.dot(hidden.astype(bf16), fc2w_ref[...],
                     preferred_element_type=f32) + fc2b
    out_ref[...] = 1.0 / (1.0 + jnp.exp(-logits))


# ------------------------------ forward wrapper ------------------------------


def graph_predictor_forward(x_nchw, prepared, max_nodes=10):
    n, cin, h, w = x_nchw.shape
    if cin != 1 or h != _H0 or w != _H0:
        raise ValueError("fused kernel expects NCHW input of shape (N, 1, 16, 16)")
    dims = _stage_dims(n)
    wp1, _, rv1 = dims[0]

    # NCHW -> zero-padded flat rows (n, y, x), then wrapper-side im2col so
    # conv1 (Cin=1) becomes a single well-shaped (rv1, 9) x (9, 32) MXU matmul.
    x = x_nchw.astype(jnp.float32).reshape(n, h, w)
    xp = jnp.pad(x, ((0, 0), (1, 1), (1, 1))).reshape(n * wp1 * wp1)
    x_col = jnp.stack(
        [xp[di * wp1 + dj: di * wp1 + dj + rv1]
         for di in range(3) for dj in range(3)], axis=-1)

    # Constant 0/1 selection matrices (trace-time constants; exact in bf16).
    sel1 = jnp.asarray(_pool_scatter_matrix(n, 16), jnp.bfloat16)
    sel2 = jnp.asarray(_pool_scatter_matrix(n, 8), jnp.bfloat16)
    sel3 = jnp.asarray(_feature_gather_matrix(n), jnp.bfloat16)

    n_pad_out = prepared["fc2_w"].shape[1]
    vmem = pl.BlockSpec(memory_space=pltpu.MemorySpace.VMEM)
    hbm = pl.BlockSpec(memory_space=pl.ANY)
    kernel = functools.partial(_fused_forward_kernel, batch=n, dims=dims)

    out = pl.pallas_call(
        kernel,
        out_shape=jax.ShapeDtypeStruct((n, n_pad_out), jnp.float32),
        in_specs=[vmem, vmem, vmem, vmem, vmem, vmem, vmem, vmem, hbm],
        out_specs=vmem,
        scratch_shapes=[
            pltpu.VMEM(prepared["fc1_w"].shape, prepared["fc1_w"].dtype),
            pltpu.SemaphoreType.DMA,
        ],
        compiler_params=pltpu.CompilerParams(
            vmem_limit_bytes=32 * 1024 * 1024),
    )(x_col, sel1, sel2, sel3, prepared["smalls"],
      prepared["conv2_w"], prepared["conv3_w"], prepared["fc2_w"],
      prepared["fc1_w"])

    n_out = max_nodes * max_nodes
    return out[:, :n_out].reshape(n, max_nodes, max_nodes)


# ------------------- one-time weight re-layout (outside jit) -----------------


def prepare_params(params, max_nodes=10):
    """Re-lay-out weights ONCE: conv taps -> (9, Cin, Cout), fc1 -> a single
    (2048, 512) matrix indexed (p*128 + c, out), big weights in bf16, and all
    small constants packed into one array."""
    def conv_taps(wp):  # PyTorch (Cout, Cin, 3, 3) -> (9, Cin, Cout)
        cout, cin = wp.shape[0], wp.shape[1]
        return jnp.transpose(wp, (2, 3, 1, 0)).reshape(9, cin, cout)

    n_out = max_nodes * max_nodes
    n_pad = ((n_out + 127) // 128) * 128
    hid = params["fc1_w"].shape[0]
    c1 = params["conv1_w"].shape[0]
    c2 = params["conv2_w"].shape[0]
    c3 = params["conv3_w"].shape[0]

    # fc1: (512, 2048) with PyTorch input index c*16 + (i*4 + j)
    #      -> (2048, 512) indexed (p*128 + c, out) to match the kernel layout.
    fc1 = jnp.transpose(params["fc1_w"].reshape(hid, c3, 4, 4),
                        (2, 3, 1, 0)).reshape(16 * c3, hid)

    # fc2: (100, 512) -> (512, 128) with zero-padded (lane-dense) output cols.
    fc2 = jnp.zeros((hid, n_pad), jnp.float32).at[:, :n_out].set(params["fc2_w"].T)

    # Pack conv1 taps + all biases into a single small f32 constant (one DMA).
    width = max(hid, n_pad, 128)
    smalls = jnp.zeros((14, width), jnp.float32)
    smalls = smalls.at[0:9, 0:c1].set(conv_taps(params["conv1_w"]).reshape(9, c1))
    smalls = smalls.at[9, 0:c1].set(params["conv1_b"])
    smalls = smalls.at[10, 0:c2].set(params["conv2_b"])
    smalls = smalls.at[11, 0:c3].set(params["conv3_b"])
    smalls = smalls.at[12, 0:hid].set(params["fc1_b"])
    smalls = smalls.at[13, 0:n_out].set(params["fc2_b"])

    return {
        "smalls": smalls,
        "conv2_w": conv_taps(params["conv2_w"]).astype(jnp.bfloat16),
        "conv3_w": conv_taps(params["conv3_w"]).astype(jnp.bfloat16),
        "fc1_w": fc1.astype(jnp.bfloat16),
        "fc2_w": fc2.astype(jnp.bfloat16),
    }


# ------------------------- params + pure-JAX reference -----------------------


def init_params(key, input_channels=1, max_nodes=10):
    ks = jax.random.split(key, 5)

    def w(k, shape, fan_in):
        return jax.random.normal(k, shape, jnp.float32) / jnp.sqrt(float(fan_in))

    return {
        # PyTorch layouts: Conv2d weight (Cout, Cin, kh, kw), Linear weight (out, in)
        "conv1_w": w(ks[0], (32, input_channels, 3, 3), 9 * input_channels),
        "conv1_b": jnp.zeros((32,), jnp.float32),
        "conv2_w": w(ks[1], (64, 32, 3, 3), 9 * 32),
        "conv2_b": jnp.zeros((64,), jnp.float32),
        "conv3_w": w(ks[2], (128, 64, 3, 3), 9 * 64),
        "conv3_b": jnp.zeros((128,), jnp.float32),
        "fc1_w": w(ks[3], (512, 128 * 4 * 4), 128 * 4 * 4),
        "fc1_b": jnp.zeros((512,), jnp.float32),
        "fc2_w": w(ks[4], (max_nodes * max_nodes, 512), 512),
        "fc2_b": jnp.zeros((max_nodes * max_nodes,), jnp.float32),
    }


def reference_forward(x, params, max_nodes=10):
    prec = jax.lax.Precision.HIGHEST

    def conv(h, wp, b):
        y = jax.lax.conv_general_dilated(
            h, wp, (1, 1), "SAME",
            dimension_numbers=("NCHW", "OIHW", "NCHW"), precision=prec)
        return jax.nn.relu(y + b[None, :, None, None])

    def pool(h):
        return jax.lax.reduce_window(h, -jnp.inf, jax.lax.max,
                                     (1, 1, 2, 2), (1, 1, 2, 2), "VALID")

    h = pool(conv(x, params["conv1_w"], params["conv1_b"]))
    h = pool(conv(h, params["conv2_w"], params["conv2_b"]))
    h = conv(h, params["conv3_w"], params["conv3_b"])
    # AdaptiveAvgPool2d((4, 4)) is the identity for 4x4 feature maps.
    f = h.reshape(h.shape[0], -1)
    f = jax.nn.relu(jnp.dot(f, params["fc1_w"].T, precision=prec) + params["fc1_b"])
    out = jax.nn.sigmoid(jnp.dot(f, params["fc2_w"].T, precision=prec) + params["fc2_b"])
    return out.reshape(-1, max_nodes, max_nodes)


if __name__ == "__main__":
    key = jax.random.PRNGKey(0)
    kx, kp = jax.random.split(key)
    x = jax.random.normal(kx, (2, 1, 16, 16), jnp.float32)
    params = init_params(kp)
    prepared = prepare_params(params)  # one-time weight re-layout, outside jit

    fwd = jax.jit(graph_predictor_forward)
    out = jax.block_until_ready(fwd(x, prepared))

    ref = jax.block_until_ready(reference_forward(x, params))

    assert out.shape == (2, 10, 10), out.shape
    assert bool(jnp.all(jnp.isfinite(out)))
    assert bool(jnp.all((out >= 0.0) & (out <= 1.0)))  # sigmoid range
    np.testing.assert_allclose(np.asarray(out), np.asarray(ref), atol=2e-2, rtol=0)
    print("KERNEL_OK")
</pallas_src>

<mosaic_0001>
module attributes {stable_mosaic.version = 11 : i64} {
  func.func @_fused_forward_kernel(%arg0: memref<610x9xf32, #tpu.memory_space<vmem>>, %arg1: memref<200x591xbf16, #tpu.memory_space<vmem>>, %arg2: memref<72x167xbf16, #tpu.memory_space<vmem>>, %arg3: memref<32x58xbf16, #tpu.memory_space<vmem>>, %arg4: memref<14x512xf32, #tpu.memory_space<vmem>>, %arg5: memref<9x32x64xbf16, #tpu.memory_space<vmem>>, %arg6: memref<9x64x128xbf16, #tpu.memory_space<vmem>>, %arg7: memref<512x128xbf16, #tpu.memory_space<vmem>>, %arg8: memref<2048x512xbf16, #tpu.memory_space<any>>, %arg9: memref<2x128xf32, #tpu.memory_space<vmem>>, %arg10: memref<2048x512xbf16, #tpu.memory_space<vmem>>, %arg11: memref<!tpu.dma_semaphore, #tpu.memory_space<semaphore_mem>>) attributes {dimension_semantics = [], scalar_prefetch = 0 : i64, scratch_operands = 2 : i64, tpu.core_type = #tpu.core_type<tc>} {
    tpu.enqueue_dma source(%arg8 : memref<2048x512xbf16, #tpu.memory_space<any>>) target(%arg10 : memref<2048x512xbf16, #tpu.memory_space<vmem>>) target_semaphore(%arg11 : memref<!tpu.dma_semaphore, #tpu.memory_space<semaphore_mem>>)
    %c0 = arith.constant 0 : index
    %c0_0 = arith.constant 0 : index
    %0 = vector.load %arg4[%c0, %c0_0] : memref<14x512xf32, #tpu.memory_space<vmem>>, vector<14x512xf32>
    %1 = vector.extract_strided_slice %0 {offsets = [0, 0], sizes = [9, 32], strides = [1, 1]} : vector<14x512xf32> to vector<9x32xf32>
    %2 = vector.extract_strided_slice %0 {offsets = [9, 0], sizes = [1, 32], strides = [1, 1]} : vector<14x512xf32> to vector<1x32xf32>
    %3 = vector.extract_strided_slice %0 {offsets = [10, 0], sizes = [1, 64], strides = [1, 1]} : vector<14x512xf32> to vector<1x64xf32>
    %4 = vector.extract_strided_slice %0 {offsets = [11, 0], sizes = [1, 128], strides = [1, 1]} : vector<14x512xf32> to vector<1x128xf32>
    %5 = vector.extract_strided_slice %0 {offsets = [12, 0], sizes = [1, 512], strides = [1, 1]} : vector<14x512xf32> to vector<1x512xf32>
    %6 = vector.extract_strided_slice %0 {offsets = [13, 0], sizes = [1, 128], strides = [1, 1]} : vector<14x512xf32> to vector<1x128xf32>
    %c0_1 = arith.constant 0 : index
    %c0_2 = arith.constant 0 : index
    %7 = vector.load %arg0[%c0_1, %c0_2] : memref<610x9xf32, #tpu.memory_space<vmem>>, vector<610x9xf32>
    %cst = arith.constant dense<0.000000e+00> : vector<610x32xf32>
    %8 = tpu.matmul %7, %1, %cst {dimension_numbers = #tpu.dot_dimension_numbers<[1], [0], [0], [1], [0, 0, 1, 1], [], []>} : vector<610x9xf32>, vector<9x32xf32>, vector<610x32xf32> -> vector<610x32xf32>
    %9 = vector.broadcast %2 : vector<1x32xf32> to vector<610x32xf32>
    %10 = arith.addf %8, %9 : vector<610x32xf32>
    %cst_3 = arith.constant 0.000000e+00 : f32
    %11 = vector.broadcast %cst_3 : f32 to vector<610x32xf32>
    %12 = arith.maximumf %10, %11 : vector<610x32xf32>
    %13 = vector.extract_strided_slice %12 {offsets = [0, 0], sizes = [591, 32], strides = [1, 1]} : vector<610x32xf32> to vector<591x32xf32>
    %14 = vector.extract_strided_slice %12 {offsets = [1, 0], sizes = [591, 32], strides = [1, 1]} : vector<610x32xf32> to vector<591x32xf32>
    %15 = arith.maximumf %13, %14 : vector<591x32xf32>
    %16 = vector.extract_strided_slice %12 {offsets = [18, 0], sizes = [591, 32], strides = [1, 1]} : vector<610x32xf32> to vector<591x32xf32>
    %17 = vector.extract_strided_slice %12 {offsets = [19, 0], sizes = [591, 32], strides = [1, 1]} : vector<610x32xf32> to vector<591x32xf32>
    %18 = arith.maximumf %16, %17 : vector<591x32xf32>
    %19 = arith.maximumf %15, %18 : vector<591x32xf32>
    %c0_4 = arith.constant 0 : index
    %c0_5 = arith.constant 0 : index
    %20 = vector.load %arg1[%c0_4, %c0_5] : memref<200x591xbf16, #tpu.memory_space<vmem>>, vector<200x591xbf16>
    %21 = arith.truncf %19 : vector<591x32xf32> to vector<591x32xbf16>
    %cst_6 = arith.constant dense<0.000000e+00> : vector<200x32xf32>
    %22 = tpu.matmul %20, %21, %cst_6 {dimension_numbers = #tpu.dot_dimension_numbers<[1], [0], [0], [1], [0, 0, 1, 1], [], []>} : vector<200x591xbf16>, vector<591x32xbf16>, vector<200x32xf32> -> vector<200x32xf32>
    %23 = vector.extract_strided_slice %22 {offsets = [0, 0], sizes = [178, 32], strides = [1, 1]} : vector<200x32xf32> to vector<178x32xf32>
    %c0_7 = arith.constant 0 : index
    %c0_8 = arith.constant 0 : index
    %c0_9 = arith.constant 0 : index
    %24 = vector.load %arg5[%c0_7, %c0_8, %c0_9] : memref<9x32x64xbf16, #tpu.memory_space<vmem>>, vector<1x32x64xbf16>
    %25 = vector.shape_cast %24 : vector<1x32x64xbf16> to vector<32x64xbf16>
    %26 = arith.extf %25 : vector<32x64xbf16> to vector<32x64xf32>
    %cst_10 = arith.constant dense<0.000000e+00> : vector<178x64xf32>
    %27 = tpu.matmul %23, %26, %cst_10 {dimension_numbers = #tpu.dot_dimension_numbers<[1], [0], [0], [1], [0, 0, 1, 1], [], []>} : vector<178x32xf32>, vector<32x64xf32>, vector<178x64xf32> -> vector<178x64xf32>
    %28 = vector.extract_strided_slice %22 {offsets = [1, 0], sizes = [178, 32], strides = [1, 1]} : vector<200x32xf32> to vector<178x32xf32>
    %c1 = arith.constant 1 : index
    %c0_11 = arith.constant 0 : index
    %c0_12 = arith.constant 0 : index
    %29 = vector.load %arg5[%c1, %c0_11, %c0_12] : memref<9x32x64xbf16, #tpu.memory_space<vmem>>, vector<1x32x64xbf16>
    %30 = vector.shape_cast %29 : vector<1x32x64xbf16> to vector<32x64xbf16>
    %31 = arith.extf %30 : vector<32x64xbf16> to vector<32x64xf32>
    %cst_13 = arith.constant dense<0.000000e+00> : vector<178x64xf32>
    %32 = tpu.matmul %28, %31, %cst_13 {dimension_numbers = #tpu.dot_dimension_numbers<[1], [0], [0], [1], [0, 0, 1, 1], [], []>} : vector<178x32xf32>, vector<32x64xf32>, vector<178x64xf32> -> vector<178x64xf32>
    %33 = arith.addf %27, %32 : vector<178x64xf32>
    %34 = vector.extract_strided_slice %22 {offsets = [2, 0], sizes = [178, 32], strides = [1, 1]} : vector<200x32xf32> to vector<178x32xf32>
    %c2 = arith.constant 2 : index
    %c0_14 = arith.constant 0 : index
    %c0_15 = arith.constant 0 : index
    %35 = vector.load %arg5[%c2, %c0_14, %c0_15] : memref<9x32x64xbf16, #tpu.memory_space<vmem>>, vector<1x32x64xbf16>
    %36 = vector.shape_cast %35 : vector<1x32x64xbf16> to vector<32x64xbf16>
    %37 = arith.extf %36 : vector<32x64xbf16> to vector<32x64xf32>
    %cst_16 = arith.constant dense<0.000000e+00> : vector<178x64xf32>
    %38 = tpu.matmul %34, %37, %cst_16 {dimension_numbers = #tpu.dot_dimension_numbers<[1], [0], [0], [1], [0, 0, 1, 1], [], []>} : vector<178x32xf32>, vector<32x64xf32>, vector<178x64xf32> -> vector<178x64xf32>
    %39 = arith.addf %33, %38 : vector<178x64xf32>
    %40 = vector.extract_strided_slice %22 {offsets = [10, 0], sizes = [178, 32], strides = [1, 1]} : vector<200x32xf32> to vector<178x32xf32>
    %c3 = arith.constant 3 : index
    %c0_17 = arith.constant 0 : index
    %c0_18 = arith.constant 0 : index
    %41 = vector.load %arg5[%c3, %c0_17, %c0_18] : memref<9x32x64xbf16, #tpu.memory_space<vmem>>, vector<1x32x64xbf16>
    %42 = vector.shape_cast %41 : vector<1x32x64xbf16> to vector<32x64xbf16>
    %43 = arith.extf %42 : vector<32x64xbf16> to vector<32x64xf32>
    %cst_19 = arith.constant dense<0.000000e+00> : vector<178x64xf32>
    %44 = tpu.matmul %40, %43, %cst_19 {dimension_numbers = #tpu.dot_dimension_numbers<[1], [0], [0], [1], [0, 0, 1, 1], [], []>} : vector<178x32xf32>, vector<32x64xf32>, vector<178x64xf32> -> vector<178x64xf32>
    %45 = arith.addf %39, %44 : vector<178x64xf32>
    %46 = vector.extract_strided_slice %22 {offsets = [11, 0], sizes = [178, 32], strides = [1, 1]} : vector<200x32xf32> to vector<178x32xf32>
    %c4 = arith.constant 4 : index
    %c0_20 = arith.constant 0 : index
    %c0_21 = arith.constant 0 : index
    %47 = vector.load %arg5[%c4, %c0_20, %c0_21] : memref<9x32x64xbf16, #tpu.memory_space<vmem>>, vector<1x32x64xbf16>
    %48 = vector.shape_cast %47 : vector<1x32x64xbf16> to vector<32x64xbf16>
    %49 = arith.extf %48 : vector<32x64xbf16> to vector<32x64xf32>
    %cst_22 = arith.constant dense<0.000000e+00> : vector<178x64xf32>
    %50 = tpu.matmul %46, %49, %cst_22 {dimension_numbers = #tpu.dot_dimension_numbers<[1], [0], [0], [1], [0, 0, 1, 1], [], []>} : vector<178x32xf32>, vector<32x64xf32>, vector<178x64xf32> -> vector<178x64xf32>
    %51 = arith.addf %45, %50 : vector<178x64xf32>
    %52 = vector.extract_strided_slice %22 {offsets = [12, 0], sizes = [178, 32], strides = [1, 1]} : vector<200x32xf32> to vector<178x32xf32>
    %c5 = arith.constant 5 : index
    %c0_23 = arith.constant 0 : index
    %c0_24 = arith.constant 0 : index
    %53 = vector.load %arg5[%c5, %c0_23, %c0_24] : memref<9x32x64xbf16, #tpu.memory_space<vmem>>, vector<1x32x64xbf16>
    %54 = vector.shape_cast %53 : vector<1x32x64xbf16> to vector<32x64xbf16>
    %55 = arith.extf %54 : vector<32x64xbf16> to vector<32x64xf32>
    %cst_25 = arith.constant dense<0.000000e+00> : vector<178x64xf32>
    %56 = tpu.matmul %52, %55, %cst_25 {dimension_numbers = #tpu.dot_dimension_numbers<[1], [0], [0], [1], [0, 0, 1, 1], [], []>} : vector<178x32xf32>, vector<32x64xf32>, vector<178x64xf32> -> vector<178x64xf32>
    %57 = arith.addf %51, %56 : vector<178x64xf32>
    %58 = vector.extract_strided_slice %22 {offsets = [20, 0], sizes = [178, 32], strides = [1, 1]} : vector<200x32xf32> to vector<178x32xf32>
    %c6 = arith.constant 6 : index
    %c0_26 = arith.constant 0 : index
    %c0_27 = arith.constant 0 : index
    %59 = vector.load %arg5[%c6, %c0_26, %c0_27] : memref<9x32x64xbf16, #tpu.memory_space<vmem>>, vector<1x32x64xbf16>
    %60 = vector.shape_cast %59 : vector<1x32x64xbf16> to vector<32x64xbf16>
    %61 = arith.extf %60 : vector<32x64xbf16> to vector<32x64xf32>
    %cst_28 = arith.constant dense<0.000000e+00> : vector<178x64xf32>
    %62 = tpu.matmul %58, %61, %cst_28 {dimension_numbers = #tpu.dot_dimension_numbers<[1], [0], [0], [1], [0, 0, 1, 1], [], []>} : vector<178x32xf32>, vector<32x64xf32>, vector<178x64xf32> -> vector<178x64xf32>
    %63 = arith.addf %57, %62 : vector<178x64xf32>
    %64 = vector.extract_strided_slice %22 {offsets = [21, 0], sizes = [178, 32], strides = [1, 1]} : vector<200x32xf32> to vector<178x32xf32>
    %c7 = arith.constant 7 : index
    %c0_29 = arith.constant 0 : index
    %c0_30 = arith.constant 0 : index
    %65 = vector.load %arg5[%c7, %c0_29, %c0_30] : memref<9x32x64xbf16, #tpu.memory_space<vmem>>, vector<1x32x64xbf16>
    %66 = vector.shape_cast %65 : vector<1x32x64xbf16> to vector<32x64xbf16>
    %67 = arith.extf %66 : vector<32x64xbf16> to vector<32x64xf32>
    %cst_31 = arith.constant dense<0.000000e+00> : vector<178x64xf32>
    %68 = tpu.matmul %64, %67, %cst_31 {dimension_numbers = #tpu.dot_dimension_numbers<[1], [0], [0], [1], [0, 0, 1, 1], [], []>} : vector<178x32xf32>, vector<32x64xf32>, vector<178x64xf32> -> vector<178x64xf32>
    %69 = arith.addf %63, %68 : vector<178x64xf32>
    %70 = vector.extract_strided_slice %22 {offsets = [22, 0], sizes = [178, 32], strides = [1, 1]} : vector<200x32xf32> to vector<178x32xf32>
    %c8 = arith.constant 8 : index
    %c0_32 = arith.constant 0 : index
    %c0_33 = arith.constant 0 : index
    %71 = vector.load %arg5[%c8, %c0_32, %c0_33] : memref<9x32x64xbf16, #tpu.memory_space<vmem>>, vector<1x32x64xbf16>
    %72 = vector.shape_cast %71 : vector<1x32x64xbf16> to vector<32x64xbf16>
    %73 = arith.extf %72 : vector<32x64xbf16> to vector<32x64xf32>
    %cst_34 = arith.constant dense<0.000000e+00> : vector<178x64xf32>
    %74 = tpu.matmul %70, %73, %cst_34 {dimension_numbers = #tpu.dot_dimension_numbers<[1], [0], [0], [1], [0, 0, 1, 1], [], []>} : vector<178x32xf32>, vector<32x64xf32>, vector<178x64xf32> -> vector<178x64xf32>
    %75 = arith.addf %69, %74 : vector<178x64xf32>
    %76 = vector.broadcast %3 : vector<1x64xf32> to vector<178x64xf32>
    %77 = arith.addf %75, %76 : vector<178x64xf32>
    %cst_35 = arith.constant 0.000000e+00 : f32
    %78 = vector.broadcast %cst_35 : f32 to vector<178x64xf32>
    %79 = arith.maximumf %77, %78 : vector<178x64xf32>
    %80 = vector.extract_strided_slice %79 {offsets = [0, 0], sizes = [167, 64], strides = [1, 1]} : vector<178x64xf32> to vector<167x64xf32>
    %81 = vector.extract_strided_slice %79 {offsets = [1, 0], sizes = [167, 64], strides = [1, 1]} : vector<178x64xf32> to vector<167x64xf32>
    %82 = arith.maximumf %80, %81 : vector<167x64xf32>
    %83 = vector.extract_strided_slice %79 {offsets = [10, 0], sizes = [167, 64], strides = [1, 1]} : vector<178x64xf32> to vector<167x64xf32>
    %84 = vector.extract_strided_slice %79 {offsets = [11, 0], sizes = [167, 64], strides = [1, 1]} : vector<178x64xf32> to vector<167x64xf32>
    %85 = arith.maximumf %83, %84 : vector<167x64xf32>
    %86 = arith.maximumf %82, %85 : vector<167x64xf32>
    %c0_36 = arith.constant 0 : index
    %c0_37 = arith.constant 0 : index
    %87 = vector.load %arg2[%c0_36, %c0_37] : memref<72x167xbf16, #tpu.memory_space<vmem>>, vector<72x167xbf16>
    %88 = arith.truncf %86 : vector<167x64xf32> to vector<167x64xbf16>
    %cst_38 = arith.constant dense<0.000000e+00> : vector<72x64xf32>
    %89 = tpu.matmul %87, %88, %cst_38 {dimension_numbers = #tpu.dot_dimension_numbers<[1], [0], [0], [1], [0, 0, 1, 1], [], []>} : vector<72x167xbf16>, vector<167x64xbf16>, vector<72x64xf32> -> vector<72x64xf32>
    %90 = vector.extract_strided_slice %89 {offsets = [0, 0], sizes = [58, 64], strides = [1, 1]} : vector<72x64xf32> to vector<58x64xf32>
    %c0_39 = arith.constant 0 : index
    %c0_40 = arith.constant 0 : index
    %c0_41 = arith.constant 0 : index
    %91 = vector.load %arg6[%c0_39, %c0_40, %c0_41] : memref<9x64x128xbf16, #tpu.memory_space<vmem>>, vector<1x64x128xbf16>
    %92 = vector.shape_cast %91 : vector<1x64x128xbf16> to vector<64x128xbf16>
    %93 = arith.extf %92 : vector<64x128xbf16> to vector<64x128xf32>
    %cst_42 = arith.constant dense<0.000000e+00> : vector<58x128xf32>
    %94 = tpu.matmul %90, %93, %cst_42 {dimension_numbers = #tpu.dot_dimension_numbers<[1], [0], [0], [1], [0, 0, 1, 1], [], []>} : vector<58x64xf32>, vector<64x128xf32>, vector<58x128xf32> -> vector<58x128xf32>
    %95 = vector.extract_strided_slice %89 {offsets = [1, 0], sizes = [58, 64], strides = [1, 1]} : vector<72x64xf32> to vector<58x64xf32>
    %c1_43 = arith.constant 1 : index
    %c0_44 = arith.constant 0 : index
    %c0_45 = arith.constant 0 : index
    %96 = vector.load %arg6[%c1_43, %c0_44, %c0_45] : memref<9x64x128xbf16, #tpu.memory_space<vmem>>, vector<1x64x128xbf16>
    %97 = vector.shape_cast %96 : vector<1x64x128xbf16> to vector<64x128xbf16>
    %98 = arith.extf %97 : vector<64x128xbf16> to vector<64x128xf32>
    %cst_46 = arith.constant dense<0.000000e+00> : vector<58x128xf32>
    %99 = tpu.matmul %95, %98, %cst_46 {dimension_numbers = #tpu.dot_dimension_numbers<[1], [0], [0], [1], [0, 0, 1, 1], [], []>} : vector<58x64xf32>, vector<64x128xf32>, vector<58x128xf32> -> vector<58x128xf32>
    %100 = arith.addf %94, %99 : vector<58x128xf32>
    %101 = vector.extract_strided_slice %89 {offsets = [2, 0], sizes = [58, 64], strides = [1, 1]} : vector<72x64xf32> to vector<58x64xf32>
    %c2_47 = arith.constant 2 : index
    %c0_48 = arith.constant 0 : index
    %c0_49 = arith.constant 0 : index
    %102 = vector.load %arg6[%c2_47, %c0_48, %c0_49] : memref<9x64x128xbf16, #tpu.memory_space<vmem>>, vector<1x64x128xbf16>
    %103 = vector.shape_cast %102 : vector<1x64x128xbf16> to vector<64x128xbf16>
    %104 = arith.extf %103 : vector<64x128xbf16> to vector<64x128xf32>
    %cst_50 = arith.constant dense<0.000000e+00> : vector<58x128xf32>
    %105 = tpu.matmul %101, %104, %cst_50 {dimension_numbers = #tpu.dot_dimension_numbers<[1], [0], [0], [1], [0, 0, 1, 1], [], []>} : vector<58x64xf32>, vector<64x128xf32>, vector<58x128xf32> -> vector<58x128xf32>
    %106 = arith.addf %100, %105 : vector<58x128xf32>
    %107 = vector.extract_strided_slice %89 {offsets = [6, 0], sizes = [58, 64], strides = [1, 1]} : vector<72x64xf32> to vector<58x64xf32>
    %c3_51 = arith.constant 3 : index
    %c0_52 = arith.constant 0 : index
    %c0_53 = arith.constant 0 : index
    %108 = vector.load %arg6[%c3_51, %c0_52, %c0_53] : memref<9x64x128xbf16, #tpu.memory_space<vmem>>, vector<1x64x128xbf16>
    %109 = vector.shape_cast %108 : vector<1x64x128xbf16> to vector<64x128xbf16>
    %110 = arith.extf %109 : vector<64x128xbf16> to vector<64x128xf32>
    %cst_54 = arith.constant dense<0.000000e+00> : vector<58x128xf32>
    %111 = tpu.matmul %107, %110, %cst_54 {dimension_numbers = #tpu.dot_dimension_numbers<[1], [0], [0], [1], [0, 0, 1, 1], [], []>} : vector<58x64xf32>, vector<64x128xf32>, vector<58x128xf32> -> vector<58x128xf32>
    %112 = arith.addf %106, %111 : vector<58x128xf32>
    %113 = vector.extract_strided_slice %89 {offsets = [7, 0], sizes = [58, 64], strides = [1, 1]} : vector<72x64xf32> to vector<58x64xf32>
    %c4_55 = arith.constant 4 : index
    %c0_56 = arith.constant 0 : index
    %c0_57 = arith.constant 0 : index
    %114 = vector.load %arg6[%c4_55, %c0_56, %c0_57] : memref<9x64x128xbf16, #tpu.memory_space<vmem>>, vector<1x64x128xbf16>
    %115 = vector.shape_cast %114 : vector<1x64x128xbf16> to vector<64x128xbf16>
    %116 = arith.extf %115 : vector<64x128xbf16> to vector<64x128xf32>
    %cst_58 = arith.constant dense<0.000000e+00> : vector<58x128xf32>
    %117 = tpu.matmul %113, %116, %cst_58 {dimension_numbers = #tpu.dot_dimension_numbers<[1], [0], [0], [1], [0, 0, 1, 1], [], []>} : vector<58x64xf32>, vector<64x128xf32>, vector<58x128xf32> -> vector<58x128xf32>
    %118 = arith.addf %112, %117 : vector<58x128xf32>
    %119 = vector.extract_strided_slice %89 {offsets = [8, 0], sizes = [58, 64], strides = [1, 1]} : vector<72x64xf32> to vector<58x64xf32>
    %c5_59 = arith.constant 5 : index
    %c0_60 = arith.constant 0 : index
    %c0_61 = arith.constant 0 : index
    %120 = vector.load %arg6[%c5_59, %c0_60, %c0_61] : memref<9x64x128xbf16, #tpu.memory_space<vmem>>, vector<1x64x128xbf16>
    %121 = vector.shape_cast %120 : vector<1x64x128xbf16> to vector<64x128xbf16>
    %122 = arith.extf %121 : vector<64x128xbf16> to vector<64x128xf32>
    %cst_62 = arith.constant dense<0.000000e+00> : vector<58x128xf32>
    %123 = tpu.matmul %119, %122, %cst_62 {dimension_numbers = #tpu.dot_dimension_numbers<[1], [0], [0], [1], [0, 0, 1, 1], [], []>} : vector<58x64xf32>, vector<64x128xf32>, vector<58x128xf32> -> vector<58x128xf32>
    %124 = arith.addf %118, %123 : vector<58x128xf32>
    %125 = vector.extract_strided_slice %89 {offsets = [12, 0], sizes = [58, 64], strides = [1, 1]} : vector<72x64xf32> to vector<58x64xf32>
    %c6_63 = arith.constant 6 : index
    %c0_64 = arith.constant 0 : index
    %c0_65 = arith.constant 0 : index
    %126 = vector.load %arg6[%c6_63, %c0_64, %c0_65] : memref<9x64x128xbf16, #tpu.memory_space<vmem>>, vector<1x64x128xbf16>
    %127 = vector.shape_cast %126 : vector<1x64x128xbf16> to vector<64x128xbf16>
    %128 = arith.extf %127 : vector<64x128xbf16> to vector<64x128xf32>
    %cst_66 = arith.constant dense<0.000000e+00> : vector<58x128xf32>
    %129 = tpu.matmul %125, %128, %cst_66 {dimension_numbers = #tpu.dot_dimension_numbers<[1], [0], [0], [1], [0, 0, 1, 1], [], []>} : vector<58x64xf32>, vector<64x128xf32>, vector<58x128xf32> -> vector<58x128xf32>
    %130 = arith.addf %124, %129 : vector<58x128xf32>
    %131 = vector.extract_strided_slice %89 {offsets = [13, 0], sizes = [58, 64], strides = [1, 1]} : vector<72x64xf32> to vector<58x64xf32>
    %c7_67 = arith.constant 7 : index
    %c0_68 = arith.constant 0 : index
    %c0_69 = arith.constant 0 : index
    %132 = vector.load %arg6[%c7_67, %c0_68, %c0_69] : memref<9x64x128xbf16, #tpu.memory_space<vmem>>, vector<1x64x128xbf16>
    %133 = vector.shape_cast %132 : vector<1x64x128xbf16> to vector<64x128xbf16>
    %134 = arith.extf %133 : vector<64x128xbf16> to vector<64x128xf32>
    %cst_70 = arith.constant dense<0.000000e+00> : vector<58x128xf32>
    %135 = tpu.matmul %131, %134, %cst_70 {dimension_numbers = #tpu.dot_dimension_numbers<[1], [0], [0], [1], [0, 0, 1, 1], [], []>} : vector<58x64xf32>, vector<64x128xf32>, vector<58x128xf32> -> vector<58x128xf32>
    %136 = arith.addf %130, %135 : vector<58x128xf32>
    %137 = vector.extract_strided_slice %89 {offsets = [14, 0], sizes = [58, 64], strides = [1, 1]} : vector<72x64xf32> to vector<58x64xf32>
    %c8_71 = arith.constant 8 : index
    %c0_72 = arith.constant 0 : index
    %c0_73 = arith.constant 0 : index
    %138 = vector.load %arg6[%c8_71, %c0_72, %c0_73] : memref<9x64x128xbf16, #tpu.memory_space<vmem>>, vector<1x64x128xbf16>
    %139 = vector.shape_cast %138 : vector<1x64x128xbf16> to vector<64x128xbf16>
    %140 = arith.extf %139 : vector<64x128xbf16> to vector<64x128xf32>
    %cst_74 = arith.constant dense<0.000000e+00> : vector<58x128xf32>
    %141 = tpu.matmul %137, %140, %cst_74 {dimension_numbers = #tpu.dot_dimension_numbers<[1], [0], [0], [1], [0, 0, 1, 1], [], []>} : vector<58x64xf32>, vector<64x128xf32>, vector<58x128xf32> -> vector<58x128xf32>
    %142 = arith.addf %136, %141 : vector<58x128xf32>
    %143 = vector.broadcast %4 : vector<1x128xf32> to vector<58x128xf32>
    %144 = arith.addf %142, %143 : vector<58x128xf32>
    %cst_75 = arith.constant 0.000000e+00 : f32
    %145 = vector.broadcast %cst_75 : f32 to vector<58x128xf32>
    %146 = arith.maximumf %144, %145 : vector<58x128xf32>
    %c0_76 = arith.constant 0 : index
    %c0_77 = arith.constant 0 : index
    %147 = vector.load %arg3[%c0_76, %c0_77] : memref<32x58xbf16, #tpu.memory_space<vmem>>, vector<32x58xbf16>
    %148 = arith.truncf %146 : vector<58x128xf32> to vector<58x128xbf16>
    %cst_78 = arith.constant dense<0.000000e+00> : vector<32x128xf32>
    %149 = tpu.matmul %147, %148, %cst_78 {dimension_numbers = #tpu.dot_dimension_numbers<[1], [0], [0], [1], [0, 0, 1, 1], [], []>} : vector<32x58xbf16>, vector<58x128xbf16>, vector<32x128xf32> -> vector<32x128xf32>
    %150 = vector.shape_cast %149 : vector<32x128xf32> to vector<2x2048xf32>
    tpu.wait_dma2 semaphore(%arg11 : memref<!tpu.dma_semaphore, #tpu.memory_space<semaphore_mem>>) src(%arg8 : memref<2048x512xbf16, #tpu.memory_space<any>>) dst(%arg10 : memref<2048x512xbf16, #tpu.memory_space<vmem>>)
    %151 = arith.truncf %150 : vector<2x2048xf32> to vector<2x2048xbf16>
    %c0_79 = arith.constant 0 : index
    %c0_80 = arith.constant 0 : index
    %152 = vector.load %arg10[%c0_79, %c0_80] : memref<2048x512xbf16, #tpu.memory_space<vmem>>, vector<2048x512xbf16>
    %cst_81 = arith.constant dense<0.000000e+00> : vector<2x512xf32>
    %153 = tpu.matmul %151, %152, %cst_81 {dimension_numbers = #tpu.dot_dimension_numbers<[1], [0], [0], [1], [0, 0, 1, 1], [], []>} : vector<2x2048xbf16>, vector<2048x512xbf16>, vector<2x512xf32> -> vector<2x512xf32>
    %154 = vector.broadcast %5 : vector<1x512xf32> to vector<2x512xf32>
    %155 = arith.addf %153, %154 : vector<2x512xf32>
    %cst_82 = arith.constant 0.000000e+00 : f32
    %156 = vector.broadcast %cst_82 : f32 to vector<2x512xf32>
    %157 = arith.maximumf %155, %156 : vector<2x512xf32>
    %158 = arith.truncf %157 : vector<2x512xf32> to vector<2x512xbf16>
    %c0_83 = arith.constant 0 : index
    %c0_84 = arith.constant 0 : index
    %159 = vector.load %arg7[%c0_83, %c0_84] : memref<512x128xbf16, #tpu.memory_space<vmem>>, vector<512x128xbf16>
    %cst_85 = arith.constant dense<0.000000e+00> : vector<2x128xf32>
    %160 = tpu.matmul %158, %159, %cst_85 {dimension_numbers = #tpu.dot_dimension_numbers<[1], [0], [0], [1], [0, 0, 1, 1], [], []>} : vector<2x512xbf16>, vector<512x128xbf16>, vector<2x128xf32> -> vector<2x128xf32>
    %161 = vector.broadcast %6 : vector<1x128xf32> to vector<2x128xf32>
    %162 = arith.addf %160, %161 : vector<2x128xf32>
    %cst_86 = arith.constant 0.000000e+00 : f32
    %163 = vector.broadcast %cst_86 : f32 to vector<2x128xf32>
    %164 = arith.subf %163, %162 : vector<2x128xf32>
    %165 = math.exp %164 : vector<2x128xf32>
    %cst_87 = arith.constant 1.000000e+00 : f32
    %166 = vector.broadcast %cst_87 : f32 to vector<2x128xf32>
    %167 = arith.addf %166, %165 : vector<2x128xf32>
    %cst_88 = arith.constant 1.000000e+00 : f32
    %168 = vector.broadcast %cst_88 : f32 to vector<2x128xf32>
    %169 = arith.divf %168, %167 : vector<2x128xf32>
    %c0_89 = arith.constant 0 : index
    %c0_90 = arith.constant 0 : index
    %170 = vector.load %arg9[%c0_89, %c0_90] : memref<2x128xf32, #tpu.memory_space<vmem>>, vector<2x128xf32>
    tpu.vector_store %arg9[%c0_89, %c0_90], %169 {strides = array<i32>} : memref<2x128xf32, #tpu.memory_space<vmem>>, vector<2x128xf32>,
    return
  }
}

</mosaic_0001>

<llo_original>
// kernel: graph_predictor_forward.1
$region0: #{graph_predictor_forward.1}
  #allocation0 [shape = 'u32[]', space=smem, size = 0x4, offset = 0x4, fixed_abs, tag = 'smem constant byte address 0x4 - core index']
  #allocation1 [shape = 'u32[144,128]{1,0:T(1,128)}', space=vmem, size = 0x12000, scoped, tag = 'internal scratch']
  #allocation2 [shape = 'bf16[2048,512]{1,0:T(8,128)(2,1)}', space=vmem, size = 0x200000, scoped, tag = 'scratch operand']
  #allocation3 [shape = 's32[1]{0}', space=sflag, size = 0x4, scoped, tag = 'scratch operand']
  #allocation15 [shape = 's32[]', space=sflag, size = 0x4, offset = 0, fixed_abs, tag = 'sflag constant byte address 0x0 - dummy sync flag']
  #allocation16 [shape = 's32[]', space=sflag, size = 0x4, offset = 0, fixed_abs, tag = 'sflag constant byte address 0x0 - dummy sync flag']
  #allocation17 [shape = 'u32[]', space=smem, size = 0x4, offset = 0x44, fixed_abs, tag = 'smem constant byte address 0x44 - assertion arg 0']
  #allocation18 [shape = 'u32[]', space=smem, size = 0x4, offset = 0x48, fixed_abs, tag = 'smem constant byte address 0x48 - assertion arg 1']
  %s0 = inlined_call_operand.vmem [shape: f32[610,9], index: 0, kind: input, shape index: {}]
  %s1 = inlined_call_operand.hbm [shape: bf16[200,591], index: 1, kind: input, shape index: {}]
  %s2 = inlined_call_operand.hbm [shape: bf16[72,167], index: 2, kind: input, shape index: {}]
  %s3 = inlined_call_operand.hbm [shape: bf16[32,58], index: 3, kind: input, shape index: {}]
  %s4 = inlined_call_operand.hbm [shape: f32[14,512], index: 4, kind: input, shape index: {}]
  %s5 = inlined_call_operand.hbm [shape: bf16[9,32,64], index: 5, kind: input, shape index: {}]
  %s6 = inlined_call_operand.hbm [shape: bf16[9,64,128], index: 6, kind: input, shape index: {}]
  %s7 = inlined_call_operand.hbm [shape: bf16[512,128], index: 7, kind: input, shape index: {}]
  %s8 = inlined_call_operand.hbm [shape: bf16[2048,512], index: 8, kind: input, shape index: {}]
  %s9 = inlined_call_operand.vmem [shape: f32[2,128], index: 9, kind: output, shape index: {}]
  %s10 = sld [smem:[#allocation0]]
  $region74: #{graph_predictor_forward.1} parent=0
    _
  %s12 = ssub.s32 1, %s10
  %s13 = scalar_select 0, %s12, %s10
  $region1: #{graph_predictor_forward.1} parent=0
    #allocation4 [shape = 'u8[256000]{0}', space=vmem, size = 0x3e800, scoped, tag = 'input window, operand 1, single buffered']
    #allocation5 [shape = 's32[1]{0}', space=sflag, size = 0x4, scoped, tag = 'scoped memory for graph_predictor_forward.1']
    #allocation6 [shape = 'u8[36864]{0}', space=vmem, size = 0x9000, scoped, tag = 'input window, operand 2, single buffered']
    #allocation7 [shape = 's32[1]{0}', space=sflag, size = 0x4, scoped, tag = 'scoped memory for graph_predictor_forward.1']
    #allocation8 [shape = 'u8[8192]{0}', space=vmem, size = 0x2000, scoped, tag = 'input window, operand 3, single buffered']
    #allocation9 [shape = 'u8[32768]{0}', space=vmem, size = 0x8000, scoped, tag = 'input window, operand 4, single buffered']
    #allocation10 [shape = 's32[1]{0}', space=sflag, size = 0x4, scoped, tag = 'scoped memory for graph_predictor_forward.1']
    #allocation11 [shape = 'u8[73728]{0}', space=vmem, size = 0x12000, scoped, tag = 'input window, operand 5, single buffered']
    #allocation12 [shape = 'u8[147456]{0}', space=vmem, size = 0x24000, scoped, tag = 'input window, operand 6, single buffered']
    #allocation13 [shape = 's32[1]{0}', space=sflag, size = 0x4, scoped, tag = 'scoped memory for graph_predictor_forward.1']
    #allocation14 [shape = 'u8[131072]{0}', space=vmem, size = 0x20000, scoped, tag = 'input window, operand 7, single buffered']
    %14 = vsyncpa [#allocation5], 0
    %15 = vsyncpa [#allocation7], 0
    %16 = vsyncpa [#allocation10], 0
    %17 = vsyncpa [#allocation13], 0
    // Predicated region
    $region2: #{graph_predictor_forward.1} parent=1 // pred_check
      _
    $region3: #{graph_predictor_forward.1} parent=1 // pred_check_branch
      %19 = sbr.rel (0) target = $region5
    $region4: #{graph_predictor_forward.1} parent=1 // pred_region
      _
    $region5: #{graph_predictor_forward.1} parent=1 // pred_fallthru
      _
    // Predicated region
    $region6: #{graph_predictor_forward.1} parent=1 // pred_check
      _
    $region7: #{graph_predictor_forward.1} parent=1 // pred_check_branch
      %21 = sbr.rel (0) target = $region9
    $region8: #{graph_predictor_forward.1} parent=1 // pred_region
      %s23 = ssub.s32 8000, 8000
      %24 = vsyncadd [#allocation5], %s23
      %s25 = sshll.u32 [#allocation4], 4
      %s26 = int_to_ptr.vmem [resolvable:$true] %s25
      %31 = dma.hbm_to_vmem [thread:$0]  %s1, 8000, %s26, [#allocation5], 320, 320, 20
    $region9: #{graph_predictor_forward.1} parent=1 // pred_fallthru
      _
    // Predicated region
    $region10: #{graph_predictor_forward.1} parent=1 // pred_check
      _
    $region11: #{graph_predictor_forward.1} parent=1 // pred_check_branch
      %33 = sbr.rel (0) target = $region13
    $region12: #{graph_predictor_forward.1} parent=1 // pred_region
      %s35 = ssub.s32 1152, 1152
      %36 = vsyncadd [#allocation7], %s35
      %s37 = sshll.u32 [#allocation6], 4
      %s38 = int_to_ptr.vmem [resolvable:$true] %s37
      %43 = dma.hbm_to_vmem [thread:$0]  %s2, 1152, %s38, [#allocation7], 128, 128, 8
    $region13: #{graph_predictor_forward.1} parent=1 // pred_fallthru
      _
    // Predicated region
    $region14: #{graph_predictor_forward.1} parent=1 // pred_check
      _
    $region15: #{graph_predictor_forward.1} parent=1 // pred_check_branch
      %45 = sbr.rel (0) target = $region17
    $region16: #{graph_predictor_forward.1} parent=1 // pred_region
      %s47 = ssub.s32 256, 256
      %48 = vsyncadd [#allocation7], %s47
      %s49 = sshll.u32 [#allocation8], 4
      %s50 = int_to_ptr.vmem [resolvable:$true] %s49
      %55 = dma.hbm_to_vmem [thread:$0]  %s3, 256, %s50, [#allocation7], 64, 64, 4
    $region17: #{graph_predictor_forward.1} parent=1 // pred_fallthru
      _
    // Predicated region
    $region18: #{graph_predictor_forward.1} parent=1 // pred_check
      _
    $region19: #{graph_predictor_forward.1} parent=1 // pred_check_branch
      %57 = sbr.rel (0) target = $region21
    $region20: #{graph_predictor_forward.1} parent=1 // pred_region
      %s59 = ssub.s32 1024, 1024
      %60 = vsyncadd [#allocation10], %s59
      %s61 = sshll.u32 [#allocation9], 4
      %s62 = int_to_ptr.vmem [resolvable:$true] %s61
      %67 = dma.hbm_to_vmem [thread:$0]  %s4, 1024, %s62, [#allocation10], 512, 512, 32
    $region21: #{graph_predictor_forward.1} parent=1 // pred_fallthru
      _
    // Predicated region
    $region22: #{graph_predictor_forward.1} parent=1 // pred_check
      _
    $region23: #{graph_predictor_forward.1} parent=1 // pred_check_branch
      %69 = sbr.rel (0) target = $region25
    $region24: #{graph_predictor_forward.1} parent=1 // pred_region
      %s71 = ssub.s32 2304, 2304
      %72 = vsyncadd [#allocation10], %s71
      %s73 = sshll.u32 [#allocation11], 4
      %s74 = int_to_ptr.vmem [resolvable:$true] %s73
      %79 = dma.hbm_to_vmem [thread:$0]  %s5, 2304, %s74, [#allocation10], 64, 64, 4
    $region25: #{graph_predictor_forward.1} parent=1 // pred_fallthru
      _
    // Predicated region
    $region26: #{graph_predictor_forward.1} parent=1 // pred_check
      _
    $region27: #{graph_predictor_forward.1} parent=1 // pred_check_branch
      %81 = sbr.rel (0) target = $region29
    $region28: #{graph_predictor_forward.1} parent=1 // pred_region
      %s83 = ssub.s32 4608, 4608
      %84 = vsyncadd [#allocation13], %s83
      %s85 = sshll.u32 [#allocation12], 4
      %s86 = int_to_ptr.vmem [resolvable:$true] %s85
      %91 = dma.hbm_to_vmem [thread:$0]  %s6, 4608, %s86, [#allocation13], 64, 64, 4
    $region29: #{graph_predictor_forward.1} parent=1 // pred_fallthru
      _
    // Predicated region
    $region30: #{graph_predictor_forward.1} parent=1 // pred_check
      _
    $region31: #{graph_predictor_forward.1} parent=1 // pred_check_branch
      %93 = sbr.rel (0) target = $region33
    $region32: #{graph_predictor_forward.1} parent=1 // pred_region
      %s95 = ssub.s32 4096, 4096
      %96 = vsyncadd [#allocation13], %s95
      %s97 = sshll.u32 [#allocation14], 4
      %s98 = int_to_ptr.vmem [resolvable:$true] %s97
      %103 = dma.hbm_to_vmem [thread:$0]  %s7, 4096, %s98, [#allocation13], 64, 64, 4
    $region33: #{graph_predictor_forward.1} parent=1 // pred_fallthru
      _
    // Predicated region
    $region34: #{graph_predictor_forward.1} parent=1 // pred_check
      _
    $region35: #{graph_predictor_forward.1} parent=1 // pred_check_branch
      %105 = sbr.rel (0) target = $region37
    $region36: #{graph_predictor_forward.1} parent=1 // pred_region
      %106 = dma.done [#allocation5], 8000
    $region37: #{graph_predictor_forward.1} parent=1 // pred_fallthru
      _
    // Predicated region
    $region38: #{graph_predictor_forward.1} parent=1 // pred_check
      _
    $region39: #{graph_predictor_forward.1} parent=1 // pred_check_branch
      %108 = sbr.rel (0) target = $region41
    $region40: #{graph_predictor_forward.1} parent=1 // pred_region
      %109 = dma.done [#allocation7], 1152
    $region41: #{graph_predictor_forward.1} parent=1 // pred_fallthru
      _
    // Predicated region
    $region42: #{graph_predictor_forward.1} parent=1 // pred_check
      _
    $region43: #{graph_predictor_forward.1} parent=1 // pred_check_branch
      %111 = sbr.rel (0) target = $region45
    $region44: #{graph_predictor_forward.1} parent=1 // pred_region
      %112 = dma.done [#allocation7], 256
    $region45: #{graph_predictor_forward.1} parent=1 // pred_fallthru
      _
    // Predicated region
    $region46: #{graph_predictor_forward.1} parent=1 // pred_check
      _
    $region47: #{graph_predictor_forward.1} parent=1 // pred_check_branch
      %114 = sbr.rel (0) target = $region49
    $region48: #{graph_predictor_forward.1} parent=1 // pred_region
      %115 = dma.done [#allocation10], 1024
    $region49: #{graph_predictor_forward.1} parent=1 // pred_fallthru
      _
    // Predicated region
    $region50: #{graph_predictor_forward.1} parent=1 // pred_check
      _
    $region51: #{graph_predictor_forward.1} parent=1 // pred_check_branch
      %117 = sbr.rel (0) target = $region53
    $region52: #{graph_predictor_forward.1} parent=1 // pred_region
      %118 = dma.done [#allocation10], 2304
    $region53: #{graph_predictor_forward.1} parent=1 // pred_fallthru
      _
    // Predicated region
    $region54: #{graph_predictor_forward.1} parent=1 // pred_check
      _
    $region55: #{graph_predictor_forward.1} parent=1 // pred_check_branch
      %120 = sbr.rel (0) target = $region57
    $region56: #{graph_predictor_forward.1} parent=1 // pred_region
      %121 = dma.done [#allocation13], 4608
    $region57: #{graph_predictor_forward.1} parent=1 // pred_fallthru
      _
    // Predicated region
    $region58: #{graph_predictor_forward.1} parent=1 // pred_check
      _
    $region59: #{graph_predictor_forward.1} parent=1 // pred_check_branch
      %123 = sbr.rel (0) target = $region61
    $region60: #{graph_predictor_forward.1} parent=1 // pred_region
      %124 = dma.done [#allocation13], 4096
    $region61: #{graph_predictor_forward.1} parent=1 // pred_fallthru
      _
    // Predicated region
    $region62: #{graph_predictor_forward.1} parent=1 // pred_check
      _
    $region63: #{graph_predictor_forward.1} parent=1 // pred_check_branch
      %127 = sbr.rel target = $region65
    $region64: #{graph_predictor_forward.1} parent=1 // pred_region
      %128 = sst [smem:[#allocation17]] [#allocation16]
      %129 = sst [smem:[#allocation18]] [#allocation15]
    $region65: #{graph_predictor_forward.1} parent=1 // pred_fallthru
      _
    %131 = shalt.err (0)
    %s133 = sshll.u32 [#allocation2], 4
    %s134 = int_to_ptr.vmem [resolvable:$true] %s133
    %136 = dma.hbm_to_vmem [thread:$0]  %s8, 65536, %s134, [#allocation3]
    %v137 = vld [vmem:[#allocation9] sm:$0xff]
    %v138 = vld [vmem:[#allocation9 + $0x20] sm:$0x3f]
    %v139 = vld [vmem:[#allocation9 + $0x28] sm:$0x3f]
    %v140 = vld [vmem:[#allocation9 + $0x30] sm:$0x3f]
    %v141 = vld [vmem:[#allocation9 + $0x38] sm:$0x3f]
    %v142 = vld [vmem:[%s0] sm:$0xff]
    %v143 = vld [vmem:[%s0 + $0x8] sm:$0xff]
    %v144 = vld [vmem:[%s0 + $0x10] sm:$0xff]
    %v145 = vld [vmem:[%s0 + $0x18] sm:$0xff]
    %v146 = vld [vmem:[%s0 + $0x20] sm:$0xff]
    %v147 = vld [vmem:[%s0 + $0x28] sm:$0xff]
    %v148 = vld [vmem:[%s0 + $0x30] sm:$0xff]
    %v149 = vld [vmem:[%s0 + $0x38] sm:$0xff]
    %v150 = vld [vmem:[%s0 + $0x40] sm:$0xff]
    %v151 = vld [vmem:[%s0 + $0x48] sm:$0xff]
    %v152 = vld [vmem:[%s0 + $0x50] sm:$0xff]
    %v153 = vld [vmem:[%s0 + $0x58] sm:$0xff]
    %v154 = vld [vmem:[%s0 + $0x60] sm:$0xff]
    %v155 = vld [vmem:[%s0 + $0x68] sm:$0xff]
    %v156 = vld [vmem:[%s0 + $0x70] sm:$0xff]
    %v157 = vld [vmem:[%s0 + $0x78] sm:$0xff]
    %v158 = vld [vmem:[%s0 + $0x80] sm:$0xff]
    %v159 = vld [vmem:[%s0 + $0x88] sm:$0xff]
    %v160 = vld [vmem:[%s0 + $0x90] sm:$0xff]
    %v161 = vld [vmem:[%s0 + $0x98] sm:$0xff]
    %v162 = vld [vmem:[%s0 + $0xa0] sm:$0xff]
    %v163 = vld [vmem:[%s0 + $0xa8] sm:$0xff]
    %v164 = vld [vmem:[%s0 + $0xb0] sm:$0xff]
    %v165 = vld [vmem:[%s0 + $0xb8] sm:$0xff]
    %v166 = vld [vmem:[%s0 + $0xc0] sm:$0xff]
    %v167 = vld [vmem:[%s0 + $0xc8] sm:$0xff]
    %v168 = vld [vmem:[%s0 + $0xd0] sm:$0xff]
    %v169 = vld [vmem:[%s0 + $0xd8] sm:$0xff]
    %v170 = vld [vmem:[%s0 + $0xe0] sm:$0xff]
    %v171 = vld [vmem:[%s0 + $0xe8] sm:$0xff]
    %v172 = vld [vmem:[%s0 + $0xf0] sm:$0xff]
    %v173 = vld [vmem:[%s0 + $0xf8] sm:$0xff]
    %v174 = vld [vmem:[%s0 + $0x100] sm:$0xff]
    %v175 = vld [vmem:[%s0 + $0x108] sm:$0xff]
    %v176 = vld [vmem:[%s0 + $0x110] sm:$0xff]
    %v177 = vld [vmem:[%s0 + $0x118] sm:$0xff]
    %v178 = vld [vmem:[%s0 + $0x120] sm:$0xff]
    %v179 = vld [vmem:[%s0 + $0x128] sm:$0xff]
    %v180 = vld [vmem:[%s0 + $0x130] sm:$0xff]
    %v181 = vld [vmem:[%s0 + $0x138] sm:$0xff]
    %v182 = vld [vmem:[%s0 + $0x140] sm:$0xff]
    %v183 = vld [vmem:[%s0 + $0x148] sm:$0xff]
    %v184 = vld [vmem:[%s0 + $0x150] sm:$0xff]
    %v185 = vld [vmem:[%s0 + $0x158] sm:$0xff]
    %v186 = vld [vmem:[%s0 + $0x160] sm:$0xff]
    %v187 = vld [vmem:[%s0 + $0x168] sm:$0xff]
    %v188 = vld [vmem:[%s0 + $0x170] sm:$0xff]
    %v189 = vld [vmem:[%s0 + $0x178] sm:$0xff]
    %v190 = vld [vmem:[%s0 + $0x180] sm:$0xff]
    %v191 = vld [vmem:[%s0 + $0x188] sm:$0xff]
    %v192 = vld [vmem:[%s0 + $0x190] sm:$0xff]
    %v193 = vld [vmem:[%s0 + $0x198] sm:$0xff]
    %v194 = vld [vmem:[%s0 + $0x1a0] sm:$0xff]
    %v195 = vld [vmem:[%s0 + $0x1a8] sm:$0xff]
    %v196 = vld [vmem:[%s0 + $0x1b0] sm:$0xff]
    %v197 = vld [vmem:[%s0 + $0x1b8] sm:$0xff]
    %v198 = vld [vmem:[%s0 + $0x1c0] sm:$0xff]
    %v199 = vld [vmem:[%s0 + $0x1c8] sm:$0xff]
    %v200 = vld [vmem:[%s0 + $0x1d0] sm:$0xff]
    %v201 = vld [vmem:[%s0 + $0x1d8] sm:$0xff]
    %v202 = vld [vmem:[%s0 + $0x1e0] sm:$0xff]
    %v203 = vld [vmem:[%s0 + $0x1e8] sm:$0xff]
    %v204 = vld [vmem:[%s0 + $0x1f0] sm:$0xff]
    %v205 = vld [vmem:[%s0 + $0x1f8] sm:$0xff]
    %v206 = vld [vmem:[%s0 + $0x200] sm:$0xff]
    %v207 = vld [vmem:[%s0 + $0x208] sm:$0xff]
    %v208 = vld [vmem:[%s0 + $0x210] sm:$0xff]
    %v209 = vld [vmem:[%s0 + $0x218] sm:$0xff]
    %v210 = vld [vmem:[%s0 + $0x220] sm:$0xff]
    %v211 = vld [vmem:[%s0 + $0x228] sm:$0xff]
    %v212 = vld [vmem:[%s0 + $0x230] sm:$0xff]
    %v213 = vld [vmem:[%s0 + $0x238] sm:$0xff]
    %v214 = vld [vmem:[%s0 + $0x240] sm:$0xff]
    %v215 = vld [vmem:[%s0 + $0x248] sm:$0xff]
    %v216 = vld [vmem:[%s0 + $0x250] sm:$0xff]
    %v217 = vld [vmem:[%s0 + $0x258] sm:$0xff]
    %v218 = vld [vmem:[%s0 + $0x260] sm:$0x3]
    %v219 = vlaneseq
    %v220 = vshrl.u32 %v219, 7
    %v221 = vsub.s32 1, %v220
    %v222 = vrot.slane %v138, %v221
    %vm223 = vcmask 72704
    %v225 = vsel %vm223, %v142, 0
    %v228 = vsel %vm223, %v143, 0
    %v231 = vsel %vm223, %v144, 0
    %v234 = vsel %vm223, %v145, 0
    %v237 = vsel %vm223, %v146, 0
    %v240 = vsel %vm223, %v147, 0
    %v243 = vsel %vm223, %v148, 0
    %v246 = vsel %vm223, %v149, 0
    %v249 = vsel %vm223, %v150, 0
    %v252 = vsel %vm223, %v151, 0
    %v255 = vsel %vm223, %v152, 0
    %v258 = vsel %vm223, %v153, 0
    %v261 = vsel %vm223, %v154, 0
    %v264 = vsel %vm223, %v155, 0
    %v267 = vsel %vm223, %v156, 0
    %v270 = vsel %vm223, %v157, 0
    %v273 = vsel %vm223, %v158, 0
    %v276 = vsel %vm223, %v159, 0
    %v279 = vsel %vm223, %v160, 0
    %v282 = vsel %vm223, %v161, 0
    %v285 = vsel %vm223, %v162, 0
    %v288 = vsel %vm223, %v163, 0
    %v291 = vsel %vm223, %v164, 0
    %v294 = vsel %vm223, %v165, 0
    %v297 = vsel %vm223, %v166, 0
    %v300 = vsel %vm223, %v167, 0
    %v303 = vsel %vm223, %v168, 0
    %v306 = vsel %vm223, %v169, 0
    %v309 = vsel %vm223, %v170, 0
    %v312 = vsel %vm223, %v171, 0
    %v315 = vsel %vm223, %v172, 0
    %v318 = vsel %vm223, %v173, 0
    %v321 = vsel %vm223, %v174, 0
    %v324 = vsel %vm223, %v175, 0
    %v327 = vsel %vm223, %v176, 0
    %v330 = vsel %vm223, %v177, 0
    %v333 = vsel %vm223, %v178, 0
    %v336 = vsel %vm223, %v179, 0
    %v339 = vsel %vm223, %v180, 0
    %v342 = vsel %vm223, %v181, 0
    %v345 = vsel %vm223, %v182, 0
    %v348 = vsel %vm223, %v183, 0
    %v351 = vsel %vm223, %v184, 0
    %v354 = vsel %vm223, %v185, 0
    %v357 = vsel %vm223, %v186, 0
    %v360 = vsel %vm223, %v187, 0
    %v363 = vsel %vm223, %v188, 0
    %v366 = vsel %vm223, %v189, 0
    %v369 = vsel %vm223, %v190, 0
    %v372 = vsel %vm223, %v191, 0
    %v375 = vsel %vm223, %v192, 0
    %v378 = vsel %vm223, %v193, 0
    %v381 = vsel %vm223, %v194, 0
    %v384 = vsel %vm223, %v195, 0
    %v387 = vsel %vm223, %v196, 0
    %v390 = vsel %vm223, %v197, 0
    %v393 = vsel %vm223, %v198, 0
    %v396 = vsel %vm223, %v199, 0
    %v399 = vsel %vm223, %v200, 0
    %v402 = vsel %vm223, %v201, 0
    %v405 = vsel %vm223, %v202, 0
    %v408 = vsel %vm223, %v203, 0
    %v411 = vsel %vm223, %v204, 0
    %v414 = vsel %vm223, %v205, 0
    %v417 = vsel %vm223, %v206, 0
    %v420 = vsel %vm223, %v207, 0
    %v423 = vsel %vm223, %v208, 0
    %v426 = vsel %vm223, %v209, 0
    %v429 = vsel %vm223, %v210, 0
    %v432 = vsel %vm223, %v211, 0
    %v435 = vsel %vm223, %v212, 0
    %v438 = vsel %vm223, %v213, 0
    %v441 = vsel %vm223, %v214, 0
    %v444 = vsel %vm223, %v215, 0
    %v447 = vsel %vm223, %v216, 0
    %v450 = vsel %vm223, %v217, 0
    %v453 = vsel %vm223, %v218, 0
    %vm455 = vcmask 1040384
    %v457 = vsel %vm455, %v138, 0
    %459 = vmatprep.subr.mxu0 0.0
    %460 = vmatpush1.msra.mxu0 0.0
    %461 = vmatprep.subr.mxu0 0.0
    %462 = vmatpush1.msra.mxu0 0.0
    %463 = vmatprep.subr.mxu0 0.0
    %464 = vmatpush1.msra.mxu0 0.0
    %465 = vmatprep.subr.mxu0 0.0
    %466 = vmatpush1.msra.mxu0 0.0
    %467 = vmatprep.subr.mxu0 0.0
    %468 = vmatpush1.msra.mxu0 0.0
    %469 = vmatprep.subr.mxu0 0.0
    %470 = vmatpush1.msra.mxu0 0.0
    %471 = vmatprep.subr.mxu0 0.0
    %472 = vmatpush1.msra.mxu0 0.0
    %473 = vmatprep.subr.mxu0 0.0
    %474 = vmatpush1.msra.mxu0 0.0
    %475 = vmatprep.subr.mxu0 0.0
    %476 = vmatpush1.msra.mxu0 0.0
    %477 = vmatprep.subr.mxu0 0.0
    %478 = vmatpush1.msra.mxu0 0.0
    %479 = vmatprep.subr.mxu0 0.0
    %480 = vmatpush1.msra.mxu0 0.0
    %481 = vmatprep.subr.mxu0 0.0
    %482 = vmatpush1.msra.mxu0 0.0
    %483 = vmatprep.subr.mxu0 0.0
    %484 = vmatpush1.msra.mxu0 0.0
    %485 = vmatprep.subr.mxu0 0.0
    %486 = vmatpush1.msra.mxu0 0.0
    %487 = vmatprep.subr.mxu0 0.0
    %488 = vmatpush1.msra.mxu0 %v457
    %489 = vmatprep.subr.mxu0 0.0
    %490 = vmatpush1.msra.mxu0 %v137
    %491 = vmatprep.subr.mxu0 0.0
    %492 = vmatpush2.msra.mxu0 0.0
    %493 = vmatprep.subr.mxu0 0.0
    %494 = vmatpush2.msra.mxu0 0.0
    %495 = vmatprep.subr.mxu0 0.0
    %496 = vmatpush2.msra.mxu0 0.0
    %497 = vmatprep.subr.mxu0 0.0
    %498 = vmatpush2.msra.mxu0 0.0
    %499 = vmatprep.subr.mxu0 0.0
    %500 = vmatpush2.msra.mxu0 0.0
    %501 = vmatprep.subr.mxu0 0.0
    %502 = vmatpush2.msra.mxu0 0.0
    %503 = vmatprep.subr.mxu0 0.0
    %504 = vmatpush2.msra.mxu0 0.0
    %505 = vmatprep.subr.mxu0 0.0
    %506 = vmatpush2.msra.mxu0 0.0
    %507 = vmatprep.subr.mxu0 0.0
    %508 = vmatpush2.msra.mxu0 0.0
    %509 = vmatprep.subr.mxu0 0.0
    %510 = vmatpush2.msra.mxu0 0.0
    %511 = vmatprep.subr.mxu0 0.0
    %512 = vmatpush2.msra.mxu0 0.0
    %513 = vmatprep.subr.mxu0 0.0
    %514 = vmatpush2.msra.mxu0 0.0
    %515 = vmatprep.subr.mxu0 0.0
    %516 = vmatpush2.msra.mxu0 0.0
    %517 = vmatprep.subr.mxu0 0.0
    %518 = vmatpush2.msra.mxu0 0.0
    %519 = vmatprep.subr.mxu0 0.0
    %520 = vmatpush2.msra.mxu0 0.0
    %521 = vmatprep.subr.mxu0 0.0
    %522 = vmatpush2.msra.mxu0 0.0
    %523 = vmatprep.mubr.f32.mxu0 0.0
    %524 = vmatmul.mubr.f32.gmra.mxu0 %v225
    %v525 = vpop.f32.mrf.mxu0
    %v526 = vadd.f32 %v222, %v525
    %v527 = vpop.f32.mrf.mxu0
    %528 = vmatprep.mubr.f32.mxu0 0.0
    %529 = vmatmul.mubr.f32.gmra.mxu0 %v228
    %v530 = vpop.f32.mrf.mxu0
    %v531 = vadd.f32 %v222, %v530
    %v532 = vpop.f32.mrf.mxu0
    %533 = vmatprep.mubr.f32.mxu0 0.0
    %534 = vmatmul.mubr.f32.gmra.mxu0 %v231
    %v535 = vpop.f32.mrf.mxu0
    %v536 = vadd.f32 %v222, %v535
    %v537 = vpop.f32.mrf.mxu0
    %538 = vmatprep.mubr.f32.mxu0 0.0
    %539 = vmatmul.mubr.f32.gmra.mxu0 %v234
    %v540 = vpop.f32.mrf.mxu0
    %v541 = vadd.f32 %v222, %v540
    %v542 = vpop.f32.mrf.mxu0
    %543 = vmatprep.mubr.f32.mxu0 0.0
    %544 = vmatmul.mubr.f32.gmra.mxu0 %v237
    %v545 = vpop.f32.mrf.mxu0
    %v546 = vadd.f32 %v222, %v545
    %v547 = vpop.f32.mrf.mxu0
    %548 = vmatprep.mubr.f32.mxu0 0.0
    %549 = vmatmul.mubr.f32.gmra.mxu0 %v240
    %v550 = vpop.f32.mrf.mxu0
    %v551 = vadd.f32 %v222, %v550
    %v552 = vpop.f32.mrf.mxu0
    %553 = vmatprep.mubr.f32.mxu0 0.0
    %554 = vmatmul.mubr.f32.gmra.mxu0 %v243
    %v555 = vpop.f32.mrf.mxu0
    %v556 = vadd.f32 %v222, %v555
    %v557 = vpop.f32.mrf.mxu0
    %558 = vmatprep.mubr.f32.mxu0 0.0
    %559 = vmatmul.mubr.f32.gmra.mxu0 %v246
    %v560 = vpop.f32.mrf.mxu0
    %v561 = vadd.f32 %v222, %v560
    %v562 = vpop.f32.mrf.mxu0
    %563 = vmatprep.mubr.f32.mxu0 0.0
    %564 = vmatmul.mubr.f32.gmra.mxu0 %v249
    %v565 = vpop.f32.mrf.mxu0
    %v566 = vadd.f32 %v222, %v565
    %v567 = vpop.f32.mrf.mxu0
    %568 = vmatprep.mubr.f32.mxu0 0.0
    %569 = vmatmul.mubr.f32.gmra.mxu0 %v252
    %v570 = vpop.f32.mrf.mxu0
    %v571 = vadd.f32 %v222, %v570
    %v572 = vpop.f32.mrf.mxu0
    %573 = vmatprep.mubr.f32.mxu0 0.0
    %574 = vmatmul.mubr.f32.gmra.mxu0 %v255
    %v575 = vpop.f32.mrf.mxu0
    %v576 = vadd.f32 %v222, %v575
    %v577 = vpop.f32.mrf.mxu0
    %578 = vmatprep.mubr.f32.mxu0 0.0
    %579 = vmatmul.mubr.f32.gmra.mxu0 %v258
    %v580 = vpop.f32.mrf.mxu0
    %v581 = vadd.f32 %v222, %v580
    %v582 = vpop.f32.mrf.mxu0
    %583 = vmatprep.mubr.f32.mxu0 0.0
    %584 = vmatmul.mubr.f32.gmra.mxu0 %v261
    %v585 = vpop.f32.mrf.mxu0
    %v586 = vadd.f32 %v222, %v585
    %v587 = vpop.f32.mrf.mxu0
    %588 = vmatprep.mubr.f32.mxu0 0.0
    %589 = vmatmul.mubr.f32.gmra.mxu0 %v264
    %v590 = vpop.f32.mrf.mxu0
    %v591 = vadd.f32 %v222, %v590
    %v592 = vpop.f32.mrf.mxu0
    %593 = vmatprep.mubr.f32.mxu0 0.0
    %594 = vmatmul.mubr.f32.gmra.mxu0 %v267
    %v595 = vpop.f32.mrf.mxu0
    %v596 = vadd.f32 %v222, %v595
    %v597 = vpop.f32.mrf.mxu0
    %598 = vmatprep.mubr.f32.mxu0 0.0
    %599 = vmatmul.mubr.f32.gmra.mxu0 %v270
    %v600 = vpop.f32.mrf.mxu0
    %v601 = vadd.f32 %v222, %v600
    %v602 = vpop.f32.mrf.mxu0
    %603 = vmatprep.mubr.f32.mxu0 0.0
    %604 = vmatmul.mubr.f32.gmra.mxu0 %v273
    %v605 = vpop.f32.mrf.mxu0
    %v606 = vadd.f32 %v222, %v605
    %v607 = vpop.f32.mrf.mxu0
    %608 = vmatprep.mubr.f32.mxu0 0.0
    %609 = vmatmul.mubr.f32.gmra.mxu0 %v276
    %v610 = vpop.f32.mrf.mxu0
    %v611 = vadd.f32 %v222, %v610
    %v612 = vpop.f32.mrf.mxu0
    %613 = vmatprep.mubr.f32.mxu0 0.0
    %614 = vmatmul.mubr.f32.gmra.mxu0 %v279
    %v615 = vpop.f32.mrf.mxu0
    %v616 = vadd.f32 %v222, %v615
    %v617 = vpop.f32.mrf.mxu0
    %618 = vmatprep.mubr.f32.mxu0 0.0
    %619 = vmatmul.mubr.f32.gmra.mxu0 %v282
    %v620 = vpop.f32.mrf.mxu0
    %v621 = vadd.f32 %v222, %v620
    %v622 = vpop.f32.mrf.mxu0
    %623 = vmatprep.mubr.f32.mxu0 0.0
    %624 = vmatmul.mubr.f32.gmra.mxu0 %v285
    %v625 = vpop.f32.mrf.mxu0
    %v626 = vadd.f32 %v222, %v625
    %v627 = vpop.f32.mrf.mxu0
    %628 = vmatprep.mubr.f32.mxu0 0.0
    %629 = vmatmul.mubr.f32.gmra.mxu0 %v288
    %v630 = vpop.f32.mrf.mxu0
    %v631 = vadd.f32 %v222, %v630
    %v632 = vpop.f32.mrf.mxu0
    %633 = vmatprep.mubr.f32.mxu0 0.0
    %634 = vmatmul.mubr.f32.gmra.mxu0 %v291
    %v635 = vpop.f32.mrf.mxu0
    %v636 = vadd.f32 %v222, %v635
    %v637 = vpop.f32.mrf.mxu0
    %638 = vmatprep.mubr.f32.mxu0 0.0
    %639 = vmatmul.mubr.f32.gmra.mxu0 %v294
    %v640 = vpop.f32.mrf.mxu0
    %v641 = vadd.f32 %v222, %v640
    %v642 = vpop.f32.mrf.mxu0
    %643 = vmatprep.mubr.f32.mxu0 0.0
    %644 = vmatmul.mubr.f32.gmra.mxu0 %v297
    %v645 = vpop.f32.mrf.mxu0
    %v646 = vadd.f32 %v222, %v645
    %v647 = vpop.f32.mrf.mxu0
    %648 = vmatprep.mubr.f32.mxu0 0.0
    %649 = vmatmul.mubr.f32.gmra.mxu0 %v300
    %v650 = vpop.f32.mrf.mxu0
    %v651 = vadd.f32 %v222, %v650
    %v652 = vpop.f32.mrf.mxu0
    %653 = vmatprep.mubr.f32.mxu0 0.0
    %654 = vmatmul.mubr.f32.gmra.mxu0 %v303
    %v655 = vpop.f32.mrf.mxu0
    %v656 = vadd.f32 %v222, %v655
    %v657 = vpop.f32.mrf.mxu0
    %658 = vmatprep.mubr.f32.mxu0 0.0
    %659 = vmatmul.mubr.f32.gmra.mxu0 %v306
    %v660 = vpop.f32.mrf.mxu0
    %v661 = vadd.f32 %v222, %v660
    %v662 = vpop.f32.mrf.mxu0
    %663 = vmatprep.mubr.f32.mxu0 0.0
    %664 = vmatmul.mubr.f32.gmra.mxu0 %v309
    %v665 = vpop.f32.mrf.mxu0
    %v666 = vadd.f32 %v222, %v665
    %v667 = vpop.f32.mrf.mxu0
    %668 = vmatprep.mubr.f32.mxu0 0.0
    %669 = vmatmul.mubr.f32.gmra.mxu0 %v312
    %v670 = vpop.f32.mrf.mxu0
    %v671 = vadd.f32 %v222, %v670
    %v672 = vpop.f32.mrf.mxu0
    %673 = vmatprep.mubr.f32.mxu0 0.0
    %674 = vmatmul.mubr.f32.gmra.mxu0 %v315
    %v675 = vpop.f32.mrf.mxu0
    %v676 = vadd.f32 %v222, %v675
    %v677 = vpop.f32.mrf.mxu0
    %678 = vmatprep.mubr.f32.mxu0 0.0
    %679 = vmatmul.mubr.f32.gmra.mxu0 %v318
    %v680 = vpop.f32.mrf.mxu0
    %v681 = vadd.f32 %v222, %v680
    %v682 = vpop.f32.mrf.mxu0
    %683 = vmatprep.mubr.f32.mxu0 0.0
    %684 = vmatmul.mubr.f32.gmra.mxu0 %v321
    %v685 = vpop.f32.mrf.mxu0
    %v686 = vadd.f32 %v222, %v685
    %v687 = vpop.f32.mrf.mxu0
    %688 = vmatprep.mubr.f32.mxu0 0.0
    %689 = vmatmul.mubr.f32.gmra.mxu0 %v324
    %v690 = vpop.f32.mrf.mxu0
    %v691 = vadd.f32 %v222, %v690
    %v692 = vpop.f32.mrf.mxu0
    %693 = vmatprep.mubr.f32.mxu0 0.0
    %694 = vmatmul.mubr.f32.gmra.mxu0 %v327
    %v695 = vpop.f32.mrf.mxu0
    %v696 = vadd.f32 %v222, %v695
    %v697 = vpop.f32.mrf.mxu0
    %698 = vmatprep.mubr.f32.mxu0 0.0
    %699 = vmatmul.mubr.f32.gmra.mxu0 %v330
    %v700 = vpop.f32.mrf.mxu0
    %v701 = vadd.f32 %v222, %v700
    %v702 = vpop.f32.mrf.mxu0
    %703 = vmatprep.mubr.f32.mxu0 0.0
    %704 = vmatmul.mubr.f32.gmra.mxu0 %v333
    %v705 = vpop.f32.mrf.mxu0
    %v706 = vadd.f32 %v222, %v705
    %v707 = vpop.f32.mrf.mxu0
    %708 = vmatprep.mubr.f32.mxu0 0.0
    %709 = vmatmul.mubr.f32.gmra.mxu0 %v336
    %v710 = vpop.f32.mrf.mxu0
    %v711 = vadd.f32 %v222, %v710
    %v712 = vpop.f32.mrf.mxu0
    %713 = vmatprep.mubr.f32.mxu0 0.0
    %714 = vmatmul.mubr.f32.gmra.mxu0 %v339
    %v715 = vpop.f32.mrf.mxu0
    %v716 = vadd.f32 %v222, %v715
    %v717 = vpop.f32.mrf.mxu0
    %718 = vmatprep.mubr.f32.mxu0 0.0
    %719 = vmatmul.mubr.f32.gmra.mxu0 %v342
    %v720 = vpop.f32.mrf.mxu0
    %v721 = vadd.f32 %v222, %v720
    %v722 = vpop.f32.mrf.mxu0
    %723 = vmatprep.mubr.f32.mxu0 0.0
    %724 = vmatmul.mubr.f32.gmra.mxu0 %v345
    %v725 = vpop.f32.mrf.mxu0
    %v726 = vadd.f32 %v222, %v725
    %v727 = vpop.f32.mrf.mxu0
    %728 = vmatprep.mubr.f32.mxu0 0.0
    %729 = vmatmul.mubr.f32.gmra.mxu0 %v348
    %v730 = vpop.f32.mrf.mxu0
    %v731 = vadd.f32 %v222, %v730
    %v732 = vpop.f32.mrf.mxu0
    %733 = vmatprep.mubr.f32.mxu0 0.0
    %734 = vmatmul.mubr.f32.gmra.mxu0 %v351
    %v735 = vpop.f32.mrf.mxu0
    %v736 = vadd.f32 %v222, %v735
    %v737 = vpop.f32.mrf.mxu0
    %738 = vmatprep.mubr.f32.mxu0 0.0
    %739 = vmatmul.mubr.f32.gmra.mxu0 %v354
    %v740 = vpop.f32.mrf.mxu0
    %v741 = vadd.f32 %v222, %v740
    %v742 = vpop.f32.mrf.mxu0
    %743 = vmatprep.mubr.f32.mxu0 0.0
    %744 = vmatmul.mubr.f32.gmra.mxu0 %v357
    %v745 = vpop.f32.mrf.mxu0
    %v746 = vadd.f32 %v222, %v745
    %v747 = vpop.f32.mrf.mxu0
    %748 = vmatprep.mubr.f32.mxu0 0.0
    %749 = vmatmul.mubr.f32.gmra.mxu0 %v360
    %v750 = vpop.f32.mrf.mxu0
    %v751 = vadd.f32 %v222, %v750
    %v752 = vpop.f32.mrf.mxu0
    %753 = vmatprep.mubr.f32.mxu0 0.0
    %754 = vmatmul.mubr.f32.gmra.mxu0 %v363
    %v755 = vpop.f32.mrf.mxu0
    %v756 = vadd.f32 %v222, %v755
    %v757 = vpop.f32.mrf.mxu0
    %758 = vmatprep.mubr.f32.mxu0 0.0
    %759 = vmatmul.mubr.f32.gmra.mxu0 %v366
    %v760 = vpop.f32.mrf.mxu0
    %v761 = vadd.f32 %v222, %v760
    %v762 = vpop.f32.mrf.mxu0
    %763 = vmatprep.mubr.f32.mxu0 0.0
    %764 = vmatmul.mubr.f32.gmra.mxu0 %v369
    %v765 = vpop.f32.mrf.mxu0
    %v766 = vadd.f32 %v222, %v765
    %v767 = vpop.f32.mrf.mxu0
    %768 = vmatprep.mubr.f32.mxu0 0.0
    %769 = vmatmul.mubr.f32.gmra.mxu0 %v372
    %v770 = vpop.f32.mrf.mxu0
    %v771 = vadd.f32 %v222, %v770
    %v772 = vpop.f32.mrf.mxu0
    %773 = vmatprep.mubr.f32.mxu0 0.0
    %774 = vmatmul.mubr.f32.gmra.mxu0 %v375
    %v775 = vpop.f32.mrf.mxu0
    %v776 = vadd.f32 %v222, %v775
    %v777 = vpop.f32.mrf.mxu0
    %778 = vmatprep.mubr.f32.mxu0 0.0
    %779 = vmatmul.mubr.f32.gmra.mxu0 %v378
    %v780 = vpop.f32.mrf.mxu0
    %v781 = vadd.f32 %v222, %v780
    %v782 = vpop.f32.mrf.mxu0
    %783 = vmatprep.mubr.f32.mxu0 0.0
    %784 = vmatmul.mubr.f32.gmra.mxu0 %v381
    %v785 = vpop.f32.mrf.mxu0
    %v786 = vadd.f32 %v222, %v785
    %v787 = vpop.f32.mrf.mxu0
    %788 = vmatprep.mubr.f32.mxu0 0.0
    %789 = vmatmul.mubr.f32.gmra.mxu0 %v384
    %v790 = vpop.f32.mrf.mxu0
    %v791 = vadd.f32 %v222, %v790
    %v792 = vpop.f32.mrf.mxu0
    %793 = vmatprep.mubr.f32.mxu0 0.0
    %794 = vmatmul.mubr.f32.gmra.mxu0 %v387
    %v795 = vpop.f32.mrf.mxu0
    %v796 = vadd.f32 %v222, %v795
    %v797 = vpop.f32.mrf.mxu0
    %798 = vmatprep.mubr.f32.mxu0 0.0
    %799 = vmatmul.mubr.f32.gmra.mxu0 %v390
    %v800 = vpop.f32.mrf.mxu0
    %v801 = vadd.f32 %v222, %v800
    %v802 = vpop.f32.mrf.mxu0
    %803 = vmatprep.mubr.f32.mxu0 0.0
    %804 = vmatmul.mubr.f32.gmra.mxu0 %v393
    %v805 = vpop.f32.mrf.mxu0
    %v806 = vadd.f32 %v222, %v805
    %v807 = vpop.f32.mrf.mxu0
    %808 = vmatprep.mubr.f32.mxu0 0.0
    %809 = vmatmul.mubr.f32.gmra.mxu0 %v396
    %v810 = vpop.f32.mrf.mxu0
    %v811 = vadd.f32 %v222, %v810
    %v812 = vpop.f32.mrf.mxu0
    %813 = vmatprep.mubr.f32.mxu0 0.0
    %814 = vmatmul.mubr.f32.gmra.mxu0 %v399
    %v815 = vpop.f32.mrf.mxu0
    %v816 = vadd.f32 %v222, %v815
    %v817 = vpop.f32.mrf.mxu0
    %818 = vmatprep.mubr.f32.mxu0 0.0
    %819 = vmatmul.mubr.f32.gmra.mxu0 %v402
    %v820 = vpop.f32.mrf.mxu0
    %v821 = vadd.f32 %v222, %v820
    %v822 = vpop.f32.mrf.mxu0
    %823 = vmatprep.mubr.f32.mxu0 0.0
    %824 = vmatmul.mubr.f32.gmra.mxu0 %v405
    %v825 = vpop.f32.mrf.mxu0
    %v826 = vadd.f32 %v222, %v825
    %v827 = vpop.f32.mrf.mxu0
    %828 = vmatprep.mubr.f32.mxu0 0.0
    %829 = vmatmul.mubr.f32.gmra.mxu0 %v408
    %v830 = vpop.f32.mrf.mxu0
    %v831 = vadd.f32 %v222, %v830
    %v832 = vpop.f32.mrf.mxu0
    %833 = vmatprep.mubr.f32.mxu0 0.0
    %834 = vmatmul.mubr.f32.gmra.mxu0 %v411
    %v835 = vpop.f32.mrf.mxu0
    %v836 = vadd.f32 %v222, %v835
    %v837 = vpop.f32.mrf.mxu0
    %838 = vmatprep.mubr.f32.mxu0 0.0
    %839 = vmatmul.mubr.f32.gmra.mxu0 %v414
    %v840 = vpop.f32.mrf.mxu0
    %v841 = vadd.f32 %v222, %v840
    %v842 = vpop.f32.mrf.mxu0
    %843 = vmatprep.mubr.f32.mxu0 0.0
    %844 = vmatmul.mubr.f32.gmra.mxu0 %v417
    %v845 = vpop.f32.mrf.mxu0
    %v846 = vadd.f32 %v222, %v845
    %v847 = vpop.f32.mrf.mxu0
    %848 = vmatprep.mubr.f32.mxu0 0.0
    %849 = vmatmul.mubr.f32.gmra.mxu0 %v420
    %v850 = vpop.f32.mrf.mxu0
    %v851 = vadd.f32 %v222, %v850
    %v852 = vpop.f32.mrf.mxu0
    %853 = vmatprep.mubr.f32.mxu0 0.0
    %854 = vmatmul.mubr.f32.gmra.mxu0 %v423
    %v855 = vpop.f32.mrf.mxu0
    %v856 = vadd.f32 %v222, %v855
    %v857 = vpop.f32.mrf.mxu0
    %858 = vmatprep.mubr.f32.mxu0 0.0
    %859 = vmatmul.mubr.f32.gmra.mxu0 %v426
    %v860 = vpop.f32.mrf.mxu0
    %v861 = vadd.f32 %v222, %v860
    %v862 = vpop.f32.mrf.mxu0
    %863 = vmatprep.mubr.f32.mxu0 0.0
    %864 = vmatmul.mubr.f32.gmra.mxu0 %v429
    %v865 = vpop.f32.mrf.mxu0
    %v866 = vadd.f32 %v222, %v865
    %v867 = vpop.f32.mrf.mxu0
    %868 = vmatprep.mubr.f32.mxu0 0.0
    %869 = vmatmul.mubr.f32.gmra.mxu0 %v432
    %v870 = vpop.f32.mrf.mxu0
    %v871 = vadd.f32 %v222, %v870
    %v872 = vpop.f32.mrf.mxu0
    %873 = vmatprep.mubr.f32.mxu0 0.0
    %874 = vmatmul.mubr.f32.gmra.mxu0 %v435
    %v875 = vpop.f32.mrf.mxu0
    %v876 = vadd.f32 %v222, %v875
    %v877 = vpop.f32.mrf.mxu0
    %878 = vmatprep.mubr.f32.mxu0 0.0
    %879 = vmatmul.mubr.f32.gmra.mxu0 %v438
    %v880 = vpop.f32.mrf.mxu0
    %v881 = vadd.f32 %v222, %v880
    %v882 = vpop.f32.mrf.mxu0
    %883 = vmatprep.mubr.f32.mxu0 0.0
    %884 = vmatmul.mubr.f32.gmra.mxu0 %v441
    %v885 = vpop.f32.mrf.mxu0
    %v886 = vadd.f32 %v222, %v885
    %v887 = vpop.f32.mrf.mxu0
    %888 = vmatprep.mubr.f32.mxu0 0.0
    %889 = vmatmul.mubr.f32.gmra.mxu0 %v444
    %v890 = vpop.f32.mrf.mxu0
    %v891 = vadd.f32 %v222, %v890
    %v892 = vpop.f32.mrf.mxu0
    %893 = vmatprep.mubr.f32.mxu0 0.0
    %894 = vmatmul.mubr.f32.gmra.mxu0 %v447
    %v895 = vpop.f32.mrf.mxu0
    %v896 = vadd.f32 %v222, %v895
    %v897 = vpop.f32.mrf.mxu0
    %898 = vmatprep.mubr.f32.mxu0 0.0
    %899 = vmatmul.mubr.f32.gmra.mxu0 %v450
    %v900 = vpop.f32.mrf.mxu0
    %v901 = vadd.f32 %v222, %v900
    %v902 = vpop.f32.mrf.mxu0
    %903 = vmatprep.mubr.f32.mxu0 0.0
    %904 = vmatmul.mubr.f32.gmra.mxu0 %v453
    %v905 = vpop.f32.mrf.mxu0
    %v906 = vadd.f32 %v222, %v905
    %v907 = vpop.f32.mrf.mxu0
    %908 = vdwg.mxu0
    %v909 = vmax.f32 %v526, 0.0
    %v910 = vmax.f32 %v531, 0.0
    %v911 = vmax.f32 %v536, 0.0
    %v912 = vmax.f32 %v541, 0.0
    %v913 = vmax.f32 %v546, 0.0
    %v914 = vmax.f32 %v551, 0.0
    %v915 = vmax.f32 %v556, 0.0
    %v916 = vmax.f32 %v561, 0.0
    %v917 = vmax.f32 %v566, 0.0
    %v918 = vmax.f32 %v571, 0.0
    %v919 = vmax.f32 %v576, 0.0
    %v920 = vmax.f32 %v581, 0.0
    %v921 = vmax.f32 %v586, 0.0
    %v922 = vmax.f32 %v591, 0.0
    %v923 = vmax.f32 %v596, 0.0
    %v924 = vmax.f32 %v601, 0.0
    %v925 = vmax.f32 %v606, 0.0
    %v926 = vmax.f32 %v611, 0.0
    %v927 = vmax.f32 %v616, 0.0
    %v928 = vmax.f32 %v621, 0.0
    %v929 = vmax.f32 %v626, 0.0
    %v930 = vmax.f32 %v631, 0.0
    %v931 = vmax.f32 %v636, 0.0
    %v932 = vmax.f32 %v641, 0.0
    %v933 = vmax.f32 %v646, 0.0
    %v934 = vmax.f32 %v651, 0.0
    %v935 = vmax.f32 %v656, 0.0
    %v936 = vmax.f32 %v661, 0.0
    %v937 = vmax.f32 %v666, 0.0
    %v938 = vmax.f32 %v671, 0.0
    %v939 = vmax.f32 %v676, 0.0
    %v940 = vmax.f32 %v681, 0.0
    %v941 = vmax.f32 %v686, 0.0
    %v942 = vmax.f32 %v691, 0.0
    %v943 = vmax.f32 %v696, 0.0
    %v944 = vmax.f32 %v701, 0.0
    %v945 = vmax.f32 %v706, 0.0
    %v946 = vmax.f32 %v711, 0.0
    %v947 = vmax.f32 %v716, 0.0
    %v948 = vmax.f32 %v721, 0.0
    %v949 = vmax.f32 %v726, 0.0
    %v950 = vmax.f32 %v731, 0.0
    %v951 = vmax.f32 %v736, 0.0
    %v952 = vmax.f32 %v741, 0.0
    %v953 = vmax.f32 %v746, 0.0
    %v954 = vmax.f32 %v751, 0.0
    %v955 = vmax.f32 %v756, 0.0
    %v956 = vmax.f32 %v761, 0.0
    %v957 = vmax.f32 %v766, 0.0
    %v958 = vmax.f32 %v771, 0.0
    %v959 = vmax.f32 %v776, 0.0
    %v960 = vmax.f32 %v781, 0.0
    %v961 = vmax.f32 %v786, 0.0
    %v962 = vmax.f32 %v791, 0.0
    %v963 = vmax.f32 %v796, 0.0
    %v964 = vmax.f32 %v801, 0.0
    %v965 = vmax.f32 %v806, 0.0
    %v966 = vmax.f32 %v811, 0.0
    %v967 = vmax.f32 %v816, 0.0
    %v968 = vmax.f32 %v821, 0.0
    %v969 = vmax.f32 %v826, 0.0
    %v970 = vmax.f32 %v831, 0.0
    %v971 = vmax.f32 %v836, 0.0
    %v972 = vmax.f32 %v841, 0.0
    %v973 = vmax.f32 %v846, 0.0
    %v974 = vmax.f32 %v851, 0.0
    %v975 = vmax.f32 %v856, 0.0
    %v976 = vmax.f32 %v861, 0.0
    %v977 = vmax.f32 %v866, 0.0
    %v978 = vmax.f32 %v871, 0.0
    %v979 = vmax.f32 %v876, 0.0
    %v980 = vmax.f32 %v881, 0.0
    %v981 = vmax.f32 %v886, 0.0
    %v982 = vmax.f32 %v891, 0.0
    %v983 = vmax.f32 %v896, 0.0
    %v984 = vmax.f32 %v901, 0.0
    %v985 = vmax.f32 %v906, 0.0
    %vm1060 = vcmask 1046528
    %v1061 = vrot.slane %v909, 1
    %v1062 = vrot.slane %v910, 1
    %v1063 = vsel %vm1060, %v1061, %v1062
    %v1064 = vrot.slane %v911, 1
    %v1065 = vsel %vm1060, %v1062, %v1064
    %v1066 = vrot.slane %v912, 1
    %v1067 = vsel %vm1060, %v1064, %v1066
    %v1068 = vrot.slane %v913, 1
    %v1069 = vsel %vm1060, %v1066, %v1068
    %v1070 = vrot.slane %v914, 1
    %v1071 = vsel %vm1060, %v1068, %v1070
    %v1072 = vrot.slane %v915, 1
    %v1073 = vsel %vm1060, %v1070, %v1072
    %v1074 = vrot.slane %v916, 1
    %v1075 = vsel %vm1060, %v1072, %v1074
    %v1076 = vrot.slane %v917, 1
    %v1077 = vsel %vm1060, %v1074, %v1076
    %v1078 = vrot.slane %v918, 1
    %v1079 = vsel %vm1060, %v1076, %v1078
    %v1080 = vrot.slane %v919, 1
    %v1081 = vsel %vm1060, %v1078, %v1080
    %v1082 = vrot.slane %v920, 1
    %v1083 = vsel %vm1060, %v1080, %v1082
    %v1084 = vrot.slane %v921, 1
    %v1085 = vsel %vm1060, %v1082, %v1084
    %v1086 = vrot.slane %v922, 1
    %v1087 = vsel %vm1060, %v1084, %v1086
    %v1088 = vrot.slane %v923, 1
    %v1089 = vsel %vm1060, %v1086, %v1088
    %v1090 = vrot.slane %v924, 1
    %v1091 = vsel %vm1060, %v1088, %v1090
    %v1092 = vrot.slane %v925, 1
    %v1093 = vsel %vm1060, %v1090, %v1092
    %v1094 = vrot.slane %v926, 1
    %v1095 = vsel %vm1060, %v1092, %v1094
    %v1096 = vrot.slane %v927, 1
    %v1097 = vsel %vm1060, %v1094, %v1096
    %v1098 = vrot.slane %v928, 1
    %v1099 = vsel %vm1060, %v1096, %v1098
    %v1100 = vrot.slane %v929, 1
    %v1101 = vsel %vm1060, %v1098, %v1100
    %v1102 = vrot.slane %v930, 1
    %v1103 = vsel %vm1060, %v1100, %v1102
    %v1104 = vrot.slane %v931, 1
    %v1105 = vsel %vm1060, %v1102, %v1104
    %v1106 = vrot.slane %v932, 1
    %v1107 = vsel %vm1060, %v1104, %v1106
    %v1108 = vrot.slane %v933, 1
    %v1109 = vsel %vm1060, %v1106, %v1108
    %v1110 = vrot.slane %v934, 1
    %v1111 = vsel %vm1060, %v1108, %v1110
    %v1112 = vrot.slane %v935, 1
    %v1113 = vsel %vm1060, %v1110, %v1112
    %v1114 = vrot.slane %v936, 1
    %v1115 = vsel %vm1060, %v1112, %v1114
    %v1116 = vrot.slane %v937, 1
    %v1117 = vsel %vm1060, %v1114, %v1116
    %v1118 = vrot.slane %v938, 1
    %v1119 = vsel %vm1060, %v1116, %v1118
    %v1120 = vrot.slane %v939, 1
    %v1121 = vsel %vm1060, %v1118, %v1120
    %v1122 = vrot.slane %v940, 1
    %v1123 = vsel %vm1060, %v1120, %v1122
    %v1124 = vrot.slane %v941, 1
    %v1125 = vsel %vm1060, %v1122, %v1124
    %v1126 = vrot.slane %v942, 1
    %v1127 = vsel %vm1060, %v1124, %v1126
    %v1128 = vrot.slane %v943, 1
    %v1129 = vsel %vm1060, %v1126, %v1128
    %v1130 = vrot.slane %v944, 1
    %v1131 = vsel %vm1060, %v1128, %v1130
    %v1132 = vrot.slane %v945, 1
    %v1133 = vsel %vm1060, %v1130, %v1132
    %v1134 = vrot.slane %v946, 1
    %v1135 = vsel %vm1060, %v1132, %v1134
    %v1136 = vrot.slane %v947, 1
    %v1137 = vsel %vm1060, %v1134, %v1136
    %v1138 = vrot.slane %v948, 1
    %v1139 = vsel %vm1060, %v1136, %v1138
    %v1140 = vrot.slane %v949, 1
    %v1141 = vsel %vm1060, %v1138, %v1140
    %v1142 = vrot.slane %v950, 1
    %v1143 = vsel %vm1060, %v1140, %v1142
    %v1144 = vrot.slane %v951, 1
    %v1145 = vsel %vm1060, %v1142, %v1144
    %v1146 = vrot.slane %v952, 1
    %v1147 = vsel %vm1060, %v1144, %v1146
    %v1148 = vrot.slane %v953, 1
    %v1149 = vsel %vm1060, %v1146, %v1148
    %v1150 = vrot.slane %v954, 1
    %v1151 = vsel %vm1060, %v1148, %v1150
    %v1152 = vrot.slane %v955, 1
    %v1153 = vsel %vm1060, %v1150, %v1152
    %v1154 = vrot.slane %v956, 1
    %v1155 = vsel %vm1060, %v1152, %v1154
    %v1156 = vrot.slane %v957, 1
    %v1157 = vsel %vm1060, %v1154, %v1156
    %v1158 = vrot.slane %v958, 1
    %v1159 = vsel %vm1060, %v1156, %v1158
    %v1160 = vrot.slane %v959, 1
    %v1161 = vsel %vm1060, %v1158, %v1160
    %v1162 = vrot.slane %v960, 1
    %v1163 = vsel %vm1060, %v1160, %v1162
    %v1164 = vrot.slane %v961, 1
    %v1165 = vsel %vm1060, %v1162, %v1164
    %v1166 = vrot.slane %v962, 1
    %v1167 = vsel %vm1060, %v1164, %v1166
    %v1168 = vrot.slane %v963, 1
    %v1169 = vsel %vm1060, %v1166, %v1168
    %v1170 = vrot.slane %v964, 1
    %v1171 = vsel %vm1060, %v1168, %v1170
    %v1172 = vrot.slane %v965, 1
    %v1173 = vsel %vm1060, %v1170, %v1172
    %v1174 = vrot.slane %v966, 1
    %v1175 = vsel %vm1060, %v1172, %v1174
    %v1176 = vrot.slane %v967, 1
    %v1177 = vsel %vm1060, %v1174, %v1176
    %v1178 = vrot.slane %v968, 1
    %v1179 = vsel %vm1060, %v1176, %v1178
    %v1180 = vrot.slane %v969, 1
    %v1181 = vsel %vm1060, %v1178, %v1180
    %v1182 = vrot.slane %v970, 1
    %v1183 = vsel %vm1060, %v1180, %v1182
    %v1184 = vrot.slane %v971, 1
    %v1185 = vsel %vm1060, %v1182, %v1184
    %v1186 = vrot.slane %v972, 1
    %v1187 = vsel %vm1060, %v1184, %v1186
    %v1188 = vrot.slane %v973, 1
    %v1189 = vsel %vm1060, %v1186, %v1188
    %v1190 = vrot.slane %v974, 1
    %v1191 = vsel %vm1060, %v1188, %v1190
    %v1192 = vrot.slane %v975, 1
    %v1193 = vsel %vm1060, %v1190, %v1192
    %v1194 = vrot.slane %v976, 1
    %v1195 = vsel %vm1060, %v1192, %v1194
    %v1196 = vrot.slane %v977, 1
    %v1197 = vsel %vm1060, %v1194, %v1196
    %v1198 = vrot.slane %v978, 1
    %v1199 = vsel %vm1060, %v1196, %v1198
    %v1200 = vrot.slane %v979, 1
    %v1201 = vsel %vm1060, %v1198, %v1200
    %v1202 = vrot.slane %v980, 1
    %v1203 = vsel %vm1060, %v1200, %v1202
    %v1204 = vrot.slane %v981, 1
    %v1205 = vsel %vm1060, %v1202, %v1204
    %v1206 = vrot.slane %v982, 1
    %v1207 = vsel %vm1060, %v1204, %v1206
    %v1282 = vmax.f32 %v909, %v1063
    %v1283 = vmax.f32 %v910, %v1065
    %v1284 = vmax.f32 %v911, %v1067
    %v1285 = vmax.f32 %v912, %v1069
    %v1286 = vmax.f32 %v913, %v1071
    %v1287 = vmax.f32 %v914, %v1073
    %v1288 = vmax.f32 %v915, %v1075
    %v1289 = vmax.f32 %v916, %v1077
    %v1290 = vmax.f32 %v917, %v1079
    %v1291 = vmax.f32 %v918, %v1081
    %v1292 = vmax.f32 %v919, %v1083
    %v1293 = vmax.f32 %v920, %v1085
    %v1294 = vmax.f32 %v921, %v1087
    %v1295 = vmax.f32 %v922, %v1089
    %v1296 = vmax.f32 %v923, %v1091
    %v1297 = vmax.f32 %v924, %v1093
    %v1298 = vmax.f32 %v925, %v1095
    %v1299 = vmax.f32 %v926, %v1097
    %v1300 = vmax.f32 %v927, %v1099
    %v1301 = vmax.f32 %v928, %v1101
    %v1302 = vmax.f32 %v929, %v1103
    %v1303 = vmax.f32 %v930, %v1105
    %v1304 = vmax.f32 %v931, %v1107
    %v1305 = vmax.f32 %v932, %v1109
    %v1306 = vmax.f32 %v933, %v1111
    %v1307 = vmax.f32 %v934, %v1113
    %v1308 = vmax.f32 %v935, %v1115
    %v1309 = vmax.f32 %v936, %v1117
    %v1310 = vmax.f32 %v937, %v1119
    %v1311 = vmax.f32 %v938, %v1121
    %v1312 = vmax.f32 %v939, %v1123
    %v1313 = vmax.f32 %v940, %v1125
    %v1314 = vmax.f32 %v941, %v1127
    %v1315 = vmax.f32 %v942, %v1129
    %v1316 = vmax.f32 %v943, %v1131
    %v1317 = vmax.f32 %v944, %v1133
    %v1318 = vmax.f32 %v945, %v1135
    %v1319 = vmax.f32 %v946, %v1137
    %v1320 = vmax.f32 %v947, %v1139
    %v1321 = vmax.f32 %v948, %v1141
    %v1322 = vmax.f32 %v949, %v1143
    %v1323 = vmax.f32 %v950, %v1145
    %v1324 = vmax.f32 %v951, %v1147
    %v1325 = vmax.f32 %v952, %v1149
    %v1326 = vmax.f32 %v953, %v1151
    %v1327 = vmax.f32 %v954, %v1153
    %v1328 = vmax.f32 %v955, %v1155
    %v1329 = vmax.f32 %v956, %v1157
    %v1330 = vmax.f32 %v957, %v1159
    %v1331 = vmax.f32 %v958, %v1161
    %v1332 = vmax.f32 %v959, %v1163
    %v1333 = vmax.f32 %v960, %v1165
    %v1334 = vmax.f32 %v961, %v1167
    %v1335 = vmax.f32 %v962, %v1169
    %v1336 = vmax.f32 %v963, %v1171
    %v1337 = vmax.f32 %v964, %v1173
    %v1338 = vmax.f32 %v965, %v1175
    %v1339 = vmax.f32 %v966, %v1177
    %v1340 = vmax.f32 %v967, %v1179
    %v1341 = vmax.f32 %v968, %v1181
    %v1342 = vmax.f32 %v969, %v1183
    %v1343 = vmax.f32 %v970, %v1185
    %v1344 = vmax.f32 %v971, %v1187
    %v1345 = vmax.f32 %v972, %v1189
    %v1346 = vmax.f32 %v973, %v1191
    %v1347 = vmax.f32 %v974, %v1193
    %v1348 = vmax.f32 %v975, %v1195
    %v1349 = vmax.f32 %v976, %v1197
    %v1350 = vmax.f32 %v977, %v1199
    %v1351 = vmax.f32 %v978, %v1201
    %v1352 = vmax.f32 %v979, %v1203
    %v1353 = vmax.f32 %v980, %v1205
    %v1354 = vmax.f32 %v981, %v1207
    %v1355 = vmax.f32 %v982, %v1206
    %v1359 = vrot.slane %v983, 1
    %v1360 = vsel %vm1060, %v1206, %v1359
    %v1361 = vrot.slane %v984, 1
    %v1362 = vsel %vm1060, %v1359, %v1361
    %v1363 = vrot.slane %v985, 1
    %v1364 = vsel %vm1060, %v1361, %v1363
    %v1369 = vmax.f32 %v982, %v1360
    %v1370 = vmax.f32 %v983, %v1362
    %v1371 = vmax.f32 %v984, %v1364
    %v1372 = vmax.f32 %v985, %v1363
    %vm1448 = vcmask 1045504
    %v1449 = vrot.slane %v1284, 2
    %v1450 = vrot.slane %v1285, 2
    %v1451 = vsel %vm1448, %v1449, %v1450
    %v1452 = vrot.slane %v1286, 2
    %v1453 = vsel %vm1448, %v1450, %v1452
    %v1454 = vrot.slane %v1287, 2
    %v1455 = vsel %vm1448, %v1452, %v1454
    %v1456 = vrot.slane %v1288, 2
    %v1457 = vsel %vm1448, %v1454, %v1456
    %v1458 = vrot.slane %v1289, 2
    %v1459 = vsel %vm1448, %v1456, %v1458
    %v1460 = vrot.slane %v1290, 2
    %v1461 = vsel %vm1448, %v1458, %v1460
    %v1462 = vrot.slane %v1291, 2
    %v1463 = vsel %vm1448, %v1460, %v1462
    %v1464 = vrot.slane %v1292, 2
    %v1465 = vsel %vm1448, %v1462, %v1464
    %v1466 = vrot.slane %v1293, 2
    %v1467 = vsel %vm1448, %v1464, %v1466
    %v1468 = vrot.slane %v1294, 2
    %v1469 = vsel %vm1448, %v1466, %v1468
    %v1470 = vrot.slane %v1295, 2
    %v1471 = vsel %vm1448, %v1468, %v1470
    %v1472 = vrot.slane %v1296, 2
    %v1473 = vsel %vm1448, %v1470, %v1472
    %v1474 = vrot.slane %v1297, 2
    %v1475 = vsel %vm1448, %v1472, %v1474
    %v1476 = vrot.slane %v1298, 2
    %v1477 = vsel %vm1448, %v1474, %v1476
    %v1478 = vrot.slane %v1299, 2
    %v1479 = vsel %vm1448, %v1476, %v1478
    %v1480 = vrot.slane %v1300, 2
    %v1481 = vsel %vm1448, %v1478, %v1480
    %v1482 = vrot.slane %v1301, 2
    %v1483 = vsel %vm1448, %v1480, %v1482
    %v1484 = vrot.slane %v1302, 2
    %v1485 = vsel %vm1448, %v1482, %v1484
    %v1486 = vrot.slane %v1303, 2
    %v1487 = vsel %vm1448, %v1484, %v1486
    %v1488 = vrot.slane %v1304, 2
    %v1489 = vsel %vm1448, %v1486, %v1488
    %v1490 = vrot.slane %v1305, 2
    %v1491 = vsel %vm1448, %v1488, %v1490
    %v1492 = vrot.slane %v1306, 2
    %v1493 = vsel %vm1448, %v1490, %v1492
    %v1494 = vrot.slane %v1307, 2
    %v1495 = vsel %vm1448, %v1492, %v1494
    %v1496 = vrot.slane %v1308, 2
    %v1497 = vsel %vm1448, %v1494, %v1496
    %v1498 = vrot.slane %v1309, 2
    %v1499 = vsel %vm1448, %v1496, %v1498
    %v1500 = vrot.slane %v1310, 2
    %v1501 = vsel %vm1448, %v1498, %v1500
    %v1502 = vrot.slane %v1311, 2
    %v1503 = vsel %vm1448, %v1500, %v1502
    %v1504 = vrot.slane %v1312, 2
    %v1505 = vsel %vm1448, %v1502, %v1504
    %v1506 = vrot.slane %v1313, 2
    %v1507 = vsel %vm1448, %v1504, %v1506
    %v1508 = vrot.slane %v1314, 2
    %v1509 = vsel %vm1448, %v1506, %v1508
    %v1510 = vrot.slane %v1315, 2
    %v1511 = vsel %vm1448, %v1508, %v1510
    %v1512 = vrot.slane %v1316, 2
    %v1513 = vsel %vm1448, %v1510, %v1512
    %v1514 = vrot.slane %v1317, 2
    %v1515 = vsel %vm1448, %v1512, %v1514
    %v1516 = vrot.slane %v1318, 2
    %v1517 = vsel %vm1448, %v1514, %v1516
    %v1518 = vrot.slane %v1319, 2
    %v1519 = vsel %vm1448, %v1516, %v1518
    %v1520 = vrot.slane %v1320, 2
    %v1521 = vsel %vm1448, %v1518, %v1520
    %v1522 = vrot.slane %v1321, 2
    %v1523 = vsel %vm1448, %v1520, %v1522
    %v1524 = vrot.slane %v1322, 2
    %v1525 = vsel %vm1448, %v1522, %v1524
    %v1526 = vrot.slane %v1323, 2
    %v1527 = vsel %vm1448, %v1524, %v1526
    %v1528 = vrot.slane %v1324, 2
    %v1529 = vsel %vm1448, %v1526, %v1528
    %v1530 = vrot.slane %v1325, 2
    %v1531 = vsel %vm1448, %v1528, %v1530
    %v1532 = vrot.slane %v1326, 2
    %v1533 = vsel %vm1448, %v1530, %v1532
    %v1534 = vrot.slane %v1327, 2
    %v1535 = vsel %vm1448, %v1532, %v1534
    %v1536 = vrot.slane %v1328, 2
    %v1537 = vsel %vm1448, %v1534, %v1536
    %v1538 = vrot.slane %v1329, 2
    %v1539 = vsel %vm1448, %v1536, %v1538
    %v1540 = vrot.slane %v1330, 2
    %v1541 = vsel %vm1448, %v1538, %v1540
    %v1542 = vrot.slane %v1331, 2
    %v1543 = vsel %vm1448, %v1540, %v1542
    %v1544 = vrot.slane %v1332, 2
    %v1545 = vsel %vm1448, %v1542, %v1544
    %v1546 = vrot.slane %v1333, 2
    %v1547 = vsel %vm1448, %v1544, %v1546
    %v1548 = vrot.slane %v1334, 2
    %v1549 = vsel %vm1448, %v1546, %v1548
    %v1550 = vrot.slane %v1335, 2
    %v1551 = vsel %vm1448, %v1548, %v1550
    %v1552 = vrot.slane %v1336, 2
    %v1553 = vsel %vm1448, %v1550, %v1552
    %v1554 = vrot.slane %v1337, 2
    %v1555 = vsel %vm1448, %v1552, %v1554
    %v1556 = vrot.slane %v1338, 2
    %v1557 = vsel %vm1448, %v1554, %v1556
    %v1558 = vrot.slane %v1339, 2
    %v1559 = vsel %vm1448, %v1556, %v1558
    %v1560 = vrot.slane %v1340, 2
    %v1561 = vsel %vm1448, %v1558, %v1560
    %v1562 = vrot.slane %v1341, 2
    %v1563 = vsel %vm1448, %v1560, %v1562
    %v1564 = vrot.slane %v1342, 2
    %v1565 = vsel %vm1448, %v1562, %v1564
    %v1566 = vrot.slane %v1343, 2
    %v1567 = vsel %vm1448, %v1564, %v1566
    %v1568 = vrot.slane %v1344, 2
    %v1569 = vsel %vm1448, %v1566, %v1568
    %v1570 = vrot.slane %v1345, 2
    %v1571 = vsel %vm1448, %v1568, %v1570
    %v1572 = vrot.slane %v1346, 2
    %v1573 = vsel %vm1448, %v1570, %v1572
    %v1574 = vrot.slane %v1347, 2
    %v1575 = vsel %vm1448, %v1572, %v1574
    %v1576 = vrot.slane %v1348, 2
    %v1577 = vsel %vm1448, %v1574, %v1576
    %v1578 = vrot.slane %v1349, 2
    %v1579 = vsel %vm1448, %v1576, %v1578
    %v1580 = vrot.slane %v1350, 2
    %v1581 = vsel %vm1448, %v1578, %v1580
    %v1582 = vrot.slane %v1351, 2
    %v1583 = vsel %vm1448, %v1580, %v1582
    %v1584 = vrot.slane %v1352, 2
    %v1585 = vsel %vm1448, %v1582, %v1584
    %v1586 = vrot.slane %v1353, 2
    %v1587 = vsel %vm1448, %v1584, %v1586
    %v1588 = vrot.slane %v1354, 2
    %v1589 = vsel %vm1448, %v1586, %v1588
    %v1590 = vrot.slane %v1369, 2
    %v1591 = vsel %vm1448, %v1588, %v1590
    %v1592 = vrot.slane %v1370, 2
    %v1593 = vsel %vm1448, %v1590, %v1592
    %v1594 = vrot.slane %v1371, 2
    %v1595 = vsel %vm1448, %v1592, %v1594
    %v1596 = vrot.slane %v1372, 2
    %v1597 = vsel %vm1448, %v1594, %v1596
    %v1672 = vmax.f32 %v1282, %v1451
    %v1673 = vmax.f32 %v1283, %v1453
    %v1674 = vmax.f32 %v1284, %v1455
    %v1675 = vmax.f32 %v1285, %v1457
    %v1676 = vmax.f32 %v1286, %v1459
    %v1677 = vmax.f32 %v1287, %v1461
    %v1678 = vmax.f32 %v1288, %v1463
    %v1679 = vmax.f32 %v1289, %v1465
    %v1680 = vmax.f32 %v1290, %v1467
    %v1681 = vmax.f32 %v1291, %v1469
    %v1682 = vmax.f32 %v1292, %v1471
    %v1683 = vmax.f32 %v1293, %v1473
    %v1684 = vmax.f32 %v1294, %v1475
    %v1685 = vmax.f32 %v1295, %v1477
    %v1686 = vmax.f32 %v1296, %v1479
    %v1687 = vmax.f32 %v1297, %v1481
    %v1688 = vmax.f32 %v1298, %v1483
    %v1689 = vmax.f32 %v1299, %v1485
    %v1690 = vmax.f32 %v1300, %v1487
    %v1691 = vmax.f32 %v1301, %v1489
    %v1692 = vmax.f32 %v1302, %v1491
    %v1693 = vmax.f32 %v1303, %v1493
    %v1694 = vmax.f32 %v1304, %v1495
    %v1695 = vmax.f32 %v1305, %v1497
    %v1696 = vmax.f32 %v1306, %v1499
    %v1697 = vmax.f32 %v1307, %v1501
    %v1698 = vmax.f32 %v1308, %v1503
    %v1699 = vmax.f32 %v1309, %v1505
    %v1700 = vmax.f32 %v1310, %v1507
    %v1701 = vmax.f32 %v1311, %v1509
    %v1702 = vmax.f32 %v1312, %v1511
    %v1703 = vmax.f32 %v1313, %v1513
    %v1704 = vmax.f32 %v1314, %v1515
    %v1705 = vmax.f32 %v1315, %v1517
    %v1706 = vmax.f32 %v1316, %v1519
    %v1707 = vmax.f32 %v1317, %v1521
    %v1708 = vmax.f32 %v1318, %v1523
    %v1709 = vmax.f32 %v1319, %v1525
    %v1710 = vmax.f32 %v1320, %v1527
    %v1711 = vmax.f32 %v1321, %v1529
    %v1712 = vmax.f32 %v1322, %v1531
    %v1713 = vmax.f32 %v1323, %v1533
    %v1714 = vmax.f32 %v1324, %v1535
    %v1715 = vmax.f32 %v1325, %v1537
    %v1716 = vmax.f32 %v1326, %v1539
    %v1717 = vmax.f32 %v1327, %v1541
    %v1718 = vmax.f32 %v1328, %v1543
    %v1719 = vmax.f32 %v1329, %v1545
    %v1720 = vmax.f32 %v1330, %v1547
    %v1721 = vmax.f32 %v1331, %v1549
    %v1722 = vmax.f32 %v1332, %v1551
    %v1723 = vmax.f32 %v1333, %v1553
    %v1724 = vmax.f32 %v1334, %v1555
    %v1725 = vmax.f32 %v1335, %v1557
    %v1726 = vmax.f32 %v1336, %v1559
    %v1727 = vmax.f32 %v1337, %v1561
    %v1728 = vmax.f32 %v1338, %v1563
    %v1729 = vmax.f32 %v1339, %v1565
    %v1730 = vmax.f32 %v1340, %v1567
    %v1731 = vmax.f32 %v1341, %v1569
    %v1732 = vmax.f32 %v1342, %v1571
    %v1733 = vmax.f32 %v1343, %v1573
    %v1734 = vmax.f32 %v1344, %v1575
    %v1735 = vmax.f32 %v1345, %v1577
    %v1736 = vmax.f32 %v1346, %v1579
    %v1737 = vmax.f32 %v1347, %v1581
    %v1738 = vmax.f32 %v1348, %v1583
    %v1739 = vmax.f32 %v1349, %v1585
    %v1740 = vmax.f32 %v1350, %v1587
    %v1741 = vmax.f32 %v1351, %v1589
    %v1742 = vmax.f32 %v1352, %v1591
    %v1743 = vmax.f32 %v1353, %v1593
    %v1744 = vmax.f32 %v1354, %v1595
    %v1745 = vmax.f32 %v1355, %v1597
    %v1746 = vld [vmem:[#allocation4] sm:$0xff]
    %v1747 = vld [vmem:[#allocation4 + $0x8] sm:$0xff]
    %v1748 = vld [vmem:[#allocation4 + $0x10] sm:$0xf]
    %v1749 = vld [vmem:[#allocation4 + $0x14] sm:$0xff]
    %v1750 = vld [vmem:[#allocation4 + $0x1c] sm:$0xff]
    %v1751 = vld [vmem:[#allocation4 + $0x24] sm:$0xf]
    %v1752 = vld [vmem:[#allocation4 + $0x28] sm:$0xff]
    %v1753 = vld [vmem:[#allocation4 + $0x30] sm:$0xff]
    %v1754 = vld [vmem:[#allocation4 + $0x38] sm:$0xf]
    %v1755 = vld [vmem:[#allocation4 + $0x3c] sm:$0xff]
    %v1756 = vld [vmem:[#allocation4 + $0x44] sm:$0xff]
    %v1757 = vld [vmem:[#allocation4 + $0x4c] sm:$0xf]
    %v1758 = vld [vmem:[#allocation4 + $0x50] sm:$0xff]
    %v1759 = vld [vmem:[#allocation4 + $0x58] sm:$0xff]
    %v1760 = vld [vmem:[#allocation4 + $0x60] sm:$0xf]
    %v1761 = vld [vmem:[#allocation4 + $0x64] sm:$0xff]
    %v1762 = vld [vmem:[#allocation4 + $0x6c] sm:$0xff]
    %v1763 = vld [vmem:[#allocation4 + $0x74] sm:$0xf]
    %v1764 = vld [vmem:[#allocation4 + $0x78] sm:$0xff]
    %v1765 = vld [vmem:[#allocation4 + $0x80] sm:$0xff]
    %v1766 = vld [vmem:[#allocation4 + $0x88] sm:$0xf]
    %v1767 = vld [vmem:[#allocation4 + $0x8c] sm:$0xff]
    %v1768 = vld [vmem:[#allocation4 + $0x94] sm:$0xff]
    %v1769 = vld [vmem:[#allocation4 + $0x9c] sm:$0xf]
    %v1770 = vld [vmem:[#allocation4 + $0xa0] sm:$0xff]
    %v1771 = vld [vmem:[#allocation4 + $0xa8] sm:$0xff]
    %v1772 = vld [vmem:[#allocation4 + $0xb0] sm:$0xf]
    %v1773 = vld [vmem:[#allocation4 + $0xb4] sm:$0xff]
    %v1774 = vld [vmem:[#allocation4 + $0xbc] sm:$0xff]
    %v1775 = vld [vmem:[#allocation4 + $0xc4] sm:$0xf]
    %v1776 = vld [vmem:[#allocation4 + $0xc8] sm:$0xff]
    %v1777 = vld [vmem:[#allocation4 + $0xd0] sm:$0xff]
    %v1778 = vld [vmem:[#allocation4 + $0xd8] sm:$0xf]
    %v1779 = vld [vmem:[#allocation4 + $0xdc] sm:$0xff]
    %v1780 = vld [vmem:[#allocation4 + $0xe4] sm:$0xff]
    %v1781 = vld [vmem:[#allocation4 + $0xec] sm:$0xf]
    %v1782 = vld [vmem:[#allocation4 + $0xf0] sm:$0xff]
    %v1783 = vld [vmem:[#allocation4 + $0xf8] sm:$0xff]
    %v1784 = vld [vmem:[#allocation4 + $0x100] sm:$0xf]
    %v1785 = vld [vmem:[#allocation4 + $0x104] sm:$0xff]
    %v1786 = vld [vmem:[#allocation4 + $0x10c] sm:$0xff]
    %v1787 = vld [vmem:[#allocation4 + $0x114] sm:$0xf]
    %v1788 = vld [vmem:[#allocation4 + $0x118] sm:$0xff]
    %v1789 = vld [vmem:[#allocation4 + $0x120] sm:$0xff]
    %v1790 = vld [vmem:[#allocation4 + $0x128] sm:$0xf]
    %v1791 = vld [vmem:[#allocation4 + $0x12c] sm:$0xff]
    %v1792 = vld [vmem:[#allocation4 + $0x134] sm:$0xff]
    %v1793 = vld [vmem:[#allocation4 + $0x13c] sm:$0xf]
    %v1794 = vld [vmem:[#allocation4 + $0x140] sm:$0xff]
    %v1795 = vld [vmem:[#allocation4 + $0x148] sm:$0xff]
    %v1796 = vld [vmem:[#allocation4 + $0x150] sm:$0xf]
    %v1797 = vld [vmem:[#allocation4 + $0x154] sm:$0xff]
    %v1798 = vld [vmem:[#allocation4 + $0x15c] sm:$0xff]
    %v1799 = vld [vmem:[#allocation4 + $0x164] sm:$0xf]
    %v1800 = vld [vmem:[#allocation4 + $0x168] sm:$0xff]
    %v1801 = vld [vmem:[#allocation4 + $0x170] sm:$0xff]
    %v1802 = vld [vmem:[#allocation4 + $0x178] sm:$0xf]
    %v1803 = vld [vmem:[#allocation4 + $0x17c] sm:$0xff]
    %v1804 = vld [vmem:[#allocation4 + $0x184] sm:$0xff]
    %v1805 = vld [vmem:[#allocation4 + $0x18c] sm:$0xf]
    %v1806 = vld [vmem:[#allocation4 + $0x190] sm:$0xff]
    %v1807 = vld [vmem:[#allocation4 + $0x198] sm:$0xff]
    %v1808 = vld [vmem:[#allocation4 + $0x1a0] sm:$0xf]
    %v1809 = vld [vmem:[#allocation4 + $0x1a4] sm:$0xff]
    %v1810 = vld [vmem:[#allocation4 + $0x1ac] sm:$0xff]
    %v1811 = vld [vmem:[#allocation4 + $0x1b4] sm:$0xf]
    %v1812 = vld [vmem:[#allocation4 + $0x1b8] sm:$0xff]
    %v1813 = vld [vmem:[#allocation4 + $0x1c0] sm:$0xff]
    %v1814 = vld [vmem:[#allocation4 + $0x1c8] sm:$0xf]
    %v1815 = vld [vmem:[#allocation4 + $0x1cc] sm:$0xff]
    %v1816 = vld [vmem:[#allocation4 + $0x1d4] sm:$0xff]
    %v1817 = vld [vmem:[#allocation4 + $0x1dc] sm:$0xf]
    %v1818 = vld [vmem:[#allocation4 + $0x1e0] sm:$0xff]
    %v1819 = vld [vmem:[#allocation4 + $0x1e8] sm:$0xff]
    %v1820 = vld [vmem:[#allocation4 + $0x1f0] sm:$0xf]
    %v1821 = vpack.c.bf16 %v1673, %v1672
    %v1822 = vpack.c.bf16 %v1675, %v1674
    %v1823 = vpack.c.bf16 %v1677, %v1676
    %v1824 = vpack.c.bf16 %v1679, %v1678
    %v1825 = vpack.c.bf16 %v1681, %v1680
    %v1826 = vpack.c.bf16 %v1683, %v1682
    %v1827 = vpack.c.bf16 %v1685, %v1684
    %v1828 = vpack.c.bf16 %v1687, %v1686
    %v1829 = vpack.c.bf16 %v1689, %v1688
    %v1830 = vpack.c.bf16 %v1691, %v1690
    %v1831 = vpack.c.bf16 %v1693, %v1692
    %v1832 = vpack.c.bf16 %v1695, %v1694
    %v1833 = vpack.c.bf16 %v1697, %v1696
    %v1834 = vpack.c.bf16 %v1699, %v1698
    %v1835 = vpack.c.bf16 %v1701, %v1700
    %v1836 = vpack.c.bf16 %v1703, %v1702
    %v1837 = vpack.c.bf16 %v1705, %v1704
    %v1838 = vpack.c.bf16 %v1707, %v1706
    %v1839 = vpack.c.bf16 %v1709, %v1708
    %v1840 = vpack.c.bf16 %v1711, %v1710
    %v1841 = vpack.c.bf16 %v1713, %v1712
    %v1842 = vpack.c.bf16 %v1715, %v1714
    %v1843 = vpack.c.bf16 %v1717, %v1716
    %v1844 = vpack.c.bf16 %v1719, %v1718
    %v1845 = vpack.c.bf16 %v1721, %v1720
    %v1846 = vpack.c.bf16 %v1723, %v1722
    %v1847 = vpack.c.bf16 %v1725, %v1724
    %v1848 = vpack.c.bf16 %v1727, %v1726
    %v1849 = vpack.c.bf16 %v1729, %v1728
    %v1850 = vpack.c.bf16 %v1731, %v1730
    %v1851 = vpack.c.bf16 %v1733, %v1732
    %v1852 = vpack.c.bf16 %v1735, %v1734
    %v1853 = vpack.c.bf16 %v1737, %v1736
    %v1854 = vpack.c.bf16 %v1739, %v1738
    %v1855 = vpack.c.bf16 %v1741, %v1740
    %v1856 = vpack.c.bf16 %v1743, %v1742
    %v1857 = vpack.c.bf16 %v1745, %v1744
    %v1933 = vunpack.c.l.b16 %v1746
    %v1934 = vunpack.c.h.b16 %v1746
    %v1935 = vunpack.c.l.b16 %v1747
    %v1936 = vunpack.c.h.b16 %v1747
    %v1937 = vunpack.c.l.b16 %v1748
    %v1938 = vunpack.c.l.b16 %v1749
    %v1939 = vunpack.c.h.b16 %v1749
    %v1940 = vunpack.c.l.b16 %v1750
    %v1941 = vunpack.c.h.b16 %v1750
    %v1942 = vunpack.c.l.b16 %v1751
    %v1943 = vunpack.c.l.b16 %v1752
    %v1944 = vunpack.c.h.b16 %v1752
    %v1945 = vunpack.c.l.b16 %v1753
    %v1946 = vunpack.c.h.b16 %v1753
    %v1947 = vunpack.c.l.b16 %v1754
    %v1948 = vunpack.c.l.b16 %v1755
    %v1949 = vunpack.c.h.b16 %v1755
    %v1950 = vunpack.c.l.b16 %v1756
    %v1951 = vunpack.c.h.b16 %v1756
    %v1952 = vunpack.c.l.b16 %v1757
    %v1953 = vunpack.c.l.b16 %v1758
    %v1954 = vunpack.c.h.b16 %v1758
    %v1955 = vunpack.c.l.b16 %v1759
    %v1956 = vunpack.c.h.b16 %v1759
    %v1957 = vunpack.c.l.b16 %v1760
    %v1958 = vunpack.c.l.b16 %v1761
    %v1959 = vunpack.c.h.b16 %v1761
    %v1960 = vunpack.c.l.b16 %v1762
    %v1961 = vunpack.c.h.b16 %v1762
    %v1962 = vunpack.c.l.b16 %v1763
    %v1963 = vunpack.c.l.b16 %v1764
    %v1964 = vunpack.c.h.b16 %v1764
    %v1965 = vunpack.c.l.b16 %v1765
    %v1966 = vunpack.c.h.b16 %v1765
    %v1967 = vunpack.c.l.b16 %v1766
    %v1968 = vunpack.c.l.b16 %v1767
    %v1969 = vunpack.c.h.b16 %v1767
    %v1970 = vunpack.c.l.b16 %v1768
    %v1971 = vunpack.c.h.b16 %v1768
    %v1972 = vunpack.c.l.b16 %v1769
    %v1973 = vunpack.c.l.b16 %v1770
    %v1974 = vunpack.c.h.b16 %v1770
    %v1975 = vunpack.c.l.b16 %v1771
    %v1976 = vunpack.c.h.b16 %v1771
    %v1977 = vunpack.c.l.b16 %v1772
    %v1978 = vunpack.c.l.b16 %v1773
    %v1979 = vunpack.c.h.b16 %v1773
    %v1980 = vunpack.c.l.b16 %v1774
    %v1981 = vunpack.c.h.b16 %v1774
    %v1982 = vunpack.c.l.b16 %v1775
    %v1983 = vunpack.c.l.b16 %v1776
    %v1984 = vunpack.c.h.b16 %v1776
    %v1985 = vunpack.c.l.b16 %v1777
    %v1986 = vunpack.c.h.b16 %v1777
    %v1987 = vunpack.c.l.b16 %v1778
    %v1988 = vunpack.c.l.b16 %v1779
    %v1989 = vunpack.c.h.b16 %v1779
    %v1990 = vunpack.c.l.b16 %v1780
    %v1991 = vunpack.c.h.b16 %v1780
    %v1992 = vunpack.c.l.b16 %v1781
    %v1993 = vunpack.c.l.b16 %v1782
    %v1994 = vunpack.c.h.b16 %v1782
    %v1995 = vunpack.c.l.b16 %v1783
    %v1996 = vunpack.c.h.b16 %v1783
    %v1997 = vunpack.c.l.b16 %v1784
    %v1998 = vunpack.c.l.b16 %v1785
    %v1999 = vunpack.c.h.b16 %v1785
    %v2000 = vunpack.c.l.b16 %v1786
    %v2001 = vunpack.c.h.b16 %v1786
    %v2002 = vunpack.c.l.b16 %v1787
    %v2003 = vunpack.c.l.b16 %v1788
    %v2004 = vunpack.c.h.b16 %v1788
    %v2005 = vunpack.c.l.b16 %v1789
    %v2006 = vunpack.c.h.b16 %v1789
    %v2007 = vunpack.c.l.b16 %v1790
    %v2008 = vunpack.c.l.b16 %v1791
    %v2009 = vunpack.c.h.b16 %v1791
    %v2010 = vunpack.c.l.b16 %v1792
    %v2011 = vunpack.c.h.b16 %v1792
    %v2012 = vunpack.c.l.b16 %v1793
    %v2013 = vunpack.c.l.b16 %v1794
    %v2014 = vunpack.c.h.b16 %v1794
    %v2015 = vunpack.c.l.b16 %v1795
    %v2016 = vunpack.c.h.b16 %v1795
    %v2017 = vunpack.c.l.b16 %v1796
    %v2018 = vunpack.c.l.b16 %v1797
    %v2019 = vunpack.c.h.b16 %v1797
    %v2020 = vunpack.c.l.b16 %v1798
    %v2021 = vunpack.c.h.b16 %v1798
    %v2022 = vunpack.c.l.b16 %v1799
    %v2023 = vunpack.c.l.b16 %v1800
    %v2024 = vunpack.c.h.b16 %v1800
    %v2025 = vunpack.c.l.b16 %v1801
    %v2026 = vunpack.c.h.b16 %v1801
    %v2027 = vunpack.c.l.b16 %v1802
    %v2028 = vunpack.c.l.b16 %v1803
    %v2029 = vunpack.c.h.b16 %v1803
    %v2030 = vunpack.c.l.b16 %v1804
    %v2031 = vunpack.c.h.b16 %v1804
    %v2032 = vunpack.c.l.b16 %v1805
    %v2033 = vunpack.c.l.b16 %v1806
    %v2034 = vunpack.c.h.b16 %v1806
    %v2035 = vunpack.c.l.b16 %v1807
    %v2036 = vunpack.c.h.b16 %v1807
    %v2037 = vunpack.c.l.b16 %v1808
    %v2038 = vunpack.c.l.b16 %v1809
    %v2039 = vunpack.c.h.b16 %v1809
    %v2040 = vunpack.c.l.b16 %v1810
    %v2041 = vunpack.c.h.b16 %v1810
    %v2042 = vunpack.c.l.b16 %v1811
    %v2043 = vunpack.c.l.b16 %v1812
    %v2044 = vunpack.c.h.b16 %v1812
    %v2045 = vunpack.c.l.b16 %v1813
    %v2046 = vunpack.c.h.b16 %v1813
    %v2047 = vunpack.c.l.b16 %v1814
    %v2048 = vunpack.c.l.b16 %v1815
    %v2049 = vunpack.c.h.b16 %v1815
    %v2050 = vunpack.c.l.b16 %v1816
    %v2051 = vunpack.c.h.b16 %v1816
    %v2052 = vunpack.c.l.b16 %v1817
    %v2053 = vunpack.c.l.b16 %v1818
    %v2054 = vunpack.c.h.b16 %v1818
    %v2055 = vunpack.c.l.b16 %v1819
    %v2056 = vunpack.c.h.b16 %v1819
    %v2057 = vunpack.c.l.b16 %v1820
    %v2058 = vpack.c.b16 %v1938, %v1933
    %v2059 = vpack.c.b16 %v1939, %v1934
    %v2060 = vpack.c.b16 %v1940, %v1935
    %v2061 = vpack.c.b16 %v1941, %v1936
    %v2062 = vpack.c.b16 %v1942, %v1937
    %v2063 = vpack.c.b16 %v1948, %v1943
    %v2064 = vpack.c.b16 %v1949, %v1944
    %v2065 = vpack.c.b16 %v1950, %v1945
    %v2066 = vpack.c.b16 %v1951, %v1946
    %v2067 = vpack.c.b16 %v1952, %v1947
    %v2068 = vpack.c.b16 %v1958, %v1953
    %v2069 = vpack.c.b16 %v1959, %v1954
    %v2070 = vpack.c.b16 %v1960, %v1955
    %v2071 = vpack.c.b16 %v1961, %v1956
    %v2072 = vpack.c.b16 %v1962, %v1957
    %v2073 = vpack.c.b16 %v1968, %v1963
    %v2074 = vpack.c.b16 %v1969, %v1964
    %v2075 = vpack.c.b16 %v1970, %v1965
    %v2076 = vpack.c.b16 %v1971, %v1966
    %v2077 = vpack.c.b16 %v1972, %v1967
    %v2078 = vpack.c.b16 %v1978, %v1973
    %v2079 = vpack.c.b16 %v1979, %v1974
    %v2080 = vpack.c.b16 %v1980, %v1975
    %v2081 = vpack.c.b16 %v1981, %v1976
    %v2082 = vpack.c.b16 %v1982, %v1977
    %v2083 = vpack.c.b16 %v1988, %v1983
    %v2084 = vpack.c.b16 %v1989, %v1984
    %v2085 = vpack.c.b16 %v1990, %v1985
    %v2086 = vpack.c.b16 %v1991, %v1986
    %v2087 = vpack.c.b16 %v1992, %v1987
    %v2088 = vpack.c.b16 %v1998, %v1993
    %v2089 = vpack.c.b16 %v1999, %v1994
    %v2090 = vpack.c.b16 %v2000, %v1995
    %v2091 = vpack.c.b16 %v2001, %v1996
    %v2092 = vpack.c.b16 %v2002, %v1997
    %v2093 = vpack.c.b16 %v2008, %v2003
    %v2094 = vpack.c.b16 %v2009, %v2004
    %v2095 = vpack.c.b16 %v2010, %v2005
    %v2096 = vpack.c.b16 %v2011, %v2006
    %v2097 = vpack.c.b16 %v2012, %v2007
    %v2098 = vpack.c.b16 %v2018, %v2013
    %v2099 = vpack.c.b16 %v2019, %v2014
    %v2100 = vpack.c.b16 %v2020, %v2015
    %v2101 = vpack.c.b16 %v2021, %v2016
    %v2102 = vpack.c.b16 %v2022, %v2017
    %v2103 = vpack.c.b16 %v2028, %v2023
    %v2104 = vpack.c.b16 %v2029, %v2024
    %v2105 = vpack.c.b16 %v2030, %v2025
    %v2106 = vpack.c.b16 %v2031, %v2026
    %v2107 = vpack.c.b16 %v2032, %v2027
    %v2108 = vpack.c.b16 %v2038, %v2033
    %v2109 = vpack.c.b16 %v2039, %v2034
    %v2110 = vpack.c.b16 %v2040, %v2035
    %v2111 = vpack.c.b16 %v2041, %v2036
    %v2112 = vpack.c.b16 %v2042, %v2037
    %v2113 = vpack.c.b16 %v2048, %v2043
    %v2114 = vpack.c.b16 %v2049, %v2044
    %v2115 = vpack.c.b16 %v2050, %v2045
    %v2116 = vpack.c.b16 %v2051, %v2046
    %v2117 = vpack.c.b16 %v2052, %v2047
    %v2118 = vpack.c.b16 %v2053, %v2053
    %v2119 = vpack.c.b16 %v2054, %v2054
    %v2120 = vpack.c.b16 %v2055, %v2055
    %v2121 = vpack.c.b16 %v2056, %v2056
    %v2122 = vpack.c.b16 %v2057, %v2057
    %vm2175 = vcmask 646144
    %v2177 = vsel %vm2175, %v2062, 0
    %v2180 = vsel %vm2175, %v2067, 0
    %v2183 = vsel %vm2175, %v2072, 0
    %v2186 = vsel %vm2175, %v2077, 0
    %v2189 = vsel %vm2175, %v2082, 0
    %v2192 = vsel %vm2175, %v2087, 0
    %v2195 = vsel %vm2175, %v2092, 0
    %v2198 = vsel %vm2175, %v2097, 0
    %v2201 = vsel %vm2175, %v2102, 0
    %v2204 = vsel %vm2175, %v2107, 0
    %v2207 = vsel %vm2175, %v2112, 0
    %v2210 = vsel %vm2175, %v2117, 0
    %v2213 = vsel %vm2175, %v2122, 0
    %vm2215 = vcmask 1047552
    %v2216 = vsel %vm1060, 4294967295, 65535
    %v2217 = vsel %vm2215, %v2216, 0
    %v2219 = vand.u32 %v1857, %v2217
    %2221 = vmatprep.subr.bf16.mxu0 0
    %2222 = vmatpush1.bf16.msra.mxu0 %v1828
    %2223 = vmatprep.subr.bf16.mxu0 0
    %2224 = vmatpush1.bf16.msra.mxu0 %v1827
    %2225 = vmatprep.subr.bf16.mxu0 0
    %2226 = vmatpush1.bf16.msra.mxu0 %v1826
    %2227 = vmatprep.subr.bf16.mxu0 0
    %2228 = vmatpush1.bf16.msra.mxu0 %v1825
    %2229 = vmatprep.subr.bf16.mxu0 0
    %2230 = vmatpush1.bf16.msra.mxu0 %v1824
    %2231 = vmatprep.subr.bf16.mxu0 0
    %2232 = vmatpush1.bf16.msra.mxu0 %v1823
    %2233 = vmatprep.subr.bf16.mxu0 0
    %2234 = vmatpush1.bf16.msra.mxu0 %v1822
    %2235 = vmatprep.subr.bf16.mxu0 0
    %2236 = vmatpush1.bf16.msra.mxu0 %v1821
    %2237 = vmatprep.subr.bf16.mxu0 0
    %2238 = vmatpush2.bf16.msra.mxu0 %v1836
    %2239 = vmatprep.subr.bf16.mxu0 0
    %2240 = vmatpush2.bf16.msra.mxu0 %v1835
    %2241 = vmatprep.subr.bf16.mxu0 0
    %2242 = vmatpush2.bf16.msra.mxu0 %v1834
    %2243 = vmatprep.subr.bf16.mxu0 0
    %2244 = vmatpush2.bf16.msra.mxu0 %v1833
    %2245 = vmatprep.subr.bf16.mxu0 0
    %2246 = vmatpush2.bf16.msra.mxu0 %v1832
    %2247 = vmatprep.subr.bf16.mxu0 0
    %2248 = vmatpush2.bf16.msra.mxu0 %v1831
    %2249 = vmatprep.subr.bf16.mxu0 0
    %2250 = vmatpush2.bf16.msra.mxu0 %v1830
    %2251 = vmatprep.subr.bf16.mxu0 0
    %2252 = vmatpush2.bf16.msra.mxu0 %v1829
    %2253 = vmatprep.mubr.bf16.mxu0 %v2059
    %2254 = vmatmul.mubr.bf16.gmra.mxu0 %v2058
    %v2255 = vpop.f32.mrf.mxu0
    %v2256 = vadd.f32 0.0, %v2255
    %v2257 = vpop.f32.mrf.mxu0
    %v2258 = vpop.f32.mrf.mxu0
    %v2259 = vadd.f32 0.0, %v2258
    %v2260 = vpop.f32.mrf.mxu0
    %2261 = vmatprep.mubr.bf16.mxu0 %v2064
    %2262 = vmatmul.mubr.bf16.gmra.mxu0 %v2063
    %v2263 = vpop.f32.mrf.mxu0
    %v2264 = vadd.f32 0.0, %v2263
    %v2265 = vpop.f32.mrf.mxu0
    %v2266 = vpop.f32.mrf.mxu0
    %v2267 = vadd.f32 0.0, %v2266
    %v2268 = vpop.f32.mrf.mxu0
    %2269 = vmatprep.mubr.bf16.mxu0 %v2069
    %2270 = vmatmul.mubr.bf16.gmra.mxu0 %v2068
    %v2271 = vpop.f32.mrf.mxu0
    %v2272 = vadd.f32 0.0, %v2271
    %v2273 = vpop.f32.mrf.mxu0
    %v2274 = vpop.f32.mrf.mxu0
    %v2275 = vadd.f32 0.0, %v2274
    %v2276 = vpop.f32.mrf.mxu0
    %2277 = vmatprep.mubr.bf16.mxu0 %v2074
    %2278 = vmatmul.mubr.bf16.gmra.mxu0 %v2073
    %v2279 = vpop.f32.mrf.mxu0
    %v2280 = vadd.f32 0.0, %v2279
    %v2281 = vpop.f32.mrf.mxu0
    %v2282 = vpop.f32.mrf.mxu0
    %v2283 = vadd.f32 0.0, %v2282
    %v2284 = vpop.f32.mrf.mxu0
    %2285 = vmatprep.mubr.bf16.mxu0 %v2079
    %2286 = vmatmul.mubr.bf16.gmra.mxu0 %v2078
    %v2287 = vpop.f32.mrf.mxu0
    %v2288 = vadd.f32 0.0, %v2287
    %v2289 = vpop.f32.mrf.mxu0
    %v2290 = vpop.f32.mrf.mxu0
    %v2291 = vadd.f32 0.0, %v2290
    %v2292 = vpop.f32.mrf.mxu0
    %2293 = vmatprep.mubr.bf16.mxu0 %v2084
    %2294 = vmatmul.mubr.bf16.gmra.mxu0 %v2083
    %v2295 = vpop.f32.mrf.mxu0
    %v2296 = vadd.f32 0.0, %v2295
    %v2297 = vpop.f32.mrf.mxu0
    %v2298 = vpop.f32.mrf.mxu0
    %v2299 = vadd.f32 0.0, %v2298
    %v2300 = vpop.f32.mrf.mxu0
    %2301 = vmatprep.mubr.bf16.mxu0 %v2089
    %2302 = vmatmul.mubr.bf16.gmra.mxu0 %v2088
    %v2303 = vpop.f32.mrf.mxu0
    %v2304 = vadd.f32 0.0, %v2303
    %v2305 = vpop.f32.mrf.mxu0
    %v2306 = vpop.f32.mrf.mxu0
    %v2307 = vadd.f32 0.0, %v2306
    %v2308 = vpop.f32.mrf.mxu0
    %2309 = vmatprep.mubr.bf16.mxu0 %v2094
    %2310 = vmatmul.mubr.bf16.gmra.mxu0 %v2093
    %v2311 = vpop.f32.mrf.mxu0
    %v2312 = vadd.f32 0.0, %v2311
    %v2313 = vpop.f32.mrf.mxu0
    %v2314 = vpop.f32.mrf.mxu0
    %v2315 = vadd.f32 0.0, %v2314
    %v2316 = vpop.f32.mrf.mxu0
    %2317 = vmatprep.mubr.bf16.mxu0 %v2099
    %2318 = vmatmul.mubr.bf16.gmra.mxu0 %v2098
    %v2319 = vpop.f32.mrf.mxu0
    %v2320 = vadd.f32 0.0, %v2319
    %v2321 = vpop.f32.mrf.mxu0
    %v2322 = vpop.f32.mrf.mxu0
    %v2323 = vadd.f32 0.0, %v2322
    %v2324 = vpop.f32.mrf.mxu0
    %2325 = vmatprep.mubr.bf16.mxu0 %v2104
    %2326 = vmatmul.mubr.bf16.gmra.mxu0 %v2103
    %v2327 = vpop.f32.mrf.mxu0
    %v2328 = vadd.f32 0.0, %v2327
    %v2329 = vpop.f32.mrf.mxu0
    %v2330 = vpop.f32.mrf.mxu0
    %v2331 = vadd.f32 0.0, %v2330
    %v2332 = vpop.f32.mrf.mxu0
    %2333 = vmatprep.mubr.bf16.mxu0 %v2109
    %2334 = vmatmul.mubr.bf16.gmra.mxu0 %v2108
    %v2335 = vpop.f32.mrf.mxu0
    %v2336 = vadd.f32 0.0, %v2335
    %v2337 = vpop.f32.mrf.mxu0
    %v2338 = vpop.f32.mrf.mxu0
    %v2339 = vadd.f32 0.0, %v2338
    %v2340 = vpop.f32.mrf.mxu0
    %2341 = vmatprep.mubr.bf16.mxu0 %v2114
    %2342 = vmatmul.mubr.bf16.gmra.mxu0 %v2113
    %v2343 = vpop.f32.mrf.mxu0
    %v2344 = vadd.f32 0.0, %v2343
    %v2345 = vpop.f32.mrf.mxu0
    %v2346 = vpop.f32.mrf.mxu0
    %v2347 = vadd.f32 0.0, %v2346
    %v2348 = vpop.f32.mrf.mxu0
    %2349 = vmatprep.mubr.bf16.mxu0 %v2119
    %2350 = vmatmul.mubr.bf16.gmra.mxu0 %v2118
    %v2351 = vpop.f32.mrf.mxu0
    %v2352 = vadd.f32 0.0, %v2351
    %v2353 = vpop.f32.mrf.mxu0
    %v2354 = vpop.f32.mrf.mxu0
    %v2355 = vpop.f32.mrf.mxu0
    %2356 = vdwg.mxu0
    %2357 = vmatprep.subr.bf16.mxu0 0
    %2358 = vmatpush1.bf16.msra.mxu0 %v1844
    %2359 = vmatprep.subr.bf16.mxu0 0
    %2360 = vmatpush1.bf16.msra.mxu0 %v1843
    %2361 = vmatprep.subr.bf16.mxu0 0
    %2362 = vmatpush1.bf16.msra.mxu0 %v1842
    %2363 = vmatprep.subr.bf16.mxu0 0
    %2364 = vmatpush1.bf16.msra.mxu0 %v1841
    %2365 = vmatprep.subr.bf16.mxu0 0
    %2366 = vmatpush1.bf16.msra.mxu0 %v1840
    %2367 = vmatprep.subr.bf16.mxu0 0
    %2368 = vmatpush1.bf16.msra.mxu0 %v1839
    %2369 = vmatprep.subr.bf16.mxu0 0
    %2370 = vmatpush1.bf16.msra.mxu0 %v1838
    %2371 = vmatprep.subr.bf16.mxu0 0
    %2372 = vmatpush1.bf16.msra.mxu0 %v1837
    %2373 = vmatprep.subr.bf16.mxu0 0
    %2374 = vmatpush2.bf16.msra.mxu0 %v1852
    %2375 = vmatprep.subr.bf16.mxu0 0
    %2376 = vmatpush2.bf16.msra.mxu0 %v1851
    %2377 = vmatprep.subr.bf16.mxu0 0
    %2378 = vmatpush2.bf16.msra.mxu0 %v1850
    %2379 = vmatprep.subr.bf16.mxu0 0
    %2380 = vmatpush2.bf16.msra.mxu0 %v1849
    %2381 = vmatprep.subr.bf16.mxu0 0
    %2382 = vmatpush2.bf16.msra.mxu0 %v1848
    %2383 = vmatprep.subr.bf16.mxu0 0
    %2384 = vmatpush2.bf16.msra.mxu0 %v1847
    %2385 = vmatprep.subr.bf16.mxu0 0
    %2386 = vmatpush2.bf16.msra.mxu0 %v1846
    %2387 = vmatprep.subr.bf16.mxu0 0
    %2388 = vmatpush2.bf16.msra.mxu0 %v1845
    %2389 = vmatprep.mubr.bf16.mxu0 %v2061
    %2390 = vmatmul.mubr.bf16.gmra.mxu0 %v2060
    %v2391 = vpop.f32.mrf.mxu0
    %v2392 = vadd.f32 %v2256, %v2391
    %v2393 = vpop.f32.mrf.mxu0
    %v2394 = vpop.f32.mrf.mxu0
    %v2395 = vadd.f32 %v2259, %v2394
    %v2396 = vpop.f32.mrf.mxu0
    %2397 = vmatprep.mubr.bf16.mxu0 %v2066
    %2398 = vmatmul.mubr.bf16.gmra.mxu0 %v2065
    %v2399 = vpop.f32.mrf.mxu0
    %v2400 = vadd.f32 %v2264, %v2399
    %v2401 = vpop.f32.mrf.mxu0
    %v2402 = vpop.f32.mrf.mxu0
    %v2403 = vadd.f32 %v2267, %v2402
    %v2404 = vpop.f32.mrf.mxu0
    %2405 = vmatprep.mubr.bf16.mxu0 %v2071
    %2406 = vmatmul.mubr.bf16.gmra.mxu0 %v2070
    %v2407 = vpop.f32.mrf.mxu0
    %v2408 = vadd.f32 %v2272, %v2407
    %v2409 = vpop.f32.mrf.mxu0
    %v2410 = vpop.f32.mrf.mxu0
    %v2411 = vadd.f32 %v2275, %v2410
    %v2412 = vpop.f32.mrf.mxu0
    %2413 = vmatprep.mubr.bf16.mxu0 %v2076
    %2414 = vmatmul.mubr.bf16.gmra.mxu0 %v2075
    %v2415 = vpop.f32.mrf.mxu0
    %v2416 = vadd.f32 %v2280, %v2415
    %v2417 = vpop.f32.mrf.mxu0
    %v2418 = vpop.f32.mrf.mxu0
    %v2419 = vadd.f32 %v2283, %v2418
    %v2420 = vpop.f32.mrf.mxu0
    %2421 = vmatprep.mubr.bf16.mxu0 %v2081
    %2422 = vmatmul.mubr.bf16.gmra.mxu0 %v2080
    %v2423 = vpop.f32.mrf.mxu0
    %v2424 = vadd.f32 %v2288, %v2423
    %v2425 = vpop.f32.mrf.mxu0
    %v2426 = vpop.f32.mrf.mxu0
    %v2427 = vadd.f32 %v2291, %v2426
    %v2428 = vpop.f32.mrf.mxu0
    %2429 = vmatprep.mubr.bf16.mxu0 %v2086
    %2430 = vmatmul.mubr.bf16.gmra.mxu0 %v2085
    %v2431 = vpop.f32.mrf.mxu0
    %v2432 = vadd.f32 %v2296, %v2431
    %v2433 = vpop.f32.mrf.mxu0
    %v2434 = vpop.f32.mrf.mxu0
    %v2435 = vadd.f32 %v2299, %v2434
    %v2436 = vpop.f32.mrf.mxu0
    %2437 = vmatprep.mubr.bf16.mxu0 %v2091
    %2438 = vmatmul.mubr.bf16.gmra.mxu0 %v2090
    %v2439 = vpop.f32.mrf.mxu0
    %v2440 = vadd.f32 %v2304, %v2439
    %v2441 = vpop.f32.mrf.mxu0
    %v2442 = vpop.f32.mrf.mxu0
    %v2443 = vadd.f32 %v2307, %v2442
    %v2444 = vpop.f32.mrf.mxu0
    %2445 = vmatprep.mubr.bf16.mxu0 %v2096
    %2446 = vmatmul.mubr.bf16.gmra.mxu0 %v2095
    %v2447 = vpop.f32.mrf.mxu0
    %v2448 = vadd.f32 %v2312, %v2447
    %v2449 = vpop.f32.mrf.mxu0
    %v2450 = vpop.f32.mrf.mxu0
    %v2451 = vadd.f32 %v2315, %v2450
    %v2452 = vpop.f32.mrf.mxu0
    %2453 = vmatprep.mubr.bf16.mxu0 %v2101
    %2454 = vmatmul.mubr.bf16.gmra.mxu0 %v2100
    %v2455 = vpop.f32.mrf.mxu0
    %v2456 = vadd.f32 %v2320, %v2455
    %v2457 = vpop.f32.mrf.mxu0
    %v2458 = vpop.f32.mrf.mxu0
    %v2459 = vadd.f32 %v2323, %v2458
    %v2460 = vpop.f32.mrf.mxu0
    %2461 = vmatprep.mubr.bf16.mxu0 %v2106
    %2462 = vmatmul.mubr.bf16.gmra.mxu0 %v2105
    %v2463 = vpop.f32.mrf.mxu0
    %v2464 = vadd.f32 %v2328, %v2463
    %v2465 = vpop.f32.mrf.mxu0
    %v2466 = vpop.f32.mrf.mxu0
    %v2467 = vadd.f32 %v2331, %v2466
    %v2468 = vpop.f32.mrf.mxu0
    %2469 = vmatprep.mubr.bf16.mxu0 %v2111
    %2470 = vmatmul.mubr.bf16.gmra.mxu0 %v2110
    %v2471 = vpop.f32.mrf.mxu0
    %v2472 = vadd.f32 %v2336, %v2471
    %v2473 = vpop.f32.mrf.mxu0
    %v2474 = vpop.f32.mrf.mxu0
    %v2475 = vadd.f32 %v2339, %v2474
    %v2476 = vpop.f32.mrf.mxu0
    %2477 = vmatprep.mubr.bf16.mxu0 %v2116
    %2478 = vmatmul.mubr.bf16.gmra.mxu0 %v2115
    %v2479 = vpop.f32.mrf.mxu0
    %v2480 = vadd.f32 %v2344, %v2479
    %v2481 = vpop.f32.mrf.mxu0
    %v2482 = vpop.f32.mrf.mxu0
    %v2483 = vadd.f32 %v2347, %v2482
    %v2484 = vpop.f32.mrf.mxu0
    %2485 = vmatprep.mubr.bf16.mxu0 %v2121
    %2486 = vmatmul.mubr.bf16.gmra.mxu0 %v2120
    %v2487 = vpop.f32.mrf.mxu0
    %v2488 = vadd.f32 %v2352, %v2487
    %v2489 = vpop.f32.mrf.mxu0
    %v2490 = vpop.f32.mrf.mxu0
    %v2491 = vpop.f32.mrf.mxu0
    %2492 = vdwg.mxu0
    %2493 = vmatprep.subr.bf16.mxu0 0
    %2494 = vmatpush1.bf16.msra.mxu0 0
    %2495 = vmatprep.subr.bf16.mxu0 0
    %2496 = vmatpush1.bf16.msra.mxu0 0
    %2497 = vmatprep.subr.bf16.mxu0 0
    %2498 = vmatpush1.bf16.msra.mxu0 0
    %2499 = vmatprep.subr.bf16.mxu0 0
    %2500 = vmatpush1.bf16.msra.mxu0 %v2219
    %2501 = vmatprep.subr.bf16.mxu0 0
    %2502 = vmatpush1.bf16.msra.mxu0 %v1856
    %2503 = vmatprep.subr.bf16.mxu0 0
    %2504 = vmatpush1.bf16.msra.mxu0 %v1855
    %2505 = vmatprep.subr.bf16.mxu0 0
    %2506 = vmatpush1.bf16.msra.mxu0 %v1854
    %2507 = vmatprep.subr.bf16.mxu0 0
    %2508 = vmatpush1.bf16.msra.mxu0 %v1853
    %2509 = vmatprep.subr.bf16.mxu0 0
    %2510 = vmatpush2.bf16.msra.mxu0 0
    %2511 = vmatprep.subr.bf16.mxu0 0
    %2512 = vmatpush2.bf16.msra.mxu0 0
    %2513 = vmatprep.subr.bf16.mxu0 0
    %2514 = vmatpush2.bf16.msra.mxu0 0
    %2515 = vmatprep.subr.bf16.mxu0 0
    %2516 = vmatpush2.bf16.msra.mxu0 0
    %2517 = vmatprep.subr.bf16.mxu0 0
    %2518 = vmatpush2.bf16.msra.mxu0 0
    %2519 = vmatprep.subr.bf16.mxu0 0
    %2520 = vmatpush2.bf16.msra.mxu0 0
    %2521 = vmatprep.subr.bf16.mxu0 0
    %2522 = vmatpush2.bf16.msra.mxu0 0
    %2523 = vmatprep.subr.bf16.mxu0 0
    %2524 = vmatpush2.bf16.msra.mxu0 0
    %2525 = vmatprep.mubr.bf16.mxu0 0
    %2526 = vmatmul.mubr.bf16.gmra.mxu0 %v2177
    %v2527 = vpop.f32.mrf.mxu0
    %v2528 = vadd.f32 %v2392, %v2527
    %v2529 = vpop.f32.mrf.mxu0
    %v2530 = vpop.f32.mrf.mxu0
    %v2531 = vadd.f32 %v2395, %v2530
    %v2532 = vpop.f32.mrf.mxu0
    %2533 = vmatprep.mubr.bf16.mxu0 0
    %2534 = vmatmul.mubr.bf16.gmra.mxu0 %v2180
    %v2535 = vpop.f32.mrf.mxu0
    %v2536 = vadd.f32 %v2400, %v2535
    %v2537 = vpop.f32.mrf.mxu0
    %v2538 = vpop.f32.mrf.mxu0
    %v2539 = vadd.f32 %v2403, %v2538
    %v2540 = vpop.f32.mrf.mxu0
    %2541 = vmatprep.mubr.bf16.mxu0 0
    %2542 = vmatmul.mubr.bf16.gmra.mxu0 %v2183
    %v2543 = vpop.f32.mrf.mxu0
    %v2544 = vadd.f32 %v2408, %v2543
    %v2545 = vpop.f32.mrf.mxu0
    %v2546 = vpop.f32.mrf.mxu0
    %v2547 = vadd.f32 %v2411, %v2546
    %v2548 = vpop.f32.mrf.mxu0
    %2549 = vmatprep.mubr.bf16.mxu0 0
    %2550 = vmatmul.mubr.bf16.gmra.mxu0 %v2186
    %v2551 = vpop.f32.mrf.mxu0
    %v2552 = vadd.f32 %v2416, %v2551
    %v2553 = vpop.f32.mrf.mxu0
    %v2554 = vpop.f32.mrf.mxu0
    %v2555 = vadd.f32 %v2419, %v2554
    %v2556 = vpop.f32.mrf.mxu0
    %2557 = vmatprep.mubr.bf16.mxu0 0
    %2558 = vmatmul.mubr.bf16.gmra.mxu0 %v2189
    %v2559 = vpop.f32.mrf.mxu0
    %v2560 = vadd.f32 %v2424, %v2559
    %v2561 = vpop.f32.mrf.mxu0
    %v2562 = vpop.f32.mrf.mxu0
    %v2563 = vadd.f32 %v2427, %v2562
    %v2564 = vpop.f32.mrf.mxu0
    %2565 = vmatprep.mubr.bf16.mxu0 0
    %2566 = vmatmul.mubr.bf16.gmra.mxu0 %v2192
    %v2567 = vpop.f32.mrf.mxu0
    %v2568 = vadd.f32 %v2432, %v2567
    %v2569 = vpop.f32.mrf.mxu0
    %v2570 = vpop.f32.mrf.mxu0
    %v2571 = vadd.f32 %v2435, %v2570
    %v2572 = vpop.f32.mrf.mxu0
    %2573 = vmatprep.mubr.bf16.mxu0 0
    %2574 = vmatmul.mubr.bf16.gmra.mxu0 %v2195
    %v2575 = vpop.f32.mrf.mxu0
    %v2576 = vadd.f32 %v2440, %v2575
    %v2577 = vpop.f32.mrf.mxu0
    %v2578 = vpop.f32.mrf.mxu0
    %v2579 = vadd.f32 %v2443, %v2578
    %v2580 = vpop.f32.mrf.mxu0
    %2581 = vmatprep.mubr.bf16.mxu0 0
    %2582 = vmatmul.mubr.bf16.gmra.mxu0 %v2198
    %v2583 = vpop.f32.mrf.mxu0
    %v2584 = vadd.f32 %v2448, %v2583
    %v2585 = vpop.f32.mrf.mxu0
    %v2586 = vpop.f32.mrf.mxu0
    %v2587 = vadd.f32 %v2451, %v2586
    %v2588 = vpop.f32.mrf.mxu0
    %2589 = vmatprep.mubr.bf16.mxu0 0
    %2590 = vmatmul.mubr.bf16.gmra.mxu0 %v2201
    %v2591 = vpop.f32.mrf.mxu0
    %v2592 = vadd.f32 %v2456, %v2591
    %v2593 = vpop.f32.mrf.mxu0
    %v2594 = vpop.f32.mrf.mxu0
    %v2595 = vadd.f32 %v2459, %v2594
    %v2596 = vpop.f32.mrf.mxu0
    %2597 = vmatprep.mubr.bf16.mxu0 0
    %2598 = vmatmul.mubr.bf16.gmra.mxu0 %v2204
    %v2599 = vpop.f32.mrf.mxu0
    %v2600 = vadd.f32 %v2464, %v2599
    %v2601 = vpop.f32.mrf.mxu0
    %v2602 = vpop.f32.mrf.mxu0
    %v2603 = vadd.f32 %v2467, %v2602
    %v2604 = vpop.f32.mrf.mxu0
    %2605 = vmatprep.mubr.bf16.mxu0 0
    %2606 = vmatmul.mubr.bf16.gmra.mxu0 %v2207
    %v2607 = vpop.f32.mrf.mxu0
    %v2608 = vadd.f32 %v2472, %v2607
    %v2609 = vpop.f32.mrf.mxu0
    %v2610 = vpop.f32.mrf.mxu0
    %v2611 = vadd.f32 %v2475, %v2610
    %v2612 = vpop.f32.mrf.mxu0
    %2613 = vmatprep.mubr.bf16.mxu0 0
    %2614 = vmatmul.mubr.bf16.gmra.mxu0 %v2210
    %v2615 = vpop.f32.mrf.mxu0
    %v2616 = vadd.f32 %v2480, %v2615
    %v2617 = vpop.f32.mrf.mxu0
    %v2618 = vpop.f32.mrf.mxu0
    %v2619 = vadd.f32 %v2483, %v2618
    %v2620 = vpop.f32.mrf.mxu0
    %2621 = vmatprep.mubr.bf16.mxu0 0
    %2622 = vmatmul.mubr.bf16.gmra.mxu0 %v2213
    %v2623 = vpop.f32.mrf.mxu0
    %v2624 = vadd.f32 %v2488, %v2623
    %v2625 = vpop.f32.mrf.mxu0
    %v2626 = vpop.f32.mrf.mxu0
    %v2627 = vpop.f32.mrf.mxu0
    %2628 = vdwg.mxu0
    %v2629 = vld [vmem:[#allocation11] sm:$0xf]
    %v2630 = vld [vmem:[#allocation11 + $0x4] sm:$0xf]
    %v2631 = vld [vmem:[#allocation11 + $0x8] sm:$0xf]
    %v2632 = vld [vmem:[#allocation11 + $0xc] sm:$0xf]
    %v2633 = vunpack.c.l.bf16 %v2629
    %v2634 = vunpack.c.l.bf16 %v2630
    %v2635 = vunpack.c.l.bf16 %v2631
    %v2636 = vunpack.c.l.bf16 %v2632
    %s2637 = scalar_lea.vmem [#allocation11], 16
    %v2638 = vld [vmem:[%s2637] sm:$0xf]
    %v2639 = vld [vmem:[%s2637 + $0x4] sm:$0xf]
    %v2640 = vld [vmem:[%s2637 + $0x8] sm:$0xf]
    %v2641 = vld [vmem:[%s2637 + $0xc] sm:$0xf]
    %v2642 = vunpack.c.l.bf16 %v2638
    %v2643 = vunpack.c.l.bf16 %v2639
    %v2644 = vunpack.c.l.bf16 %v2640
    %v2645 = vunpack.c.l.bf16 %v2641
    %v2669 = vrot.slane %v2528, 1
    %v2670 = vrot.slane %v2531, 1
    %v2671 = vsel %vm1060, %v2669, %v2670
    %v2672 = vrot.slane %v2536, 1
    %v2673 = vsel %vm1060, %v2670, %v2672
    %v2674 = vrot.slane %v2539, 1
    %v2675 = vsel %vm1060, %v2672, %v2674
    %v2676 = vrot.slane %v2544, 1
    %v2677 = vsel %vm1060, %v2674, %v2676
    %v2678 = vrot.slane %v2547, 1
    %v2679 = vsel %vm1060, %v2676, %v2678
    %v2680 = vrot.slane %v2552, 1
    %v2681 = vsel %vm1060, %v2678, %v2680
    %v2682 = vrot.slane %v2555, 1
    %v2683 = vsel %vm1060, %v2680, %v2682
    %v2684 = vrot.slane %v2560, 1
    %v2685 = vsel %vm1060, %v2682, %v2684
    %v2686 = vrot.slane %v2563, 1
    %v2687 = vsel %vm1060, %v2684, %v2686
    %v2688 = vrot.slane %v2568, 1
    %v2689 = vsel %vm1060, %v2686, %v2688
    %v2690 = vrot.slane %v2571, 1
    %v2691 = vsel %vm1060, %v2688, %v2690
    %v2692 = vrot.slane %v2576, 1
    %v2693 = vsel %vm1060, %v2690, %v2692
    %v2694 = vrot.slane %v2579, 1
    %v2695 = vsel %vm1060, %v2692, %v2694
    %v2696 = vrot.slane %v2584, 1
    %v2697 = vsel %vm1060, %v2694, %v2696
    %v2698 = vrot.slane %v2587, 1
    %v2699 = vsel %vm1060, %v2696, %v2698
    %v2700 = vrot.slane %v2592, 1
    %v2701 = vsel %vm1060, %v2698, %v2700
    %v2702 = vrot.slane %v2595, 1
    %v2703 = vsel %vm1060, %v2700, %v2702
    %v2704 = vrot.slane %v2600, 1
    %v2705 = vsel %vm1060, %v2702, %v2704
    %v2706 = vrot.slane %v2603, 1
    %v2707 = vsel %vm1060, %v2704, %v2706
    %v2708 = vrot.slane %v2608, 1
    %v2709 = vsel %vm1060, %v2706, %v2708
    %v2710 = vrot.slane %v2611, 1
    %v2711 = vsel %vm1060, %v2708, %v2710
    %v2712 = vrot.slane %v2616, 1
    %v2713 = vsel %vm1060, %v2710, %v2712
    %vm2714 = vcmask 261120
    %v2715 = vsel %vm2714, %v2671, 0
    %v2717 = vsel %vm2714, %v2673, 0
    %v2719 = vsel %vm2714, %v2675, 0
    %v2721 = vsel %vm2714, %v2677, 0
    %v2723 = vsel %vm2714, %v2679, 0
    %v2725 = vsel %vm2714, %v2681, 0
    %v2727 = vsel %vm2714, %v2683, 0
    %v2729 = vsel %vm2714, %v2685, 0
    %v2731 = vsel %vm2714, %v2687, 0
    %v2733 = vsel %vm2714, %v2689, 0
    %v2735 = vsel %vm2714, %v2691, 0
    %v2737 = vsel %vm2714, %v2693, 0
    %v2739 = vsel %vm2714, %v2695, 0
    %v2741 = vsel %vm2714, %v2697, 0
    %v2743 = vsel %vm2714, %v2699, 0
    %v2745 = vsel %vm2714, %v2701, 0
    %v2747 = vsel %vm2714, %v2703, 0
    %v2749 = vsel %vm2714, %v2705, 0
    %v2751 = vsel %vm2714, %v2707, 0
    %v2753 = vsel %vm2714, %v2709, 0
    %v2755 = vsel %vm2714, %v2711, 0
    %v2757 = vsel %vm2714, %v2713, 0
    %v2759 = vsel %vm2714, %v2712, 0
    %2761 = vmatprep.subr.mxu0 0.0
    %2762 = vmatpush1.msra.mxu0 0.0
    %2763 = vmatprep.subr.mxu0 0.0
    %2764 = vmatpush1.msra.mxu0 0.0
    %2765 = vmatprep.subr.mxu0 0.0
    %2766 = vmatpush1.msra.mxu0 0.0
    %2767 = vmatprep.subr.mxu0 0.0
    %2768 = vmatpush1.msra.mxu0 0.0
    %2769 = vmatprep.subr.mxu0 0.0
    %2770 = vmatpush1.msra.mxu0 0.0
    %2771 = vmatprep.subr.mxu0 0.0
    %2772 = vmatpush1.msra.mxu0 0.0
    %2773 = vmatprep.subr.mxu0 0.0
    %2774 = vmatpush1.msra.mxu0 0.0
    %2775 = vmatprep.subr.mxu0 0.0
    %2776 = vmatpush1.msra.mxu0 0.0
    %2777 = vmatprep.subr.mxu0 0.0
    %2778 = vmatpush1.msra.mxu0 0.0
    %2779 = vmatprep.subr.mxu0 0.0
    %2780 = vmatpush1.msra.mxu0 0.0
    %2781 = vmatprep.subr.mxu0 0.0
    %2782 = vmatpush1.msra.mxu0 0.0
    %2783 = vmatprep.subr.mxu0 0.0
    %2784 = vmatpush1.msra.mxu0 0.0
    %2785 = vmatprep.subr.mxu0 0.0
    %2786 = vmatpush1.msra.mxu0 %v2645
    %2787 = vmatprep.subr.mxu0 0.0
    %2788 = vmatpush1.msra.mxu0 %v2644
    %2789 = vmatprep.subr.mxu0 0.0
    %2790 = vmatpush1.msra.mxu0 %v2643
    %2791 = vmatprep.subr.mxu0 0.0
    %2792 = vmatpush1.msra.mxu0 %v2642
    %2793 = vmatprep.subr.mxu0 0.0
    %2794 = vmatpush2.msra.mxu0 0.0
    %2795 = vmatprep.subr.mxu0 0.0
    %2796 = vmatpush2.msra.mxu0 0.0
    %2797 = vmatprep.subr.mxu0 0.0
    %2798 = vmatpush2.msra.mxu0 0.0
    %2799 = vmatprep.subr.mxu0 0.0
    %2800 = vmatpush2.msra.mxu0 0.0
    %2801 = vmatprep.subr.mxu0 0.0
    %2802 = vmatpush2.msra.mxu0 0.0
    %2803 = vmatprep.subr.mxu0 0.0
    %2804 = vmatpush2.msra.mxu0 0.0
    %2805 = vmatprep.subr.mxu0 0.0
    %2806 = vmatpush2.msra.mxu0 0.0
    %2807 = vmatprep.subr.mxu0 0.0
    %2808 = vmatpush2.msra.mxu0 0.0
    %2809 = vmatprep.subr.mxu0 0.0
    %2810 = vmatpush2.msra.mxu0 0.0
    %2811 = vmatprep.subr.mxu0 0.0
    %2812 = vmatpush2.msra.mxu0 0.0
    %2813 = vmatprep.subr.mxu0 0.0
    %2814 = vmatpush2.msra.mxu0 0.0
    %2815 = vmatprep.subr.mxu0 0.0
    %2816 = vmatpush2.msra.mxu0 0.0
    %2817 = vmatprep.subr.mxu0 0.0
    %2818 = vmatpush2.msra.mxu0 0.0
    %2819 = vmatprep.subr.mxu0 0.0
    %2820 = vmatpush2.msra.mxu0 0.0
    %2821 = vmatprep.subr.mxu0 0.0
    %2822 = vmatpush2.msra.mxu0 0.0
    %2823 = vmatprep.subr.mxu0 0.0
    %2824 = vmatpush2.msra.mxu0 0.0
    %2825 = vmatprep.mubr.f32.mxu0 0.0
    %2826 = vmatmul.mubr.f32.gmra.mxu0 %v2715
    %v2827 = vpop.f32.mrf.mxu0
    %v2828 = vadd.f32 0.0, %v2827
    %v2829 = vpop.f32.mrf.mxu0
    %2830 = vmatprep.mubr.f32.mxu0 0.0
    %2831 = vmatmul.mubr.f32.gmra.mxu0 %v2717
    %v2832 = vpop.f32.mrf.mxu0
    %v2833 = vadd.f32 0.0, %v2832
    %v2834 = vpop.f32.mrf.mxu0
    %2835 = vmatprep.mubr.f32.mxu0 0.0
    %2836 = vmatmul.mubr.f32.gmra.mxu0 %v2719
    %v2837 = vpop.f32.mrf.mxu0
    %v2838 = vadd.f32 0.0, %v2837
    %v2839 = vpop.f32.mrf.mxu0
    %2840 = vmatprep.mubr.f32.mxu0 0.0
    %2841 = vmatmul.mubr.f32.gmra.mxu0 %v2721
    %v2842 = vpop.f32.mrf.mxu0
    %v2843 = vadd.f32 0.0, %v2842
    %v2844 = vpop.f32.mrf.mxu0
    %2845 = vmatprep.mubr.f32.mxu0 0.0
    %2846 = vmatmul.mubr.f32.gmra.mxu0 %v2723
    %v2847 = vpop.f32.mrf.mxu0
    %v2848 = vadd.f32 0.0, %v2847
    %v2849 = vpop.f32.mrf.mxu0
    %2850 = vmatprep.mubr.f32.mxu0 0.0
    %2851 = vmatmul.mubr.f32.gmra.mxu0 %v2725
    %v2852 = vpop.f32.mrf.mxu0
    %v2853 = vadd.f32 0.0, %v2852
    %v2854 = vpop.f32.mrf.mxu0
    %2855 = vmatprep.mubr.f32.mxu0 0.0
    %2856 = vmatmul.mubr.f32.gmra.mxu0 %v2727
    %v2857 = vpop.f32.mrf.mxu0
    %v2858 = vadd.f32 0.0, %v2857
    %v2859 = vpop.f32.mrf.mxu0
    %2860 = vmatprep.mubr.f32.mxu0 0.0
    %2861 = vmatmul.mubr.f32.gmra.mxu0 %v2729
    %v2862 = vpop.f32.mrf.mxu0
    %v2863 = vadd.f32 0.0, %v2862
    %v2864 = vpop.f32.mrf.mxu0
    %2865 = vmatprep.mubr.f32.mxu0 0.0
    %2866 = vmatmul.mubr.f32.gmra.mxu0 %v2731
    %v2867 = vpop.f32.mrf.mxu0
    %v2868 = vadd.f32 0.0, %v2867
    %v2869 = vpop.f32.mrf.mxu0
    %2870 = vmatprep.mubr.f32.mxu0 0.0
    %2871 = vmatmul.mubr.f32.gmra.mxu0 %v2733
    %v2872 = vpop.f32.mrf.mxu0
    %v2873 = vadd.f32 0.0, %v2872
    %v2874 = vpop.f32.mrf.mxu0
    %2875 = vmatprep.mubr.f32.mxu0 0.0
    %2876 = vmatmul.mubr.f32.gmra.mxu0 %v2735
    %v2877 = vpop.f32.mrf.mxu0
    %v2878 = vadd.f32 0.0, %v2877
    %v2879 = vpop.f32.mrf.mxu0
    %2880 = vmatprep.mubr.f32.mxu0 0.0
    %2881 = vmatmul.mubr.f32.gmra.mxu0 %v2737
    %v2882 = vpop.f32.mrf.mxu0
    %v2883 = vadd.f32 0.0, %v2882
    %v2884 = vpop.f32.mrf.mxu0
    %2885 = vmatprep.mubr.f32.mxu0 0.0
    %2886 = vmatmul.mubr.f32.gmra.mxu0 %v2739
    %v2887 = vpop.f32.mrf.mxu0
    %v2888 = vadd.f32 0.0, %v2887
    %v2889 = vpop.f32.mrf.mxu0
    %2890 = vmatprep.mubr.f32.mxu0 0.0
    %2891 = vmatmul.mubr.f32.gmra.mxu0 %v2741
    %v2892 = vpop.f32.mrf.mxu0
    %v2893 = vadd.f32 0.0, %v2892
    %v2894 = vpop.f32.mrf.mxu0
    %2895 = vmatprep.mubr.f32.mxu0 0.0
    %2896 = vmatmul.mubr.f32.gmra.mxu0 %v2743
    %v2897 = vpop.f32.mrf.mxu0
    %v2898 = vadd.f32 0.0, %v2897
    %v2899 = vpop.f32.mrf.mxu0
    %2900 = vmatprep.mubr.f32.mxu0 0.0
    %2901 = vmatmul.mubr.f32.gmra.mxu0 %v2745
    %v2902 = vpop.f32.mrf.mxu0
    %v2903 = vadd.f32 0.0, %v2902
    %v2904 = vpop.f32.mrf.mxu0
    %2905 = vmatprep.mubr.f32.mxu0 0.0
    %2906 = vmatmul.mubr.f32.gmra.mxu0 %v2747
    %v2907 = vpop.f32.mrf.mxu0
    %v2908 = vadd.f32 0.0, %v2907
    %v2909 = vpop.f32.mrf.mxu0
    %2910 = vmatprep.mubr.f32.mxu0 0.0
    %2911 = vmatmul.mubr.f32.gmra.mxu0 %v2749
    %v2912 = vpop.f32.mrf.mxu0
    %v2913 = vadd.f32 0.0, %v2912
    %v2914 = vpop.f32.mrf.mxu0
    %2915 = vmatprep.mubr.f32.mxu0 0.0
    %2916 = vmatmul.mubr.f32.gmra.mxu0 %v2751
    %v2917 = vpop.f32.mrf.mxu0
    %v2918 = vadd.f32 0.0, %v2917
    %v2919 = vpop.f32.mrf.mxu0
    %2920 = vmatprep.mubr.f32.mxu0 0.0
    %2921 = vmatmul.mubr.f32.gmra.mxu0 %v2753
    %v2922 = vpop.f32.mrf.mxu0
    %v2923 = vadd.f32 0.0, %v2922
    %v2924 = vpop.f32.mrf.mxu0
    %2925 = vmatprep.mubr.f32.mxu0 0.0
    %2926 = vmatmul.mubr.f32.gmra.mxu0 %v2755
    %v2927 = vpop.f32.mrf.mxu0
    %v2928 = vadd.f32 0.0, %v2927
    %v2929 = vpop.f32.mrf.mxu0
    %2930 = vmatprep.mubr.f32.mxu0 0.0
    %2931 = vmatmul.mubr.f32.gmra.mxu0 %v2757
    %v2932 = vpop.f32.mrf.mxu0
    %v2933 = vadd.f32 0.0, %v2932
    %v2934 = vpop.f32.mrf.mxu0
    %2935 = vmatprep.mubr.f32.mxu0 0.0
    %2936 = vmatmul.mubr.f32.gmra.mxu0 %v2759
    %v2937 = vpop.f32.mrf.mxu0
    %v2938 = vadd.f32 0.0, %v2937
    %v2939 = vpop.f32.mrf.mxu0
    %2940 = vdwg.mxu0
    %v2941 = vsel %vm2714, %v2528, 0
    %v2943 = vsel %vm2714, %v2531, 0
    %v2945 = vsel %vm2714, %v2536, 0
    %v2947 = vsel %vm2714, %v2539, 0
    %v2949 = vsel %vm2714, %v2544, 0
    %v2951 = vsel %vm2714, %v2547, 0
    %v2953 = vsel %vm2714, %v2552, 0
    %v2955 = vsel %vm2714, %v2555, 0
    %v2957 = vsel %vm2714, %v2560, 0
    %v2959 = vsel %vm2714, %v2563, 0
    %v2961 = vsel %vm2714, %v2568, 0
    %v2963 = vsel %vm2714, %v2571, 0
    %v2965 = vsel %vm2714, %v2576, 0
    %v2967 = vsel %vm2714, %v2579, 0
    %v2969 = vsel %vm2714, %v2584, 0
    %v2971 = vsel %vm2714, %v2587, 0
    %v2973 = vsel %vm2714, %v2592, 0
    %v2975 = vsel %vm2714, %v2595, 0
    %v2977 = vsel %vm2714, %v2600, 0
    %v2979 = vsel %vm2714, %v2603, 0
    %v2981 = vsel %vm2714, %v2608, 0
    %v2983 = vsel %vm2714, %v2611, 0
    %v2985 = vsel %vm2714, %v2616, 0
    %2987 = vmatprep.subr.mxu0 0.0
    %2988 = vmatpush1.msra.mxu0 0.0
    %2989 = vmatprep.subr.mxu0 0.0
    %2990 = vmatpush1.msra.mxu0 0.0
    %2991 = vmatprep.subr.mxu0 0.0
    %2992 = vmatpush1.msra.mxu0 0.0
    %2993 = vmatprep.subr.mxu0 0.0
    %2994 = vmatpush1.msra.mxu0 0.0
    %2995 = vmatprep.subr.mxu0 0.0
    %2996 = vmatpush1.msra.mxu0 0.0
    %2997 = vmatprep.subr.mxu0 0.0
    %2998 = vmatpush1.msra.mxu0 0.0
    %2999 = vmatprep.subr.mxu0 0.0
    %3000 = vmatpush1.msra.mxu0 0.0
    %3001 = vmatprep.subr.mxu0 0.0
    %3002 = vmatpush1.msra.mxu0 0.0
    %3003 = vmatprep.subr.mxu0 0.0
    %3004 = vmatpush1.msra.mxu0 0.0
    %3005 = vmatprep.subr.mxu0 0.0
    %3006 = vmatpush1.msra.mxu0 0.0
    %3007 = vmatprep.subr.mxu0 0.0
    %3008 = vmatpush1.msra.mxu0 0.0
    %3009 = vmatprep.subr.mxu0 0.0
    %3010 = vmatpush1.msra.mxu0 0.0
    %3011 = vmatprep.subr.mxu0 0.0
    %3012 = vmatpush1.msra.mxu0 %v2636
    %3013 = vmatprep.subr.mxu0 0.0
    %3014 = vmatpush1.msra.mxu0 %v2635
    %3015 = vmatprep.subr.mxu0 0.0
    %3016 = vmatpush1.msra.mxu0 %v2634
    %3017 = vmatprep.subr.mxu0 0.0
    %3018 = vmatpush1.msra.mxu0 %v2633
    %3019 = vmatprep.subr.mxu0 0.0
    %3020 = vmatpush2.msra.mxu0 0.0
    %3021 = vmatprep.subr.mxu0 0.0
    %3022 = vmatpush2.msra.mxu0 0.0
    %3023 = vmatprep.subr.mxu0 0.0
    %3024 = vmatpush2.msra.mxu0 0.0
    %3025 = vmatprep.subr.mxu0 0.0
    %3026 = vmatpush2.msra.mxu0 0.0
    %3027 = vmatprep.subr.mxu0 0.0
    %3028 = vmatpush2.msra.mxu0 0.0
    %3029 = vmatprep.subr.mxu0 0.0
    %3030 = vmatpush2.msra.mxu0 0.0
    %3031 = vmatprep.subr.mxu0 0.0
    %3032 = vmatpush2.msra.mxu0 0.0
    %3033 = vmatprep.subr.mxu0 0.0
    %3034 = vmatpush2.msra.mxu0 0.0
    %3035 = vmatprep.subr.mxu0 0.0
    %3036 = vmatpush2.msra.mxu0 0.0
    %3037 = vmatprep.subr.mxu0 0.0
    %3038 = vmatpush2.msra.mxu0 0.0
    %3039 = vmatprep.subr.mxu0 0.0
    %3040 = vmatpush2.msra.mxu0 0.0
    %3041 = vmatprep.subr.mxu0 0.0
    %3042 = vmatpush2.msra.mxu0 0.0
    %3043 = vmatprep.subr.mxu0 0.0
    %3044 = vmatpush2.msra.mxu0 0.0
    %3045 = vmatprep.subr.mxu0 0.0
    %3046 = vmatpush2.msra.mxu0 0.0
    %3047 = vmatprep.subr.mxu0 0.0
    %3048 = vmatpush2.msra.mxu0 0.0
    %3049 = vmatprep.subr.mxu0 0.0
    %3050 = vmatpush2.msra.mxu0 0.0
    %3051 = vmatprep.mubr.f32.mxu0 0.0
    %3052 = vmatmul.mubr.f32.gmra.mxu0 %v2941
    %v3053 = vpop.f32.mrf.mxu0
    %v3054 = vadd.f32 %v2828, %v3053
    %v3055 = vpop.f32.mrf.mxu0
    %3056 = vmatprep.mubr.f32.mxu0 0.0
    %3057 = vmatmul.mubr.f32.gmra.mxu0 %v2943
    %v3058 = vpop.f32.mrf.mxu0
    %v3059 = vadd.f32 %v2833, %v3058
    %v3060 = vpop.f32.mrf.mxu0
    %3061 = vmatprep.mubr.f32.mxu0 0.0
    %3062 = vmatmul.mubr.f32.gmra.mxu0 %v2945
    %v3063 = vpop.f32.mrf.mxu0
    %v3064 = vadd.f32 %v2838, %v3063
    %v3065 = vpop.f32.mrf.mxu0
    %3066 = vmatprep.mubr.f32.mxu0 0.0
    %3067 = vmatmul.mubr.f32.gmra.mxu0 %v2947
    %v3068 = vpop.f32.mrf.mxu0
    %v3069 = vadd.f32 %v2843, %v3068
    %v3070 = vpop.f32.mrf.mxu0
    %3071 = vmatprep.mubr.f32.mxu0 0.0
    %3072 = vmatmul.mubr.f32.gmra.mxu0 %v2949
    %v3073 = vpop.f32.mrf.mxu0
    %v3074 = vadd.f32 %v2848, %v3073
    %v3075 = vpop.f32.mrf.mxu0
    %3076 = vmatprep.mubr.f32.mxu0 0.0
    %3077 = vmatmul.mubr.f32.gmra.mxu0 %v2951
    %v3078 = vpop.f32.mrf.mxu0
    %v3079 = vadd.f32 %v2853, %v3078
    %v3080 = vpop.f32.mrf.mxu0
    %3081 = vmatprep.mubr.f32.mxu0 0.0
    %3082 = vmatmul.mubr.f32.gmra.mxu0 %v2953
    %v3083 = vpop.f32.mrf.mxu0
    %v3084 = vadd.f32 %v2858, %v3083
    %v3085 = vpop.f32.mrf.mxu0
    %3086 = vmatprep.mubr.f32.mxu0 0.0
    %3087 = vmatmul.mubr.f32.gmra.mxu0 %v2955
    %v3088 = vpop.f32.mrf.mxu0
    %v3089 = vadd.f32 %v2863, %v3088
    %v3090 = vpop.f32.mrf.mxu0
    %3091 = vmatprep.mubr.f32.mxu0 0.0
    %3092 = vmatmul.mubr.f32.gmra.mxu0 %v2957
    %v3093 = vpop.f32.mrf.mxu0
    %v3094 = vadd.f32 %v2868, %v3093
    %v3095 = vpop.f32.mrf.mxu0
    %3096 = vmatprep.mubr.f32.mxu0 0.0
    %3097 = vmatmul.mubr.f32.gmra.mxu0 %v2959
    %v3098 = vpop.f32.mrf.mxu0
    %v3099 = vadd.f32 %v2873, %v3098
    %v3100 = vpop.f32.mrf.mxu0
    %3101 = vmatprep.mubr.f32.mxu0 0.0
    %3102 = vmatmul.mubr.f32.gmra.mxu0 %v2961
    %v3103 = vpop.f32.mrf.mxu0
    %v3104 = vadd.f32 %v2878, %v3103
    %v3105 = vpop.f32.mrf.mxu0
    %3106 = vmatprep.mubr.f32.mxu0 0.0
    %3107 = vmatmul.mubr.f32.gmra.mxu0 %v2963
    %v3108 = vpop.f32.mrf.mxu0
    %v3109 = vadd.f32 %v2883, %v3108
    %v3110 = vpop.f32.mrf.mxu0
    %3111 = vmatprep.mubr.f32.mxu0 0.0
    %3112 = vmatmul.mubr.f32.gmra.mxu0 %v2965
    %v3113 = vpop.f32.mrf.mxu0
    %v3114 = vadd.f32 %v2888, %v3113
    %v3115 = vpop.f32.mrf.mxu0
    %3116 = vmatprep.mubr.f32.mxu0 0.0
    %3117 = vmatmul.mubr.f32.gmra.mxu0 %v2967
    %v3118 = vpop.f32.mrf.mxu0
    %v3119 = vadd.f32 %v2893, %v3118
    %v3120 = vpop.f32.mrf.mxu0
    %3121 = vmatprep.mubr.f32.mxu0 0.0
    %3122 = vmatmul.mubr.f32.gmra.mxu0 %v2969
    %v3123 = vpop.f32.mrf.mxu0
    %v3124 = vadd.f32 %v2898, %v3123
    %v3125 = vpop.f32.mrf.mxu0
    %3126 = vmatprep.mubr.f32.mxu0 0.0
    %3127 = vmatmul.mubr.f32.gmra.mxu0 %v2971
    %v3128 = vpop.f32.mrf.mxu0
    %v3129 = vadd.f32 %v2903, %v3128
    %v3130 = vpop.f32.mrf.mxu0
    %3131 = vmatprep.mubr.f32.mxu0 0.0
    %3132 = vmatmul.mubr.f32.gmra.mxu0 %v2973
    %v3133 = vpop.f32.mrf.mxu0
    %v3134 = vadd.f32 %v2908, %v3133
    %v3135 = vpop.f32.mrf.mxu0
    %3136 = vmatprep.mubr.f32.mxu0 0.0
    %3137 = vmatmul.mubr.f32.gmra.mxu0 %v2975
    %v3138 = vpop.f32.mrf.mxu0
    %v3139 = vadd.f32 %v2913, %v3138
    %v3140 = vpop.f32.mrf.mxu0
    %3141 = vmatprep.mubr.f32.mxu0 0.0
    %3142 = vmatmul.mubr.f32.gmra.mxu0 %v2977
    %v3143 = vpop.f32.mrf.mxu0
    %v3144 = vadd.f32 %v2918, %v3143
    %v3145 = vpop.f32.mrf.mxu0
    %3146 = vmatprep.mubr.f32.mxu0 0.0
    %3147 = vmatmul.mubr.f32.gmra.mxu0 %v2979
    %v3148 = vpop.f32.mrf.mxu0
    %v3149 = vadd.f32 %v2923, %v3148
    %v3150 = vpop.f32.mrf.mxu0
    %3151 = vmatprep.mubr.f32.mxu0 0.0
    %3152 = vmatmul.mubr.f32.gmra.mxu0 %v2981
    %v3153 = vpop.f32.mrf.mxu0
    %v3154 = vadd.f32 %v2928, %v3153
    %v3155 = vpop.f32.mrf.mxu0
    %3156 = vmatprep.mubr.f32.mxu0 0.0
    %3157 = vmatmul.mubr.f32.gmra.mxu0 %v2983
    %v3158 = vpop.f32.mrf.mxu0
    %v3159 = vadd.f32 %v2933, %v3158
    %v3160 = vpop.f32.mrf.mxu0
    %3161 = vmatprep.mubr.f32.mxu0 0.0
    %3162 = vmatmul.mubr.f32.gmra.mxu0 %v2985
    %v3163 = vpop.f32.mrf.mxu0
    %v3164 = vadd.f32 %v2938, %v3163
    %v3165 = vpop.f32.mrf.mxu0
    %3166 = vdwg.mxu0
    %s3167 = scalar_lea.vmem [#allocation11], 32
    %v3168 = vld [vmem:[%s3167] sm:$0xf]
    %v3169 = vld [vmem:[%s3167 + $0x4] sm:$0xf]
    %v3170 = vld [vmem:[%s3167 + $0x8] sm:$0xf]
    %v3171 = vld [vmem:[%s3167 + $0xc] sm:$0xf]
    %v3172 = vunpack.c.l.bf16 %v3168
    %v3173 = vunpack.c.l.bf16 %v3169
    %v3174 = vunpack.c.l.bf16 %v3170
    %v3175 = vunpack.c.l.bf16 %v3171
    %v3176 = vrot.slane %v2528, 2
    %v3177 = vrot.slane %v2531, 2
    %v3178 = vsel %vm1448, %v3176, %v3177
    %v3179 = vrot.slane %v2536, 2
    %v3180 = vsel %vm1448, %v3177, %v3179
    %v3181 = vrot.slane %v2539, 2
    %v3182 = vsel %vm1448, %v3179, %v3181
    %v3183 = vrot.slane %v2544, 2
    %v3184 = vsel %vm1448, %v3181, %v3183
    %v3185 = vrot.slane %v2547, 2
    %v3186 = vsel %vm1448, %v3183, %v3185
    %v3187 = vrot.slane %v2552, 2
    %v3188 = vsel %vm1448, %v3185, %v3187
    %v3189 = vrot.slane %v2555, 2
    %v3190 = vsel %vm1448, %v3187, %v3189
    %v3191 = vrot.slane %v2560, 2
    %v3192 = vsel %vm1448, %v3189, %v3191
    %v3193 = vrot.slane %v2563, 2
    %v3194 = vsel %vm1448, %v3191, %v3193
    %v3195 = vrot.slane %v2568, 2
    %v3196 = vsel %vm1448, %v3193, %v3195
    %v3197 = vrot.slane %v2571, 2
    %v3198 = vsel %vm1448, %v3195, %v3197
    %v3199 = vrot.slane %v2576, 2
    %v3200 = vsel %vm1448, %v3197, %v3199
    %v3201 = vrot.slane %v2579, 2
    %v3202 = vsel %vm1448, %v3199, %v3201
    %v3203 = vrot.slane %v2584, 2
    %v3204 = vsel %vm1448, %v3201, %v3203
    %v3205 = vrot.slane %v2587, 2
    %v3206 = vsel %vm1448, %v3203, %v3205
    %v3207 = vrot.slane %v2592, 2
    %v3208 = vsel %vm1448, %v3205, %v3207
    %v3209 = vrot.slane %v2595, 2
    %v3210 = vsel %vm1448, %v3207, %v3209
    %v3211 = vrot.slane %v2600, 2
    %v3212 = vsel %vm1448, %v3209, %v3211
    %v3213 = vrot.slane %v2603, 2
    %v3214 = vsel %vm1448, %v3211, %v3213
    %v3215 = vrot.slane %v2608, 2
    %v3216 = vsel %vm1448, %v3213, %v3215
    %v3217 = vrot.slane %v2611, 2
    %v3218 = vsel %vm1448, %v3215, %v3217
    %v3219 = vrot.slane %v2616, 2
    %v3220 = vsel %vm1448, %v3217, %v3219
    %v3221 = vsel %vm2714, %v3178, 0
    %v3223 = vsel %vm2714, %v3180, 0
    %v3225 = vsel %vm2714, %v3182, 0
    %v3227 = vsel %vm2714, %v3184, 0
    %v3229 = vsel %vm2714, %v3186, 0
    %v3231 = vsel %vm2714, %v3188, 0
    %v3233 = vsel %vm2714, %v3190, 0
    %v3235 = vsel %vm2714, %v3192, 0
    %v3237 = vsel %vm2714, %v3194, 0
    %v3239 = vsel %vm2714, %v3196, 0
    %v3241 = vsel %vm2714, %v3198, 0
    %v3243 = vsel %vm2714, %v3200, 0
    %v3245 = vsel %vm2714, %v3202, 0
    %v3247 = vsel %vm2714, %v3204, 0
    %v3249 = vsel %vm2714, %v3206, 0
    %v3251 = vsel %vm2714, %v3208, 0
    %v3253 = vsel %vm2714, %v3210, 0
    %v3255 = vsel %vm2714, %v3212, 0
    %v3257 = vsel %vm2714, %v3214, 0
    %v3259 = vsel %vm2714, %v3216, 0
    %v3261 = vsel %vm2714, %v3218, 0
    %v3263 = vsel %vm2714, %v3220, 0
    %v3265 = vsel %vm2714, %v3219, 0
    %3267 = vmatprep.subr.mxu0 0.0
    %3268 = vmatpush1.msra.mxu0 0.0
    %3269 = vmatprep.subr.mxu0 0.0
    %3270 = vmatpush1.msra.mxu0 0.0
    %3271 = vmatprep.subr.mxu0 0.0
    %3272 = vmatpush1.msra.mxu0 0.0
    %3273 = vmatprep.subr.mxu0 0.0
    %3274 = vmatpush1.msra.mxu0 0.0
    %3275 = vmatprep.subr.mxu0 0.0
    %3276 = vmatpush1.msra.mxu0 0.0
    %3277 = vmatprep.subr.mxu0 0.0
    %3278 = vmatpush1.msra.mxu0 0.0
    %3279 = vmatprep.subr.mxu0 0.0
    %3280 = vmatpush1.msra.mxu0 0.0
    %3281 = vmatprep.subr.mxu0 0.0
    %3282 = vmatpush1.msra.mxu0 0.0
    %3283 = vmatprep.subr.mxu0 0.0
    %3284 = vmatpush1.msra.mxu0 0.0
    %3285 = vmatprep.subr.mxu0 0.0
    %3286 = vmatpush1.msra.mxu0 0.0
    %3287 = vmatprep.subr.mxu0 0.0
    %3288 = vmatpush1.msra.mxu0 0.0
    %3289 = vmatprep.subr.mxu0 0.0
    %3290 = vmatpush1.msra.mxu0 0.0
    %3291 = vmatprep.subr.mxu0 0.0
    %3292 = vmatpush1.msra.mxu0 %v3175
    %3293 = vmatprep.subr.mxu0 0.0
    %3294 = vmatpush1.msra.mxu0 %v3174
    %3295 = vmatprep.subr.mxu0 0.0
    %3296 = vmatpush1.msra.mxu0 %v3173
    %3297 = vmatprep.subr.mxu0 0.0
    %3298 = vmatpush1.msra.mxu0 %v3172
    %3299 = vmatprep.subr.mxu0 0.0
    %3300 = vmatpush2.msra.mxu0 0.0
    %3301 = vmatprep.subr.mxu0 0.0
    %3302 = vmatpush2.msra.mxu0 0.0
    %3303 = vmatprep.subr.mxu0 0.0
    %3304 = vmatpush2.msra.mxu0 0.0
    %3305 = vmatprep.subr.mxu0 0.0
    %3306 = vmatpush2.msra.mxu0 0.0
    %3307 = vmatprep.subr.mxu0 0.0
    %3308 = vmatpush2.msra.mxu0 0.0
    %3309 = vmatprep.subr.mxu0 0.0
    %3310 = vmatpush2.msra.mxu0 0.0
    %3311 = vmatprep.subr.mxu0 0.0
    %3312 = vmatpush2.msra.mxu0 0.0
    %3313 = vmatprep.subr.mxu0 0.0
    %3314 = vmatpush2.msra.mxu0 0.0
    %3315 = vmatprep.subr.mxu0 0.0
    %3316 = vmatpush2.msra.mxu0 0.0
    %3317 = vmatprep.subr.mxu0 0.0
    %3318 = vmatpush2.msra.mxu0 0.0
    %3319 = vmatprep.subr.mxu0 0.0
    %3320 = vmatpush2.msra.mxu0 0.0
    %3321 = vmatprep.subr.mxu0 0.0
    %3322 = vmatpush2.msra.mxu0 0.0
    %3323 = vmatprep.subr.mxu0 0.0
    %3324 = vmatpush2.msra.mxu0 0.0
    %3325 = vmatprep.subr.mxu0 0.0
    %3326 = vmatpush2.msra.mxu0 0.0
    %3327 = vmatprep.subr.mxu0 0.0
    %3328 = vmatpush2.msra.mxu0 0.0
    %3329 = vmatprep.subr.mxu0 0.0
    %3330 = vmatpush2.msra.mxu0 0.0
    %3331 = vmatprep.mubr.f32.mxu0 0.0
    %3332 = vmatmul.mubr.f32.gmra.mxu0 %v3221
    %v3333 = vpop.f32.mrf.mxu0
    %v3334 = vadd.f32 0.0, %v3333
    %v3335 = vpop.f32.mrf.mxu0
    %3336 = vmatprep.mubr.f32.mxu0 0.0
    %3337 = vmatmul.mubr.f32.gmra.mxu0 %v3223
    %v3338 = vpop.f32.mrf.mxu0
    %v3339 = vadd.f32 0.0, %v3338
    %v3340 = vpop.f32.mrf.mxu0
    %3341 = vmatprep.mubr.f32.mxu0 0.0
    %3342 = vmatmul.mubr.f32.gmra.mxu0 %v3225
    %v3343 = vpop.f32.mrf.mxu0
    %v3344 = vadd.f32 0.0, %v3343
    %v3345 = vpop.f32.mrf.mxu0
    %3346 = vmatprep.mubr.f32.mxu0 0.0
    %3347 = vmatmul.mubr.f32.gmra.mxu0 %v3227
    %v3348 = vpop.f32.mrf.mxu0
    %v3349 = vadd.f32 0.0, %v3348
    %v3350 = vpop.f32.mrf.mxu0
    %3351 = vmatprep.mubr.f32.mxu0 0.0
    %3352 = vmatmul.mubr.f32.gmra.mxu0 %v3229
    %v3353 = vpop.f32.mrf.mxu0
    %v3354 = vadd.f32 0.0, %v3353
    %v3355 = vpop.f32.mrf.mxu0
    %3356 = vmatprep.mubr.f32.mxu0 0.0
    %3357 = vmatmul.mubr.f32.gmra.mxu0 %v3231
    %v3358 = vpop.f32.mrf.mxu0
    %v3359 = vadd.f32 0.0, %v3358
    %v3360 = vpop.f32.mrf.mxu0
    %3361 = vmatprep.mubr.f32.mxu0 0.0
    %3362 = vmatmul.mubr.f32.gmra.mxu0 %v3233
    %v3363 = vpop.f32.mrf.mxu0
    %v3364 = vadd.f32 0.0, %v3363
    %v3365 = vpop.f32.mrf.mxu0
    %3366 = vmatprep.mubr.f32.mxu0 0.0
    %3367 = vmatmul.mubr.f32.gmra.mxu0 %v3235
    %v3368 = vpop.f32.mrf.mxu0
    %v3369 = vadd.f32 0.0, %v3368
    %v3370 = vpop.f32.mrf.mxu0
    %3371 = vmatprep.mubr.f32.mxu0 0.0
    %3372 = vmatmul.mubr.f32.gmra.mxu0 %v3237
    %v3373 = vpop.f32.mrf.mxu0
    %v3374 = vadd.f32 0.0, %v3373
    %v3375 = vpop.f32.mrf.mxu0
    %3376 = vmatprep.mubr.f32.mxu0 0.0
    %3377 = vmatmul.mubr.f32.gmra.mxu0 %v3239
    %v3378 = vpop.f32.mrf.mxu0
    %v3379 = vadd.f32 0.0, %v3378
    %v3380 = vpop.f32.mrf.mxu0
    %3381 = vmatprep.mubr.f32.mxu0 0.0
    %3382 = vmatmul.mubr.f32.gmra.mxu0 %v3241
    %v3383 = vpop.f32.mrf.mxu0
    %v3384 = vadd.f32 0.0, %v3383
    %v3385 = vpop.f32.mrf.mxu0
    %3386 = vmatprep.mubr.f32.mxu0 0.0
    %3387 = vmatmul.mubr.f32.gmra.mxu0 %v3243
    %v3388 = vpop.f32.mrf.mxu0
    %v3389 = vadd.f32 0.0, %v3388
    %v3390 = vpop.f32.mrf.mxu0
    %3391 = vmatprep.mubr.f32.mxu0 0.0
    %3392 = vmatmul.mubr.f32.gmra.mxu0 %v3245
    %v3393 = vpop.f32.mrf.mxu0
    %v3394 = vadd.f32 0.0, %v3393
    %v3395 = vpop.f32.mrf.mxu0
    %3396 = vmatprep.mubr.f32.mxu0 0.0
    %3397 = vmatmul.mubr.f32.gmra.mxu0 %v3247
    %v3398 = vpop.f32.mrf.mxu0
    %v3399 = vadd.f32 0.0, %v3398
    %v3400 = vpop.f32.mrf.mxu0
    %3401 = vmatprep.mubr.f32.mxu0 0.0
    %3402 = vmatmul.mubr.f32.gmra.mxu0 %v3249
    %v3403 = vpop.f32.mrf.mxu0
    %v3404 = vadd.f32 0.0, %v3403
    %v3405 = vpop.f32.mrf.mxu0
    %3406 = vmatprep.mubr.f32.mxu0 0.0
    %3407 = vmatmul.mubr.f32.gmra.mxu0 %v3251
    %v3408 = vpop.f32.mrf.mxu0
    %v3409 = vadd.f32 0.0, %v3408
    %v3410 = vpop.f32.mrf.mxu0
    %3411 = vmatprep.mubr.f32.mxu0 0.0
    %3412 = vmatmul.mubr.f32.gmra.mxu0 %v3253
    %v3413 = vpop.f32.mrf.mxu0
    %v3414 = vadd.f32 0.0, %v3413
    %v3415 = vpop.f32.mrf.mxu0
    %3416 = vmatprep.mubr.f32.mxu0 0.0
    %3417 = vmatmul.mubr.f32.gmra.mxu0 %v3255
    %v3418 = vpop.f32.mrf.mxu0
    %v3419 = vadd.f32 0.0, %v3418
    %v3420 = vpop.f32.mrf.mxu0
    %3421 = vmatprep.mubr.f32.mxu0 0.0
    %3422 = vmatmul.mubr.f32.gmra.mxu0 %v3257
    %v3423 = vpop.f32.mrf.mxu0
    %v3424 = vadd.f32 0.0, %v3423
    %v3425 = vpop.f32.mrf.mxu0
    %3426 = vmatprep.mubr.f32.mxu0 0.0
    %3427 = vmatmul.mubr.f32.gmra.mxu0 %v3259
    %v3428 = vpop.f32.mrf.mxu0
    %v3429 = vadd.f32 0.0, %v3428
    %v3430 = vpop.f32.mrf.mxu0
    %3431 = vmatprep.mubr.f32.mxu0 0.0
    %3432 = vmatmul.mubr.f32.gmra.mxu0 %v3261
    %v3433 = vpop.f32.mrf.mxu0
    %v3434 = vadd.f32 0.0, %v3433
    %v3435 = vpop.f32.mrf.mxu0
    %3436 = vmatprep.mubr.f32.mxu0 0.0
    %3437 = vmatmul.mubr.f32.gmra.mxu0 %v3263
    %v3438 = vpop.f32.mrf.mxu0
    %v3439 = vadd.f32 0.0, %v3438
    %v3440 = vpop.f32.mrf.mxu0
    %3441 = vmatprep.mubr.f32.mxu0 0.0
    %3442 = vmatmul.mubr.f32.gmra.mxu0 %v3265
    %v3443 = vpop.f32.mrf.mxu0
    %v3444 = vadd.f32 0.0, %v3443
    %v3445 = vpop.f32.mrf.mxu0
    %3446 = vdwg.mxu0
    %v3447 = vadd.f32 %v3054, %v3334
    %v3448 = vadd.f32 %v3059, %v3339
    %v3449 = vadd.f32 %v3064, %v3344
    %v3450 = vadd.f32 %v3069, %v3349
    %v3451 = vadd.f32 %v3074, %v3354
    %v3452 = vadd.f32 %v3079, %v3359
    %v3453 = vadd.f32 %v3084, %v3364
    %v3454 = vadd.f32 %v3089, %v3369
    %v3455 = vadd.f32 %v3094, %v3374
    %v3456 = vadd.f32 %v3099, %v3379
    %v3457 = vadd.f32 %v3104, %v3384
    %v3458 = vadd.f32 %v3109, %v3389
    %v3459 = vadd.f32 %v3114, %v3394
    %v3460 = vadd.f32 %v3119, %v3399
    %v3461 = vadd.f32 %v3124, %v3404
    %v3462 = vadd.f32 %v3129, %v3409
    %v3463 = vadd.f32 %v3134, %v3414
    %v3464 = vadd.f32 %v3139, %v3419
    %v3465 = vadd.f32 %v3144, %v3424
    %v3466 = vadd.f32 %v3149, %v3429
    %v3467 = vadd.f32 %v3154, %v3434
    %v3468 = vadd.f32 %v3159, %v3439
    %v3469 = vadd.f32 %v3164, %v3444
    %s3470 = scalar_lea.vmem [#allocation11], 48
    %v3471 = vld [vmem:[%s3470] sm:$0xf]
    %v3472 = vld [vmem:[%s3470 + $0x4] sm:$0xf]
    %v3473 = vld [vmem:[%s3470 + $0x8] sm:$0xf]
    %v3474 = vld [vmem:[%s3470 + $0xc] sm:$0xf]
    %v3475 = vunpack.c.l.bf16 %v3471
    %v3476 = vunpack.c.l.bf16 %v3472
    %v3477 = vunpack.c.l.bf16 %v3473
    %v3478 = vunpack.c.l.bf16 %v3474
    %v3480 = vrot.slane %v2619, 2
    %v3481 = vsel %vm1448, %v3219, %v3480
    %v3482 = vsel %vm2714, %v3481, 0
    %v3484 = vsel %vm2714, %v3480, 0
    %3486 = vmatprep.subr.mxu0 0.0
    %3487 = vmatpush1.msra.mxu0 0.0
    %3488 = vmatprep.subr.mxu0 0.0
    %3489 = vmatpush1.msra.mxu0 0.0
    %3490 = vmatprep.subr.mxu0 0.0
    %3491 = vmatpush1.msra.mxu0 0.0
    %3492 = vmatprep.subr.mxu0 0.0
    %3493 = vmatpush1.msra.mxu0 0.0
    %3494 = vmatprep.subr.mxu0 0.0
    %3495 = vmatpush1.msra.mxu0 0.0
    %3496 = vmatprep.subr.mxu0 0.0
    %3497 = vmatpush1.msra.mxu0 0.0
    %3498 = vmatprep.subr.mxu0 0.0
    %3499 = vmatpush1.msra.mxu0 0.0
    %3500 = vmatprep.subr.mxu0 0.0
    %3501 = vmatpush1.msra.mxu0 0.0
    %3502 = vmatprep.subr.mxu0 0.0
    %3503 = vmatpush1.msra.mxu0 0.0
    %3504 = vmatprep.subr.mxu0 0.0
    %3505 = vmatpush1.msra.mxu0 0.0
    %3506 = vmatprep.subr.mxu0 0.0
    %3507 = vmatpush1.msra.mxu0 0.0
    %3508 = vmatprep.subr.mxu0 0.0
    %3509 = vmatpush1.msra.mxu0 0.0
    %3510 = vmatprep.subr.mxu0 0.0
    %3511 = vmatpush1.msra.mxu0 %v3478
    %3512 = vmatprep.subr.mxu0 0.0
    %3513 = vmatpush1.msra.mxu0 %v3477
    %3514 = vmatprep.subr.mxu0 0.0
    %3515 = vmatpush1.msra.mxu0 %v3476
    %3516 = vmatprep.subr.mxu0 0.0
    %3517 = vmatpush1.msra.mxu0 %v3475
    %3518 = vmatprep.subr.mxu0 0.0
    %3519 = vmatpush2.msra.mxu0 0.0
    %3520 = vmatprep.subr.mxu0 0.0
    %3521 = vmatpush2.msra.mxu0 0.0
    %3522 = vmatprep.subr.mxu0 0.0
    %3523 = vmatpush2.msra.mxu0 0.0
    %3524 = vmatprep.subr.mxu0 0.0
    %3525 = vmatpush2.msra.mxu0 0.0
    %3526 = vmatprep.subr.mxu0 0.0
    %3527 = vmatpush2.msra.mxu0 0.0
    %3528 = vmatprep.subr.mxu0 0.0
    %3529 = vmatpush2.msra.mxu0 0.0
    %3530 = vmatprep.subr.mxu0 0.0
    %3531 = vmatpush2.msra.mxu0 0.0
    %3532 = vmatprep.subr.mxu0 0.0
    %3533 = vmatpush2.msra.mxu0 0.0
    %3534 = vmatprep.subr.mxu0 0.0
    %3535 = vmatpush2.msra.mxu0 0.0
    %3536 = vmatprep.subr.mxu0 0.0
    %3537 = vmatpush2.msra.mxu0 0.0
    %3538 = vmatprep.subr.mxu0 0.0
    %3539 = vmatpush2.msra.mxu0 0.0
    %3540 = vmatprep.subr.mxu0 0.0
    %3541 = vmatpush2.msra.mxu0 0.0
    %3542 = vmatprep.subr.mxu0 0.0
    %3543 = vmatpush2.msra.mxu0 0.0
    %3544 = vmatprep.subr.mxu0 0.0
    %3545 = vmatpush2.msra.mxu0 0.0
    %3546 = vmatprep.subr.mxu0 0.0
    %3547 = vmatpush2.msra.mxu0 0.0
    %3548 = vmatprep.subr.mxu0 0.0
    %3549 = vmatpush2.msra.mxu0 0.0
    %3550 = vmatprep.mubr.f32.mxu0 0.0
    %3551 = vmatmul.mubr.f32.gmra.mxu0 %v3223
    %v3552 = vpop.f32.mrf.mxu0
    %v3553 = vadd.f32 0.0, %v3552
    %v3554 = vpop.f32.mrf.mxu0
    %3555 = vmatprep.mubr.f32.mxu0 0.0
    %3556 = vmatmul.mubr.f32.gmra.mxu0 %v3225
    %v3557 = vpop.f32.mrf.mxu0
    %v3558 = vadd.f32 0.0, %v3557
    %v3559 = vpop.f32.mrf.mxu0
    %3560 = vmatprep.mubr.f32.mxu0 0.0
    %3561 = vmatmul.mubr.f32.gmra.mxu0 %v3227
    %v3562 = vpop.f32.mrf.mxu0
    %v3563 = vadd.f32 0.0, %v3562
    %v3564 = vpop.f32.mrf.mxu0
    %3565 = vmatprep.mubr.f32.mxu0 0.0
    %3566 = vmatmul.mubr.f32.gmra.mxu0 %v3229
    %v3567 = vpop.f32.mrf.mxu0
    %v3568 = vadd.f32 0.0, %v3567
    %v3569 = vpop.f32.mrf.mxu0
    %3570 = vmatprep.mubr.f32.mxu0 0.0
    %3571 = vmatmul.mubr.f32.gmra.mxu0 %v3231
    %v3572 = vpop.f32.mrf.mxu0
    %v3573 = vadd.f32 0.0, %v3572
    %v3574 = vpop.f32.mrf.mxu0
    %3575 = vmatprep.mubr.f32.mxu0 0.0
    %3576 = vmatmul.mubr.f32.gmra.mxu0 %v3233
    %v3577 = vpop.f32.mrf.mxu0
    %v3578 = vadd.f32 0.0, %v3577
    %v3579 = vpop.f32.mrf.mxu0
    %3580 = vmatprep.mubr.f32.mxu0 0.0
    %3581 = vmatmul.mubr.f32.gmra.mxu0 %v3235
    %v3582 = vpop.f32.mrf.mxu0
    %v3583 = vadd.f32 0.0, %v3582
    %v3584 = vpop.f32.mrf.mxu0
    %3585 = vmatprep.mubr.f32.mxu0 0.0
    %3586 = vmatmul.mubr.f32.gmra.mxu0 %v3237
    %v3587 = vpop.f32.mrf.mxu0
    %v3588 = vadd.f32 0.0, %v3587
    %v3589 = vpop.f32.mrf.mxu0
    %3590 = vmatprep.mubr.f32.mxu0 0.0
    %3591 = vmatmul.mubr.f32.gmra.mxu0 %v3239
    %v3592 = vpop.f32.mrf.mxu0
    %v3593 = vadd.f32 0.0, %v3592
    %v3594 = vpop.f32.mrf.mxu0
    %3595 = vmatprep.mubr.f32.mxu0 0.0
    %3596 = vmatmul.mubr.f32.gmra.mxu0 %v3241
    %v3597 = vpop.f32.mrf.mxu0
    %v3598 = vadd.f32 0.0, %v3597
    %v3599 = vpop.f32.mrf.mxu0
    %3600 = vmatprep.mubr.f32.mxu0 0.0
    %3601 = vmatmul.mubr.f32.gmra.mxu0 %v3243
    %v3602 = vpop.f32.mrf.mxu0
    %v3603 = vadd.f32 0.0, %v3602
    %v3604 = vpop.f32.mrf.mxu0
    %3605 = vmatprep.mubr.f32.mxu0 0.0
    %3606 = vmatmul.mubr.f32.gmra.mxu0 %v3245
    %v3607 = vpop.f32.mrf.mxu0
    %v3608 = vadd.f32 0.0, %v3607
    %v3609 = vpop.f32.mrf.mxu0
    %3610 = vmatprep.mubr.f32.mxu0 0.0
    %3611 = vmatmul.mubr.f32.gmra.mxu0 %v3247
    %v3612 = vpop.f32.mrf.mxu0
    %v3613 = vadd.f32 0.0, %v3612
    %v3614 = vpop.f32.mrf.mxu0
    %3615 = vmatprep.mubr.f32.mxu0 0.0
    %3616 = vmatmul.mubr.f32.gmra.mxu0 %v3249
    %v3617 = vpop.f32.mrf.mxu0
    %v3618 = vadd.f32 0.0, %v3617
    %v3619 = vpop.f32.mrf.mxu0
    %3620 = vmatprep.mubr.f32.mxu0 0.0
    %3621 = vmatmul.mubr.f32.gmra.mxu0 %v3251
    %v3622 = vpop.f32.mrf.mxu0
    %v3623 = vadd.f32 0.0, %v3622
    %v3624 = vpop.f32.mrf.mxu0
    %3625 = vmatprep.mubr.f32.mxu0 0.0
    %3626 = vmatmul.mubr.f32.gmra.mxu0 %v3253
    %v3627 = vpop.f32.mrf.mxu0
    %v3628 = vadd.f32 0.0, %v3627
    %v3629 = vpop.f32.mrf.mxu0
    %3630 = vmatprep.mubr.f32.mxu0 0.0
    %3631 = vmatmul.mubr.f32.gmra.mxu0 %v3255
    %v3632 = vpop.f32.mrf.mxu0
    %v3633 = vadd.f32 0.0, %v3632
    %v3634 = vpop.f32.mrf.mxu0
    %3635 = vmatprep.mubr.f32.mxu0 0.0
    %3636 = vmatmul.mubr.f32.gmra.mxu0 %v3257
    %v3637 = vpop.f32.mrf.mxu0
    %v3638 = vadd.f32 0.0, %v3637
    %v3639 = vpop.f32.mrf.mxu0
    %3640 = vmatprep.mubr.f32.mxu0 0.0
    %3641 = vmatmul.mubr.f32.gmra.mxu0 %v3259
    %v3642 = vpop.f32.mrf.mxu0
    %v3643 = vadd.f32 0.0, %v3642
    %v3644 = vpop.f32.mrf.mxu0
    %3645 = vmatprep.mubr.f32.mxu0 0.0
    %3646 = vmatmul.mubr.f32.gmra.mxu0 %v3261
    %v3647 = vpop.f32.mrf.mxu0
    %v3648 = vadd.f32 0.0, %v3647
    %v3649 = vpop.f32.mrf.mxu0
    %3650 = vmatprep.mubr.f32.mxu0 0.0
    %3651 = vmatmul.mubr.f32.gmra.mxu0 %v3263
    %v3652 = vpop.f32.mrf.mxu0
    %v3653 = vadd.f32 0.0, %v3652
    %v3654 = vpop.f32.mrf.mxu0
    %3655 = vmatprep.mubr.f32.mxu0 0.0
    %3656 = vmatmul.mubr.f32.gmra.mxu0 %v3482
    %v3657 = vpop.f32.mrf.mxu0
    %v3658 = vadd.f32 0.0, %v3657
    %v3659 = vpop.f32.mrf.mxu0
    %3660 = vmatprep.mubr.f32.mxu0 0.0
    %3661 = vmatmul.mubr.f32.gmra.mxu0 %v3484
    %v3662 = vpop.f32.mrf.mxu0
    %v3663 = vadd.f32 0.0, %v3662
    %v3664 = vpop.f32.mrf.mxu0
    %3665 = vdwg.mxu0
    %v3666 = vadd.f32 %v3447, %v3553
    %v3667 = vadd.f32 %v3448, %v3558
    %v3668 = vadd.f32 %v3449, %v3563
    %v3669 = vadd.f32 %v3450, %v3568
    %v3670 = vadd.f32 %v3451, %v3573
    %v3671 = vadd.f32 %v3452, %v3578
    %v3672 = vadd.f32 %v3453, %v3583
    %v3673 = vadd.f32 %v3454, %v3588
    %v3674 = vadd.f32 %v3455, %v3593
    %v3675 = vadd.f32 %v3456, %v3598
    %v3676 = vadd.f32 %v3457, %v3603
    %v3677 = vadd.f32 %v3458, %v3608
    %v3678 = vadd.f32 %v3459, %v3613
    %v3679 = vadd.f32 %v3460, %v3618
    %v3680 = vadd.f32 %v3461, %v3623
    %v3681 = vadd.f32 %v3462, %v3628
    %v3682 = vadd.f32 %v3463, %v3633
    %v3683 = vadd.f32 %v3464, %v3638
    %v3684 = vadd.f32 %v3465, %v3643
    %v3685 = vadd.f32 %v3466, %v3648
    %v3686 = vadd.f32 %v3467, %v3653
    %v3687 = vadd.f32 %v3468, %v3658
    %v3688 = vadd.f32 %v3469, %v3663
    %s3689 = scalar_lea.vmem [#allocation11], 64
    %v3690 = vld [vmem:[%s3689] sm:$0xf]
    %v3691 = vld [vmem:[%s3689 + $0x4] sm:$0xf]
    %v3692 = vld [vmem:[%s3689 + $0x8] sm:$0xf]
    %v3693 = vld [vmem:[%s3689 + $0xc] sm:$0xf]
    %v3694 = vunpack.c.l.bf16 %v3690
    %v3695 = vunpack.c.l.bf16 %v3691
    %v3696 = vunpack.c.l.bf16 %v3692
    %v3697 = vunpack.c.l.bf16 %v3693
    %vm3698 = vcmask 1044480
    %v3699 = vrot.slane %v2531, 3
    %v3700 = vrot.slane %v2536, 3
    %v3701 = vsel %vm3698, %v3699, %v3700
    %v3702 = vrot.slane %v2539, 3
    %v3703 = vsel %vm3698, %v3700, %v3702
    %v3704 = vrot.slane %v2544, 3
    %v3705 = vsel %vm3698, %v3702, %v3704
    %v3706 = vrot.slane %v2547, 3
    %v3707 = vsel %vm3698, %v3704, %v3706
    %v3708 = vrot.slane %v2552, 3
    %v3709 = vsel %vm3698, %v3706, %v3708
    %v3710 = vrot.slane %v2555, 3
    %v3711 = vsel %vm3698, %v3708, %v3710
    %v3712 = vrot.slane %v2560, 3
    %v3713 = vsel %vm3698, %v3710, %v3712
    %v3714 = vrot.slane %v2563, 3
    %v3715 = vsel %vm3698, %v3712, %v3714
    %v3716 = vrot.slane %v2568, 3
    %v3717 = vsel %vm3698, %v3714, %v3716
    %v3718 = vrot.slane %v2571, 3
    %v3719 = vsel %vm3698, %v3716, %v3718
    %v3720 = vrot.slane %v2576, 3
    %v3721 = vsel %vm3698, %v3718, %v3720
    %v3722 = vrot.slane %v2579, 3
    %v3723 = vsel %vm3698, %v3720, %v3722
    %v3724 = vrot.slane %v2584, 3
    %v3725 = vsel %vm3698, %v3722, %v3724
    %v3726 = vrot.slane %v2587, 3
    %v3727 = vsel %vm3698, %v3724, %v3726
    %v3728 = vrot.slane %v2592, 3
    %v3729 = vsel %vm3698, %v3726, %v3728
    %v3730 = vrot.slane %v2595, 3
    %v3731 = vsel %vm3698, %v3728, %v3730
    %v3732 = vrot.slane %v2600, 3
    %v3733 = vsel %vm3698, %v3730, %v3732
    %v3734 = vrot.slane %v2603, 3
    %v3735 = vsel %vm3698, %v3732, %v3734
    %v3736 = vrot.slane %v2608, 3
    %v3737 = vsel %vm3698, %v3734, %v3736
    %v3738 = vrot.slane %v2611, 3
    %v3739 = vsel %vm3698, %v3736, %v3738
    %v3740 = vrot.slane %v2616, 3
    %v3741 = vsel %vm3698, %v3738, %v3740
    %v3742 = vrot.slane %v2619, 3
    %v3743 = vsel %vm3698, %v3740, %v3742
    %v3744 = vsel %vm2714, %v3701, 0
    %v3746 = vsel %vm2714, %v3703, 0
    %v3748 = vsel %vm2714, %v3705, 0
    %v3750 = vsel %vm2714, %v3707, 0
    %v3752 = vsel %vm2714, %v3709, 0
    %v3754 = vsel %vm2714, %v3711, 0
    %v3756 = vsel %vm2714, %v3713, 0
    %v3758 = vsel %vm2714, %v3715, 0
    %v3760 = vsel %vm2714, %v3717, 0
    %v3762 = vsel %vm2714, %v3719, 0
    %v3764 = vsel %vm2714, %v3721, 0
    %v3766 = vsel %vm2714, %v3723, 0
    %v3768 = vsel %vm2714, %v3725, 0
    %v3770 = vsel %vm2714, %v3727, 0
    %v3772 = vsel %vm2714, %v3729, 0
    %v3774 = vsel %vm2714, %v3731, 0
    %v3776 = vsel %vm2714, %v3733, 0
    %v3778 = vsel %vm2714, %v3735, 0
    %v3780 = vsel %vm2714, %v3737, 0
    %v3782 = vsel %vm2714, %v3739, 0
    %v3784 = vsel %vm2714, %v3741, 0
    %v3786 = vsel %vm2714, %v3743, 0
    %v3788 = vsel %vm2714, %v3742, 0
    %3790 = vmatprep.subr.mxu0 0.0
    %3791 = vmatpush1.msra.mxu0 0.0
    %3792 = vmatprep.subr.mxu0 0.0
    %3793 = vmatpush1.msra.mxu0 0.0
    %3794 = vmatprep.subr.mxu0 0.0
    %3795 = vmatpush1.msra.mxu0 0.0
    %3796 = vmatprep.subr.mxu0 0.0
    %3797 = vmatpush1.msra.mxu0 0.0
    %3798 = vmatprep.subr.mxu0 0.0
    %3799 = vmatpush1.msra.mxu0 0.0
    %3800 = vmatprep.subr.mxu0 0.0
    %3801 = vmatpush1.msra.mxu0 0.0
    %3802 = vmatprep.subr.mxu0 0.0
    %3803 = vmatpush1.msra.mxu0 0.0
    %3804 = vmatprep.subr.mxu0 0.0
    %3805 = vmatpush1.msra.mxu0 0.0
    %3806 = vmatprep.subr.mxu0 0.0
    %3807 = vmatpush1.msra.mxu0 0.0
    %3808 = vmatprep.subr.mxu0 0.0
    %3809 = vmatpush1.msra.mxu0 0.0
    %3810 = vmatprep.subr.mxu0 0.0
    %3811 = vmatpush1.msra.mxu0 0.0
    %3812 = vmatprep.subr.mxu0 0.0
    %3813 = vmatpush1.msra.mxu0 0.0
    %3814 = vmatprep.subr.mxu0 0.0
    %3815 = vmatpush1.msra.mxu0 %v3697
    %3816 = vmatprep.subr.mxu0 0.0
    %3817 = vmatpush1.msra.mxu0 %v3696
    %3818 = vmatprep.subr.mxu0 0.0
    %3819 = vmatpush1.msra.mxu0 %v3695
    %3820 = vmatprep.subr.mxu0 0.0
    %3821 = vmatpush1.msra.mxu0 %v3694
    %3822 = vmatprep.subr.mxu0 0.0
    %3823 = vmatpush2.msra.mxu0 0.0
    %3824 = vmatprep.subr.mxu0 0.0
    %3825 = vmatpush2.msra.mxu0 0.0
    %3826 = vmatprep.subr.mxu0 0.0
    %3827 = vmatpush2.msra.mxu0 0.0
    %3828 = vmatprep.subr.mxu0 0.0
    %3829 = vmatpush2.msra.mxu0 0.0
    %3830 = vmatprep.subr.mxu0 0.0
    %3831 = vmatpush2.msra.mxu0 0.0
    %3832 = vmatprep.subr.mxu0 0.0
    %3833 = vmatpush2.msra.mxu0 0.0
    %3834 = vmatprep.subr.mxu0 0.0
    %3835 = vmatpush2.msra.mxu0 0.0
    %3836 = vmatprep.subr.mxu0 0.0
    %3837 = vmatpush2.msra.mxu0 0.0
    %3838 = vmatprep.subr.mxu0 0.0
    %3839 = vmatpush2.msra.mxu0 0.0
    %3840 = vmatprep.subr.mxu0 0.0
    %3841 = vmatpush2.msra.mxu0 0.0
    %3842 = vmatprep.subr.mxu0 0.0
    %3843 = vmatpush2.msra.mxu0 0.0
    %3844 = vmatprep.subr.mxu0 0.0
    %3845 = vmatpush2.msra.mxu0 0.0
    %3846 = vmatprep.subr.mxu0 0.0
    %3847 = vmatpush2.msra.mxu0 0.0
    %3848 = vmatprep.subr.mxu0 0.0
    %3849 = vmatpush2.msra.mxu0 0.0
    %3850 = vmatprep.subr.mxu0 0.0
    %3851 = vmatpush2.msra.mxu0 0.0
    %3852 = vmatprep.subr.mxu0 0.0
    %3853 = vmatpush2.msra.mxu0 0.0
    %3854 = vmatprep.mubr.f32.mxu0 0.0
    %3855 = vmatmul.mubr.f32.gmra.mxu0 %v3744
    %v3856 = vpop.f32.mrf.mxu0
    %v3857 = vadd.f32 0.0, %v3856
    %v3858 = vpop.f32.mrf.mxu0
    %3859 = vmatprep.mubr.f32.mxu0 0.0
    %3860 = vmatmul.mubr.f32.gmra.mxu0 %v3746
    %v3861 = vpop.f32.mrf.mxu0
    %v3862 = vadd.f32 0.0, %v3861
    %v3863 = vpop.f32.mrf.mxu0
    %3864 = vmatprep.mubr.f32.mxu0 0.0
    %3865 = vmatmul.mubr.f32.gmra.mxu0 %v3748
    %v3866 = vpop.f32.mrf.mxu0
    %v3867 = vadd.f32 0.0, %v3866
    %v3868 = vpop.f32.mrf.mxu0
    %3869 = vmatprep.mubr.f32.mxu0 0.0
    %3870 = vmatmul.mubr.f32.gmra.mxu0 %v3750
    %v3871 = vpop.f32.mrf.mxu0
    %v3872 = vadd.f32 0.0, %v3871
    %v3873 = vpop.f32.mrf.mxu0
    %3874 = vmatprep.mubr.f32.mxu0 0.0
    %3875 = vmatmul.mubr.f32.gmra.mxu0 %v3752
    %v3876 = vpop.f32.mrf.mxu0
    %v3877 = vadd.f32 0.0, %v3876
    %v3878 = vpop.f32.mrf.mxu0
    %3879 = vmatprep.mubr.f32.mxu0 0.0
    %3880 = vmatmul.mubr.f32.gmra.mxu0 %v3754
    %v3881 = vpop.f32.mrf.mxu0
    %v3882 = vadd.f32 0.0, %v3881
    %v3883 = vpop.f32.mrf.mxu0
    %3884 = vmatprep.mubr.f32.mxu0 0.0
    %3885 = vmatmul.mubr.f32.gmra.mxu0 %v3756
    %v3886 = vpop.f32.mrf.mxu0
    %v3887 = vadd.f32 0.0, %v3886
    %v3888 = vpop.f32.mrf.mxu0
    %3889 = vmatprep.mubr.f32.mxu0 0.0
    %3890 = vmatmul.mubr.f32.gmra.mxu0 %v3758
    %v3891 = vpop.f32.mrf.mxu0
    %v3892 = vadd.f32 0.0, %v3891
    %v3893 = vpop.f32.mrf.mxu0
    %3894 = vmatprep.mubr.f32.mxu0 0.0
    %3895 = vmatmul.mubr.f32.gmra.mxu0 %v3760
    %v3896 = vpop.f32.mrf.mxu0
    %v3897 = vadd.f32 0.0, %v3896
    %v3898 = vpop.f32.mrf.mxu0
    %3899 = vmatprep.mubr.f32.mxu0 0.0
    %3900 = vmatmul.mubr.f32.gmra.mxu0 %v3762
    %v3901 = vpop.f32.mrf.mxu0
    %v3902 = vadd.f32 0.0, %v3901
    %v3903 = vpop.f32.mrf.mxu0
    %3904 = vmatprep.mubr.f32.mxu0 0.0
    %3905 = vmatmul.mubr.f32.gmra.mxu0 %v3764
    %v3906 = vpop.f32.mrf.mxu0
    %v3907 = vadd.f32 0.0, %v3906
    %v3908 = vpop.f32.mrf.mxu0
    %3909 = vmatprep.mubr.f32.mxu0 0.0
    %3910 = vmatmul.mubr.f32.gmra.mxu0 %v3766
    %v3911 = vpop.f32.mrf.mxu0
    %v3912 = vadd.f32 0.0, %v3911
    %v3913 = vpop.f32.mrf.mxu0
    %3914 = vmatprep.mubr.f32.mxu0 0.0
    %3915 = vmatmul.mubr.f32.gmra.mxu0 %v3768
    %v3916 = vpop.f32.mrf.mxu0
    %v3917 = vadd.f32 0.0, %v3916
    %v3918 = vpop.f32.mrf.mxu0
    %3919 = vmatprep.mubr.f32.mxu0 0.0
    %3920 = vmatmul.mubr.f32.gmra.mxu0 %v3770
    %v3921 = vpop.f32.mrf.mxu0
    %v3922 = vadd.f32 0.0, %v3921
    %v3923 = vpop.f32.mrf.mxu0
    %3924 = vmatprep.mubr.f32.mxu0 0.0
    %3925 = vmatmul.mubr.f32.gmra.mxu0 %v3772
    %v3926 = vpop.f32.mrf.mxu0
    %v3927 = vadd.f32 0.0, %v3926
    %v3928 = vpop.f32.mrf.mxu0
    %3929 = vmatprep.mubr.f32.mxu0 0.0
    %3930 = vmatmul.mubr.f32.gmra.mxu0 %v3774
    %v3931 = vpop.f32.mrf.mxu0
    %v3932 = vadd.f32 0.0, %v3931
    %v3933 = vpop.f32.mrf.mxu0
    %3934 = vmatprep.mubr.f32.mxu0 0.0
    %3935 = vmatmul.mubr.f32.gmra.mxu0 %v3776
    %v3936 = vpop.f32.mrf.mxu0
    %v3937 = vadd.f32 0.0, %v3936
    %v3938 = vpop.f32.mrf.mxu0
    %3939 = vmatprep.mubr.f32.mxu0 0.0
    %3940 = vmatmul.mubr.f32.gmra.mxu0 %v3778
    %v3941 = vpop.f32.mrf.mxu0
    %v3942 = vadd.f32 0.0, %v3941
    %v3943 = vpop.f32.mrf.mxu0
    %3944 = vmatprep.mubr.f32.mxu0 0.0
    %3945 = vmatmul.mubr.f32.gmra.mxu0 %v3780
    %v3946 = vpop.f32.mrf.mxu0
    %v3947 = vadd.f32 0.0, %v3946
    %v3948 = vpop.f32.mrf.mxu0
    %3949 = vmatprep.mubr.f32.mxu0 0.0
    %3950 = vmatmul.mubr.f32.gmra.mxu0 %v3782
    %v3951 = vpop.f32.mrf.mxu0
    %v3952 = vadd.f32 0.0, %v3951
    %v3953 = vpop.f32.mrf.mxu0
    %3954 = vmatprep.mubr.f32.mxu0 0.0
    %3955 = vmatmul.mubr.f32.gmra.mxu0 %v3784
    %v3956 = vpop.f32.mrf.mxu0
    %v3957 = vadd.f32 0.0, %v3956
    %v3958 = vpop.f32.mrf.mxu0
    %3959 = vmatprep.mubr.f32.mxu0 0.0
    %3960 = vmatmul.mubr.f32.gmra.mxu0 %v3786
    %v3961 = vpop.f32.mrf.mxu0
    %v3962 = vadd.f32 0.0, %v3961
    %v3963 = vpop.f32.mrf.mxu0
    %3964 = vmatprep.mubr.f32.mxu0 0.0
    %3965 = vmatmul.mubr.f32.gmra.mxu0 %v3788
    %v3966 = vpop.f32.mrf.mxu0
    %v3967 = vadd.f32 0.0, %v3966
    %v3968 = vpop.f32.mrf.mxu0
    %3969 = vdwg.mxu0
    %v3970 = vadd.f32 %v3666, %v3857
    %v3971 = vadd.f32 %v3667, %v3862
    %v3972 = vadd.f32 %v3668, %v3867
    %v3973 = vadd.f32 %v3669, %v3872
    %v3974 = vadd.f32 %v3670, %v3877
    %v3975 = vadd.f32 %v3671, %v3882
    %v3976 = vadd.f32 %v3672, %v3887
    %v3977 = vadd.f32 %v3673, %v3892
    %v3978 = vadd.f32 %v3674, %v3897
    %v3979 = vadd.f32 %v3675, %v3902
    %v3980 = vadd.f32 %v3676, %v3907
    %v3981 = vadd.f32 %v3677, %v3912
    %v3982 = vadd.f32 %v3678, %v3917
    %v3983 = vadd.f32 %v3679, %v3922
    %v3984 = vadd.f32 %v3680, %v3927
    %v3985 = vadd.f32 %v3681, %v3932
    %v3986 = vadd.f32 %v3682, %v3937
    %v3987 = vadd.f32 %v3683, %v3942
    %v3988 = vadd.f32 %v3684, %v3947
    %v3989 = vadd.f32 %v3685, %v3952
    %v3990 = vadd.f32 %v3686, %v3957
    %v3991 = vadd.f32 %v3687, %v3962
    %v3992 = vadd.f32 %v3688, %v3967
    %s3993 = scalar_lea.vmem [#allocation11], 80
    %v3994 = vld [vmem:[%s3993] sm:$0xf]
    %v3995 = vld [vmem:[%s3993 + $0x4] sm:$0xf]
    %v3996 = vld [vmem:[%s3993 + $0x8] sm:$0xf]
    %v3997 = vld [vmem:[%s3993 + $0xc] sm:$0xf]
    %v3998 = vunpack.c.l.bf16 %v3994
    %v3999 = vunpack.c.l.bf16 %v3995
    %v4000 = vunpack.c.l.bf16 %v3996
    %v4001 = vunpack.c.l.bf16 %v3997
    %vm4002 = vcmask 1043456
    %v4003 = vrot.slane %v2531, 4
    %v4004 = vrot.slane %v2536, 4
    %v4005 = vsel %vm4002, %v4003, %v4004
    %v4006 = vrot.slane %v2539, 4
    %v4007 = vsel %vm4002, %v4004, %v4006
    %v4008 = vrot.slane %v2544, 4
    %v4009 = vsel %vm4002, %v4006, %v4008
    %v4010 = vrot.slane %v2547, 4
    %v4011 = vsel %vm4002, %v4008, %v4010
    %v4012 = vrot.slane %v2552, 4
    %v4013 = vsel %vm4002, %v4010, %v4012
    %v4014 = vrot.slane %v2555, 4
    %v4015 = vsel %vm4002, %v4012, %v4014
    %v4016 = vrot.slane %v2560, 4
    %v4017 = vsel %vm4002, %v4014, %v4016
    %v4018 = vrot.slane %v2563, 4
    %v4019 = vsel %vm4002, %v4016, %v4018
    %v4020 = vrot.slane %v2568, 4
    %v4021 = vsel %vm4002, %v4018, %v4020
    %v4022 = vrot.slane %v2571, 4
    %v4023 = vsel %vm4002, %v4020, %v4022
    %v4024 = vrot.slane %v2576, 4
    %v4025 = vsel %vm4002, %v4022, %v4024
    %v4026 = vrot.slane %v2579, 4
    %v4027 = vsel %vm4002, %v4024, %v4026
    %v4028 = vrot.slane %v2584, 4
    %v4029 = vsel %vm4002, %v4026, %v4028
    %v4030 = vrot.slane %v2587, 4
    %v4031 = vsel %vm4002, %v4028, %v4030
    %v4032 = vrot.slane %v2592, 4
    %v4033 = vsel %vm4002, %v4030, %v4032
    %v4034 = vrot.slane %v2595, 4
    %v4035 = vsel %vm4002, %v4032, %v4034
    %v4036 = vrot.slane %v2600, 4
    %v4037 = vsel %vm4002, %v4034, %v4036
    %v4038 = vrot.slane %v2603, 4
    %v4039 = vsel %vm4002, %v4036, %v4038
    %v4040 = vrot.slane %v2608, 4
    %v4041 = vsel %vm4002, %v4038, %v4040
    %v4042 = vrot.slane %v2611, 4
    %v4043 = vsel %vm4002, %v4040, %v4042
    %v4044 = vrot.slane %v2616, 4
    %v4045 = vsel %vm4002, %v4042, %v4044
    %v4046 = vrot.slane %v2619, 4
    %v4047 = vsel %vm4002, %v4044, %v4046
    %v4048 = vsel %vm2714, %v4005, 0
    %v4050 = vsel %vm2714, %v4007, 0
    %v4052 = vsel %vm2714, %v4009, 0
    %v4054 = vsel %vm2714, %v4011, 0
    %v4056 = vsel %vm2714, %v4013, 0
    %v4058 = vsel %vm2714, %v4015, 0
    %v4060 = vsel %vm2714, %v4017, 0
    %v4062 = vsel %vm2714, %v4019, 0
    %v4064 = vsel %vm2714, %v4021, 0
    %v4066 = vsel %vm2714, %v4023, 0
    %v4068 = vsel %vm2714, %v4025, 0
    %v4070 = vsel %vm2714, %v4027, 0
    %v4072 = vsel %vm2714, %v4029, 0
    %v4074 = vsel %vm2714, %v4031, 0
    %v4076 = vsel %vm2714, %v4033, 0
    %v4078 = vsel %vm2714, %v4035, 0
    %v4080 = vsel %vm2714, %v4037, 0
    %v4082 = vsel %vm2714, %v4039, 0
    %v4084 = vsel %vm2714, %v4041, 0
    %v4086 = vsel %vm2714, %v4043, 0
    %v4088 = vsel %vm2714, %v4045, 0
    %v4090 = vsel %vm2714, %v4047, 0
    %v4092 = vsel %vm2714, %v4046, 0
    %4094 = vmatprep.subr.mxu0 0.0
    %4095 = vmatpush1.msra.mxu0 0.0
    %4096 = vmatprep.subr.mxu0 0.0
    %4097 = vmatpush1.msra.mxu0 0.0
    %4098 = vmatprep.subr.mxu0 0.0
    %4099 = vmatpush1.msra.mxu0 0.0
    %4100 = vmatprep.subr.mxu0 0.0
    %4101 = vmatpush1.msra.mxu0 0.0
    %4102 = vmatprep.subr.mxu0 0.0
    %4103 = vmatpush1.msra.mxu0 0.0
    %4104 = vmatprep.subr.mxu0 0.0
    %4105 = vmatpush1.msra.mxu0 0.0
    %4106 = vmatprep.subr.mxu0 0.0
    %4107 = vmatpush1.msra.mxu0 0.0
    %4108 = vmatprep.subr.mxu0 0.0
    %4109 = vmatpush1.msra.mxu0 0.0
    %4110 = vmatprep.subr.mxu0 0.0
    %4111 = vmatpush1.msra.mxu0 0.0
    %4112 = vmatprep.subr.mxu0 0.0
    %4113 = vmatpush1.msra.mxu0 0.0
    %4114 = vmatprep.subr.mxu0 0.0
    %4115 = vmatpush1.msra.mxu0 0.0
    %4116 = vmatprep.subr.mxu0 0.0
    %4117 = vmatpush1.msra.mxu0 0.0
    %4118 = vmatprep.subr.mxu0 0.0
    %4119 = vmatpush1.msra.mxu0 %v4001
    %4120 = vmatprep.subr.mxu0 0.0
    %4121 = vmatpush1.msra.mxu0 %v4000
    %4122 = vmatprep.subr.mxu0 0.0
    %4123 = vmatpush1.msra.mxu0 %v3999
    %4124 = vmatprep.subr.mxu0 0.0
    %4125 = vmatpush1.msra.mxu0 %v3998
    %4126 = vmatprep.subr.mxu0 0.0
    %4127 = vmatpush2.msra.mxu0 0.0
    %4128 = vmatprep.subr.mxu0 0.0
    %4129 = vmatpush2.msra.mxu0 0.0
    %4130 = vmatprep.subr.mxu0 0.0
    %4131 = vmatpush2.msra.mxu0 0.0
    %4132 = vmatprep.subr.mxu0 0.0
    %4133 = vmatpush2.msra.mxu0 0.0
    %4134 = vmatprep.subr.mxu0 0.0
    %4135 = vmatpush2.msra.mxu0 0.0
    %4136 = vmatprep.subr.mxu0 0.0
    %4137 = vmatpush2.msra.mxu0 0.0
    %4138 = vmatprep.subr.mxu0 0.0
    %4139 = vmatpush2.msra.mxu0 0.0
    %4140 = vmatprep.subr.mxu0 0.0
    %4141 = vmatpush2.msra.mxu0 0.0
    %4142 = vmatprep.subr.mxu0 0.0
    %4143 = vmatpush2.msra.mxu0 0.0
    %4144 = vmatprep.subr.mxu0 0.0
    %4145 = vmatpush2.msra.mxu0 0.0
    %4146 = vmatprep.subr.mxu0 0.0
    %4147 = vmatpush2.msra.mxu0 0.0
    %4148 = vmatprep.subr.mxu0 0.0
    %4149 = vmatpush2.msra.mxu0 0.0
    %4150 = vmatprep.subr.mxu0 0.0
    %4151 = vmatpush2.msra.mxu0 0.0
    %4152 = vmatprep.subr.mxu0 0.0
    %4153 = vmatpush2.msra.mxu0 0.0
    %4154 = vmatprep.subr.mxu0 0.0
    %4155 = vmatpush2.msra.mxu0 0.0
    %4156 = vmatprep.subr.mxu0 0.0
    %4157 = vmatpush2.msra.mxu0 0.0
    %4158 = vmatprep.mubr.f32.mxu0 0.0
    %4159 = vmatmul.mubr.f32.gmra.mxu0 %v4048
    %v4160 = vpop.f32.mrf.mxu0
    %v4161 = vadd.f32 0.0, %v4160
    %v4162 = vpop.f32.mrf.mxu0
    %4163 = vmatprep.mubr.f32.mxu0 0.0
    %4164 = vmatmul.mubr.f32.gmra.mxu0 %v4050
    %v4165 = vpop.f32.mrf.mxu0
    %v4166 = vadd.f32 0.0, %v4165
    %v4167 = vpop.f32.mrf.mxu0
    %4168 = vmatprep.mubr.f32.mxu0 0.0
    %4169 = vmatmul.mubr.f32.gmra.mxu0 %v4052
    %v4170 = vpop.f32.mrf.mxu0
    %v4171 = vadd.f32 0.0, %v4170
    %v4172 = vpop.f32.mrf.mxu0
    %4173 = vmatprep.mubr.f32.mxu0 0.0
    %4174 = vmatmul.mubr.f32.gmra.mxu0 %v4054
    %v4175 = vpop.f32.mrf.mxu0
    %v4176 = vadd.f32 0.0, %v4175
    %v4177 = vpop.f32.mrf.mxu0
    %4178 = vmatprep.mubr.f32.mxu0 0.0
    %4179 = vmatmul.mubr.f32.gmra.mxu0 %v4056
    %v4180 = vpop.f32.mrf.mxu0
    %v4181 = vadd.f32 0.0, %v4180
    %v4182 = vpop.f32.mrf.mxu0
    %4183 = vmatprep.mubr.f32.mxu0 0.0
    %4184 = vmatmul.mubr.f32.gmra.mxu0 %v4058
    %v4185 = vpop.f32.mrf.mxu0
    %v4186 = vadd.f32 0.0, %v4185
    %v4187 = vpop.f32.mrf.mxu0
    %4188 = vmatprep.mubr.f32.mxu0 0.0
    %4189 = vmatmul.mubr.f32.gmra.mxu0 %v4060
    %v4190 = vpop.f32.mrf.mxu0
    %v4191 = vadd.f32 0.0, %v4190
    %v4192 = vpop.f32.mrf.mxu0
    %4193 = vmatprep.mubr.f32.mxu0 0.0
    %4194 = vmatmul.mubr.f32.gmra.mxu0 %v4062
    %v4195 = vpop.f32.mrf.mxu0
    %v4196 = vadd.f32 0.0, %v4195
    %v4197 = vpop.f32.mrf.mxu0
    %4198 = vmatprep.mubr.f32.mxu0 0.0
    %4199 = vmatmul.mubr.f32.gmra.mxu0 %v4064
    %v4200 = vpop.f32.mrf.mxu0
    %v4201 = vadd.f32 0.0, %v4200
    %v4202 = vpop.f32.mrf.mxu0
    %4203 = vmatprep.mubr.f32.mxu0 0.0
    %4204 = vmatmul.mubr.f32.gmra.mxu0 %v4066
    %v4205 = vpop.f32.mrf.mxu0
    %v4206 = vadd.f32 0.0, %v4205
    %v4207 = vpop.f32.mrf.mxu0
    %4208 = vmatprep.mubr.f32.mxu0 0.0
    %4209 = vmatmul.mubr.f32.gmra.mxu0 %v4068
    %v4210 = vpop.f32.mrf.mxu0
    %v4211 = vadd.f32 0.0, %v4210
    %v4212 = vpop.f32.mrf.mxu0
    %4213 = vmatprep.mubr.f32.mxu0 0.0
    %4214 = vmatmul.mubr.f32.gmra.mxu0 %v4070
    %v4215 = vpop.f32.mrf.mxu0
    %v4216 = vadd.f32 0.0, %v4215
    %v4217 = vpop.f32.mrf.mxu0
    %4218 = vmatprep.mubr.f32.mxu0 0.0
    %4219 = vmatmul.mubr.f32.gmra.mxu0 %v4072
    %v4220 = vpop.f32.mrf.mxu0
    %v4221 = vadd.f32 0.0, %v4220
    %v4222 = vpop.f32.mrf.mxu0
    %4223 = vmatprep.mubr.f32.mxu0 0.0
    %4224 = vmatmul.mubr.f32.gmra.mxu0 %v4074
    %v4225 = vpop.f32.mrf.mxu0
    %v4226 = vadd.f32 0.0, %v4225
    %v4227 = vpop.f32.mrf.mxu0
    %4228 = vmatprep.mubr.f32.mxu0 0.0
    %4229 = vmatmul.mubr.f32.gmra.mxu0 %v4076
    %v4230 = vpop.f32.mrf.mxu0
    %v4231 = vadd.f32 0.0, %v4230
    %v4232 = vpop.f32.mrf.mxu0
    %4233 = vmatprep.mubr.f32.mxu0 0.0
    %4234 = vmatmul.mubr.f32.gmra.mxu0 %v4078
    %v4235 = vpop.f32.mrf.mxu0
    %v4236 = vadd.f32 0.0, %v4235
    %v4237 = vpop.f32.mrf.mxu0
    %4238 = vmatprep.mubr.f32.mxu0 0.0
    %4239 = vmatmul.mubr.f32.gmra.mxu0 %v4080
    %v4240 = vpop.f32.mrf.mxu0
    %v4241 = vadd.f32 0.0, %v4240
    %v4242 = vpop.f32.mrf.mxu0
    %4243 = vmatprep.mubr.f32.mxu0 0.0
    %4244 = vmatmul.mubr.f32.gmra.mxu0 %v4082
    %v4245 = vpop.f32.mrf.mxu0
    %v4246 = vadd.f32 0.0, %v4245
    %v4247 = vpop.f32.mrf.mxu0
    %4248 = vmatprep.mubr.f32.mxu0 0.0
    %4249 = vmatmul.mubr.f32.gmra.mxu0 %v4084
    %v4250 = vpop.f32.mrf.mxu0
    %v4251 = vadd.f32 0.0, %v4250
    %v4252 = vpop.f32.mrf.mxu0
    %4253 = vmatprep.mubr.f32.mxu0 0.0
    %4254 = vmatmul.mubr.f32.gmra.mxu0 %v4086
    %v4255 = vpop.f32.mrf.mxu0
    %v4256 = vadd.f32 0.0, %v4255
    %v4257 = vpop.f32.mrf.mxu0
    %4258 = vmatprep.mubr.f32.mxu0 0.0
    %4259 = vmatmul.mubr.f32.gmra.mxu0 %v4088
    %v4260 = vpop.f32.mrf.mxu0
    %v4261 = vadd.f32 0.0, %v4260
    %v4262 = vpop.f32.mrf.mxu0
    %4263 = vmatprep.mubr.f32.mxu0 0.0
    %4264 = vmatmul.mubr.f32.gmra.mxu0 %v4090
    %v4265 = vpop.f32.mrf.mxu0
    %v4266 = vadd.f32 0.0, %v4265
    %v4267 = vpop.f32.mrf.mxu0
    %4268 = vmatprep.mubr.f32.mxu0 0.0
    %4269 = vmatmul.mubr.f32.gmra.mxu0 %v4092
    %v4270 = vpop.f32.mrf.mxu0
    %v4271 = vadd.f32 0.0, %v4270
    %v4272 = vpop.f32.mrf.mxu0
    %4273 = vdwg.mxu0
    %v4274 = vadd.f32 %v3970, %v4161
    %v4275 = vadd.f32 %v3971, %v4166
    %v4276 = vadd.f32 %v3972, %v4171
    %v4277 = vadd.f32 %v3973, %v4176
    %v4278 = vadd.f32 %v3974, %v4181
    %v4279 = vadd.f32 %v3975, %v4186
    %v4280 = vadd.f32 %v3976, %v4191
    %v4281 = vadd.f32 %v3977, %v4196
    %v4282 = vadd.f32 %v3978, %v4201
    %v4283 = vadd.f32 %v3979, %v4206
    %v4284 = vadd.f32 %v3980, %v4211
    %v4285 = vadd.f32 %v3981, %v4216
    %v4286 = vadd.f32 %v3982, %v4221
    %v4287 = vadd.f32 %v3983, %v4226
    %v4288 = vadd.f32 %v3984, %v4231
    %v4289 = vadd.f32 %v3985, %v4236
    %v4290 = vadd.f32 %v3986, %v4241
    %v4291 = vadd.f32 %v3987, %v4246
    %v4292 = vadd.f32 %v3988, %v4251
    %v4293 = vadd.f32 %v3989, %v4256
    %v4294 = vadd.f32 %v3990, %v4261
    %v4295 = vadd.f32 %v3991, %v4266
    %v4296 = vadd.f32 %v3992, %v4271
    %s4297 = scalar_lea.vmem [#allocation11], 96
    %v4298 = vld [vmem:[%s4297] sm:$0xf]
    %v4299 = vld [vmem:[%s4297 + $0x4] sm:$0xf]
    %v4300 = vld [vmem:[%s4297 + $0x8] sm:$0xf]
    %v4301 = vld [vmem:[%s4297 + $0xc] sm:$0xf]
    %v4302 = vunpack.c.l.bf16 %v4298
    %v4303 = vunpack.c.l.bf16 %v4299
    %v4304 = vunpack.c.l.bf16 %v4300
    %v4305 = vunpack.c.l.bf16 %v4301
    %v4307 = vrot.slane %v2624, 4
    %v4308 = vsel %vm4002, %v4046, %v4307
    %v4309 = vsel %vm2714, %v4308, 0
    %v4311 = vsel %vm2714, %v4307, 0
    %4313 = vmatprep.subr.mxu0 0.0
    %4314 = vmatpush1.msra.mxu0 0.0
    %4315 = vmatprep.subr.mxu0 0.0
    %4316 = vmatpush1.msra.mxu0 0.0
    %4317 = vmatprep.subr.mxu0 0.0
    %4318 = vmatpush1.msra.mxu0 0.0
    %4319 = vmatprep.subr.mxu0 0.0
    %4320 = vmatpush1.msra.mxu0 0.0
    %4321 = vmatprep.subr.mxu0 0.0
    %4322 = vmatpush1.msra.mxu0 0.0
    %4323 = vmatprep.subr.mxu0 0.0
    %4324 = vmatpush1.msra.mxu0 0.0
    %4325 = vmatprep.subr.mxu0 0.0
    %4326 = vmatpush1.msra.mxu0 0.0
    %4327 = vmatprep.subr.mxu0 0.0
    %4328 = vmatpush1.msra.mxu0 0.0
    %4329 = vmatprep.subr.mxu0 0.0
    %4330 = vmatpush1.msra.mxu0 0.0
    %4331 = vmatprep.subr.mxu0 0.0
    %4332 = vmatpush1.msra.mxu0 0.0
    %4333 = vmatprep.subr.mxu0 0.0
    %4334 = vmatpush1.msra.mxu0 0.0
    %4335 = vmatprep.subr.mxu0 0.0
    %4336 = vmatpush1.msra.mxu0 0.0
    %4337 = vmatprep.subr.mxu0 0.0
    %4338 = vmatpush1.msra.mxu0 %v4305
    %4339 = vmatprep.subr.mxu0 0.0
    %4340 = vmatpush1.msra.mxu0 %v4304
    %4341 = vmatprep.subr.mxu0 0.0
    %4342 = vmatpush1.msra.mxu0 %v4303
    %4343 = vmatprep.subr.mxu0 0.0
    %4344 = vmatpush1.msra.mxu0 %v4302
    %4345 = vmatprep.subr.mxu0 0.0
    %4346 = vmatpush2.msra.mxu0 0.0
    %4347 = vmatprep.subr.mxu0 0.0
    %4348 = vmatpush2.msra.mxu0 0.0
    %4349 = vmatprep.subr.mxu0 0.0
    %4350 = vmatpush2.msra.mxu0 0.0
    %4351 = vmatprep.subr.mxu0 0.0
    %4352 = vmatpush2.msra.mxu0 0.0
    %4353 = vmatprep.subr.mxu0 0.0
    %4354 = vmatpush2.msra.mxu0 0.0
    %4355 = vmatprep.subr.mxu0 0.0
    %4356 = vmatpush2.msra.mxu0 0.0
    %4357 = vmatprep.subr.mxu0 0.0
    %4358 = vmatpush2.msra.mxu0 0.0
    %4359 = vmatprep.subr.mxu0 0.0
    %4360 = vmatpush2.msra.mxu0 0.0
    %4361 = vmatprep.subr.mxu0 0.0
    %4362 = vmatpush2.msra.mxu0 0.0
    %4363 = vmatprep.subr.mxu0 0.0
    %4364 = vmatpush2.msra.mxu0 0.0
    %4365 = vmatprep.subr.mxu0 0.0
    %4366 = vmatpush2.msra.mxu0 0.0
    %4367 = vmatprep.subr.mxu0 0.0
    %4368 = vmatpush2.msra.mxu0 0.0
    %4369 = vmatprep.subr.mxu0 0.0
    %4370 = vmatpush2.msra.mxu0 0.0
    %4371 = vmatprep.subr.mxu0 0.0
    %4372 = vmatpush2.msra.mxu0 0.0
    %4373 = vmatprep.subr.mxu0 0.0
    %4374 = vmatpush2.msra.mxu0 0.0
    %4375 = vmatprep.subr.mxu0 0.0
    %4376 = vmatpush2.msra.mxu0 0.0
    %4377 = vmatprep.mubr.f32.mxu0 0.0
    %4378 = vmatmul.mubr.f32.gmra.mxu0 %v4050
    %v4379 = vpop.f32.mrf.mxu0
    %v4380 = vadd.f32 0.0, %v4379
    %v4381 = vpop.f32.mrf.mxu0
    %4382 = vmatprep.mubr.f32.mxu0 0.0
    %4383 = vmatmul.mubr.f32.gmra.mxu0 %v4052
    %v4384 = vpop.f32.mrf.mxu0
    %v4385 = vadd.f32 0.0, %v4384
    %v4386 = vpop.f32.mrf.mxu0
    %4387 = vmatprep.mubr.f32.mxu0 0.0
    %4388 = vmatmul.mubr.f32.gmra.mxu0 %v4054
    %v4389 = vpop.f32.mrf.mxu0
    %v4390 = vadd.f32 0.0, %v4389
    %v4391 = vpop.f32.mrf.mxu0
    %4392 = vmatprep.mubr.f32.mxu0 0.0
    %4393 = vmatmul.mubr.f32.gmra.mxu0 %v4056
    %v4394 = vpop.f32.mrf.mxu0
    %v4395 = vadd.f32 0.0, %v4394
    %v4396 = vpop.f32.mrf.mxu0
    %4397 = vmatprep.mubr.f32.mxu0 0.0
    %4398 = vmatmul.mubr.f32.gmra.mxu0 %v4058
    %v4399 = vpop.f32.mrf.mxu0
    %v4400 = vadd.f32 0.0, %v4399
    %v4401 = vpop.f32.mrf.mxu0
    %4402 = vmatprep.mubr.f32.mxu0 0.0
    %4403 = vmatmul.mubr.f32.gmra.mxu0 %v4060
    %v4404 = vpop.f32.mrf.mxu0
    %v4405 = vadd.f32 0.0, %v4404
    %v4406 = vpop.f32.mrf.mxu0
    %4407 = vmatprep.mubr.f32.mxu0 0.0
    %4408 = vmatmul.mubr.f32.gmra.mxu0 %v4062
    %v4409 = vpop.f32.mrf.mxu0
    %v4410 = vadd.f32 0.0, %v4409
    %v4411 = vpop.f32.mrf.mxu0
    %4412 = vmatprep.mubr.f32.mxu0 0.0
    %4413 = vmatmul.mubr.f32.gmra.mxu0 %v4064
    %v4414 = vpop.f32.mrf.mxu0
    %v4415 = vadd.f32 0.0, %v4414
    %v4416 = vpop.f32.mrf.mxu0
    %4417 = vmatprep.mubr.f32.mxu0 0.0
    %4418 = vmatmul.mubr.f32.gmra.mxu0 %v4066
    %v4419 = vpop.f32.mrf.mxu0
    %v4420 = vadd.f32 0.0, %v4419
    %v4421 = vpop.f32.mrf.mxu0
    %4422 = vmatprep.mubr.f32.mxu0 0.0
    %4423 = vmatmul.mubr.f32.gmra.mxu0 %v4068
    %v4424 = vpop.f32.mrf.mxu0
    %v4425 = vadd.f32 0.0, %v4424
    %v4426 = vpop.f32.mrf.mxu0
    %4427 = vmatprep.mubr.f32.mxu0 0.0
    %4428 = vmatmul.mubr.f32.gmra.mxu0 %v4070
    %v4429 = vpop.f32.mrf.mxu0
    %v4430 = vadd.f32 0.0, %v4429
    %v4431 = vpop.f32.mrf.mxu0
    %4432 = vmatprep.mubr.f32.mxu0 0.0
    %4433 = vmatmul.mubr.f32.gmra.mxu0 %v4072
    %v4434 = vpop.f32.mrf.mxu0
    %v4435 = vadd.f32 0.0, %v4434
    %v4436 = vpop.f32.mrf.mxu0
    %4437 = vmatprep.mubr.f32.mxu0 0.0
    %4438 = vmatmul.mubr.f32.gmra.mxu0 %v4074
    %v4439 = vpop.f32.mrf.mxu0
    %v4440 = vadd.f32 0.0, %v4439
    %v4441 = vpop.f32.mrf.mxu0
    %4442 = vmatprep.mubr.f32.mxu0 0.0
    %4443 = vmatmul.mubr.f32.gmra.mxu0 %v4076
    %v4444 = vpop.f32.mrf.mxu0
    %v4445 = vadd.f32 0.0, %v4444
    %v4446 = vpop.f32.mrf.mxu0
    %4447 = vmatprep.mubr.f32.mxu0 0.0
    %4448 = vmatmul.mubr.f32.gmra.mxu0 %v4078
    %v4449 = vpop.f32.mrf.mxu0
    %v4450 = vadd.f32 0.0, %v4449
    %v4451 = vpop.f32.mrf.mxu0
    %4452 = vmatprep.mubr.f32.mxu0 0.0
    %4453 = vmatmul.mubr.f32.gmra.mxu0 %v4080
    %v4454 = vpop.f32.mrf.mxu0
    %v4455 = vadd.f32 0.0, %v4454
    %v4456 = vpop.f32.mrf.mxu0
    %4457 = vmatprep.mubr.f32.mxu0 0.0
    %4458 = vmatmul.mubr.f32.gmra.mxu0 %v4082
    %v4459 = vpop.f32.mrf.mxu0
    %v4460 = vadd.f32 0.0, %v4459
    %v4461 = vpop.f32.mrf.mxu0
    %4462 = vmatprep.mubr.f32.mxu0 0.0
    %4463 = vmatmul.mubr.f32.gmra.mxu0 %v4084
    %v4464 = vpop.f32.mrf.mxu0
    %v4465 = vadd.f32 0.0, %v4464
    %v4466 = vpop.f32.mrf.mxu0
    %4467 = vmatprep.mubr.f32.mxu0 0.0
    %4468 = vmatmul.mubr.f32.gmra.mxu0 %v4086
    %v4469 = vpop.f32.mrf.mxu0
    %v4470 = vadd.f32 0.0, %v4469
    %v4471 = vpop.f32.mrf.mxu0
    %4472 = vmatprep.mubr.f32.mxu0 0.0
    %4473 = vmatmul.mubr.f32.gmra.mxu0 %v4088
    %v4474 = vpop.f32.mrf.mxu0
    %v4475 = vadd.f32 0.0, %v4474
    %v4476 = vpop.f32.mrf.mxu0
    %4477 = vmatprep.mubr.f32.mxu0 0.0
    %4478 = vmatmul.mubr.f32.gmra.mxu0 %v4090
    %v4479 = vpop.f32.mrf.mxu0
    %v4480 = vadd.f32 0.0, %v4479
    %v4481 = vpop.f32.mrf.mxu0
    %4482 = vmatprep.mubr.f32.mxu0 0.0
    %4483 = vmatmul.mubr.f32.gmra.mxu0 %v4309
    %v4484 = vpop.f32.mrf.mxu0
    %v4485 = vadd.f32 0.0, %v4484
    %v4486 = vpop.f32.mrf.mxu0
    %4487 = vmatprep.mubr.f32.mxu0 0.0
    %4488 = vmatmul.mubr.f32.gmra.mxu0 %v4311
    %v4489 = vpop.f32.mrf.mxu0
    %v4490 = vadd.f32 0.0, %v4489
    %v4491 = vpop.f32.mrf.mxu0
    %4492 = vdwg.mxu0
    %v4493 = vadd.f32 %v4274, %v4380
    %v4494 = vadd.f32 %v4275, %v4385
    %v4495 = vadd.f32 %v4276, %v4390
    %v4496 = vadd.f32 %v4277, %v4395
    %v4497 = vadd.f32 %v4278, %v4400
    %v4498 = vadd.f32 %v4279, %v4405
    %v4499 = vadd.f32 %v4280, %v4410
    %v4500 = vadd.f32 %v4281, %v4415
    %v4501 = vadd.f32 %v4282, %v4420
    %v4502 = vadd.f32 %v4283, %v4425
    %v4503 = vadd.f32 %v4284, %v4430
    %v4504 = vadd.f32 %v4285, %v4435
    %v4505 = vadd.f32 %v4286, %v4440
    %v4506 = vadd.f32 %v4287, %v4445
    %v4507 = vadd.f32 %v4288, %v4450
    %v4508 = vadd.f32 %v4289, %v4455
    %v4509 = vadd.f32 %v4290, %v4460
    %v4510 = vadd.f32 %v4291, %v4465
    %v4511 = vadd.f32 %v4292, %v4470
    %v4512 = vadd.f32 %v4293, %v4475
    %v4513 = vadd.f32 %v4294, %v4480
    %v4514 = vadd.f32 %v4295, %v4485
    %v4515 = vadd.f32 %v4296, %v4490
    %s4516 = scalar_lea.vmem [#allocation11], 112
    %v4517 = vld [vmem:[%s4516] sm:$0xf]
    %v4518 = vld [vmem:[%s4516 + $0x4] sm:$0xf]
    %v4519 = vld [vmem:[%s4516 + $0x8] sm:$0xf]
    %v4520 = vld [vmem:[%s4516 + $0xc] sm:$0xf]
    %v4521 = vunpack.c.l.bf16 %v4517
    %v4522 = vunpack.c.l.bf16 %v4518
    %v4523 = vunpack.c.l.bf16 %v4519
    %v4524 = vunpack.c.l.bf16 %v4520
    %vm4525 = vcmask 1042432
    %v4526 = vrot.slane %v2536, 5
    %v4527 = vrot.slane %v2539, 5
    %v4528 = vsel %vm4525, %v4526, %v4527
    %v4529 = vrot.slane %v2544, 5
    %v4530 = vsel %vm4525, %v4527, %v4529
    %v4531 = vrot.slane %v2547, 5
    %v4532 = vsel %vm4525, %v4529, %v4531
    %v4533 = vrot.slane %v2552, 5
    %v4534 = vsel %vm4525, %v4531, %v4533
    %v4535 = vrot.slane %v2555, 5
    %v4536 = vsel %vm4525, %v4533, %v4535
    %v4537 = vrot.slane %v2560, 5
    %v4538 = vsel %vm4525, %v4535, %v4537
    %v4539 = vrot.slane %v2563, 5
    %v4540 = vsel %vm4525, %v4537, %v4539
    %v4541 = vrot.slane %v2568, 5
    %v4542 = vsel %vm4525, %v4539, %v4541
    %v4543 = vrot.slane %v2571, 5
    %v4544 = vsel %vm4525, %v4541, %v4543
    %v4545 = vrot.slane %v2576, 5
    %v4546 = vsel %vm4525, %v4543, %v4545
    %v4547 = vrot.slane %v2579, 5
    %v4548 = vsel %vm4525, %v4545, %v4547
    %v4549 = vrot.slane %v2584, 5
    %v4550 = vsel %vm4525, %v4547, %v4549
    %v4551 = vrot.slane %v2587, 5
    %v4552 = vsel %vm4525, %v4549, %v4551
    %v4553 = vrot.slane %v2592, 5
    %v4554 = vsel %vm4525, %v4551, %v4553
    %v4555 = vrot.slane %v2595, 5
    %v4556 = vsel %vm4525, %v4553, %v4555
    %v4557 = vrot.slane %v2600, 5
    %v4558 = vsel %vm4525, %v4555, %v4557
    %v4559 = vrot.slane %v2603, 5
    %v4560 = vsel %vm4525, %v4557, %v4559
    %v4561 = vrot.slane %v2608, 5
    %v4562 = vsel %vm4525, %v4559, %v4561
    %v4563 = vrot.slane %v2611, 5
    %v4564 = vsel %vm4525, %v4561, %v4563
    %v4565 = vrot.slane %v2616, 5
    %v4566 = vsel %vm4525, %v4563, %v4565
    %v4567 = vrot.slane %v2619, 5
    %v4568 = vsel %vm4525, %v4565, %v4567
    %v4569 = vrot.slane %v2624, 5
    %v4570 = vsel %vm4525, %v4567, %v4569
    %v4571 = vsel %vm2714, %v4528, 0
    %v4573 = vsel %vm2714, %v4530, 0
    %v4575 = vsel %vm2714, %v4532, 0
    %v4577 = vsel %vm2714, %v4534, 0
    %v4579 = vsel %vm2714, %v4536, 0
    %v4581 = vsel %vm2714, %v4538, 0
    %v4583 = vsel %vm2714, %v4540, 0
    %v4585 = vsel %vm2714, %v4542, 0
    %v4587 = vsel %vm2714, %v4544, 0
    %v4589 = vsel %vm2714, %v4546, 0
    %v4591 = vsel %vm2714, %v4548, 0
    %v4593 = vsel %vm2714, %v4550, 0
    %v4595 = vsel %vm2714, %v4552, 0
    %v4597 = vsel %vm2714, %v4554, 0
    %v4599 = vsel %vm2714, %v4556, 0
    %v4601 = vsel %vm2714, %v4558, 0
    %v4603 = vsel %vm2714, %v4560, 0
    %v4605 = vsel %vm2714, %v4562, 0
    %v4607 = vsel %vm2714, %v4564, 0
    %v4609 = vsel %vm2714, %v4566, 0
    %v4611 = vsel %vm2714, %v4568, 0
    %v4613 = vsel %vm2714, %v4570, 0
    %v4615 = vsel %vm2714, %v4569, 0
    %4617 = vmatprep.subr.mxu0 0.0
    %4618 = vmatpush1.msra.mxu0 0.0
    %4619 = vmatprep.subr.mxu0 0.0
    %4620 = vmatpush1.msra.mxu0 0.0
    %4621 = vmatprep.subr.mxu0 0.0
    %4622 = vmatpush1.msra.mxu0 0.0
    %4623 = vmatprep.subr.mxu0 0.0
    %4624 = vmatpush1.msra.mxu0 0.0
    %4625 = vmatprep.subr.mxu0 0.0
    %4626 = vmatpush1.msra.mxu0 0.0
    %4627 = vmatprep.subr.mxu0 0.0
    %4628 = vmatpush1.msra.mxu0 0.0
    %4629 = vmatprep.subr.mxu0 0.0
    %4630 = vmatpush1.msra.mxu0 0.0
    %4631 = vmatprep.subr.mxu0 0.0
    %4632 = vmatpush1.msra.mxu0 0.0
    %4633 = vmatprep.subr.mxu0 0.0
    %4634 = vmatpush1.msra.mxu0 0.0
    %4635 = vmatprep.subr.mxu0 0.0
    %4636 = vmatpush1.msra.mxu0 0.0
    %4637 = vmatprep.subr.mxu0 0.0
    %4638 = vmatpush1.msra.mxu0 0.0
    %4639 = vmatprep.subr.mxu0 0.0
    %4640 = vmatpush1.msra.mxu0 0.0
    %4641 = vmatprep.subr.mxu0 0.0
    %4642 = vmatpush1.msra.mxu0 %v4524
    %4643 = vmatprep.subr.mxu0 0.0
    %4644 = vmatpush1.msra.mxu0 %v4523
    %4645 = vmatprep.subr.mxu0 0.0
    %4646 = vmatpush1.msra.mxu0 %v4522
    %4647 = vmatprep.subr.mxu0 0.0
    %4648 = vmatpush1.msra.mxu0 %v4521
    %4649 = vmatprep.subr.mxu0 0.0
    %4650 = vmatpush2.msra.mxu0 0.0
    %4651 = vmatprep.subr.mxu0 0.0
    %4652 = vmatpush2.msra.mxu0 0.0
    %4653 = vmatprep.subr.mxu0 0.0
    %4654 = vmatpush2.msra.mxu0 0.0
    %4655 = vmatprep.subr.mxu0 0.0
    %4656 = vmatpush2.msra.mxu0 0.0
    %4657 = vmatprep.subr.mxu0 0.0
    %4658 = vmatpush2.msra.mxu0 0.0
    %4659 = vmatprep.subr.mxu0 0.0
    %4660 = vmatpush2.msra.mxu0 0.0
    %4661 = vmatprep.subr.mxu0 0.0
    %4662 = vmatpush2.msra.mxu0 0.0
    %4663 = vmatprep.subr.mxu0 0.0
    %4664 = vmatpush2.msra.mxu0 0.0
    %4665 = vmatprep.subr.mxu0 0.0
    %4666 = vmatpush2.msra.mxu0 0.0
    %4667 = vmatprep.subr.mxu0 0.0
    %4668 = vmatpush2.msra.mxu0 0.0
    %4669 = vmatprep.subr.mxu0 0.0
    %4670 = vmatpush2.msra.mxu0 0.0
    %4671 = vmatprep.subr.mxu0 0.0
    %4672 = vmatpush2.msra.mxu0 0.0
    %4673 = vmatprep.subr.mxu0 0.0
    %4674 = vmatpush2.msra.mxu0 0.0
    %4675 = vmatprep.subr.mxu0 0.0
    %4676 = vmatpush2.msra.mxu0 0.0
    %4677 = vmatprep.subr.mxu0 0.0
    %4678 = vmatpush2.msra.mxu0 0.0
    %4679 = vmatprep.subr.mxu0 0.0
    %4680 = vmatpush2.msra.mxu0 0.0
    %4681 = vmatprep.mubr.f32.mxu0 0.0
    %4682 = vmatmul.mubr.f32.gmra.mxu0 %v4571
    %v4683 = vpop.f32.mrf.mxu0
    %v4684 = vadd.f32 0.0, %v4683
    %v4685 = vpop.f32.mrf.mxu0
    %4686 = vmatprep.mubr.f32.mxu0 0.0
    %4687 = vmatmul.mubr.f32.gmra.mxu0 %v4573
    %v4688 = vpop.f32.mrf.mxu0
    %v4689 = vadd.f32 0.0, %v4688
    %v4690 = vpop.f32.mrf.mxu0
    %4691 = vmatprep.mubr.f32.mxu0 0.0
    %4692 = vmatmul.mubr.f32.gmra.mxu0 %v4575
    %v4693 = vpop.f32.mrf.mxu0
    %v4694 = vadd.f32 0.0, %v4693
    %v4695 = vpop.f32.mrf.mxu0
    %4696 = vmatprep.mubr.f32.mxu0 0.0
    %4697 = vmatmul.mubr.f32.gmra.mxu0 %v4577
    %v4698 = vpop.f32.mrf.mxu0
    %v4699 = vadd.f32 0.0, %v4698
    %v4700 = vpop.f32.mrf.mxu0
    %4701 = vmatprep.mubr.f32.mxu0 0.0
    %4702 = vmatmul.mubr.f32.gmra.mxu0 %v4579
    %v4703 = vpop.f32.mrf.mxu0
    %v4704 = vadd.f32 0.0, %v4703
    %v4705 = vpop.f32.mrf.mxu0
    %4706 = vmatprep.mubr.f32.mxu0 0.0
    %4707 = vmatmul.mubr.f32.gmra.mxu0 %v4581
    %v4708 = vpop.f32.mrf.mxu0
    %v4709 = vadd.f32 0.0, %v4708
    %v4710 = vpop.f32.mrf.mxu0
    %4711 = vmatprep.mubr.f32.mxu0 0.0
    %4712 = vmatmul.mubr.f32.gmra.mxu0 %v4583
    %v4713 = vpop.f32.mrf.mxu0
    %v4714 = vadd.f32 0.0, %v4713
    %v4715 = vpop.f32.mrf.mxu0
    %4716 = vmatprep.mubr.f32.mxu0 0.0
    %4717 = vmatmul.mubr.f32.gmra.mxu0 %v4585
    %v4718 = vpop.f32.mrf.mxu0
    %v4719 = vadd.f32 0.0, %v4718
    %v4720 = vpop.f32.mrf.mxu0
    %4721 = vmatprep.mubr.f32.mxu0 0.0
    %4722 = vmatmul.mubr.f32.gmra.mxu0 %v4587
    %v4723 = vpop.f32.mrf.mxu0
    %v4724 = vadd.f32 0.0, %v4723
    %v4725 = vpop.f32.mrf.mxu0
    %4726 = vmatprep.mubr.f32.mxu0 0.0
    %4727 = vmatmul.mubr.f32.gmra.mxu0 %v4589
    %v4728 = vpop.f32.mrf.mxu0
    %v4729 = vadd.f32 0.0, %v4728
    %v4730 = vpop.f32.mrf.mxu0
    %4731 = vmatprep.mubr.f32.mxu0 0.0
    %4732 = vmatmul.mubr.f32.gmra.mxu0 %v4591
    %v4733 = vpop.f32.mrf.mxu0
    %v4734 = vadd.f32 0.0, %v4733
    %v4735 = vpop.f32.mrf.mxu0
    %4736 = vmatprep.mubr.f32.mxu0 0.0
    %4737 = vmatmul.mubr.f32.gmra.mxu0 %v4593
    %v4738 = vpop.f32.mrf.mxu0
    %v4739 = vadd.f32 0.0, %v4738
    %v4740 = vpop.f32.mrf.mxu0
    %4741 = vmatprep.mubr.f32.mxu0 0.0
    %4742 = vmatmul.mubr.f32.gmra.mxu0 %v4595
    %v4743 = vpop.f32.mrf.mxu0
    %v4744 = vadd.f32 0.0, %v4743
    %v4745 = vpop.f32.mrf.mxu0
    %4746 = vmatprep.mubr.f32.mxu0 0.0
    %4747 = vmatmul.mubr.f32.gmra.mxu0 %v4597
    %v4748 = vpop.f32.mrf.mxu0
    %v4749 = vadd.f32 0.0, %v4748
    %v4750 = vpop.f32.mrf.mxu0
    %4751 = vmatprep.mubr.f32.mxu0 0.0
    %4752 = vmatmul.mubr.f32.gmra.mxu0 %v4599
    %v4753 = vpop.f32.mrf.mxu0
    %v4754 = vadd.f32 0.0, %v4753
    %v4755 = vpop.f32.mrf.mxu0
    %4756 = vmatprep.mubr.f32.mxu0 0.0
    %4757 = vmatmul.mubr.f32.gmra.mxu0 %v4601
    %v4758 = vpop.f32.mrf.mxu0
    %v4759 = vadd.f32 0.0, %v4758
    %v4760 = vpop.f32.mrf.mxu0
    %4761 = vmatprep.mubr.f32.mxu0 0.0
    %4762 = vmatmul.mubr.f32.gmra.mxu0 %v4603
    %v4763 = vpop.f32.mrf.mxu0
    %v4764 = vadd.f32 0.0, %v4763
    %v4765 = vpop.f32.mrf.mxu0
    %4766 = vmatprep.mubr.f32.mxu0 0.0
    %4767 = vmatmul.mubr.f32.gmra.mxu0 %v4605
    %v4768 = vpop.f32.mrf.mxu0
    %v4769 = vadd.f32 0.0, %v4768
    %v4770 = vpop.f32.mrf.mxu0
    %4771 = vmatprep.mubr.f32.mxu0 0.0
    %4772 = vmatmul.mubr.f32.gmra.mxu0 %v4607
    %v4773 = vpop.f32.mrf.mxu0
    %v4774 = vadd.f32 0.0, %v4773
    %v4775 = vpop.f32.mrf.mxu0
    %4776 = vmatprep.mubr.f32.mxu0 0.0
    %4777 = vmatmul.mubr.f32.gmra.mxu0 %v4609
    %v4778 = vpop.f32.mrf.mxu0
    %v4779 = vadd.f32 0.0, %v4778
    %v4780 = vpop.f32.mrf.mxu0
    %4781 = vmatprep.mubr.f32.mxu0 0.0
    %4782 = vmatmul.mubr.f32.gmra.mxu0 %v4611
    %v4783 = vpop.f32.mrf.mxu0
    %v4784 = vadd.f32 0.0, %v4783
    %v4785 = vpop.f32.mrf.mxu0
    %4786 = vmatprep.mubr.f32.mxu0 0.0
    %4787 = vmatmul.mubr.f32.gmra.mxu0 %v4613
    %v4788 = vpop.f32.mrf.mxu0
    %v4789 = vadd.f32 0.0, %v4788
    %v4790 = vpop.f32.mrf.mxu0
    %4791 = vmatprep.mubr.f32.mxu0 0.0
    %4792 = vmatmul.mubr.f32.gmra.mxu0 %v4615
    %v4793 = vpop.f32.mrf.mxu0
    %v4794 = vadd.f32 0.0, %v4793
    %v4795 = vpop.f32.mrf.mxu0
    %4796 = vdwg.mxu0
    %v4797 = vadd.f32 %v4493, %v4684
    %v4798 = vadd.f32 %v4494, %v4689
    %v4799 = vadd.f32 %v4495, %v4694
    %v4800 = vadd.f32 %v4496, %v4699
    %v4801 = vadd.f32 %v4497, %v4704
    %v4802 = vadd.f32 %v4498, %v4709
    %v4803 = vadd.f32 %v4499, %v4714
    %v4804 = vadd.f32 %v4500, %v4719
    %v4805 = vadd.f32 %v4501, %v4724
    %v4806 = vadd.f32 %v4502, %v4729
    %v4807 = vadd.f32 %v4503, %v4734
    %v4808 = vadd.f32 %v4504, %v4739
    %v4809 = vadd.f32 %v4505, %v4744
    %v4810 = vadd.f32 %v4506, %v4749
    %v4811 = vadd.f32 %v4507, %v4754
    %v4812 = vadd.f32 %v4508, %v4759
    %v4813 = vadd.f32 %v4509, %v4764
    %v4814 = vadd.f32 %v4510, %v4769
    %v4815 = vadd.f32 %v4511, %v4774
    %v4816 = vadd.f32 %v4512, %v4779
    %v4817 = vadd.f32 %v4513, %v4784
    %v4818 = vadd.f32 %v4514, %v4789
    %v4819 = vadd.f32 %v4515, %v4794
    %s4820 = scalar_lea.vmem [#allocation11], 128
    %v4821 = vld [vmem:[%s4820] sm:$0xf]
    %v4822 = vld [vmem:[%s4820 + $0x4] sm:$0xf]
    %v4823 = vld [vmem:[%s4820 + $0x8] sm:$0xf]
    %v4824 = vld [vmem:[%s4820 + $0xc] sm:$0xf]
    %v4825 = vunpack.c.l.bf16 %v4821
    %v4826 = vunpack.c.l.bf16 %v4822
    %v4827 = vunpack.c.l.bf16 %v4823
    %v4828 = vunpack.c.l.bf16 %v4824
    %vm4829 = vcmask 1041408
    %v4830 = vrot.slane %v2536, 6
    %v4831 = vrot.slane %v2539, 6
    %v4832 = vsel %vm4829, %v4830, %v4831
    %v4833 = vrot.slane %v2544, 6
    %v4834 = vsel %vm4829, %v4831, %v4833
    %v4835 = vrot.slane %v2547, 6
    %v4836 = vsel %vm4829, %v4833, %v4835
    %v4837 = vrot.slane %v2552, 6
    %v4838 = vsel %vm4829, %v4835, %v4837
    %v4839 = vrot.slane %v2555, 6
    %v4840 = vsel %vm4829, %v4837, %v4839
    %v4841 = vrot.slane %v2560, 6
    %v4842 = vsel %vm4829, %v4839, %v4841
    %v4843 = vrot.slane %v2563, 6
    %v4844 = vsel %vm4829, %v4841, %v4843
    %v4845 = vrot.slane %v2568, 6
    %v4846 = vsel %vm4829, %v4843, %v4845
    %v4847 = vrot.slane %v2571, 6
    %v4848 = vsel %vm4829, %v4845, %v4847
    %v4849 = vrot.slane %v2576, 6
    %v4850 = vsel %vm4829, %v4847, %v4849
    %v4851 = vrot.slane %v2579, 6
    %v4852 = vsel %vm4829, %v4849, %v4851
    %v4853 = vrot.slane %v2584, 6
    %v4854 = vsel %vm4829, %v4851, %v4853
    %v4855 = vrot.slane %v2587, 6
    %v4856 = vsel %vm4829, %v4853, %v4855
    %v4857 = vrot.slane %v2592, 6
    %v4858 = vsel %vm4829, %v4855, %v4857
    %v4859 = vrot.slane %v2595, 6
    %v4860 = vsel %vm4829, %v4857, %v4859
    %v4861 = vrot.slane %v2600, 6
    %v4862 = vsel %vm4829, %v4859, %v4861
    %v4863 = vrot.slane %v2603, 6
    %v4864 = vsel %vm4829, %v4861, %v4863
    %v4865 = vrot.slane %v2608, 6
    %v4866 = vsel %vm4829, %v4863, %v4865
    %v4867 = vrot.slane %v2611, 6
    %v4868 = vsel %vm4829, %v4865, %v4867
    %v4869 = vrot.slane %v2616, 6
    %v4870 = vsel %vm4829, %v4867, %v4869
    %v4871 = vrot.slane %v2619, 6
    %v4872 = vsel %vm4829, %v4869, %v4871
    %v4873 = vrot.slane %v2624, 6
    %v4874 = vsel %vm4829, %v4871, %v4873
    %v4875 = vsel %vm2714, %v4832, 0
    %v4877 = vsel %vm2714, %v4834, 0
    %v4879 = vsel %vm2714, %v4836, 0
    %v4881 = vsel %vm2714, %v4838, 0
    %v4883 = vsel %vm2714, %v4840, 0
    %v4885 = vsel %vm2714, %v4842, 0
    %v4887 = vsel %vm2714, %v4844, 0
    %v4889 = vsel %vm2714, %v4846, 0
    %v4891 = vsel %vm2714, %v4848, 0
    %v4893 = vsel %vm2714, %v4850, 0
    %v4895 = vsel %vm2714, %v4852, 0
    %v4897 = vsel %vm2714, %v4854, 0
    %v4899 = vsel %vm2714, %v4856, 0
    %v4901 = vsel %vm2714, %v4858, 0
    %v4903 = vsel %vm2714, %v4860, 0
    %v4905 = vsel %vm2714, %v4862, 0
    %v4907 = vsel %vm2714, %v4864, 0
    %v4909 = vsel %vm2714, %v4866, 0
    %v4911 = vsel %vm2714, %v4868, 0
    %v4913 = vsel %vm2714, %v4870, 0
    %v4915 = vsel %vm2714, %v4872, 0
    %v4917 = vsel %vm2714, %v4874, 0
    %v4919 = vsel %vm2714, %v4873, 0
    %4921 = vmatprep.subr.mxu0 0.0
    %4922 = vmatpush1.msra.mxu0 0.0
    %4923 = vmatprep.subr.mxu0 0.0
    %4924 = vmatpush1.msra.mxu0 0.0
    %4925 = vmatprep.subr.mxu0 0.0
    %4926 = vmatpush1.msra.mxu0 0.0
    %4927 = vmatprep.subr.mxu0 0.0
    %4928 = vmatpush1.msra.mxu0 0.0
    %4929 = vmatprep.subr.mxu0 0.0
    %4930 = vmatpush1.msra.mxu0 0.0
    %4931 = vmatprep.subr.mxu0 0.0
    %4932 = vmatpush1.msra.mxu0 0.0
    %4933 = vmatprep.subr.mxu0 0.0
    %4934 = vmatpush1.msra.mxu0 0.0
    %4935 = vmatprep.subr.mxu0 0.0
    %4936 = vmatpush1.msra.mxu0 0.0
    %4937 = vmatprep.subr.mxu0 0.0
    %4938 = vmatpush1.msra.mxu0 0.0
    %4939 = vmatprep.subr.mxu0 0.0
    %4940 = vmatpush1.msra.mxu0 0.0
    %4941 = vmatprep.subr.mxu0 0.0
    %4942 = vmatpush1.msra.mxu0 0.0
    %4943 = vmatprep.subr.mxu0 0.0
    %4944 = vmatpush1.msra.mxu0 0.0
    %4945 = vmatprep.subr.mxu0 0.0
    %4946 = vmatpush1.msra.mxu0 %v4828
    %4947 = vmatprep.subr.mxu0 0.0
    %4948 = vmatpush1.msra.mxu0 %v4827
    %4949 = vmatprep.subr.mxu0 0.0
    %4950 = vmatpush1.msra.mxu0 %v4826
    %4951 = vmatprep.subr.mxu0 0.0
    %4952 = vmatpush1.msra.mxu0 %v4825
    %4953 = vmatprep.subr.mxu0 0.0
    %4954 = vmatpush2.msra.mxu0 0.0
    %4955 = vmatprep.subr.mxu0 0.0
    %4956 = vmatpush2.msra.mxu0 0.0
    %4957 = vmatprep.subr.mxu0 0.0
    %4958 = vmatpush2.msra.mxu0 0.0
    %4959 = vmatprep.subr.mxu0 0.0
    %4960 = vmatpush2.msra.mxu0 0.0
    %4961 = vmatprep.subr.mxu0 0.0
    %4962 = vmatpush2.msra.mxu0 0.0
    %4963 = vmatprep.subr.mxu0 0.0
    %4964 = vmatpush2.msra.mxu0 0.0
    %4965 = vmatprep.subr.mxu0 0.0
    %4966 = vmatpush2.msra.mxu0 0.0
    %4967 = vmatprep.subr.mxu0 0.0
    %4968 = vmatpush2.msra.mxu0 0.0
    %4969 = vmatprep.subr.mxu0 0.0
    %4970 = vmatpush2.msra.mxu0 0.0
    %4971 = vmatprep.subr.mxu0 0.0
    %4972 = vmatpush2.msra.mxu0 0.0
    %4973 = vmatprep.subr.mxu0 0.0
    %4974 = vmatpush2.msra.mxu0 0.0
    %4975 = vmatprep.subr.mxu0 0.0
    %4976 = vmatpush2.msra.mxu0 0.0
    %4977 = vmatprep.subr.mxu0 0.0
    %4978 = vmatpush2.msra.mxu0 0.0
    %4979 = vmatprep.subr.mxu0 0.0
    %4980 = vmatpush2.msra.mxu0 0.0
    %4981 = vmatprep.subr.mxu0 0.0
    %4982 = vmatpush2.msra.mxu0 0.0
    %4983 = vmatprep.subr.mxu0 0.0
    %4984 = vmatpush2.msra.mxu0 0.0
    %4985 = vmatprep.mubr.f32.mxu0 0.0
    %4986 = vmatmul.mubr.f32.gmra.mxu0 %v4875
    %v4987 = vpop.f32.mrf.mxu0
    %v4988 = vadd.f32 0.0, %v4987
    %v4989 = vpop.f32.mrf.mxu0
    %4990 = vmatprep.mubr.f32.mxu0 0.0
    %4991 = vmatmul.mubr.f32.gmra.mxu0 %v4877
    %v4992 = vpop.f32.mrf.mxu0
    %v4993 = vadd.f32 0.0, %v4992
    %v4994 = vpop.f32.mrf.mxu0
    %4995 = vmatprep.mubr.f32.mxu0 0.0
    %4996 = vmatmul.mubr.f32.gmra.mxu0 %v4879
    %v4997 = vpop.f32.mrf.mxu0
    %v4998 = vadd.f32 0.0, %v4997
    %v4999 = vpop.f32.mrf.mxu0
    %5000 = vmatprep.mubr.f32.mxu0 0.0
    %5001 = vmatmul.mubr.f32.gmra.mxu0 %v4881
    %v5002 = vpop.f32.mrf.mxu0
    %v5003 = vadd.f32 0.0, %v5002
    %v5004 = vpop.f32.mrf.mxu0
    %5005 = vmatprep.mubr.f32.mxu0 0.0
    %5006 = vmatmul.mubr.f32.gmra.mxu0 %v4883
    %v5007 = vpop.f32.mrf.mxu0
    %v5008 = vadd.f32 0.0, %v5007
    %v5009 = vpop.f32.mrf.mxu0
    %5010 = vmatprep.mubr.f32.mxu0 0.0
    %5011 = vmatmul.mubr.f32.gmra.mxu0 %v4885
    %v5012 = vpop.f32.mrf.mxu0
    %v5013 = vadd.f32 0.0, %v5012
    %v5014 = vpop.f32.mrf.mxu0
    %5015 = vmatprep.mubr.f32.mxu0 0.0
    %5016 = vmatmul.mubr.f32.gmra.mxu0 %v4887
    %v5017 = vpop.f32.mrf.mxu0
    %v5018 = vadd.f32 0.0, %v5017
    %v5019 = vpop.f32.mrf.mxu0
    %5020 = vmatprep.mubr.f32.mxu0 0.0
    %5021 = vmatmul.mubr.f32.gmra.mxu0 %v4889
    %v5022 = vpop.f32.mrf.mxu0
    %v5023 = vadd.f32 0.0, %v5022
    %v5024 = vpop.f32.mrf.mxu0
    %5025 = vmatprep.mubr.f32.mxu0 0.0
    %5026 = vmatmul.mubr.f32.gmra.mxu0 %v4891
    %v5027 = vpop.f32.mrf.mxu0
    %v5028 = vadd.f32 0.0, %v5027
    %v5029 = vpop.f32.mrf.mxu0
    %5030 = vmatprep.mubr.f32.mxu0 0.0
    %5031 = vmatmul.mubr.f32.gmra.mxu0 %v4893
    %v5032 = vpop.f32.mrf.mxu0
    %v5033 = vadd.f32 0.0, %v5032
    %v5034 = vpop.f32.mrf.mxu0
    %5035 = vmatprep.mubr.f32.mxu0 0.0
    %5036 = vmatmul.mubr.f32.gmra.mxu0 %v4895
    %v5037 = vpop.f32.mrf.mxu0
    %v5038 = vadd.f32 0.0, %v5037
    %v5039 = vpop.f32.mrf.mxu0
    %5040 = vmatprep.mubr.f32.mxu0 0.0
    %5041 = vmatmul.mubr.f32.gmra.mxu0 %v4897
    %v5042 = vpop.f32.mrf.mxu0
    %v5043 = vadd.f32 0.0, %v5042
    %v5044 = vpop.f32.mrf.mxu0
    %5045 = vmatprep.mubr.f32.mxu0 0.0
    %5046 = vmatmul.mubr.f32.gmra.mxu0 %v4899
    %v5047 = vpop.f32.mrf.mxu0
    %v5048 = vadd.f32 0.0, %v5047
    %v5049 = vpop.f32.mrf.mxu0
    %5050 = vmatprep.mubr.f32.mxu0 0.0
    %5051 = vmatmul.mubr.f32.gmra.mxu0 %v4901
    %v5052 = vpop.f32.mrf.mxu0
    %v5053 = vadd.f32 0.0, %v5052
    %v5054 = vpop.f32.mrf.mxu0
    %5055 = vmatprep.mubr.f32.mxu0 0.0
    %5056 = vmatmul.mubr.f32.gmra.mxu0 %v4903
    %v5057 = vpop.f32.mrf.mxu0
    %v5058 = vadd.f32 0.0, %v5057
    %v5059 = vpop.f32.mrf.mxu0
    %5060 = vmatprep.mubr.f32.mxu0 0.0
    %5061 = vmatmul.mubr.f32.gmra.mxu0 %v4905
    %v5062 = vpop.f32.mrf.mxu0
    %v5063 = vadd.f32 0.0, %v5062
    %v5064 = vpop.f32.mrf.mxu0
    %5065 = vmatprep.mubr.f32.mxu0 0.0
    %5066 = vmatmul.mubr.f32.gmra.mxu0 %v4907
    %v5067 = vpop.f32.mrf.mxu0
    %v5068 = vadd.f32 0.0, %v5067
    %v5069 = vpop.f32.mrf.mxu0
    %5070 = vmatprep.mubr.f32.mxu0 0.0
    %5071 = vmatmul.mubr.f32.gmra.mxu0 %v4909
    %v5072 = vpop.f32.mrf.mxu0
    %v5073 = vadd.f32 0.0, %v5072
    %v5074 = vpop.f32.mrf.mxu0
    %5075 = vmatprep.mubr.f32.mxu0 0.0
    %5076 = vmatmul.mubr.f32.gmra.mxu0 %v4911
    %v5077 = vpop.f32.mrf.mxu0
    %v5078 = vadd.f32 0.0, %v5077
    %v5079 = vpop.f32.mrf.mxu0
    %5080 = vmatprep.mubr.f32.mxu0 0.0
    %5081 = vmatmul.mubr.f32.gmra.mxu0 %v4913
    %v5082 = vpop.f32.mrf.mxu0
    %v5083 = vadd.f32 0.0, %v5082
    %v5084 = vpop.f32.mrf.mxu0
    %5085 = vmatprep.mubr.f32.mxu0 0.0
    %5086 = vmatmul.mubr.f32.gmra.mxu0 %v4915
    %v5087 = vpop.f32.mrf.mxu0
    %v5088 = vadd.f32 0.0, %v5087
    %v5089 = vpop.f32.mrf.mxu0
    %5090 = vmatprep.mubr.f32.mxu0 0.0
    %5091 = vmatmul.mubr.f32.gmra.mxu0 %v4917
    %v5092 = vpop.f32.mrf.mxu0
    %v5093 = vadd.f32 0.0, %v5092
    %v5094 = vpop.f32.mrf.mxu0
    %5095 = vmatprep.mubr.f32.mxu0 0.0
    %5096 = vmatmul.mubr.f32.gmra.mxu0 %v4919
    %v5097 = vpop.f32.mrf.mxu0
    %v5098 = vadd.f32 0.0, %v5097
    %v5099 = vpop.f32.mrf.mxu0
    %5100 = vdwg.mxu0
    %v5101 = vadd.f32 %v4797, %v4988
    %v5102 = vadd.f32 %v4798, %v4993
    %v5103 = vadd.f32 %v4799, %v4998
    %v5104 = vadd.f32 %v4800, %v5003
    %v5105 = vadd.f32 %v4801, %v5008
    %v5106 = vadd.f32 %v4802, %v5013
    %v5107 = vadd.f32 %v4803, %v5018
    %v5108 = vadd.f32 %v4804, %v5023
    %v5109 = vadd.f32 %v4805, %v5028
    %v5110 = vadd.f32 %v4806, %v5033
    %v5111 = vadd.f32 %v4807, %v5038
    %v5112 = vadd.f32 %v4808, %v5043
    %v5113 = vadd.f32 %v4809, %v5048
    %v5114 = vadd.f32 %v4810, %v5053
    %v5115 = vadd.f32 %v4811, %v5058
    %v5116 = vadd.f32 %v4812, %v5063
    %v5117 = vadd.f32 %v4813, %v5068
    %v5118 = vadd.f32 %v4814, %v5073
    %v5119 = vadd.f32 %v4815, %v5078
    %v5120 = vadd.f32 %v4816, %v5083
    %v5121 = vadd.f32 %v4817, %v5088
    %v5122 = vadd.f32 %v4818, %v5093
    %v5123 = vadd.f32 %v4819, %v5098
    %v5124 = vlaneseq
    %v5125 = vshrl.u32 %v5124, 7
    %v5126 = vsub.s32 2, %v5125
    %v5127 = vrot.slane %v138, %v5126
    %v5128 = vadd.f32 %v5101, %v5127
    %v5129 = vadd.f32 %v5102, %v5127
    %v5130 = vadd.f32 %v5103, %v5127
    %v5131 = vadd.f32 %v5104, %v5127
    %v5132 = vadd.f32 %v5105, %v5127
    %v5133 = vadd.f32 %v5106, %v5127
    %v5134 = vadd.f32 %v5107, %v5127
    %v5135 = vadd.f32 %v5108, %v5127
    %v5136 = vadd.f32 %v5109, %v5127
    %v5137 = vadd.f32 %v5110, %v5127
    %v5138 = vadd.f32 %v5111, %v5127
    %v5139 = vadd.f32 %v5112, %v5127
    %v5140 = vadd.f32 %v5113, %v5127
    %v5141 = vadd.f32 %v5114, %v5127
    %v5142 = vadd.f32 %v5115, %v5127
    %v5143 = vadd.f32 %v5116, %v5127
    %v5144 = vadd.f32 %v5117, %v5127
    %v5145 = vadd.f32 %v5118, %v5127
    %v5146 = vadd.f32 %v5119, %v5127
    %v5147 = vadd.f32 %v5120, %v5127
    %v5148 = vadd.f32 %v5121, %v5127
    %v5149 = vadd.f32 %v5122, %v5127
    %v5150 = vadd.f32 %v5123, %v5127
    %v5151 = vmax.f32 %v5128, 0.0
    %v5152 = vmax.f32 %v5129, 0.0
    %v5153 = vmax.f32 %v5130, 0.0
    %v5154 = vmax.f32 %v5131, 0.0
    %v5155 = vmax.f32 %v5132, 0.0
    %v5156 = vmax.f32 %v5133, 0.0
    %v5157 = vmax.f32 %v5134, 0.0
    %v5158 = vmax.f32 %v5135, 0.0
    %v5159 = vmax.f32 %v5136, 0.0
    %v5160 = vmax.f32 %v5137, 0.0
    %v5161 = vmax.f32 %v5138, 0.0
    %v5162 = vmax.f32 %v5139, 0.0
    %v5163 = vmax.f32 %v5140, 0.0
    %v5164 = vmax.f32 %v5141, 0.0
    %v5165 = vmax.f32 %v5142, 0.0
    %v5166 = vmax.f32 %v5143, 0.0
    %v5167 = vmax.f32 %v5144, 0.0
    %v5168 = vmax.f32 %v5145, 0.0
    %v5169 = vmax.f32 %v5146, 0.0
    %v5170 = vmax.f32 %v5147, 0.0
    %v5171 = vmax.f32 %v5148, 0.0
    %v5172 = vmax.f32 %v5149, 0.0
    %v5173 = vmax.f32 %v5150, 0.0
    %v5195 = vrot.slane %v5151, 1
    %v5196 = vrot.slane %v5152, 1
    %v5197 = vsel %vm1060, %v5195, %v5196
    %v5198 = vrot.slane %v5153, 1
    %v5199 = vsel %vm1060, %v5196, %v5198
    %v5200 = vrot.slane %v5154, 1
    %v5201 = vsel %vm1060, %v5198, %v5200
    %v5202 = vrot.slane %v5155, 1
    %v5203 = vsel %vm1060, %v5200, %v5202
    %v5204 = vrot.slane %v5156, 1
    %v5205 = vsel %vm1060, %v5202, %v5204
    %v5206 = vrot.slane %v5157, 1
    %v5207 = vsel %vm1060, %v5204, %v5206
    %v5208 = vrot.slane %v5158, 1
    %v5209 = vsel %vm1060, %v5206, %v5208
    %v5210 = vrot.slane %v5159, 1
    %v5211 = vsel %vm1060, %v5208, %v5210
    %v5212 = vrot.slane %v5160, 1
    %v5213 = vsel %vm1060, %v5210, %v5212
    %v5214 = vrot.slane %v5161, 1
    %v5215 = vsel %vm1060, %v5212, %v5214
    %v5216 = vrot.slane %v5162, 1
    %v5217 = vsel %vm1060, %v5214, %v5216
    %v5218 = vrot.slane %v5163, 1
    %v5219 = vsel %vm1060, %v5216, %v5218
    %v5220 = vrot.slane %v5164, 1
    %v5221 = vsel %vm1060, %v5218, %v5220
    %v5222 = vrot.slane %v5165, 1
    %v5223 = vsel %vm1060, %v5220, %v5222
    %v5224 = vrot.slane %v5166, 1
    %v5225 = vsel %vm1060, %v5222, %v5224
    %v5226 = vrot.slane %v5167, 1
    %v5227 = vsel %vm1060, %v5224, %v5226
    %v5228 = vrot.slane %v5168, 1
    %v5229 = vsel %vm1060, %v5226, %v5228
    %v5230 = vrot.slane %v5169, 1
    %v5231 = vsel %vm1060, %v5228, %v5230
    %v5232 = vrot.slane %v5170, 1
    %v5233 = vsel %vm1060, %v5230, %v5232
    %v5234 = vrot.slane %v5171, 1
    %v5235 = vsel %vm1060, %v5232, %v5234
    %v5257 = vmax.f32 %v5151, %v5197
    %v5258 = vmax.f32 %v5152, %v5199
    %v5259 = vmax.f32 %v5153, %v5201
    %v5260 = vmax.f32 %v5154, %v5203
    %v5261 = vmax.f32 %v5155, %v5205
    %v5262 = vmax.f32 %v5156, %v5207
    %v5263 = vmax.f32 %v5157, %v5209
    %v5264 = vmax.f32 %v5158, %v5211
    %v5265 = vmax.f32 %v5159, %v5213
    %v5266 = vmax.f32 %v5160, %v5215
    %v5267 = vmax.f32 %v5161, %v5217
    %v5268 = vmax.f32 %v5162, %v5219
    %v5269 = vmax.f32 %v5163, %v5221
    %v5270 = vmax.f32 %v5164, %v5223
    %v5271 = vmax.f32 %v5165, %v5225
    %v5272 = vmax.f32 %v5166, %v5227
    %v5273 = vmax.f32 %v5167, %v5229
    %v5274 = vmax.f32 %v5168, %v5231
    %v5275 = vmax.f32 %v5169, %v5233
    %v5276 = vmax.f32 %v5170, %v5235
    %v5277 = vmax.f32 %v5171, %v5234
    %v5280 = vrot.slane %v5172, 1
    %v5281 = vsel %vm1060, %v5234, %v5280
    %v5282 = vrot.slane %v5173, 1
    %v5283 = vsel %vm1060, %v5280, %v5282
    %v5287 = vmax.f32 %v5171, %v5281
    %v5288 = vmax.f32 %v5172, %v5283
    %v5289 = vmax.f32 %v5173, %v5282
    %v5312 = vrot.slane %v5258, 2
    %v5313 = vrot.slane %v5259, 2
    %v5314 = vsel %vm1448, %v5312, %v5313
    %v5315 = vrot.slane %v5260, 2
    %v5316 = vsel %vm1448, %v5313, %v5315
    %v5317 = vrot.slane %v5261, 2
    %v5318 = vsel %vm1448, %v5315, %v5317
    %v5319 = vrot.slane %v5262, 2
    %v5320 = vsel %vm1448, %v5317, %v5319
    %v5321 = vrot.slane %v5263, 2
    %v5322 = vsel %vm1448, %v5319, %v5321
    %v5323 = vrot.slane %v5264, 2
    %v5324 = vsel %vm1448, %v5321, %v5323
    %v5325 = vrot.slane %v5265, 2
    %v5326 = vsel %vm1448, %v5323, %v5325
    %v5327 = vrot.slane %v5266, 2
    %v5328 = vsel %vm1448, %v5325, %v5327
    %v5329 = vrot.slane %v5267, 2
    %v5330 = vsel %vm1448, %v5327, %v5329
    %v5331 = vrot.slane %v5268, 2
    %v5332 = vsel %vm1448, %v5329, %v5331
    %v5333 = vrot.slane %v5269, 2
    %v5334 = vsel %vm1448, %v5331, %v5333
    %v5335 = vrot.slane %v5270, 2
    %v5336 = vsel %vm1448, %v5333, %v5335
    %v5337 = vrot.slane %v5271, 2
    %v5338 = vsel %vm1448, %v5335, %v5337
    %v5339 = vrot.slane %v5272, 2
    %v5340 = vsel %vm1448, %v5337, %v5339
    %v5341 = vrot.slane %v5273, 2
    %v5342 = vsel %vm1448, %v5339, %v5341
    %v5343 = vrot.slane %v5274, 2
    %v5344 = vsel %vm1448, %v5341, %v5343
    %v5345 = vrot.slane %v5275, 2
    %v5346 = vsel %vm1448, %v5343, %v5345
    %v5347 = vrot.slane %v5276, 2
    %v5348 = vsel %vm1448, %v5345, %v5347
    %v5349 = vrot.slane %v5287, 2
    %v5350 = vsel %vm1448, %v5347, %v5349
    %v5351 = vrot.slane %v5288, 2
    %v5352 = vsel %vm1448, %v5349, %v5351
    %v5353 = vrot.slane %v5289, 2
    %v5354 = vsel %vm1448, %v5351, %v5353
    %v5376 = vmax.f32 %v5257, %v5314
    %v5377 = vmax.f32 %v5258, %v5316
    %v5378 = vmax.f32 %v5259, %v5318
    %v5379 = vmax.f32 %v5260, %v5320
    %v5380 = vmax.f32 %v5261, %v5322
    %v5381 = vmax.f32 %v5262, %v5324
    %v5382 = vmax.f32 %v5263, %v5326
    %v5383 = vmax.f32 %v5264, %v5328
    %v5384 = vmax.f32 %v5265, %v5330
    %v5385 = vmax.f32 %v5266, %v5332
    %v5386 = vmax.f32 %v5267, %v5334
    %v5387 = vmax.f32 %v5268, %v5336
    %v5388 = vmax.f32 %v5269, %v5338
    %v5389 = vmax.f32 %v5270, %v5340
    %v5390 = vmax.f32 %v5271, %v5342
    %v5391 = vmax.f32 %v5272, %v5344
    %v5392 = vmax.f32 %v5273, %v5346
    %v5393 = vmax.f32 %v5274, %v5348
    %v5394 = vmax.f32 %v5275, %v5350
    %v5395 = vmax.f32 %v5276, %v5352
    %v5396 = vmax.f32 %v5277, %v5354
    %v5397 = vld [vmem:[#allocation6] sm:$0xff]
    %v5398 = vld [vmem:[#allocation6 + $0x8] sm:$0xff]
    %v5399 = vld [vmem:[#allocation6 + $0x10] sm:$0xff]
    %v5400 = vld [vmem:[#allocation6 + $0x18] sm:$0xff]
    %v5401 = vld [vmem:[#allocation6 + $0x20] sm:$0xff]
    %v5402 = vld [vmem:[#allocation6 + $0x28] sm:$0xff]
    %v5403 = vld [vmem:[#allocation6 + $0x30] sm:$0xff]
    %v5404 = vld [vmem:[#allocation6 + $0x38] sm:$0xff]
    %v5405 = vld [vmem:[#allocation6 + $0x40] sm:$0xff]
    %v5406 = vpack.c.bf16 %v5377, %v5376
    %v5407 = vpack.c.bf16 %v5379, %v5378
    %v5408 = vpack.c.bf16 %v5381, %v5380
    %v5409 = vpack.c.bf16 %v5383, %v5382
    %v5410 = vpack.c.bf16 %v5385, %v5384
    %v5411 = vpack.c.bf16 %v5387, %v5386
    %v5412 = vpack.c.bf16 %v5389, %v5388
    %v5413 = vpack.c.bf16 %v5391, %v5390
    %v5414 = vpack.c.bf16 %v5393, %v5392
    %v5415 = vpack.c.bf16 %v5395, %v5394
    %v5416 = vpack.c.bf16 %v5396, %v5396
    %v5426 = vunpack.c.l.b16 %v5397
    %v5427 = vunpack.c.h.b16 %v5397
    %v5428 = vunpack.c.l.b16 %v5398
    %v5429 = vunpack.c.h.b16 %v5398
    %v5430 = vunpack.c.l.b16 %v5399
    %v5431 = vunpack.c.h.b16 %v5399
    %v5432 = vunpack.c.l.b16 %v5400
    %v5433 = vunpack.c.h.b16 %v5400
    %v5434 = vunpack.c.l.b16 %v5401
    %v5435 = vunpack.c.h.b16 %v5401
    %v5436 = vunpack.c.l.b16 %v5402
    %v5437 = vunpack.c.h.b16 %v5402
    %v5438 = vunpack.c.l.b16 %v5403
    %v5439 = vunpack.c.h.b16 %v5403
    %v5440 = vunpack.c.l.b16 %v5404
    %v5441 = vunpack.c.h.b16 %v5404
    %v5442 = vunpack.c.l.b16 %v5405
    %v5443 = vunpack.c.h.b16 %v5405
    %v5444 = vpack.c.b16 %v5428, %v5426
    %v5445 = vpack.c.b16 %v5429, %v5427
    %v5446 = vpack.c.b16 %v5432, %v5430
    %v5447 = vpack.c.b16 %v5433, %v5431
    %v5448 = vpack.c.b16 %v5436, %v5434
    %v5449 = vpack.c.b16 %v5437, %v5435
    %v5450 = vpack.c.b16 %v5440, %v5438
    %v5451 = vpack.c.b16 %v5441, %v5439
    %v5452 = vpack.c.b16 %v5442, %v5442
    %v5453 = vpack.c.b16 %v5443, %v5443
    %vm5459 = vcmask 318464
    %v5461 = vsel %vm5459, %v5445, 0
    %v5464 = vsel %vm5459, %v5447, 0
    %v5467 = vsel %vm5459, %v5449, 0
    %v5470 = vsel %vm5459, %v5451, 0
    %v5473 = vsel %vm5459, %v5453, 0
    %v5475 = vsel %vm4525, 4294967295, 65535
    %v5476 = vsel %vm4002, %v5475, 0
    %v5478 = vand.u32 %v5416, %v5476
    %5480 = vmatprep.subr.bf16.mxu0 0
    %5481 = vmatpush1.bf16.msra.mxu0 %v5413
    %5482 = vmatprep.subr.bf16.mxu0 0
    %5483 = vmatpush1.bf16.msra.mxu0 %v5412
    %5484 = vmatprep.subr.bf16.mxu0 0
    %5485 = vmatpush1.bf16.msra.mxu0 %v5411
    %5486 = vmatprep.subr.bf16.mxu0 0
    %5487 = vmatpush1.bf16.msra.mxu0 %v5410
    %5488 = vmatprep.subr.bf16.mxu0 0
    %5489 = vmatpush1.bf16.msra.mxu0 %v5409
    %5490 = vmatprep.subr.bf16.mxu0 0
    %5491 = vmatpush1.bf16.msra.mxu0 %v5408
    %5492 = vmatprep.subr.bf16.mxu0 0
    %5493 = vmatpush1.bf16.msra.mxu0 %v5407
    %5494 = vmatprep.subr.bf16.mxu0 0
    %5495 = vmatpush1.bf16.msra.mxu0 %v5406
    %5496 = vmatprep.subr.bf16.mxu0 0
    %5497 = vmatpush2.bf16.msra.mxu0 0
    %5498 = vmatprep.subr.bf16.mxu0 0
    %5499 = vmatpush2.bf16.msra.mxu0 0
    %5500 = vmatprep.subr.bf16.mxu0 0
    %5501 = vmatpush2.bf16.msra.mxu0 0
    %5502 = vmatprep.subr.bf16.mxu0 0
    %5503 = vmatpush2.bf16.msra.mxu0 0
    %5504 = vmatprep.subr.bf16.mxu0 0
    %5505 = vmatpush2.bf16.msra.mxu0 0
    %5506 = vmatprep.subr.bf16.mxu0 0
    %5507 = vmatpush2.bf16.msra.mxu0 %v5478
    %5508 = vmatprep.subr.bf16.mxu0 0
    %5509 = vmatpush2.bf16.msra.mxu0 %v5415
    %5510 = vmatprep.subr.bf16.mxu0 0
    %5511 = vmatpush2.bf16.msra.mxu0 %v5414
    %5512 = vmatprep.mubr.bf16.mxu0 %v5461
    %5513 = vmatmul.mubr.bf16.gmra.mxu0 %v5444
    %v5514 = vpop.f32.mrf.mxu0
    %v5515 = vadd.f32 0.0, %v5514
    %v5516 = vpop.f32.mrf.mxu0
    %v5517 = vpop.f32.mrf.mxu0
    %v5518 = vadd.f32 0.0, %v5517
    %v5519 = vpop.f32.mrf.mxu0
    %5520 = vmatprep.mubr.bf16.mxu0 %v5464
    %5521 = vmatmul.mubr.bf16.gmra.mxu0 %v5446
    %v5522 = vpop.f32.mrf.mxu0
    %v5523 = vadd.f32 0.0, %v5522
    %v5524 = vpop.f32.mrf.mxu0
    %v5525 = vpop.f32.mrf.mxu0
    %v5526 = vadd.f32 0.0, %v5525
    %v5527 = vpop.f32.mrf.mxu0
    %5528 = vmatprep.mubr.bf16.mxu0 %v5467
    %5529 = vmatmul.mubr.bf16.gmra.mxu0 %v5448
    %v5530 = vpop.f32.mrf.mxu0
    %v5531 = vadd.f32 0.0, %v5530
    %v5532 = vpop.f32.mrf.mxu0
    %v5533 = vpop.f32.mrf.mxu0
    %v5534 = vadd.f32 0.0, %v5533
    %v5535 = vpop.f32.mrf.mxu0
    %5536 = vmatprep.mubr.bf16.mxu0 %v5470
    %5537 = vmatmul.mubr.bf16.gmra.mxu0 %v5450
    %v5538 = vpop.f32.mrf.mxu0
    %v5539 = vadd.f32 0.0, %v5538
    %v5540 = vpop.f32.mrf.mxu0
    %v5541 = vpop.f32.mrf.mxu0
    %v5542 = vadd.f32 0.0, %v5541
    %v5543 = vpop.f32.mrf.mxu0
    %5544 = vmatprep.mubr.bf16.mxu0 %v5473
    %5545 = vmatmul.mubr.bf16.gmra.mxu0 %v5452
    %v5546 = vpop.f32.mrf.mxu0
    %v5547 = vadd.f32 0.0, %v5546
    %v5548 = vpop.f32.mrf.mxu0
    %v5549 = vpop.f32.mrf.mxu0
    %v5550 = vpop.f32.mrf.mxu0
    %5551 = vdwg.mxu0
    %v5552 = vld [vmem:[#allocation12] sm:$0xf]
    %v5553 = vld [vmem:[#allocation12 + $0x4] sm:$0xf]
    %v5554 = vld [vmem:[#allocation12 + $0x8] sm:$0xf]
    %v5555 = vld [vmem:[#allocation12 + $0xc] sm:$0xf]
    %v5556 = vld [vmem:[#allocation12 + $0x10] sm:$0xf]
    %v5557 = vld [vmem:[#allocation12 + $0x14] sm:$0xf]
    %v5558 = vld [vmem:[#allocation12 + $0x18] sm:$0xf]
    %v5559 = vld [vmem:[#allocation12 + $0x1c] sm:$0xf]
    %v5560 = vunpack.c.l.bf16 %v5552
    %v5561 = vunpack.c.l.bf16 %v5553
    %v5562 = vunpack.c.l.bf16 %v5554
    %v5563 = vunpack.c.l.bf16 %v5555
    %v5564 = vunpack.c.l.bf16 %v5556
    %v5565 = vunpack.c.l.bf16 %v5557
    %v5566 = vunpack.c.l.bf16 %v5558
    %v5567 = vunpack.c.l.bf16 %v5559
    %s5568 = scalar_lea.vmem [#allocation12], 32
    %v5569 = vld [vmem:[%s5568] sm:$0xf]
    %v5570 = vld [vmem:[%s5568 + $0x4] sm:$0xf]
    %v5571 = vld [vmem:[%s5568 + $0x8] sm:$0xf]
    %v5572 = vld [vmem:[%s5568 + $0xc] sm:$0xf]
    %v5573 = vld [vmem:[%s5568 + $0x10] sm:$0xf]
    %v5574 = vld [vmem:[%s5568 + $0x14] sm:$0xf]
    %v5575 = vld [vmem:[%s5568 + $0x18] sm:$0xf]
    %v5576 = vld [vmem:[%s5568 + $0x1c] sm:$0xf]
    %v5577 = vunpack.c.l.bf16 %v5569
    %v5578 = vunpack.c.l.bf16 %v5570
    %v5579 = vunpack.c.l.bf16 %v5571
    %v5580 = vunpack.c.l.bf16 %v5572
    %v5581 = vunpack.c.l.bf16 %v5573
    %v5582 = vunpack.c.l.bf16 %v5574
    %v5583 = vunpack.c.l.bf16 %v5575
    %v5584 = vunpack.c.l.bf16 %v5576
    %v5593 = vrot.slane %v5515, 1
    %v5594 = vrot.slane %v5518, 1
    %v5595 = vsel %vm1060, %v5593, %v5594
    %v5596 = vrot.slane %v5523, 1
    %v5597 = vsel %vm1060, %v5594, %v5596
    %v5598 = vrot.slane %v5526, 1
    %v5599 = vsel %vm1060, %v5596, %v5598
    %v5600 = vrot.slane %v5531, 1
    %v5601 = vsel %vm1060, %v5598, %v5600
    %v5602 = vrot.slane %v5534, 1
    %v5603 = vsel %vm1060, %v5600, %v5602
    %v5604 = vrot.slane %v5539, 1
    %v5605 = vsel %vm1060, %v5602, %v5604
    %v5606 = vrot.slane %v5542, 1
    %v5607 = vsel %vm1060, %v5604, %v5606
    %vm5608 = vcmask 523264
    %v5609 = vsel %vm5608, %v5595, 0
    %v5611 = vsel %vm5608, %v5597, 0
    %v5613 = vsel %vm5608, %v5599, 0
    %v5615 = vsel %vm5608, %v5601, 0
    %v5617 = vsel %vm5608, %v5603, 0
    %v5619 = vsel %vm5608, %v5605, 0
    %v5621 = vsel %vm5608, %v5607, 0
    %v5623 = vsel %vm5608, %v5606, 0
    %5625 = vmatprep.subr.mxu0 0.0
    %5626 = vmatpush1.msra.mxu0 0.0
    %5627 = vmatprep.subr.mxu0 0.0
    %5628 = vmatpush1.msra.mxu0 0.0
    %5629 = vmatprep.subr.mxu0 0.0
    %5630 = vmatpush1.msra.mxu0 0.0
    %5631 = vmatprep.subr.mxu0 0.0
    %5632 = vmatpush1.msra.mxu0 0.0
    %5633 = vmatprep.subr.mxu0 0.0
    %5634 = vmatpush1.msra.mxu0 0.0
    %5635 = vmatprep.subr.mxu0 0.0
    %5636 = vmatpush1.msra.mxu0 0.0
    %5637 = vmatprep.subr.mxu0 0.0
    %5638 = vmatpush1.msra.mxu0 0.0
    %5639 = vmatprep.subr.mxu0 0.0
    %5640 = vmatpush1.msra.mxu0 0.0
    %5641 = vmatprep.subr.mxu0 0.0
    %5642 = vmatpush1.msra.mxu0 %v5584
    %5643 = vmatprep.subr.mxu0 0.0
    %5644 = vmatpush1.msra.mxu0 %v5583
    %5645 = vmatprep.subr.mxu0 0.0
    %5646 = vmatpush1.msra.mxu0 %v5582
    %5647 = vmatprep.subr.mxu0 0.0
    %5648 = vmatpush1.msra.mxu0 %v5581
    %5649 = vmatprep.subr.mxu0 0.0
    %5650 = vmatpush1.msra.mxu0 %v5580
    %5651 = vmatprep.subr.mxu0 0.0
    %5652 = vmatpush1.msra.mxu0 %v5579
    %5653 = vmatprep.subr.mxu0 0.0
    %5654 = vmatpush1.msra.mxu0 %v5578
    %5655 = vmatprep.subr.mxu0 0.0
    %5656 = vmatpush1.msra.mxu0 %v5577
    %5657 = vmatprep.subr.mxu0 0.0
    %5658 = vmatpush2.msra.mxu0 0.0
    %5659 = vmatprep.subr.mxu0 0.0
    %5660 = vmatpush2.msra.mxu0 0.0
    %5661 = vmatprep.subr.mxu0 0.0
    %5662 = vmatpush2.msra.mxu0 0.0
    %5663 = vmatprep.subr.mxu0 0.0
    %5664 = vmatpush2.msra.mxu0 0.0
    %5665 = vmatprep.subr.mxu0 0.0
    %5666 = vmatpush2.msra.mxu0 0.0
    %5667 = vmatprep.subr.mxu0 0.0
    %5668 = vmatpush2.msra.mxu0 0.0
    %5669 = vmatprep.subr.mxu0 0.0
    %5670 = vmatpush2.msra.mxu0 0.0
    %5671 = vmatprep.subr.mxu0 0.0
    %5672 = vmatpush2.msra.mxu0 0.0
    %5673 = vmatprep.subr.mxu0 0.0
    %5674 = vmatpush2.msra.mxu0 0.0
    %5675 = vmatprep.subr.mxu0 0.0
    %5676 = vmatpush2.msra.mxu0 0.0
    %5677 = vmatprep.subr.mxu0 0.0
    %5678 = vmatpush2.msra.mxu0 0.0
    %5679 = vmatprep.subr.mxu0 0.0
    %5680 = vmatpush2.msra.mxu0 0.0
    %5681 = vmatprep.subr.mxu0 0.0
    %5682 = vmatpush2.msra.mxu0 0.0
    %5683 = vmatprep.subr.mxu0 0.0
    %5684 = vmatpush2.msra.mxu0 0.0
    %5685 = vmatprep.subr.mxu0 0.0
    %5686 = vmatpush2.msra.mxu0 0.0
    %5687 = vmatprep.subr.mxu0 0.0
    %5688 = vmatpush2.msra.mxu0 0.0
    %5689 = vmatprep.mubr.f32.mxu0 0.0
    %5690 = vmatmul.mubr.f32.gmra.mxu0 %v5609
    %v5691 = vpop.f32.mrf.mxu0
    %v5692 = vadd.f32 0.0, %v5691
    %v5693 = vpop.f32.mrf.mxu0
    %5694 = vmatprep.mubr.f32.mxu0 0.0
    %5695 = vmatmul.mubr.f32.gmra.mxu0 %v5611
    %v5696 = vpop.f32.mrf.mxu0
    %v5697 = vadd.f32 0.0, %v5696
    %v5698 = vpop.f32.mrf.mxu0
    %5699 = vmatprep.mubr.f32.mxu0 0.0
    %5700 = vmatmul.mubr.f32.gmra.mxu0 %v5613
    %v5701 = vpop.f32.mrf.mxu0
    %v5702 = vadd.f32 0.0, %v5701
    %v5703 = vpop.f32.mrf.mxu0
    %5704 = vmatprep.mubr.f32.mxu0 0.0
    %5705 = vmatmul.mubr.f32.gmra.mxu0 %v5615
    %v5706 = vpop.f32.mrf.mxu0
    %v5707 = vadd.f32 0.0, %v5706
    %v5708 = vpop.f32.mrf.mxu0
    %5709 = vmatprep.mubr.f32.mxu0 0.0
    %5710 = vmatmul.mubr.f32.gmra.mxu0 %v5617
    %v5711 = vpop.f32.mrf.mxu0
    %v5712 = vadd.f32 0.0, %v5711
    %v5713 = vpop.f32.mrf.mxu0
    %5714 = vmatprep.mubr.f32.mxu0 0.0
    %5715 = vmatmul.mubr.f32.gmra.mxu0 %v5619
    %v5716 = vpop.f32.mrf.mxu0
    %v5717 = vadd.f32 0.0, %v5716
    %v5718 = vpop.f32.mrf.mxu0
    %5719 = vmatprep.mubr.f32.mxu0 0.0
    %5720 = vmatmul.mubr.f32.gmra.mxu0 %v5621
    %v5721 = vpop.f32.mrf.mxu0
    %v5722 = vadd.f32 0.0, %v5721
    %v5723 = vpop.f32.mrf.mxu0
    %5724 = vmatprep.mubr.f32.mxu0 0.0
    %5725 = vmatmul.mubr.f32.gmra.mxu0 %v5623
    %v5726 = vpop.f32.mrf.mxu0
    %v5727 = vadd.f32 0.0, %v5726
    %v5728 = vpop.f32.mrf.mxu0
    %5729 = vdwg.mxu0
    %v5730 = vsel %vm5608, %v5515, 0
    %v5732 = vsel %vm5608, %v5518, 0
    %v5734 = vsel %vm5608, %v5523, 0
    %v5736 = vsel %vm5608, %v5526, 0
    %v5738 = vsel %vm5608, %v5531, 0
    %v5740 = vsel %vm5608, %v5534, 0
    %v5742 = vsel %vm5608, %v5539, 0
    %v5744 = vsel %vm5608, %v5542, 0
    %5746 = vmatprep.subr.mxu0 0.0
    %5747 = vmatpush1.msra.mxu0 0.0
    %5748 = vmatprep.subr.mxu0 0.0
    %5749 = vmatpush1.msra.mxu0 0.0
    %5750 = vmatprep.subr.mxu0 0.0
    %5751 = vmatpush1.msra.mxu0 0.0
    %5752 = vmatprep.subr.mxu0 0.0
    %5753 = vmatpush1.msra.mxu0 0.0
    %5754 = vmatprep.subr.mxu0 0.0
    %5755 = vmatpush1.msra.mxu0 0.0
    %5756 = vmatprep.subr.mxu0 0.0
    %5757 = vmatpush1.msra.mxu0 0.0
    %5758 = vmatprep.subr.mxu0 0.0
    %5759 = vmatpush1.msra.mxu0 0.0
    %5760 = vmatprep.subr.mxu0 0.0
    %5761 = vmatpush1.msra.mxu0 0.0
    %5762 = vmatprep.subr.mxu0 0.0
    %5763 = vmatpush1.msra.mxu0 %v5567
    %5764 = vmatprep.subr.mxu0 0.0
    %5765 = vmatpush1.msra.mxu0 %v5566
    %5766 = vmatprep.subr.mxu0 0.0
    %5767 = vmatpush1.msra.mxu0 %v5565
    %5768 = vmatprep.subr.mxu0 0.0
    %5769 = vmatpush1.msra.mxu0 %v5564
    %5770 = vmatprep.subr.mxu0 0.0
    %5771 = vmatpush1.msra.mxu0 %v5563
    %5772 = vmatprep.subr.mxu0 0.0
    %5773 = vmatpush1.msra.mxu0 %v5562
    %5774 = vmatprep.subr.mxu0 0.0
    %5775 = vmatpush1.msra.mxu0 %v5561
    %5776 = vmatprep.subr.mxu0 0.0
    %5777 = vmatpush1.msra.mxu0 %v5560
    %5778 = vmatprep.subr.mxu0 0.0
    %5779 = vmatpush2.msra.mxu0 0.0
    %5780 = vmatprep.subr.mxu0 0.0
    %5781 = vmatpush2.msra.mxu0 0.0
    %5782 = vmatprep.subr.mxu0 0.0
    %5783 = vmatpush2.msra.mxu0 0.0
    %5784 = vmatprep.subr.mxu0 0.0
    %5785 = vmatpush2.msra.mxu0 0.0
    %5786 = vmatprep.subr.mxu0 0.0
    %5787 = vmatpush2.msra.mxu0 0.0
    %5788 = vmatprep.subr.mxu0 0.0
    %5789 = vmatpush2.msra.mxu0 0.0
    %5790 = vmatprep.subr.mxu0 0.0
    %5791 = vmatpush2.msra.mxu0 0.0
    %5792 = vmatprep.subr.mxu0 0.0
    %5793 = vmatpush2.msra.mxu0 0.0
    %5794 = vmatprep.subr.mxu0 0.0
    %5795 = vmatpush2.msra.mxu0 0.0
    %5796 = vmatprep.subr.mxu0 0.0
    %5797 = vmatpush2.msra.mxu0 0.0
    %5798 = vmatprep.subr.mxu0 0.0
    %5799 = vmatpush2.msra.mxu0 0.0
    %5800 = vmatprep.subr.mxu0 0.0
    %5801 = vmatpush2.msra.mxu0 0.0
    %5802 = vmatprep.subr.mxu0 0.0
    %5803 = vmatpush2.msra.mxu0 0.0
    %5804 = vmatprep.subr.mxu0 0.0
    %5805 = vmatpush2.msra.mxu0 0.0
    %5806 = vmatprep.subr.mxu0 0.0
    %5807 = vmatpush2.msra.mxu0 0.0
    %5808 = vmatprep.subr.mxu0 0.0
    %5809 = vmatpush2.msra.mxu0 0.0
    %5810 = vmatprep.mubr.f32.mxu0 0.0
    %5811 = vmatmul.mubr.f32.gmra.mxu0 %v5730
    %v5812 = vpop.f32.mrf.mxu0
    %v5813 = vadd.f32 %v5692, %v5812
    %v5814 = vpop.f32.mrf.mxu0
    %5815 = vmatprep.mubr.f32.mxu0 0.0
    %5816 = vmatmul.mubr.f32.gmra.mxu0 %v5732
    %v5817 = vpop.f32.mrf.mxu0
    %v5818 = vadd.f32 %v5697, %v5817
    %v5819 = vpop.f32.mrf.mxu0
    %5820 = vmatprep.mubr.f32.mxu0 0.0
    %5821 = vmatmul.mubr.f32.gmra.mxu0 %v5734
    %v5822 = vpop.f32.mrf.mxu0
    %v5823 = vadd.f32 %v5702, %v5822
    %v5824 = vpop.f32.mrf.mxu0
    %5825 = vmatprep.mubr.f32.mxu0 0.0
    %5826 = vmatmul.mubr.f32.gmra.mxu0 %v5736
    %v5827 = vpop.f32.mrf.mxu0
    %v5828 = vadd.f32 %v5707, %v5827
    %v5829 = vpop.f32.mrf.mxu0
    %5830 = vmatprep.mubr.f32.mxu0 0.0
    %5831 = vmatmul.mubr.f32.gmra.mxu0 %v5738
    %v5832 = vpop.f32.mrf.mxu0
    %v5833 = vadd.f32 %v5712, %v5832
    %v5834 = vpop.f32.mrf.mxu0
    %5835 = vmatprep.mubr.f32.mxu0 0.0
    %5836 = vmatmul.mubr.f32.gmra.mxu0 %v5740
    %v5837 = vpop.f32.mrf.mxu0
    %v5838 = vadd.f32 %v5717, %v5837
    %v5839 = vpop.f32.mrf.mxu0
    %5840 = vmatprep.mubr.f32.mxu0 0.0
    %5841 = vmatmul.mubr.f32.gmra.mxu0 %v5742
    %v5842 = vpop.f32.mrf.mxu0
    %v5843 = vadd.f32 %v5722, %v5842
    %v5844 = vpop.f32.mrf.mxu0
    %5845 = vmatprep.mubr.f32.mxu0 0.0
    %5846 = vmatmul.mubr.f32.gmra.mxu0 %v5744
    %v5847 = vpop.f32.mrf.mxu0
    %v5848 = vadd.f32 %v5727, %v5847
    %v5849 = vpop.f32.mrf.mxu0
    %5850 = vdwg.mxu0
    %s5851 = scalar_lea.vmem [#allocation12], 64
    %v5852 = vld [vmem:[%s5851] sm:$0xf]
    %v5853 = vld [vmem:[%s5851 + $0x4] sm:$0xf]
    %v5854 = vld [vmem:[%s5851 + $0x8] sm:$0xf]
    %v5855 = vld [vmem:[%s5851 + $0xc] sm:$0xf]
    %v5856 = vld [vmem:[%s5851 + $0x10] sm:$0xf]
    %v5857 = vld [vmem:[%s5851 + $0x14] sm:$0xf]
    %v5858 = vld [vmem:[%s5851 + $0x18] sm:$0xf]
    %v5859 = vld [vmem:[%s5851 + $0x1c] sm:$0xf]
    %v5860 = vunpack.c.l.bf16 %v5852
    %v5861 = vunpack.c.l.bf16 %v5853
    %v5862 = vunpack.c.l.bf16 %v5854
    %v5863 = vunpack.c.l.bf16 %v5855
    %v5864 = vunpack.c.l.bf16 %v5856
    %v5865 = vunpack.c.l.bf16 %v5857
    %v5866 = vunpack.c.l.bf16 %v5858
    %v5867 = vunpack.c.l.bf16 %v5859
    %v5868 = vrot.slane %v5515, 2
    %v5869 = vrot.slane %v5518, 2
    %v5870 = vsel %vm1448, %v5868, %v5869
    %v5871 = vrot.slane %v5523, 2
    %v5872 = vsel %vm1448, %v5869, %v5871
    %v5873 = vrot.slane %v5526, 2
    %v5874 = vsel %vm1448, %v5871, %v5873
    %v5875 = vrot.slane %v5531, 2
    %v5876 = vsel %vm1448, %v5873, %v5875
    %v5877 = vrot.slane %v5534, 2
    %v5878 = vsel %vm1448, %v5875, %v5877
    %v5879 = vrot.slane %v5539, 2
    %v5880 = vsel %vm1448, %v5877, %v5879
    %v5881 = vrot.slane %v5542, 2
    %v5882 = vsel %vm1448, %v5879, %v5881
    %v5883 = vsel %vm5608, %v5870, 0
    %v5885 = vsel %vm5608, %v5872, 0
    %v5887 = vsel %vm5608, %v5874, 0
    %v5889 = vsel %vm5608, %v5876, 0
    %v5891 = vsel %vm5608, %v5878, 0
    %v5893 = vsel %vm5608, %v5880, 0
    %v5895 = vsel %vm5608, %v5882, 0
    %v5897 = vsel %vm5608, %v5881, 0
    %5899 = vmatprep.subr.mxu0 0.0
    %5900 = vmatpush1.msra.mxu0 0.0
    %5901 = vmatprep.subr.mxu0 0.0
    %5902 = vmatpush1.msra.mxu0 0.0
    %5903 = vmatprep.subr.mxu0 0.0
    %5904 = vmatpush1.msra.mxu0 0.0
    %5905 = vmatprep.subr.mxu0 0.0
    %5906 = vmatpush1.msra.mxu0 0.0
    %5907 = vmatprep.subr.mxu0 0.0
    %5908 = vmatpush1.msra.mxu0 0.0
    %5909 = vmatprep.subr.mxu0 0.0
    %5910 = vmatpush1.msra.mxu0 0.0
    %5911 = vmatprep.subr.mxu0 0.0
    %5912 = vmatpush1.msra.mxu0 0.0
    %5913 = vmatprep.subr.mxu0 0.0
    %5914 = vmatpush1.msra.mxu0 0.0
    %5915 = vmatprep.subr.mxu0 0.0
    %5916 = vmatpush1.msra.mxu0 %v5867
    %5917 = vmatprep.subr.mxu0 0.0
    %5918 = vmatpush1.msra.mxu0 %v5866
    %5919 = vmatprep.subr.mxu0 0.0
    %5920 = vmatpush1.msra.mxu0 %v5865
    %5921 = vmatprep.subr.mxu0 0.0
    %5922 = vmatpush1.msra.mxu0 %v5864
    %5923 = vmatprep.subr.mxu0 0.0
    %5924 = vmatpush1.msra.mxu0 %v5863
    %5925 = vmatprep.subr.mxu0 0.0
    %5926 = vmatpush1.msra.mxu0 %v5862
    %5927 = vmatprep.subr.mxu0 0.0
    %5928 = vmatpush1.msra.mxu0 %v5861
    %5929 = vmatprep.subr.mxu0 0.0
    %5930 = vmatpush1.msra.mxu0 %v5860
    %5931 = vmatprep.subr.mxu0 0.0
    %5932 = vmatpush2.msra.mxu0 0.0
    %5933 = vmatprep.subr.mxu0 0.0
    %5934 = vmatpush2.msra.mxu0 0.0
    %5935 = vmatprep.subr.mxu0 0.0
    %5936 = vmatpush2.msra.mxu0 0.0
    %5937 = vmatprep.subr.mxu0 0.0
    %5938 = vmatpush2.msra.mxu0 0.0
    %5939 = vmatprep.subr.mxu0 0.0
    %5940 = vmatpush2.msra.mxu0 0.0
    %5941 = vmatprep.subr.mxu0 0.0
    %5942 = vmatpush2.msra.mxu0 0.0
    %5943 = vmatprep.subr.mxu0 0.0
    %5944 = vmatpush2.msra.mxu0 0.0
    %5945 = vmatprep.subr.mxu0 0.0
    %5946 = vmatpush2.msra.mxu0 0.0
    %5947 = vmatprep.subr.mxu0 0.0
    %5948 = vmatpush2.msra.mxu0 0.0
    %5949 = vmatprep.subr.mxu0 0.0
    %5950 = vmatpush2.msra.mxu0 0.0
    %5951 = vmatprep.subr.mxu0 0.0
    %5952 = vmatpush2.msra.mxu0 0.0
    %5953 = vmatprep.subr.mxu0 0.0
    %5954 = vmatpush2.msra.mxu0 0.0
    %5955 = vmatprep.subr.mxu0 0.0
    %5956 = vmatpush2.msra.mxu0 0.0
    %5957 = vmatprep.subr.mxu0 0.0
    %5958 = vmatpush2.msra.mxu0 0.0
    %5959 = vmatprep.subr.mxu0 0.0
    %5960 = vmatpush2.msra.mxu0 0.0
    %5961 = vmatprep.subr.mxu0 0.0
    %5962 = vmatpush2.msra.mxu0 0.0
    %5963 = vmatprep.mubr.f32.mxu0 0.0
    %5964 = vmatmul.mubr.f32.gmra.mxu0 %v5883
    %v5965 = vpop.f32.mrf.mxu0
    %v5966 = vadd.f32 0.0, %v5965
    %v5967 = vpop.f32.mrf.mxu0
    %5968 = vmatprep.mubr.f32.mxu0 0.0
    %5969 = vmatmul.mubr.f32.gmra.mxu0 %v5885
    %v5970 = vpop.f32.mrf.mxu0
    %v5971 = vadd.f32 0.0, %v5970
    %v5972 = vpop.f32.mrf.mxu0
    %5973 = vmatprep.mubr.f32.mxu0 0.0
    %5974 = vmatmul.mubr.f32.gmra.mxu0 %v5887
    %v5975 = vpop.f32.mrf.mxu0
    %v5976 = vadd.f32 0.0, %v5975
    %v5977 = vpop.f32.mrf.mxu0
    %5978 = vmatprep.mubr.f32.mxu0 0.0
    %5979 = vmatmul.mubr.f32.gmra.mxu0 %v5889
    %v5980 = vpop.f32.mrf.mxu0
    %v5981 = vadd.f32 0.0, %v5980
    %v5982 = vpop.f32.mrf.mxu0
    %5983 = vmatprep.mubr.f32.mxu0 0.0
    %5984 = vmatmul.mubr.f32.gmra.mxu0 %v5891
    %v5985 = vpop.f32.mrf.mxu0
    %v5986 = vadd.f32 0.0, %v5985
    %v5987 = vpop.f32.mrf.mxu0
    %5988 = vmatprep.mubr.f32.mxu0 0.0
    %5989 = vmatmul.mubr.f32.gmra.mxu0 %v5893
    %v5990 = vpop.f32.mrf.mxu0
    %v5991 = vadd.f32 0.0, %v5990
    %v5992 = vpop.f32.mrf.mxu0
    %5993 = vmatprep.mubr.f32.mxu0 0.0
    %5994 = vmatmul.mubr.f32.gmra.mxu0 %v5895
    %v5995 = vpop.f32.mrf.mxu0
    %v5996 = vadd.f32 0.0, %v5995
    %v5997 = vpop.f32.mrf.mxu0
    %5998 = vmatprep.mubr.f32.mxu0 0.0
    %5999 = vmatmul.mubr.f32.gmra.mxu0 %v5897
    %v6000 = vpop.f32.mrf.mxu0
    %v6001 = vadd.f32 0.0, %v6000
    %v6002 = vpop.f32.mrf.mxu0
    %6003 = vdwg.mxu0
    %v6004 = vadd.f32 %v5813, %v5966
    %v6005 = vadd.f32 %v5818, %v5971
    %v6006 = vadd.f32 %v5823, %v5976
    %v6007 = vadd.f32 %v5828, %v5981
    %v6008 = vadd.f32 %v5833, %v5986
    %v6009 = vadd.f32 %v5838, %v5991
    %v6010 = vadd.f32 %v5843, %v5996
    %v6011 = vadd.f32 %v5848, %v6001
    %s6012 = scalar_lea.vmem [#allocation12], 96
    %v6013 = vld [vmem:[%s6012] sm:$0xf]
    %v6014 = vld [vmem:[%s6012 + $0x4] sm:$0xf]
    %v6015 = vld [vmem:[%s6012 + $0x8] sm:$0xf]
    %v6016 = vld [vmem:[%s6012 + $0xc] sm:$0xf]
    %v6017 = vld [vmem:[%s6012 + $0x10] sm:$0xf]
    %v6018 = vld [vmem:[%s6012 + $0x14] sm:$0xf]
    %v6019 = vld [vmem:[%s6012 + $0x18] sm:$0xf]
    %v6020 = vld [vmem:[%s6012 + $0x1c] sm:$0xf]
    %v6021 = vunpack.c.l.bf16 %v6013
    %v6022 = vunpack.c.l.bf16 %v6014
    %v6023 = vunpack.c.l.bf16 %v6015
    %v6024 = vunpack.c.l.bf16 %v6016
    %v6025 = vunpack.c.l.bf16 %v6017
    %v6026 = vunpack.c.l.bf16 %v6018
    %v6027 = vunpack.c.l.bf16 %v6019
    %v6028 = vunpack.c.l.bf16 %v6020
    %v6029 = vrot.slane %v5515, 6
    %v6030 = vrot.slane %v5518, 6
    %v6031 = vsel %vm4829, %v6029, %v6030
    %v6032 = vrot.slane %v5523, 6
    %v6033 = vsel %vm4829, %v6030, %v6032
    %v6034 = vrot.slane %v5526, 6
    %v6035 = vsel %vm4829, %v6032, %v6034
    %v6036 = vrot.slane %v5531, 6
    %v6037 = vsel %vm4829, %v6034, %v6036
    %v6038 = vrot.slane %v5534, 6
    %v6039 = vsel %vm4829, %v6036, %v6038
    %v6040 = vrot.slane %v5539, 6
    %v6041 = vsel %vm4829, %v6038, %v6040
    %v6042 = vrot.slane %v5542, 6
    %v6043 = vsel %vm4829, %v6040, %v6042
    %v6044 = vsel %vm5608, %v6031, 0
    %v6046 = vsel %vm5608, %v6033, 0
    %v6048 = vsel %vm5608, %v6035, 0
    %v6050 = vsel %vm5608, %v6037, 0
    %v6052 = vsel %vm5608, %v6039, 0
    %v6054 = vsel %vm5608, %v6041, 0
    %v6056 = vsel %vm5608, %v6043, 0
    %v6058 = vsel %vm5608, %v6042, 0
    %6060 = vmatprep.subr.mxu0 0.0
    %6061 = vmatpush1.msra.mxu0 0.0
    %6062 = vmatprep.subr.mxu0 0.0
    %6063 = vmatpush1.msra.mxu0 0.0
    %6064 = vmatprep.subr.mxu0 0.0
    %6065 = vmatpush1.msra.mxu0 0.0
    %6066 = vmatprep.subr.mxu0 0.0
    %6067 = vmatpush1.msra.mxu0 0.0
    %6068 = vmatprep.subr.mxu0 0.0
    %6069 = vmatpush1.msra.mxu0 0.0
    %6070 = vmatprep.subr.mxu0 0.0
    %6071 = vmatpush1.msra.mxu0 0.0
    %6072 = vmatprep.subr.mxu0 0.0
    %6073 = vmatpush1.msra.mxu0 0.0
    %6074 = vmatprep.subr.mxu0 0.0
    %6075 = vmatpush1.msra.mxu0 0.0
    %6076 = vmatprep.subr.mxu0 0.0
    %6077 = vmatpush1.msra.mxu0 %v6028
    %6078 = vmatprep.subr.mxu0 0.0
    %6079 = vmatpush1.msra.mxu0 %v6027
    %6080 = vmatprep.subr.mxu0 0.0
    %6081 = vmatpush1.msra.mxu0 %v6026
    %6082 = vmatprep.subr.mxu0 0.0
    %6083 = vmatpush1.msra.mxu0 %v6025
    %6084 = vmatprep.subr.mxu0 0.0
    %6085 = vmatpush1.msra.mxu0 %v6024
    %6086 = vmatprep.subr.mxu0 0.0
    %6087 = vmatpush1.msra.mxu0 %v6023
    %6088 = vmatprep.subr.mxu0 0.0
    %6089 = vmatpush1.msra.mxu0 %v6022
    %6090 = vmatprep.subr.mxu0 0.0
    %6091 = vmatpush1.msra.mxu0 %v6021
    %6092 = vmatprep.subr.mxu0 0.0
    %6093 = vmatpush2.msra.mxu0 0.0
    %6094 = vmatprep.subr.mxu0 0.0
    %6095 = vmatpush2.msra.mxu0 0.0
    %6096 = vmatprep.subr.mxu0 0.0
    %6097 = vmatpush2.msra.mxu0 0.0
    %6098 = vmatprep.subr.mxu0 0.0
    %6099 = vmatpush2.msra.mxu0 0.0
    %6100 = vmatprep.subr.mxu0 0.0
    %6101 = vmatpush2.msra.mxu0 0.0
    %6102 = vmatprep.subr.mxu0 0.0
    %6103 = vmatpush2.msra.mxu0 0.0
    %6104 = vmatprep.subr.mxu0 0.0
    %6105 = vmatpush2.msra.mxu0 0.0
    %6106 = vmatprep.subr.mxu0 0.0
    %6107 = vmatpush2.msra.mxu0 0.0
    %6108 = vmatprep.subr.mxu0 0.0
    %6109 = vmatpush2.msra.mxu0 0.0
    %6110 = vmatprep.subr.mxu0 0.0
    %6111 = vmatpush2.msra.mxu0 0.0
    %6112 = vmatprep.subr.mxu0 0.0
    %6113 = vmatpush2.msra.mxu0 0.0
    %6114 = vmatprep.subr.mxu0 0.0
    %6115 = vmatpush2.msra.mxu0 0.0
    %6116 = vmatprep.subr.mxu0 0.0
    %6117 = vmatpush2.msra.mxu0 0.0
    %6118 = vmatprep.subr.mxu0 0.0
    %6119 = vmatpush2.msra.mxu0 0.0
    %6120 = vmatprep.subr.mxu0 0.0
    %6121 = vmatpush2.msra.mxu0 0.0
    %6122 = vmatprep.subr.mxu0 0.0
    %6123 = vmatpush2.msra.mxu0 0.0
    %6124 = vmatprep.mubr.f32.mxu0 0.0
    %6125 = vmatmul.mubr.f32.gmra.mxu0 %v6044
    %v6126 = vpop.f32.mrf.mxu0
    %v6127 = vadd.f32 0.0, %v6126
    %v6128 = vpop.f32.mrf.mxu0
    %6129 = vmatprep.mubr.f32.mxu0 0.0
    %6130 = vmatmul.mubr.f32.gmra.mxu0 %v6046
    %v6131 = vpop.f32.mrf.mxu0
    %v6132 = vadd.f32 0.0, %v6131
    %v6133 = vpop.f32.mrf.mxu0
    %6134 = vmatprep.mubr.f32.mxu0 0.0
    %6135 = vmatmul.mubr.f32.gmra.mxu0 %v6048
    %v6136 = vpop.f32.mrf.mxu0
    %v6137 = vadd.f32 0.0, %v6136
    %v6138 = vpop.f32.mrf.mxu0
    %6139 = vmatprep.mubr.f32.mxu0 0.0
    %6140 = vmatmul.mubr.f32.gmra.mxu0 %v6050
    %v6141 = vpop.f32.mrf.mxu0
    %v6142 = vadd.f32 0.0, %v6141
    %v6143 = vpop.f32.mrf.mxu0
    %6144 = vmatprep.mubr.f32.mxu0 0.0
    %6145 = vmatmul.mubr.f32.gmra.mxu0 %v6052
    %v6146 = vpop.f32.mrf.mxu0
    %v6147 = vadd.f32 0.0, %v6146
    %v6148 = vpop.f32.mrf.mxu0
    %6149 = vmatprep.mubr.f32.mxu0 0.0
    %6150 = vmatmul.mubr.f32.gmra.mxu0 %v6054
    %v6151 = vpop.f32.mrf.mxu0
    %v6152 = vadd.f32 0.0, %v6151
    %v6153 = vpop.f32.mrf.mxu0
    %6154 = vmatprep.mubr.f32.mxu0 0.0
    %6155 = vmatmul.mubr.f32.gmra.mxu0 %v6056
    %v6156 = vpop.f32.mrf.mxu0
    %v6157 = vadd.f32 0.0, %v6156
    %v6158 = vpop.f32.mrf.mxu0
    %6159 = vmatprep.mubr.f32.mxu0 0.0
    %6160 = vmatmul.mubr.f32.gmra.mxu0 %v6058
    %v6161 = vpop.f32.mrf.mxu0
    %v6162 = vadd.f32 0.0, %v6161
    %v6163 = vpop.f32.mrf.mxu0
    %6164 = vdwg.mxu0
    %v6165 = vadd.f32 %v6004, %v6127
    %v6166 = vadd.f32 %v6005, %v6132
    %v6167 = vadd.f32 %v6006, %v6137
    %v6168 = vadd.f32 %v6007, %v6142
    %v6169 = vadd.f32 %v6008, %v6147
    %v6170 = vadd.f32 %v6009, %v6152
    %v6171 = vadd.f32 %v6010, %v6157
    %v6172 = vadd.f32 %v6011, %v6162
    %s6173 = scalar_lea.vmem [#allocation12], 128
    %v6174 = vld [vmem:[%s6173] sm:$0xf]
    %v6175 = vld [vmem:[%s6173 + $0x4] sm:$0xf]
    %v6176 = vld [vmem:[%s6173 + $0x8] sm:$0xf]
    %v6177 = vld [vmem:[%s6173 + $0xc] sm:$0xf]
    %v6178 = vld [vmem:[%s6173 + $0x10] sm:$0xf]
    %v6179 = vld [vmem:[%s6173 + $0x14] sm:$0xf]
    %v6180 = vld [vmem:[%s6173 + $0x18] sm:$0xf]
    %v6181 = vld [vmem:[%s6173 + $0x1c] sm:$0xf]
    %v6182 = vunpack.c.l.bf16 %v6174
    %v6183 = vunpack.c.l.bf16 %v6175
    %v6184 = vunpack.c.l.bf16 %v6176
    %v6185 = vunpack.c.l.bf16 %v6177
    %v6186 = vunpack.c.l.bf16 %v6178
    %v6187 = vunpack.c.l.bf16 %v6179
    %v6188 = vunpack.c.l.bf16 %v6180
    %v6189 = vunpack.c.l.bf16 %v6181
    %v6191 = vrot.slane %v5515, 7
    %v6192 = vrot.slane %v5518, 7
    %v6193 = vsel %vm455, %v6191, %v6192
    %v6194 = vrot.slane %v5523, 7
    %v6195 = vsel %vm455, %v6192, %v6194
    %v6196 = vrot.slane %v5526, 7
    %v6197 = vsel %vm455, %v6194, %v6196
    %v6198 = vrot.slane %v5531, 7
    %v6199 = vsel %vm455, %v6196, %v6198
    %v6200 = vrot.slane %v5534, 7
    %v6201 = vsel %vm455, %v6198, %v6200
    %v6202 = vrot.slane %v5539, 7
    %v6203 = vsel %vm455, %v6200, %v6202
    %v6204 = vrot.slane %v5542, 7
    %v6205 = vsel %vm455, %v6202, %v6204
    %v6206 = vrot.slane %v5547, 7
    %v6207 = vsel %vm455, %v6204, %v6206
    %v6208 = vsel %vm5608, %v6193, 0
    %v6210 = vsel %vm5608, %v6195, 0
    %v6212 = vsel %vm5608, %v6197, 0
    %v6214 = vsel %vm5608, %v6199, 0
    %v6216 = vsel %vm5608, %v6201, 0
    %v6218 = vsel %vm5608, %v6203, 0
    %v6220 = vsel %vm5608, %v6205, 0
    %v6222 = vsel %vm5608, %v6207, 0
    %6224 = vmatprep.subr.mxu0 0.0
    %6225 = vmatpush1.msra.mxu0 0.0
    %6226 = vmatprep.subr.mxu0 0.0
    %6227 = vmatpush1.msra.mxu0 0.0
    %6228 = vmatprep.subr.mxu0 0.0
    %6229 = vmatpush1.msra.mxu0 0.0
    %6230 = vmatprep.subr.mxu0 0.0
    %6231 = vmatpush1.msra.mxu0 0.0
    %6232 = vmatprep.subr.mxu0 0.0
    %6233 = vmatpush1.msra.mxu0 0.0
    %6234 = vmatprep.subr.mxu0 0.0
    %6235 = vmatpush1.msra.mxu0 0.0
    %6236 = vmatprep.subr.mxu0 0.0
    %6237 = vmatpush1.msra.mxu0 0.0
    %6238 = vmatprep.subr.mxu0 0.0
    %6239 = vmatpush1.msra.mxu0 0.0
    %6240 = vmatprep.subr.mxu0 0.0
    %6241 = vmatpush1.msra.mxu0 %v6189
    %6242 = vmatprep.subr.mxu0 0.0
    %6243 = vmatpush1.msra.mxu0 %v6188
    %6244 = vmatprep.subr.mxu0 0.0
    %6245 = vmatpush1.msra.mxu0 %v6187
    %6246 = vmatprep.subr.mxu0 0.0
    %6247 = vmatpush1.msra.mxu0 %v6186
    %6248 = vmatprep.subr.mxu0 0.0
    %6249 = vmatpush1.msra.mxu0 %v6185
    %6250 = vmatprep.subr.mxu0 0.0
    %6251 = vmatpush1.msra.mxu0 %v6184
    %6252 = vmatprep.subr.mxu0 0.0
    %6253 = vmatpush1.msra.mxu0 %v6183
    %6254 = vmatprep.subr.mxu0 0.0
    %6255 = vmatpush1.msra.mxu0 %v6182
    %6256 = vmatprep.subr.mxu0 0.0
    %6257 = vmatpush2.msra.mxu0 0.0
    %6258 = vmatprep.subr.mxu0 0.0
    %6259 = vmatpush2.msra.mxu0 0.0
    %6260 = vmatprep.subr.mxu0 0.0
    %6261 = vmatpush2.msra.mxu0 0.0
    %6262 = vmatprep.subr.mxu0 0.0
    %6263 = vmatpush2.msra.mxu0 0.0
    %6264 = vmatprep.subr.mxu0 0.0
    %6265 = vmatpush2.msra.mxu0 0.0
    %6266 = vmatprep.subr.mxu0 0.0
    %6267 = vmatpush2.msra.mxu0 0.0
    %6268 = vmatprep.subr.mxu0 0.0
    %6269 = vmatpush2.msra.mxu0 0.0
    %6270 = vmatprep.subr.mxu0 0.0
    %6271 = vmatpush2.msra.mxu0 0.0
    %6272 = vmatprep.subr.mxu0 0.0
    %6273 = vmatpush2.msra.mxu0 0.0
    %6274 = vmatprep.subr.mxu0 0.0
    %6275 = vmatpush2.msra.mxu0 0.0
    %6276 = vmatprep.subr.mxu0 0.0
    %6277 = vmatpush2.msra.mxu0 0.0
    %6278 = vmatprep.subr.mxu0 0.0
    %6279 = vmatpush2.msra.mxu0 0.0
    %6280 = vmatprep.subr.mxu0 0.0
    %6281 = vmatpush2.msra.mxu0 0.0
    %6282 = vmatprep.subr.mxu0 0.0
    %6283 = vmatpush2.msra.mxu0 0.0
    %6284 = vmatprep.subr.mxu0 0.0
    %6285 = vmatpush2.msra.mxu0 0.0
    %6286 = vmatprep.subr.mxu0 0.0
    %6287 = vmatpush2.msra.mxu0 0.0
    %6288 = vmatprep.mubr.f32.mxu0 0.0
    %6289 = vmatmul.mubr.f32.gmra.mxu0 %v6208
    %v6290 = vpop.f32.mrf.mxu0
    %v6291 = vadd.f32 0.0, %v6290
    %v6292 = vpop.f32.mrf.mxu0
    %6293 = vmatprep.mubr.f32.mxu0 0.0
    %6294 = vmatmul.mubr.f32.gmra.mxu0 %v6210
    %v6295 = vpop.f32.mrf.mxu0
    %v6296 = vadd.f32 0.0, %v6295
    %v6297 = vpop.f32.mrf.mxu0
    %6298 = vmatprep.mubr.f32.mxu0 0.0
    %6299 = vmatmul.mubr.f32.gmra.mxu0 %v6212
    %v6300 = vpop.f32.mrf.mxu0
    %v6301 = vadd.f32 0.0, %v6300
    %v6302 = vpop.f32.mrf.mxu0
    %6303 = vmatprep.mubr.f32.mxu0 0.0
    %6304 = vmatmul.mubr.f32.gmra.mxu0 %v6214
    %v6305 = vpop.f32.mrf.mxu0
    %v6306 = vadd.f32 0.0, %v6305
    %v6307 = vpop.f32.mrf.mxu0
    %6308 = vmatprep.mubr.f32.mxu0 0.0
    %6309 = vmatmul.mubr.f32.gmra.mxu0 %v6216
    %v6310 = vpop.f32.mrf.mxu0
    %v6311 = vadd.f32 0.0, %v6310
    %v6312 = vpop.f32.mrf.mxu0
    %6313 = vmatprep.mubr.f32.mxu0 0.0
    %6314 = vmatmul.mubr.f32.gmra.mxu0 %v6218
    %v6315 = vpop.f32.mrf.mxu0
    %v6316 = vadd.f32 0.0, %v6315
    %v6317 = vpop.f32.mrf.mxu0
    %6318 = vmatprep.mubr.f32.mxu0 0.0
    %6319 = vmatmul.mubr.f32.gmra.mxu0 %v6220
    %v6320 = vpop.f32.mrf.mxu0
    %v6321 = vadd.f32 0.0, %v6320
    %v6322 = vpop.f32.mrf.mxu0
    %6323 = vmatprep.mubr.f32.mxu0 0.0
    %6324 = vmatmul.mubr.f32.gmra.mxu0 %v6222
    %v6325 = vpop.f32.mrf.mxu0
    %v6326 = vadd.f32 0.0, %v6325
    %v6327 = vpop.f32.mrf.mxu0
    %6328 = vdwg.mxu0
    %v6329 = vadd.f32 %v6165, %v6291
    %v6330 = vadd.f32 %v6166, %v6296
    %v6331 = vadd.f32 %v6167, %v6301
    %v6332 = vadd.f32 %v6168, %v6306
    %v6333 = vadd.f32 %v6169, %v6311
    %v6334 = vadd.f32 %v6170, %v6316
    %v6335 = vadd.f32 %v6171, %v6321
    %v6336 = vadd.f32 %v6172, %v6326
    %s6337 = scalar_lea.vmem [#allocation12], 160
    %v6338 = vld [vmem:[%s6337] sm:$0xf]
    %v6339 = vld [vmem:[%s6337 + $0x4] sm:$0xf]
    %v6340 = vld [vmem:[%s6337 + $0x8] sm:$0xf]
    %v6341 = vld [vmem:[%s6337 + $0xc] sm:$0xf]
    %v6342 = vld [vmem:[%s6337 + $0x10] sm:$0xf]
    %v6343 = vld [vmem:[%s6337 + $0x14] sm:$0xf]
    %v6344 = vld [vmem:[%s6337 + $0x18] sm:$0xf]
    %v6345 = vld [vmem:[%s6337 + $0x1c] sm:$0xf]
    %v6346 = vunpack.c.l.bf16 %v6338
    %v6347 = vunpack.c.l.bf16 %v6339
    %v6348 = vunpack.c.l.bf16 %v6340
    %v6349 = vunpack.c.l.bf16 %v6341
    %v6350 = vunpack.c.l.bf16 %v6342
    %v6351 = vunpack.c.l.bf16 %v6343
    %v6352 = vunpack.c.l.bf16 %v6344
    %v6353 = vunpack.c.l.bf16 %v6345
    %v6354 = vsel %vm5608, %v5547, 0
    %6356 = vmatprep.subr.mxu0 0.0
    %6357 = vmatpush1.msra.mxu0 0.0
    %6358 = vmatprep.subr.mxu0 0.0
    %6359 = vmatpush1.msra.mxu0 0.0
    %6360 = vmatprep.subr.mxu0 0.0
    %6361 = vmatpush1.msra.mxu0 0.0
    %6362 = vmatprep.subr.mxu0 0.0
    %6363 = vmatpush1.msra.mxu0 0.0
    %6364 = vmatprep.subr.mxu0 0.0
    %6365 = vmatpush1.msra.mxu0 0.0
    %6366 = vmatprep.subr.mxu0 0.0
    %6367 = vmatpush1.msra.mxu0 0.0
    %6368 = vmatprep.subr.mxu0 0.0
    %6369 = vmatpush1.msra.mxu0 0.0
    %6370 = vmatprep.subr.mxu0 0.0
    %6371 = vmatpush1.msra.mxu0 0.0
    %6372 = vmatprep.subr.mxu0 0.0
    %6373 = vmatpush1.msra.mxu0 %v6353
    %6374 = vmatprep.subr.mxu0 0.0
    %6375 = vmatpush1.msra.mxu0 %v6352
    %6376 = vmatprep.subr.mxu0 0.0
    %6377 = vmatpush1.msra.mxu0 %v6351
    %6378 = vmatprep.subr.mxu0 0.0
    %6379 = vmatpush1.msra.mxu0 %v6350
    %6380 = vmatprep.subr.mxu0 0.0
    %6381 = vmatpush1.msra.mxu0 %v6349
    %6382 = vmatprep.subr.mxu0 0.0
    %6383 = vmatpush1.msra.mxu0 %v6348
    %6384 = vmatprep.subr.mxu0 0.0
    %6385 = vmatpush1.msra.mxu0 %v6347
    %6386 = vmatprep.subr.mxu0 0.0
    %6387 = vmatpush1.msra.mxu0 %v6346
    %6388 = vmatprep.subr.mxu0 0.0
    %6389 = vmatpush2.msra.mxu0 0.0
    %6390 = vmatprep.subr.mxu0 0.0
    %6391 = vmatpush2.msra.mxu0 0.0
    %6392 = vmatprep.subr.mxu0 0.0
    %6393 = vmatpush2.msra.mxu0 0.0
    %6394 = vmatprep.subr.mxu0 0.0
    %6395 = vmatpush2.msra.mxu0 0.0
    %6396 = vmatprep.subr.mxu0 0.0
    %6397 = vmatpush2.msra.mxu0 0.0
    %6398 = vmatprep.subr.mxu0 0.0
    %6399 = vmatpush2.msra.mxu0 0.0
    %6400 = vmatprep.subr.mxu0 0.0
    %6401 = vmatpush2.msra.mxu0 0.0
    %6402 = vmatprep.subr.mxu0 0.0
    %6403 = vmatpush2.msra.mxu0 0.0
    %6404 = vmatprep.subr.mxu0 0.0
    %6405 = vmatpush2.msra.mxu0 0.0
    %6406 = vmatprep.subr.mxu0 0.0
    %6407 = vmatpush2.msra.mxu0 0.0
    %6408 = vmatprep.subr.mxu0 0.0
    %6409 = vmatpush2.msra.mxu0 0.0
    %6410 = vmatprep.subr.mxu0 0.0
    %6411 = vmatpush2.msra.mxu0 0.0
    %6412 = vmatprep.subr.mxu0 0.0
    %6413 = vmatpush2.msra.mxu0 0.0
    %6414 = vmatprep.subr.mxu0 0.0
    %6415 = vmatpush2.msra.mxu0 0.0
    %6416 = vmatprep.subr.mxu0 0.0
    %6417 = vmatpush2.msra.mxu0 0.0
    %6418 = vmatprep.subr.mxu0 0.0
    %6419 = vmatpush2.msra.mxu0 0.0
    %6420 = vmatprep.mubr.f32.mxu0 0.0
    %6421 = vmatmul.mubr.f32.gmra.mxu0 %v5732
    %v6422 = vpop.f32.mrf.mxu0
    %v6423 = vadd.f32 0.0, %v6422
    %v6424 = vpop.f32.mrf.mxu0
    %6425 = vmatprep.mubr.f32.mxu0 0.0
    %6426 = vmatmul.mubr.f32.gmra.mxu0 %v5734
    %v6427 = vpop.f32.mrf.mxu0
    %v6428 = vadd.f32 0.0, %v6427
    %v6429 = vpop.f32.mrf.mxu0
    %6430 = vmatprep.mubr.f32.mxu0 0.0
    %6431 = vmatmul.mubr.f32.gmra.mxu0 %v5736
    %v6432 = vpop.f32.mrf.mxu0
    %v6433 = vadd.f32 0.0, %v6432
    %v6434 = vpop.f32.mrf.mxu0
    %6435 = vmatprep.mubr.f32.mxu0 0.0
    %6436 = vmatmul.mubr.f32.gmra.mxu0 %v5738
    %v6437 = vpop.f32.mrf.mxu0
    %v6438 = vadd.f32 0.0, %v6437
    %v6439 = vpop.f32.mrf.mxu0
    %6440 = vmatprep.mubr.f32.mxu0 0.0
    %6441 = vmatmul.mubr.f32.gmra.mxu0 %v5740
    %v6442 = vpop.f32.mrf.mxu0
    %v6443 = vadd.f32 0.0, %v6442
    %v6444 = vpop.f32.mrf.mxu0
    %6445 = vmatprep.mubr.f32.mxu0 0.0
    %6446 = vmatmul.mubr.f32.gmra.mxu0 %v5742
    %v6447 = vpop.f32.mrf.mxu0
    %v6448 = vadd.f32 0.0, %v6447
    %v6449 = vpop.f32.mrf.mxu0
    %6450 = vmatprep.mubr.f32.mxu0 0.0
    %6451 = vmatmul.mubr.f32.gmra.mxu0 %v5744
    %v6452 = vpop.f32.mrf.mxu0
    %v6453 = vadd.f32 0.0, %v6452
    %v6454 = vpop.f32.mrf.mxu0
    %6455 = vmatprep.mubr.f32.mxu0 0.0
    %6456 = vmatmul.mubr.f32.gmra.mxu0 %v6354
    %v6457 = vpop.f32.mrf.mxu0
    %v6458 = vadd.f32 0.0, %v6457
    %v6459 = vpop.f32.mrf.mxu0
    %6460 = vdwg.mxu0
    %v6461 = vadd.f32 %v6329, %v6423
    %v6462 = vadd.f32 %v6330, %v6428
    %v6463 = vadd.f32 %v6331, %v6433
    %v6464 = vadd.f32 %v6332, %v6438
    %v6465 = vadd.f32 %v6333, %v6443
    %v6466 = vadd.f32 %v6334, %v6448
    %v6467 = vadd.f32 %v6335, %v6453
    %v6468 = vadd.f32 %v6336, %v6458
    %s6469 = scalar_lea.vmem [#allocation12], 192
    %v6470 = vld [vmem:[%s6469] sm:$0xf]
    %v6471 = vld [vmem:[%s6469 + $0x4] sm:$0xf]
    %v6472 = vld [vmem:[%s6469 + $0x8] sm:$0xf]
    %v6473 = vld [vmem:[%s6469 + $0xc] sm:$0xf]
    %v6474 = vld [vmem:[%s6469 + $0x10] sm:$0xf]
    %v6475 = vld [vmem:[%s6469 + $0x14] sm:$0xf]
    %v6476 = vld [vmem:[%s6469 + $0x18] sm:$0xf]
    %v6477 = vld [vmem:[%s6469 + $0x1c] sm:$0xf]
    %v6478 = vunpack.c.l.bf16 %v6470
    %v6479 = vunpack.c.l.bf16 %v6471
    %v6480 = vunpack.c.l.bf16 %v6472
    %v6481 = vunpack.c.l.bf16 %v6473
    %v6482 = vunpack.c.l.bf16 %v6474
    %v6483 = vunpack.c.l.bf16 %v6475
    %v6484 = vunpack.c.l.bf16 %v6476
    %v6485 = vunpack.c.l.bf16 %v6477
    %v6486 = vrot.slane %v5518, 4
    %v6487 = vrot.slane %v5523, 4
    %v6488 = vsel %vm4002, %v6486, %v6487
    %v6489 = vrot.slane %v5526, 4
    %v6490 = vsel %vm4002, %v6487, %v6489
    %v6491 = vrot.slane %v5531, 4
    %v6492 = vsel %vm4002, %v6489, %v6491
    %v6493 = vrot.slane %v5534, 4
    %v6494 = vsel %vm4002, %v6491, %v6493
    %v6495 = vrot.slane %v5539, 4
    %v6496 = vsel %vm4002, %v6493, %v6495
    %v6497 = vrot.slane %v5542, 4
    %v6498 = vsel %vm4002, %v6495, %v6497
    %v6499 = vrot.slane %v5547, 4
    %v6500 = vsel %vm4002, %v6497, %v6499
    %v6501 = vsel %vm5608, %v6488, 0
    %v6503 = vsel %vm5608, %v6490, 0
    %v6505 = vsel %vm5608, %v6492, 0
    %v6507 = vsel %vm5608, %v6494, 0
    %v6509 = vsel %vm5608, %v6496, 0
    %v6511 = vsel %vm5608, %v6498, 0
    %v6513 = vsel %vm5608, %v6500, 0
    %v6515 = vsel %vm5608, %v6499, 0
    %6517 = vmatprep.subr.mxu0 0.0
    %6518 = vmatpush1.msra.mxu0 0.0
    %6519 = vmatprep.subr.mxu0 0.0
    %6520 = vmatpush1.msra.mxu0 0.0
    %6521 = vmatprep.subr.mxu0 0.0
    %6522 = vmatpush1.msra.mxu0 0.0
    %6523 = vmatprep.subr.mxu0 0.0
    %6524 = vmatpush1.msra.mxu0 0.0
    %6525 = vmatprep.subr.mxu0 0.0
    %6526 = vmatpush1.msra.mxu0 0.0
    %6527 = vmatprep.subr.mxu0 0.0
    %6528 = vmatpush1.msra.mxu0 0.0
    %6529 = vmatprep.subr.mxu0 0.0
    %6530 = vmatpush1.msra.mxu0 0.0
    %6531 = vmatprep.subr.mxu0 0.0
    %6532 = vmatpush1.msra.mxu0 0.0
    %6533 = vmatprep.subr.mxu0 0.0
    %6534 = vmatpush1.msra.mxu0 %v6485
    %6535 = vmatprep.subr.mxu0 0.0
    %6536 = vmatpush1.msra.mxu0 %v6484
    %6537 = vmatprep.subr.mxu0 0.0
    %6538 = vmatpush1.msra.mxu0 %v6483
    %6539 = vmatprep.subr.mxu0 0.0
    %6540 = vmatpush1.msra.mxu0 %v6482
    %6541 = vmatprep.subr.mxu0 0.0
    %6542 = vmatpush1.msra.mxu0 %v6481
    %6543 = vmatprep.subr.mxu0 0.0
    %6544 = vmatpush1.msra.mxu0 %v6480
    %6545 = vmatprep.subr.mxu0 0.0
    %6546 = vmatpush1.msra.mxu0 %v6479
    %6547 = vmatprep.subr.mxu0 0.0
    %6548 = vmatpush1.msra.mxu0 %v6478
    %6549 = vmatprep.subr.mxu0 0.0
    %6550 = vmatpush2.msra.mxu0 0.0
    %6551 = vmatprep.subr.mxu0 0.0
    %6552 = vmatpush2.msra.mxu0 0.0
    %6553 = vmatprep.subr.mxu0 0.0
    %6554 = vmatpush2.msra.mxu0 0.0
    %6555 = vmatprep.subr.mxu0 0.0
    %6556 = vmatpush2.msra.mxu0 0.0
    %6557 = vmatprep.subr.mxu0 0.0
    %6558 = vmatpush2.msra.mxu0 0.0
    %6559 = vmatprep.subr.mxu0 0.0
    %6560 = vmatpush2.msra.mxu0 0.0
    %6561 = vmatprep.subr.mxu0 0.0
    %6562 = vmatpush2.msra.mxu0 0.0
    %6563 = vmatprep.subr.mxu0 0.0
    %6564 = vmatpush2.msra.mxu0 0.0
    %6565 = vmatprep.subr.mxu0 0.0
    %6566 = vmatpush2.msra.mxu0 0.0
    %6567 = vmatprep.subr.mxu0 0.0
    %6568 = vmatpush2.msra.mxu0 0.0
    %6569 = vmatprep.subr.mxu0 0.0
    %6570 = vmatpush2.msra.mxu0 0.0
    %6571 = vmatprep.subr.mxu0 0.0
    %6572 = vmatpush2.msra.mxu0 0.0
    %6573 = vmatprep.subr.mxu0 0.0
    %6574 = vmatpush2.msra.mxu0 0.0
    %6575 = vmatprep.subr.mxu0 0.0
    %6576 = vmatpush2.msra.mxu0 0.0
    %6577 = vmatprep.subr.mxu0 0.0
    %6578 = vmatpush2.msra.mxu0 0.0
    %6579 = vmatprep.subr.mxu0 0.0
    %6580 = vmatpush2.msra.mxu0 0.0
    %6581 = vmatprep.mubr.f32.mxu0 0.0
    %6582 = vmatmul.mubr.f32.gmra.mxu0 %v6501
    %v6583 = vpop.f32.mrf.mxu0
    %v6584 = vadd.f32 0.0, %v6583
    %v6585 = vpop.f32.mrf.mxu0
    %6586 = vmatprep.mubr.f32.mxu0 0.0
    %6587 = vmatmul.mubr.f32.gmra.mxu0 %v6503
    %v6588 = vpop.f32.mrf.mxu0
    %v6589 = vadd.f32 0.0, %v6588
    %v6590 = vpop.f32.mrf.mxu0
    %6591 = vmatprep.mubr.f32.mxu0 0.0
    %6592 = vmatmul.mubr.f32.gmra.mxu0 %v6505
    %v6593 = vpop.f32.mrf.mxu0
    %v6594 = vadd.f32 0.0, %v6593
    %v6595 = vpop.f32.mrf.mxu0
    %6596 = vmatprep.mubr.f32.mxu0 0.0
    %6597 = vmatmul.mubr.f32.gmra.mxu0 %v6507
    %v6598 = vpop.f32.mrf.mxu0
    %v6599 = vadd.f32 0.0, %v6598
    %v6600 = vpop.f32.mrf.mxu0
    %6601 = vmatprep.mubr.f32.mxu0 0.0
    %6602 = vmatmul.mubr.f32.gmra.mxu0 %v6509
    %v6603 = vpop.f32.mrf.mxu0
    %v6604 = vadd.f32 0.0, %v6603
    %v6605 = vpop.f32.mrf.mxu0
    %6606 = vmatprep.mubr.f32.mxu0 0.0
    %6607 = vmatmul.mubr.f32.gmra.mxu0 %v6511
    %v6608 = vpop.f32.mrf.mxu0
    %v6609 = vadd.f32 0.0, %v6608
    %v6610 = vpop.f32.mrf.mxu0
    %6611 = vmatprep.mubr.f32.mxu0 0.0
    %6612 = vmatmul.mubr.f32.gmra.mxu0 %v6513
    %v6613 = vpop.f32.mrf.mxu0
    %v6614 = vadd.f32 0.0, %v6613
    %v6615 = vpop.f32.mrf.mxu0
    %6616 = vmatprep.mubr.f32.mxu0 0.0
    %6617 = vmatmul.mubr.f32.gmra.mxu0 %v6515
    %v6618 = vpop.f32.mrf.mxu0
    %v6619 = vadd.f32 0.0, %v6618
    %v6620 = vpop.f32.mrf.mxu0
    %6621 = vdwg.mxu0
    %v6622 = vadd.f32 %v6461, %v6584
    %v6623 = vadd.f32 %v6462, %v6589
    %v6624 = vadd.f32 %v6463, %v6594
    %v6625 = vadd.f32 %v6464, %v6599
    %v6626 = vadd.f32 %v6465, %v6604
    %v6627 = vadd.f32 %v6466, %v6609
    %v6628 = vadd.f32 %v6467, %v6614
    %v6629 = vadd.f32 %v6468, %v6619
    %s6630 = scalar_lea.vmem [#allocation12], 224
    %v6631 = vld [vmem:[%s6630] sm:$0xf]
    %v6632 = vld [vmem:[%s6630 + $0x4] sm:$0xf]
    %v6633 = vld [vmem:[%s6630 + $0x8] sm:$0xf]
    %v6634 = vld [vmem:[%s6630 + $0xc] sm:$0xf]
    %v6635 = vld [vmem:[%s6630 + $0x10] sm:$0xf]
    %v6636 = vld [vmem:[%s6630 + $0x14] sm:$0xf]
    %v6637 = vld [vmem:[%s6630 + $0x18] sm:$0xf]
    %v6638 = vld [vmem:[%s6630 + $0x1c] sm:$0xf]
    %v6639 = vunpack.c.l.bf16 %v6631
    %v6640 = vunpack.c.l.bf16 %v6632
    %v6641 = vunpack.c.l.bf16 %v6633
    %v6642 = vunpack.c.l.bf16 %v6634
    %v6643 = vunpack.c.l.bf16 %v6635
    %v6644 = vunpack.c.l.bf16 %v6636
    %v6645 = vunpack.c.l.bf16 %v6637
    %v6646 = vunpack.c.l.bf16 %v6638
    %v6647 = vrot.slane %v5518, 5
    %v6648 = vrot.slane %v5523, 5
    %v6649 = vsel %vm4525, %v6647, %v6648
    %v6650 = vrot.slane %v5526, 5
    %v6651 = vsel %vm4525, %v6648, %v6650
    %v6652 = vrot.slane %v5531, 5
    %v6653 = vsel %vm4525, %v6650, %v6652
    %v6654 = vrot.slane %v5534, 5
    %v6655 = vsel %vm4525, %v6652, %v6654
    %v6656 = vrot.slane %v5539, 5
    %v6657 = vsel %vm4525, %v6654, %v6656
    %v6658 = vrot.slane %v5542, 5
    %v6659 = vsel %vm4525, %v6656, %v6658
    %v6660 = vrot.slane %v5547, 5
    %v6661 = vsel %vm4525, %v6658, %v6660
    %v6662 = vsel %vm5608, %v6649, 0
    %v6664 = vsel %vm5608, %v6651, 0
    %v6666 = vsel %vm5608, %v6653, 0
    %v6668 = vsel %vm5608, %v6655, 0
    %v6670 = vsel %vm5608, %v6657, 0
    %v6672 = vsel %vm5608, %v6659, 0
    %v6674 = vsel %vm5608, %v6661, 0
    %v6676 = vsel %vm5608, %v6660, 0
    %6678 = vmatprep.subr.mxu0 0.0
    %6679 = vmatpush1.msra.mxu0 0.0
    %6680 = vmatprep.subr.mxu0 0.0
    %6681 = vmatpush1.msra.mxu0 0.0
    %6682 = vmatprep.subr.mxu0 0.0
    %6683 = vmatpush1.msra.mxu0 0.0
    %6684 = vmatprep.subr.mxu0 0.0
    %6685 = vmatpush1.msra.mxu0 0.0
    %6686 = vmatprep.subr.mxu0 0.0
    %6687 = vmatpush1.msra.mxu0 0.0
    %6688 = vmatprep.subr.mxu0 0.0
    %6689 = vmatpush1.msra.mxu0 0.0
    %6690 = vmatprep.subr.mxu0 0.0
    %6691 = vmatpush1.msra.mxu0 0.0
    %6692 = vmatprep.subr.mxu0 0.0
    %6693 = vmatpush1.msra.mxu0 0.0
    %6694 = vmatprep.subr.mxu0 0.0
    %6695 = vmatpush1.msra.mxu0 %v6646
    %6696 = vmatprep.subr.mxu0 0.0
    %6697 = vmatpush1.msra.mxu0 %v6645
    %6698 = vmatprep.subr.mxu0 0.0
    %6699 = vmatpush1.msra.mxu0 %v6644
    %6700 = vmatprep.subr.mxu0 0.0
    %6701 = vmatpush1.msra.mxu0 %v6643
    %6702 = vmatprep.subr.mxu0 0.0
    %6703 = vmatpush1.msra.mxu0 %v6642
    %6704 = vmatprep.subr.mxu0 0.0
    %6705 = vmatpush1.msra.mxu0 %v6641
    %6706 = vmatprep.subr.mxu0 0.0
    %6707 = vmatpush1.msra.mxu0 %v6640
    %6708 = vmatprep.subr.mxu0 0.0
    %6709 = vmatpush1.msra.mxu0 %v6639
    %6710 = vmatprep.subr.mxu0 0.0
    %6711 = vmatpush2.msra.mxu0 0.0
    %6712 = vmatprep.subr.mxu0 0.0
    %6713 = vmatpush2.msra.mxu0 0.0
    %6714 = vmatprep.subr.mxu0 0.0
    %6715 = vmatpush2.msra.mxu0 0.0
    %6716 = vmatprep.subr.mxu0 0.0
    %6717 = vmatpush2.msra.mxu0 0.0
    %6718 = vmatprep.subr.mxu0 0.0
    %6719 = vmatpush2.msra.mxu0 0.0
    %6720 = vmatprep.subr.mxu0 0.0
    %6721 = vmatpush2.msra.mxu0 0.0
    %6722 = vmatprep.subr.mxu0 0.0
    %6723 = vmatpush2.msra.mxu0 0.0
    %6724 = vmatprep.subr.mxu0 0.0
    %6725 = vmatpush2.msra.mxu0 0.0
    %6726 = vmatprep.subr.mxu0 0.0
    %6727 = vmatpush2.msra.mxu0 0.0
    %6728 = vmatprep.subr.mxu0 0.0
    %6729 = vmatpush2.msra.mxu0 0.0
    %6730 = vmatprep.subr.mxu0 0.0
    %6731 = vmatpush2.msra.mxu0 0.0
    %6732 = vmatprep.subr.mxu0 0.0
    %6733 = vmatpush2.msra.mxu0 0.0
    %6734 = vmatprep.subr.mxu0 0.0
    %6735 = vmatpush2.msra.mxu0 0.0
    %6736 = vmatprep.subr.mxu0 0.0
    %6737 = vmatpush2.msra.mxu0 0.0
    %6738 = vmatprep.subr.mxu0 0.0
    %6739 = vmatpush2.msra.mxu0 0.0
    %6740 = vmatprep.subr.mxu0 0.0
    %6741 = vmatpush2.msra.mxu0 0.0
    %6742 = vmatprep.mubr.f32.mxu0 0.0
    %6743 = vmatmul.mubr.f32.gmra.mxu0 %v6662
    %v6744 = vpop.f32.mrf.mxu0
    %v6745 = vadd.f32 0.0, %v6744
    %v6746 = vpop.f32.mrf.mxu0
    %6747 = vmatprep.mubr.f32.mxu0 0.0
    %6748 = vmatmul.mubr.f32.gmra.mxu0 %v6664
    %v6749 = vpop.f32.mrf.mxu0
    %v6750 = vadd.f32 0.0, %v6749
    %v6751 = vpop.f32.mrf.mxu0
    %6752 = vmatprep.mubr.f32.mxu0 0.0
    %6753 = vmatmul.mubr.f32.gmra.mxu0 %v6666
    %v6754 = vpop.f32.mrf.mxu0
    %v6755 = vadd.f32 0.0, %v6754
    %v6756 = vpop.f32.mrf.mxu0
    %6757 = vmatprep.mubr.f32.mxu0 0.0
    %6758 = vmatmul.mubr.f32.gmra.mxu0 %v6668
    %v6759 = vpop.f32.mrf.mxu0
    %v6760 = vadd.f32 0.0, %v6759
    %v6761 = vpop.f32.mrf.mxu0
    %6762 = vmatprep.mubr.f32.mxu0 0.0
    %6763 = vmatmul.mubr.f32.gmra.mxu0 %v6670
    %v6764 = vpop.f32.mrf.mxu0
    %v6765 = vadd.f32 0.0, %v6764
    %v6766 = vpop.f32.mrf.mxu0
    %6767 = vmatprep.mubr.f32.mxu0 0.0
    %6768 = vmatmul.mubr.f32.gmra.mxu0 %v6672
    %v6769 = vpop.f32.mrf.mxu0
    %v6770 = vadd.f32 0.0, %v6769
    %v6771 = vpop.f32.mrf.mxu0
    %6772 = vmatprep.mubr.f32.mxu0 0.0
    %6773 = vmatmul.mubr.f32.gmra.mxu0 %v6674
    %v6774 = vpop.f32.mrf.mxu0
    %v6775 = vadd.f32 0.0, %v6774
    %v6776 = vpop.f32.mrf.mxu0
    %6777 = vmatprep.mubr.f32.mxu0 0.0
    %6778 = vmatmul.mubr.f32.gmra.mxu0 %v6676
    %v6779 = vpop.f32.mrf.mxu0
    %v6780 = vadd.f32 0.0, %v6779
    %v6781 = vpop.f32.mrf.mxu0
    %6782 = vdwg.mxu0
    %v6783 = vadd.f32 %v6622, %v6745
    %v6784 = vadd.f32 %v6623, %v6750
    %v6785 = vadd.f32 %v6624, %v6755
    %v6786 = vadd.f32 %v6625, %v6760
    %v6787 = vadd.f32 %v6626, %v6765
    %v6788 = vadd.f32 %v6627, %v6770
    %v6789 = vadd.f32 %v6628, %v6775
    %v6790 = vadd.f32 %v6629, %v6780
    %s6791 = scalar_lea.vmem [#allocation12], 256
    %v6792 = vld [vmem:[%s6791] sm:$0xf]
    %v6793 = vld [vmem:[%s6791 + $0x4] sm:$0xf]
    %v6794 = vld [vmem:[%s6791 + $0x8] sm:$0xf]
    %v6795 = vld [vmem:[%s6791 + $0xc] sm:$0xf]
    %v6796 = vld [vmem:[%s6791 + $0x10] sm:$0xf]
    %v6797 = vld [vmem:[%s6791 + $0x14] sm:$0xf]
    %v6798 = vld [vmem:[%s6791 + $0x18] sm:$0xf]
    %v6799 = vld [vmem:[%s6791 + $0x1c] sm:$0xf]
    %v6800 = vunpack.c.l.bf16 %v6792
    %v6801 = vunpack.c.l.bf16 %v6793
    %v6802 = vunpack.c.l.bf16 %v6794
    %v6803 = vunpack.c.l.bf16 %v6795
    %v6804 = vunpack.c.l.bf16 %v6796
    %v6805 = vunpack.c.l.bf16 %v6797
    %v6806 = vunpack.c.l.bf16 %v6798
    %v6807 = vunpack.c.l.bf16 %v6799
    %v6808 = vrot.slane %v5547, 6
    %v6809 = vsel %vm4829, %v6042, %v6808
    %v6810 = vsel %vm5608, %v6809, 0
    %v6812 = vsel %vm5608, %v6808, 0
    %6814 = vmatprep.subr.mxu0 0.0
    %6815 = vmatpush1.msra.mxu0 0.0
    %6816 = vmatprep.subr.mxu0 0.0
    %6817 = vmatpush1.msra.mxu0 0.0
    %6818 = vmatprep.subr.mxu0 0.0
    %6819 = vmatpush1.msra.mxu0 0.0
    %6820 = vmatprep.subr.mxu0 0.0
    %6821 = vmatpush1.msra.mxu0 0.0
    %6822 = vmatprep.subr.mxu0 0.0
    %6823 = vmatpush1.msra.mxu0 0.0
    %6824 = vmatprep.subr.mxu0 0.0
    %6825 = vmatpush1.msra.mxu0 0.0
    %6826 = vmatprep.subr.mxu0 0.0
    %6827 = vmatpush1.msra.mxu0 0.0
    %6828 = vmatprep.subr.mxu0 0.0
    %6829 = vmatpush1.msra.mxu0 0.0
    %6830 = vmatprep.subr.mxu0 0.0
    %6831 = vmatpush1.msra.mxu0 %v6807
    %6832 = vmatprep.subr.mxu0 0.0
    %6833 = vmatpush1.msra.mxu0 %v6806
    %6834 = vmatprep.subr.mxu0 0.0
    %6835 = vmatpush1.msra.mxu0 %v6805
    %6836 = vmatprep.subr.mxu0 0.0
    %6837 = vmatpush1.msra.mxu0 %v6804
    %6838 = vmatprep.subr.mxu0 0.0
    %6839 = vmatpush1.msra.mxu0 %v6803
    %6840 = vmatprep.subr.mxu0 0.0
    %6841 = vmatpush1.msra.mxu0 %v6802
    %6842 = vmatprep.subr.mxu0 0.0
    %6843 = vmatpush1.msra.mxu0 %v6801
    %6844 = vmatprep.subr.mxu0 0.0
    %6845 = vmatpush1.msra.mxu0 %v6800
    %6846 = vmatprep.subr.mxu0 0.0
    %6847 = vmatpush2.msra.mxu0 0.0
    %6848 = vmatprep.subr.mxu0 0.0
    %6849 = vmatpush2.msra.mxu0 0.0
    %6850 = vmatprep.subr.mxu0 0.0
    %6851 = vmatpush2.msra.mxu0 0.0
    %6852 = vmatprep.subr.mxu0 0.0
    %6853 = vmatpush2.msra.mxu0 0.0
    %6854 = vmatprep.subr.mxu0 0.0
    %6855 = vmatpush2.msra.mxu0 0.0
    %6856 = vmatprep.subr.mxu0 0.0
    %6857 = vmatpush2.msra.mxu0 0.0
    %6858 = vmatprep.subr.mxu0 0.0
    %6859 = vmatpush2.msra.mxu0 0.0
    %6860 = vmatprep.subr.mxu0 0.0
    %6861 = vmatpush2.msra.mxu0 0.0
    %6862 = vmatprep.subr.mxu0 0.0
    %6863 = vmatpush2.msra.mxu0 0.0
    %6864 = vmatprep.subr.mxu0 0.0
    %6865 = vmatpush2.msra.mxu0 0.0
    %6866 = vmatprep.subr.mxu0 0.0
    %6867 = vmatpush2.msra.mxu0 0.0
    %6868 = vmatprep.subr.mxu0 0.0
    %6869 = vmatpush2.msra.mxu0 0.0
    %6870 = vmatprep.subr.mxu0 0.0
    %6871 = vmatpush2.msra.mxu0 0.0
    %6872 = vmatprep.subr.mxu0 0.0
    %6873 = vmatpush2.msra.mxu0 0.0
    %6874 = vmatprep.subr.mxu0 0.0
    %6875 = vmatpush2.msra.mxu0 0.0
    %6876 = vmatprep.subr.mxu0 0.0
    %6877 = vmatpush2.msra.mxu0 0.0
    %6878 = vmatprep.mubr.f32.mxu0 0.0
    %6879 = vmatmul.mubr.f32.gmra.mxu0 %v6046
    %v6880 = vpop.f32.mrf.mxu0
    %v6881 = vadd.f32 0.0, %v6880
    %v6882 = vpop.f32.mrf.mxu0
    %6883 = vmatprep.mubr.f32.mxu0 0.0
    %6884 = vmatmul.mubr.f32.gmra.mxu0 %v6048
    %v6885 = vpop.f32.mrf.mxu0
    %v6886 = vadd.f32 0.0, %v6885
    %v6887 = vpop.f32.mrf.mxu0
    %6888 = vmatprep.mubr.f32.mxu0 0.0
    %6889 = vmatmul.mubr.f32.gmra.mxu0 %v6050
    %v6890 = vpop.f32.mrf.mxu0
    %v6891 = vadd.f32 0.0, %v6890
    %v6892 = vpop.f32.mrf.mxu0
    %6893 = vmatprep.mubr.f32.mxu0 0.0
    %6894 = vmatmul.mubr.f32.gmra.mxu0 %v6052
    %v6895 = vpop.f32.mrf.mxu0
    %v6896 = vadd.f32 0.0, %v6895
    %v6897 = vpop.f32.mrf.mxu0
    %6898 = vmatprep.mubr.f32.mxu0 0.0
    %6899 = vmatmul.mubr.f32.gmra.mxu0 %v6054
    %v6900 = vpop.f32.mrf.mxu0
    %v6901 = vadd.f32 0.0, %v6900
    %v6902 = vpop.f32.mrf.mxu0
    %6903 = vmatprep.mubr.f32.mxu0 0.0
    %6904 = vmatmul.mubr.f32.gmra.mxu0 %v6056
    %v6905 = vpop.f32.mrf.mxu0
    %v6906 = vadd.f32 0.0, %v6905
    %v6907 = vpop.f32.mrf.mxu0
    %6908 = vmatprep.mubr.f32.mxu0 0.0
    %6909 = vmatmul.mubr.f32.gmra.mxu0 %v6810
    %v6910 = vpop.f32.mrf.mxu0
    %v6911 = vadd.f32 0.0, %v6910
    %v6912 = vpop.f32.mrf.mxu0
    %6913 = vmatprep.mubr.f32.mxu0 0.0
    %6914 = vmatmul.mubr.f32.gmra.mxu0 %v6812
    %v6915 = vpop.f32.mrf.mxu0
    %v6916 = vadd.f32 0.0, %v6915
    %v6917 = vpop.f32.mrf.mxu0
    %6918 = vdwg.mxu0
    %v6919 = vadd.f32 %v6783, %v6881
    %v6920 = vadd.f32 %v6784, %v6886
    %v6921 = vadd.f32 %v6785, %v6891
    %v6922 = vadd.f32 %v6786, %v6896
    %v6923 = vadd.f32 %v6787, %v6901
    %v6924 = vadd.f32 %v6788, %v6906
    %v6925 = vadd.f32 %v6789, %v6911
    %v6926 = vadd.f32 %v6790, %v6916
    %v6927 = vlaneseq
    %v6928 = vshrl.u32 %v6927, 7
    %v6929 = vsub.s32 3, %v6928
    %v6930 = vrot.slane %v138, %v6929
    %v6931 = vadd.f32 %v6919, %v6930
    %v6932 = vadd.f32 %v6920, %v6930
    %v6933 = vadd.f32 %v6921, %v6930
    %v6934 = vadd.f32 %v6922, %v6930
    %v6935 = vadd.f32 %v6923, %v6930
    %v6936 = vadd.f32 %v6924, %v6930
    %v6937 = vadd.f32 %v6925, %v6930
    %v6938 = vadd.f32 %v6926, %v6930
    %v6939 = vmax.f32 %v6931, 0.0
    %v6940 = vmax.f32 %v6932, 0.0
    %v6941 = vmax.f32 %v6933, 0.0
    %v6942 = vmax.f32 %v6934, 0.0
    %v6943 = vmax.f32 %v6935, 0.0
    %v6944 = vmax.f32 %v6936, 0.0
    %v6945 = vmax.f32 %v6937, 0.0
    %v6946 = vmax.f32 %v6938, 0.0
    %v6947 = vld [vmem:[#allocation8] sm:$0xf]
    %v6948 = vld [vmem:[#allocation8 + $0x4] sm:$0xf]
    %v6949 = vld [vmem:[#allocation8 + $0x8] sm:$0xf]
    %v6950 = vld [vmem:[#allocation8 + $0xc] sm:$0xf]
    %v6951 = vpack.c.bf16 %v6940, %v6939
    %v6952 = vpack.c.bf16 %v6942, %v6941
    %v6953 = vpack.c.bf16 %v6944, %v6943
    %v6954 = vpack.c.bf16 %v6946, %v6945
    %v6959 = vunpack.c.l.b16 %v6947
    %v6960 = vunpack.c.l.b16 %v6948
    %v6961 = vunpack.c.l.b16 %v6949
    %v6962 = vunpack.c.l.b16 %v6950
    %v6963 = vpack.c.b16 %v6960, %v6959
    %v6964 = vpack.c.b16 %v6962, %v6961
    %vm6965 = vcmask 474112
    %v6967 = vsel %vm6965, %v6963, 0
    %v6970 = vsel %vm6965, %v6964, 0
    %v6973 = vsel %vm3698, %v6954, 0
    %6975 = vmatprep.subr.bf16.mxu0 0
    %6976 = vmatpush1.bf16.msra.mxu0 0
    %6977 = vmatprep.subr.bf16.mxu0 0
    %6978 = vmatpush1.bf16.msra.mxu0 0
    %6979 = vmatprep.subr.bf16.mxu0 0
    %6980 = vmatpush1.bf16.msra.mxu0 0
    %6981 = vmatprep.subr.bf16.mxu0 0
    %6982 = vmatpush1.bf16.msra.mxu0 0
    %6983 = vmatprep.subr.bf16.mxu0 0
    %6984 = vmatpush1.bf16.msra.mxu0 %v6973
    %6985 = vmatprep.subr.bf16.mxu0 0
    %6986 = vmatpush1.bf16.msra.mxu0 %v6953
    %6987 = vmatprep.subr.bf16.mxu0 0
    %6988 = vmatpush1.bf16.msra.mxu0 %v6952
    %6989 = vmatprep.subr.bf16.mxu0 0
    %6990 = vmatpush1.bf16.msra.mxu0 %v6951
    %6991 = vmatprep.subr.bf16.mxu0 0
    %6992 = vmatpush2.bf16.msra.mxu0 0
    %6993 = vmatprep.subr.bf16.mxu0 0
    %6994 = vmatpush2.bf16.msra.mxu0 0
    %6995 = vmatprep.subr.bf16.mxu0 0
    %6996 = vmatpush2.bf16.msra.mxu0 0
    %6997 = vmatprep.subr.bf16.mxu0 0
    %6998 = vmatpush2.bf16.msra.mxu0 0
    %6999 = vmatprep.subr.bf16.mxu0 0
    %7000 = vmatpush2.bf16.msra.mxu0 0
    %7001 = vmatprep.subr.bf16.mxu0 0
    %7002 = vmatpush2.bf16.msra.mxu0 0
    %7003 = vmatprep.subr.bf16.mxu0 0
    %7004 = vmatpush2.bf16.msra.mxu0 0
    %7005 = vmatprep.subr.bf16.mxu0 0
    %7006 = vmatpush2.bf16.msra.mxu0 0
    %7007 = vmatprep.mubr.bf16.mxu0 0
    %7008 = vmatmul.mubr.bf16.gmra.mxu0 %v6967
    %v7009 = vpop.f32.mrf.mxu0
    %v7010 = vadd.f32 0.0, %v7009
    %v7011 = vpop.f32.mrf.mxu0
    %v7012 = vpop.f32.mrf.mxu0
    %v7013 = vadd.f32 0.0, %v7012
    %v7014 = vpop.f32.mrf.mxu0
    %7015 = vmatprep.mubr.bf16.mxu0 0
    %7016 = vmatmul.mubr.bf16.gmra.mxu0 %v6970
    %v7017 = vpop.f32.mrf.mxu0
    %v7018 = vadd.f32 0.0, %v7017
    %v7019 = vpop.f32.mrf.mxu0
    %v7020 = vpop.f32.mrf.mxu0
    %v7021 = vadd.f32 0.0, %v7020
    %v7022 = vpop.f32.mrf.mxu0
    %7023 = vdwg.mxu0
    %s7024 = smul.u32 4, 256
    %s7025 = smul.u32 %s7024, 4
    %s7026 = sshll.u32 %s7025, 4
    %7027 = dma.done [#allocation3], %s7026
    %v7032 = vcombine.low %v7010, %v7018
    %v7033 = vcombine.high %v7010, %v7018
    %v7035 = vunpack.c.l.s4 1966171168
    %v7036 = vunpack.c.0.s8 %v7035
    %v7037 = vlaneseq
    %v7038 = vshrl.u32 %v7037, 7
    %v7039 = vsub.s32 %v7036, %v7038
    %v7040 = vrot.slane %v7032, %v7039
    %v7042 = vunpack.c.l.s4 1966171168
    %v7043 = vunpack.c.0.s8 %v7042
    %v7044 = vlaneseq
    %v7045 = vshrl.u32 %v7044, 7
    %v7046 = vsub.s32 %v7043, %v7045
    %v7047 = vrot.slane %v7033, %v7046
    %v7048 = vcombine.high %v7040, %v7040
    %v7049 = vcombine.high %v7047, %v7047
    %v7051 = vunpack.c.l.s4 1966171168
    %v7052 = vunpack.c.0.s8 %v7051
    %v7053 = vlaneseq
    %v7054 = vshrl.u32 %v7053, 7
    %v7055 = vsub.s32 %v7052, %v7054
    %v7056 = vrot.slane %v7040, %v7055
    %v7058 = vunpack.c.l.s4 1966171168
    %v7059 = vunpack.c.0.s8 %v7058
    %v7060 = vlaneseq
    %v7061 = vshrl.u32 %v7060, 7
    %v7062 = vsub.s32 %v7059, %v7061
    %v7063 = vrot.slane %v7047, %v7062
    %v7065 = vunpack.c.l.s4 1966171168
    %v7066 = vunpack.c.0.s8 %v7065
    %v7067 = vlaneseq
    %v7068 = vshrl.u32 %v7067, 7
    %v7069 = vsub.s32 %v7066, %v7068
    %v7070 = vrot.slane %v7048, %v7069
    %v7072 = vunpack.c.l.s4 1966171168
    %v7073 = vunpack.c.0.s8 %v7072
    %v7074 = vlaneseq
    %v7075 = vshrl.u32 %v7074, 7
    %v7076 = vsub.s32 %v7073, %v7075
    %v7077 = vrot.slane %v7049, %v7076
    %v7078 = vcombine.high %v7056, %v7056
    %v7079 = vcombine.high %v7063, %v7063
    %v7080 = vcombine.high %v7070, %v7070
    %v7081 = vcombine.high %v7077, %v7077
    %v7082 = vcombine.low %v7013, %v7021
    %v7083 = vcombine.high %v7013, %v7021
    %v7085 = vunpack.c.l.s4 1966171168
    %v7086 = vunpack.c.0.s8 %v7085
    %v7087 = vlaneseq
    %v7088 = vshrl.u32 %v7087, 7
    %v7089 = vsub.s32 %v7086, %v7088
    %v7090 = vrot.slane %v7082, %v7089
    %v7092 = vunpack.c.l.s4 1966171168
    %v7093 = vunpack.c.0.s8 %v7092
    %v7094 = vlaneseq
    %v7095 = vshrl.u32 %v7094, 7
    %v7096 = vsub.s32 %v7093, %v7095
    %v7097 = vrot.slane %v7083, %v7096
    %v7098 = vcombine.high %v7090, %v7090
    %v7099 = vcombine.high %v7097, %v7097
    %v7101 = vunpack.c.l.s4 1966171168
    %v7102 = vunpack.c.0.s8 %v7101
    %v7103 = vlaneseq
    %v7104 = vshrl.u32 %v7103, 7
    %v7105 = vsub.s32 %v7102, %v7104
    %v7106 = vrot.slane %v7090, %v7105
    %v7108 = vunpack.c.l.s4 1966171168
    %v7109 = vunpack.c.0.s8 %v7108
    %v7110 = vlaneseq
    %v7111 = vshrl.u32 %v7110, 7
    %v7112 = vsub.s32 %v7109, %v7111
    %v7113 = vrot.slane %v7097, %v7112
    %v7115 = vunpack.c.l.s4 1966171168
    %v7116 = vunpack.c.0.s8 %v7115
    %v7117 = vlaneseq
    %v7118 = vshrl.u32 %v7117, 7
    %v7119 = vsub.s32 %v7116, %v7118
    %v7120 = vrot.slane %v7098, %v7119
    %v7122 = vunpack.c.l.s4 1966171168
    %v7123 = vunpack.c.0.s8 %v7122
    %v7124 = vlaneseq
    %v7125 = vshrl.u32 %v7124, 7
    %v7126 = vsub.s32 %v7123, %v7125
    %v7127 = vrot.slane %v7099, %v7126
    %v7128 = vcombine.high %v7106, %v7106
    %v7129 = vcombine.high %v7113, %v7113
    %v7130 = vcombine.high %v7120, %v7120
    %v7131 = vcombine.high %v7127, %v7127
    %v7148 = vpack.c.bf16 %v7056, %v7056
    %v7149 = vpack.c.bf16 %v7070, %v7070
    %v7150 = vpack.c.bf16 %v7078, %v7078
    %v7151 = vpack.c.bf16 %v7080, %v7080
    %v7152 = vpack.c.bf16 %v7063, %v7063
    %v7153 = vpack.c.bf16 %v7077, %v7077
    %v7154 = vpack.c.bf16 %v7079, %v7079
    %v7155 = vpack.c.bf16 %v7081, %v7081
    %v7156 = vpack.c.bf16 %v7106, %v7106
    %v7157 = vpack.c.bf16 %v7120, %v7120
    %v7158 = vpack.c.bf16 %v7128, %v7128
    %v7159 = vpack.c.bf16 %v7130, %v7130
    %v7160 = vpack.c.bf16 %v7113, %v7113
    %v7161 = vpack.c.bf16 %v7127, %v7127
    %v7162 = vpack.c.bf16 %v7129, %v7129
    %v7163 = vpack.c.bf16 %v7131, %v7131
    %v7164 = vld [vmem:[#allocation2] sm:$0xff]
    %v7165 = vld [vmem:[#allocation2 + $0x8] sm:$0xff]
    %v7166 = vld [vmem:[#allocation2 + $0x10] sm:$0xff]
    %v7167 = vld [vmem:[#allocation2 + $0x18] sm:$0xff]
    %v7168 = vld [vmem:[#allocation2 + $0x20] sm:$0xff]
    %v7169 = vld [vmem:[#allocation2 + $0x28] sm:$0xff]
    %v7170 = vld [vmem:[#allocation2 + $0x30] sm:$0xff]
    %v7171 = vld [vmem:[#allocation2 + $0x38] sm:$0xff]
    %v7172 = vld [vmem:[#allocation2 + $0x40] sm:$0xff]
    %v7173 = vld [vmem:[#allocation2 + $0x48] sm:$0xff]
    %v7174 = vld [vmem:[#allocation2 + $0x50] sm:$0xff]
    %v7175 = vld [vmem:[#allocation2 + $0x58] sm:$0xff]
    %v7176 = vld [vmem:[#allocation2 + $0x60] sm:$0xff]
    %v7177 = vld [vmem:[#allocation2 + $0x68] sm:$0xff]
    %v7178 = vld [vmem:[#allocation2 + $0x70] sm:$0xff]
    %v7179 = vld [vmem:[#allocation2 + $0x78] sm:$0xff]
    %v7180 = vld [vmem:[#allocation2 + $0x80] sm:$0xff]
    %v7181 = vld [vmem:[#allocation2 + $0x88] sm:$0xff]
    %v7182 = vld [vmem:[#allocation2 + $0x90] sm:$0xff]
    %v7183 = vld [vmem:[#allocation2 + $0x98] sm:$0xff]
    %v7184 = vld [vmem:[#allocation2 + $0xa0] sm:$0xff]
    %v7185 = vld [vmem:[#allocation2 + $0xa8] sm:$0xff]
    %v7186 = vld [vmem:[#allocation2 + $0xb0] sm:$0xff]
    %v7187 = vld [vmem:[#allocation2 + $0xb8] sm:$0xff]
    %v7188 = vld [vmem:[#allocation2 + $0xc0] sm:$0xff]
    %v7189 = vld [vmem:[#allocation2 + $0xc8] sm:$0xff]
    %v7190 = vld [vmem:[#allocation2 + $0xd0] sm:$0xff]
    %v7191 = vld [vmem:[#allocation2 + $0xd8] sm:$0xff]
    %v7192 = vld [vmem:[#allocation2 + $0xe0] sm:$0xff]
    %v7193 = vld [vmem:[#allocation2 + $0xe8] sm:$0xff]
    %v7194 = vld [vmem:[#allocation2 + $0xf0] sm:$0xff]
    %v7195 = vld [vmem:[#allocation2 + $0xf8] sm:$0xff]
    %v7196 = vld [vmem:[#allocation2 + $0x100] sm:$0xff]
    %v7197 = vld [vmem:[#allocation2 + $0x108] sm:$0xff]
    %v7198 = vld [vmem:[#allocation2 + $0x110] sm:$0xff]
    %v7199 = vld [vmem:[#allocation2 + $0x118] sm:$0xff]
    %v7200 = vld [vmem:[#allocation2 + $0x120] sm:$0xff]
    %v7201 = vld [vmem:[#allocation2 + $0x128] sm:$0xff]
    %v7202 = vld [vmem:[#allocation2 + $0x130] sm:$0xff]
    %v7203 = vld [vmem:[#allocation2 + $0x138] sm:$0xff]
    %v7204 = vld [vmem:[#allocation2 + $0x140] sm:$0xff]
    %v7205 = vld [vmem:[#allocation2 + $0x148] sm:$0xff]
    %v7206 = vld [vmem:[#allocation2 + $0x150] sm:$0xff]
    %v7207 = vld [vmem:[#allocation2 + $0x158] sm:$0xff]
    %v7208 = vld [vmem:[#allocation2 + $0x160] sm:$0xff]
    %v7209 = vld [vmem:[#allocation2 + $0x168] sm:$0xff]
    %v7210 = vld [vmem:[#allocation2 + $0x170] sm:$0xff]
    %v7211 = vld [vmem:[#allocation2 + $0x178] sm:$0xff]
    %v7212 = vld [vmem:[#allocation2 + $0x180] sm:$0xff]
    %v7213 = vld [vmem:[#allocation2 + $0x188] sm:$0xff]
    %v7214 = vld [vmem:[#allocation2 + $0x190] sm:$0xff]
    %v7215 = vld [vmem:[#allocation2 + $0x198] sm:$0xff]
    %v7216 = vld [vmem:[#allocation2 + $0x1a0] sm:$0xff]
    %v7217 = vld [vmem:[#allocation2 + $0x1a8] sm:$0xff]
    %v7218 = vld [vmem:[#allocation2 + $0x1b0] sm:$0xff]
    %v7219 = vld [vmem:[#allocation2 + $0x1b8] sm:$0xff]
    %v7220 = vld [vmem:[#allocation2 + $0x1c0] sm:$0xff]
    %v7221 = vld [vmem:[#allocation2 + $0x1c8] sm:$0xff]
    %v7222 = vld [vmem:[#allocation2 + $0x1d0] sm:$0xff]
    %v7223 = vld [vmem:[#allocation2 + $0x1d8] sm:$0xff]
    %v7224 = vld [vmem:[#allocation2 + $0x1e0] sm:$0xff]
    %v7225 = vld [vmem:[#allocation2 + $0x1e8] sm:$0xff]
    %v7226 = vld [vmem:[#allocation2 + $0x1f0] sm:$0xff]
    %v7227 = vld [vmem:[#allocation2 + $0x1f8] sm:$0xff]
    %v7228 = vld [vmem:[#allocation2 + $0x200] sm:$0xff]
    %v7229 = vld [vmem:[#allocation2 + $0x208] sm:$0xff]
    %v7230 = vld [vmem:[#allocation2 + $0x210] sm:$0xff]
    %v7231 = vld [vmem:[#allocation2 + $0x218] sm:$0xff]
    %v7232 = vld [vmem:[#allocation2 + $0x220] sm:$0xff]
    %v7233 = vld [vmem:[#allocation2 + $0x228] sm:$0xff]
    %v7234 = vld [vmem:[#allocation2 + $0x230] sm:$0xff]
    %v7235 = vld [vmem:[#allocation2 + $0x238] sm:$0xff]
    %v7236 = vld [vmem:[#allocation2 + $0x240] sm:$0xff]
    %v7237 = vld [vmem:[#allocation2 + $0x248] sm:$0xff]
    %v7238 = vld [vmem:[#allocation2 + $0x250] sm:$0xff]
    %v7239 = vld [vmem:[#allocation2 + $0x258] sm:$0xff]
    %v7240 = vld [vmem:[#allocation2 + $0x260] sm:$0xff]
    %v7241 = vld [vmem:[#allocation2 + $0x268] sm:$0xff]
    %v7242 = vld [vmem:[#allocation2 + $0x270] sm:$0xff]
    %v7243 = vld [vmem:[#allocation2 + $0x278] sm:$0xff]
    %v7244 = vld [vmem:[#allocation2 + $0x280] sm:$0xff]
    %v7245 = vld [vmem:[#allocation2 + $0x288] sm:$0xff]
    %v7246 = vld [vmem:[#allocation2 + $0x290] sm:$0xff]
    %v7247 = vld [vmem:[#allocation2 + $0x298] sm:$0xff]
    %v7248 = vld [vmem:[#allocation2 + $0x2a0] sm:$0xff]
    %v7249 = vld [vmem:[#allocation2 + $0x2a8] sm:$0xff]
    %v7250 = vld [vmem:[#allocation2 + $0x2b0] sm:$0xff]
    %v7251 = vld [vmem:[#allocation2 + $0x2b8] sm:$0xff]
    %v7252 = vld [vmem:[#allocation2 + $0x2c0] sm:$0xff]
    %v7253 = vld [vmem:[#allocation2 + $0x2c8] sm:$0xff]
    %v7254 = vld [vmem:[#allocation2 + $0x2d0] sm:$0xff]
    %v7255 = vld [vmem:[#allocation2 + $0x2d8] sm:$0xff]
    %v7256 = vld [vmem:[#allocation2 + $0x2e0] sm:$0xff]
    %v7257 = vld [vmem:[#allocation2 + $0x2e8] sm:$0xff]
    %v7258 = vld [vmem:[#allocation2 + $0x2f0] sm:$0xff]
    %v7259 = vld [vmem:[#allocation2 + $0x2f8] sm:$0xff]
    %v7260 = vld [vmem:[#allocation2 + $0x300] sm:$0xff]
    %v7261 = vld [vmem:[#allocation2 + $0x308] sm:$0xff]
    %v7262 = vld [vmem:[#allocation2 + $0x310] sm:$0xff]
    %v7263 = vld [vmem:[#allocation2 + $0x318] sm:$0xff]
    %v7264 = vld [vmem:[#allocation2 + $0x320] sm:$0xff]
    %v7265 = vld [vmem:[#allocation2 + $0x328] sm:$0xff]
    %v7266 = vld [vmem:[#allocation2 + $0x330] sm:$0xff]
    %v7267 = vld [vmem:[#allocation2 + $0x338] sm:$0xff]
    %v7268 = vld [vmem:[#allocation2 + $0x340] sm:$0xff]
    %v7269 = vld [vmem:[#allocation2 + $0x348] sm:$0xff]
    %v7270 = vld [vmem:[#allocation2 + $0x350] sm:$0xff]
    %v7271 = vld [vmem:[#allocation2 + $0x358] sm:$0xff]
    %v7272 = vld [vmem:[#allocation2 + $0x360] sm:$0xff]
    %v7273 = vld [vmem:[#allocation2 + $0x368] sm:$0xff]
    %v7274 = vld [vmem:[#allocation2 + $0x370] sm:$0xff]
    %v7275 = vld [vmem:[#allocation2 + $0x378] sm:$0xff]
    %v7276 = vld [vmem:[#allocation2 + $0x380] sm:$0xff]
    %v7277 = vld [vmem:[#allocation2 + $0x388] sm:$0xff]
    %v7278 = vld [vmem:[#allocation2 + $0x390] sm:$0xff]
    %v7279 = vld [vmem:[#allocation2 + $0x398] sm:$0xff]
    %v7280 = vld [vmem:[#allocation2 + $0x3a0] sm:$0xff]
    %v7281 = vld [vmem:[#allocation2 + $0x3a8] sm:$0xff]
    %v7282 = vld [vmem:[#allocation2 + $0x3b0] sm:$0xff]
    %v7283 = vld [vmem:[#allocation2 + $0x3b8] sm:$0xff]
    %v7284 = vld [vmem:[#allocation2 + $0x3c0] sm:$0xff]
    %v7285 = vld [vmem:[#allocation2 + $0x3c8] sm:$0xff]
    %v7286 = vld [vmem:[#allocation2 + $0x3d0] sm:$0xff]
    %v7287 = vld [vmem:[#allocation2 + $0x3d8] sm:$0xff]
    %v7288 = vld [vmem:[#allocation2 + $0x3e0] sm:$0xff]
    %v7289 = vld [vmem:[#allocation2 + $0x3e8] sm:$0xff]
    %v7290 = vld [vmem:[#allocation2 + $0x3f0] sm:$0xff]
    %v7291 = vld [vmem:[#allocation2 + $0x3f8] sm:$0xff]
    %v7292 = vld [vmem:[#allocation2 + $0x400] sm:$0xff]
    %v7293 = vld [vmem:[#allocation2 + $0x408] sm:$0xff]
    %v7294 = vld [vmem:[#allocation2 + $0x410] sm:$0xff]
    %v7295 = vld [vmem:[#allocation2 + $0x418] sm:$0xff]
    %v7296 = vld [vmem:[#allocation2 + $0x420] sm:$0xff]
    %v7297 = vld [vmem:[#allocation2 + $0x428] sm:$0xff]
    %v7298 = vld [vmem:[#allocation2 + $0x430] sm:$0xff]
    %v7299 = vld [vmem:[#allocation2 + $0x438] sm:$0xff]
    %v7300 = vld [vmem:[#allocation2 + $0x440] sm:$0xff]
    %v7301 = vld [vmem:[#allocation2 + $0x448] sm:$0xff]
    %v7302 = vld [vmem:[#allocation2 + $0x450] sm:$0xff]
    %v7303 = vld [vmem:[#allocation2 + $0x458] sm:$0xff]
    %v7304 = vld [vmem:[#allocation2 + $0x460] sm:$0xff]
    %v7305 = vld [vmem:[#allocation2 + $0x468] sm:$0xff]
    %v7306 = vld [vmem:[#allocation2 + $0x470] sm:$0xff]
    %v7307 = vld [vmem:[#allocation2 + $0x478] sm:$0xff]
    %v7308 = vld [vmem:[#allocation2 + $0x480] sm:$0xff]
    %v7309 = vld [vmem:[#allocation2 + $0x488] sm:$0xff]
    %v7310 = vld [vmem:[#allocation2 + $0x490] sm:$0xff]
    %v7311 = vld [vmem:[#allocation2 + $0x498] sm:$0xff]
    %v7312 = vld [vmem:[#allocation2 + $0x4a0] sm:$0xff]
    %v7313 = vld [vmem:[#allocation2 + $0x4a8] sm:$0xff]
    %v7314 = vld [vmem:[#allocation2 + $0x4b0] sm:$0xff]
    %v7315 = vld [vmem:[#allocation2 + $0x4b8] sm:$0xff]
    %v7316 = vld [vmem:[#allocation2 + $0x4c0] sm:$0xff]
    %v7317 = vld [vmem:[#allocation2 + $0x4c8] sm:$0xff]
    %v7318 = vld [vmem:[#allocation2 + $0x4d0] sm:$0xff]
    %v7319 = vld [vmem:[#allocation2 + $0x4d8] sm:$0xff]
    %v7320 = vld [vmem:[#allocation2 + $0x4e0] sm:$0xff]
    %v7321 = vld [vmem:[#allocation2 + $0x4e8] sm:$0xff]
    %v7322 = vld [vmem:[#allocation2 + $0x4f0] sm:$0xff]
    %v7323 = vld [vmem:[#allocation2 + $0x4f8] sm:$0xff]
    %v7324 = vld [vmem:[#allocation2 + $0x500] sm:$0xff]
    %v7325 = vld [vmem:[#allocation2 + $0x508] sm:$0xff]
    %v7326 = vld [vmem:[#allocation2 + $0x510] sm:$0xff]
    %v7327 = vld [vmem:[#allocation2 + $0x518] sm:$0xff]
    %v7328 = vld [vmem:[#allocation2 + $0x520] sm:$0xff]
    %v7329 = vld [vmem:[#allocation2 + $0x528] sm:$0xff]
    %v7330 = vld [vmem:[#allocation2 + $0x530] sm:$0xff]
    %v7331 = vld [vmem:[#allocation2 + $0x538] sm:$0xff]
    %v7332 = vld [vmem:[#allocation2 + $0x540] sm:$0xff]
    %v7333 = vld [vmem:[#allocation2 + $0x548] sm:$0xff]
    %v7334 = vld [vmem:[#allocation2 + $0x550] sm:$0xff]
    %v7335 = vld [vmem:[#allocation2 + $0x558] sm:$0xff]
    %v7336 = vld [vmem:[#allocation2 + $0x560] sm:$0xff]
    %v7337 = vld [vmem:[#allocation2 + $0x568] sm:$0xff]
    %v7338 = vld [vmem:[#allocation2 + $0x570] sm:$0xff]
    %v7339 = vld [vmem:[#allocation2 + $0x578] sm:$0xff]
    %v7340 = vld [vmem:[#allocation2 + $0x580] sm:$0xff]
    %v7341 = vld [vmem:[#allocation2 + $0x588] sm:$0xff]
    %v7342 = vld [vmem:[#allocation2 + $0x590] sm:$0xff]
    %v7343 = vld [vmem:[#allocation2 + $0x598] sm:$0xff]
    %v7344 = vld [vmem:[#allocation2 + $0x5a0] sm:$0xff]
    %v7345 = vld [vmem:[#allocation2 + $0x5a8] sm:$0xff]
    %v7346 = vld [vmem:[#allocation2 + $0x5b0] sm:$0xff]
    %v7347 = vld [vmem:[#allocation2 + $0x5b8] sm:$0xff]
    %v7348 = vld [vmem:[#allocation2 + $0x5c0] sm:$0xff]
    %v7349 = vld [vmem:[#allocation2 + $0x5c8] sm:$0xff]
    %v7350 = vld [vmem:[#allocation2 + $0x5d0] sm:$0xff]
    %v7351 = vld [vmem:[#allocation2 + $0x5d8] sm:$0xff]
    %v7352 = vld [vmem:[#allocation2 + $0x5e0] sm:$0xff]
    %v7353 = vld [vmem:[#allocation2 + $0x5e8] sm:$0xff]
    %v7354 = vld [vmem:[#allocation2 + $0x5f0] sm:$0xff]
    %v7355 = vld [vmem:[#allocation2 + $0x5f8] sm:$0xff]
    %v7356 = vld [vmem:[#allocation2 + $0x600] sm:$0xff]
    %v7357 = vld [vmem:[#allocation2 + $0x608] sm:$0xff]
    %v7358 = vld [vmem:[#allocation2 + $0x610] sm:$0xff]
    %v7359 = vld [vmem:[#allocation2 + $0x618] sm:$0xff]
    %v7360 = vld [vmem:[#allocation2 + $0x620] sm:$0xff]
    %v7361 = vld [vmem:[#allocation2 + $0x628] sm:$0xff]
    %v7362 = vld [vmem:[#allocation2 + $0x630] sm:$0xff]
    %v7363 = vld [vmem:[#allocation2 + $0x638] sm:$0xff]
    %v7364 = vld [vmem:[#allocation2 + $0x640] sm:$0xff]
    %v7365 = vld [vmem:[#allocation2 + $0x648] sm:$0xff]
    %v7366 = vld [vmem:[#allocation2 + $0x650] sm:$0xff]
    %v7367 = vld [vmem:[#allocation2 + $0x658] sm:$0xff]
    %v7368 = vld [vmem:[#allocation2 + $0x660] sm:$0xff]
    %v7369 = vld [vmem:[#allocation2 + $0x668] sm:$0xff]
    %v7370 = vld [vmem:[#allocation2 + $0x670] sm:$0xff]
    %v7371 = vld [vmem:[#allocation2 + $0x678] sm:$0xff]
    %v7372 = vld [vmem:[#allocation2 + $0x680] sm:$0xff]
    %v7373 = vld [vmem:[#allocation2 + $0x688] sm:$0xff]
    %v7374 = vld [vmem:[#allocation2 + $0x690] sm:$0xff]
    %v7375 = vld [vmem:[#allocation2 + $0x698] sm:$0xff]
    %v7376 = vld [vmem:[#allocation2 + $0x6a0] sm:$0xff]
    %v7377 = vld [vmem:[#allocation2 + $0x6a8] sm:$0xff]
    %v7378 = vld [vmem:[#allocation2 + $0x6b0] sm:$0xff]
    %v7379 = vld [vmem:[#allocation2 + $0x6b8] sm:$0xff]
    %v7380 = vld [vmem:[#allocation2 + $0x6c0] sm:$0xff]
    %v7381 = vld [vmem:[#allocation2 + $0x6c8] sm:$0xff]
    %v7382 = vld [vmem:[#allocation2 + $0x6d0] sm:$0xff]
    %v7383 = vld [vmem:[#allocation2 + $0x6d8] sm:$0xff]
    %v7384 = vld [vmem:[#allocation2 + $0x6e0] sm:$0xff]
    %v7385 = vld [vmem:[#allocation2 + $0x6e8] sm:$0xff]
    %v7386 = vld [vmem:[#allocation2 + $0x6f0] sm:$0xff]
    %v7387 = vld [vmem:[#allocation2 + $0x6f8] sm:$0xff]
    %v7388 = vld [vmem:[#allocation2 + $0x700] sm:$0xff]
    %v7389 = vld [vmem:[#allocation2 + $0x708] sm:$0xff]
    %v7390 = vld [vmem:[#allocation2 + $0x710] sm:$0xff]
    %v7391 = vld [vmem:[#allocation2 + $0x718] sm:$0xff]
    %v7392 = vld [vmem:[#allocation2 + $0x720] sm:$0xff]
    %v7393 = vld [vmem:[#allocation2 + $0x728] sm:$0xff]
    %v7394 = vld [vmem:[#allocation2 + $0x730] sm:$0xff]
    %v7395 = vld [vmem:[#allocation2 + $0x738] sm:$0xff]
    %v7396 = vld [vmem:[#allocation2 + $0x740] sm:$0xff]
    %v7397 = vld [vmem:[#allocation2 + $0x748] sm:$0xff]
    %v7398 = vld [vmem:[#allocation2 + $0x750] sm:$0xff]
    %v7399 = vld [vmem:[#allocation2 + $0x758] sm:$0xff]
    %v7400 = vld [vmem:[#allocation2 + $0x760] sm:$0xff]
    %v7401 = vld [vmem:[#allocation2 + $0x768] sm:$0xff]
    %v7402 = vld [vmem:[#allocation2 + $0x770] sm:$0xff]
    %v7403 = vld [vmem:[#allocation2 + $0x778] sm:$0xff]
    %v7404 = vld [vmem:[#allocation2 + $0x780] sm:$0xff]
    %v7405 = vld [vmem:[#allocation2 + $0x788] sm:$0xff]
    %v7406 = vld [vmem:[#allocation2 + $0x790] sm:$0xff]
    %v7407 = vld [vmem:[#allocation2 + $0x798] sm:$0xff]
    %v7408 = vld [vmem:[#allocation2 + $0x7a0] sm:$0xff]
    %v7409 = vld [vmem:[#allocation2 + $0x7a8] sm:$0xff]
    %v7410 = vld [vmem:[#allocation2 + $0x7b0] sm:$0xff]
    %v7411 = vld [vmem:[#allocation2 + $0x7b8] sm:$0xff]
    %v7412 = vld [vmem:[#allocation2 + $0x7c0] sm:$0xff]
    %v7413 = vld [vmem:[#allocation2 + $0x7c8] sm:$0xff]
    %v7414 = vld [vmem:[#allocation2 + $0x7d0] sm:$0xff]
    %v7415 = vld [vmem:[#allocation2 + $0x7d8] sm:$0xff]
    %v7416 = vld [vmem:[#allocation2 + $0x7e0] sm:$0xff]
    %v7417 = vld [vmem:[#allocation2 + $0x7e8] sm:$0xff]
    %v7418 = vld [vmem:[#allocation2 + $0x7f0] sm:$0xff]
    %v7419 = vld [vmem:[#allocation2 + $0x7f8] sm:$0xff]
    %v7420 = vld [vmem:[#allocation2 + $0x800] sm:$0xff]
    %v7421 = vld [vmem:[#allocation2 + $0x808] sm:$0xff]
    %v7422 = vld [vmem:[#allocation2 + $0x810] sm:$0xff]
    %v7423 = vld [vmem:[#allocation2 + $0x818] sm:$0xff]
    %v7424 = vld [vmem:[#allocation2 + $0x820] sm:$0xff]
    %v7425 = vld [vmem:[#allocation2 + $0x828] sm:$0xff]
    %v7426 = vld [vmem:[#allocation2 + $0x830] sm:$0xff]
    %v7427 = vld [vmem:[#allocation2 + $0x838] sm:$0xff]
    %v7428 = vld [vmem:[#allocation2 + $0x840] sm:$0xff]
    %v7429 = vld [vmem:[#allocation2 + $0x848] sm:$0xff]
    %v7430 = vld [vmem:[#allocation2 + $0x850] sm:$0xff]
    %v7431 = vld [vmem:[#allocation2 + $0x858] sm:$0xff]
    %v7432 = vld [vmem:[#allocation2 + $0x860] sm:$0xff]
    %v7433 = vld [vmem:[#allocation2 + $0x868] sm:$0xff]
    %v7434 = vld [vmem:[#allocation2 + $0x870] sm:$0xff]
    %v7435 = vld [vmem:[#allocation2 + $0x878] sm:$0xff]
    %v7436 = vld [vmem:[#allocation2 + $0x880] sm:$0xff]
    %v7437 = vld [vmem:[#allocation2 + $0x888] sm:$0xff]
    %v7438 = vld [vmem:[#allocation2 + $0x890] sm:$0xff]
    %v7439 = vld [vmem:[#allocation2 + $0x898] sm:$0xff]
    %v7440 = vld [vmem:[#allocation2 + $0x8a0] sm:$0xff]
    %v7441 = vld [vmem:[#allocation2 + $0x8a8] sm:$0xff]
    %v7442 = vld [vmem:[#allocation2 + $0x8b0] sm:$0xff]
    %v7443 = vld [vmem:[#allocation2 + $0x8b8] sm:$0xff]
    %v7444 = vld [vmem:[#allocation2 + $0x8c0] sm:$0xff]
    %v7445 = vld [vmem:[#allocation2 + $0x8c8] sm:$0xff]
    %v7446 = vld [vmem:[#allocation2 + $0x8d0] sm:$0xff]
    %v7447 = vld [vmem:[#allocation2 + $0x8d8] sm:$0xff]
    %v7448 = vld [vmem:[#allocation2 + $0x8e0] sm:$0xff]
    %v7449 = vld [vmem:[#allocation2 + $0x8e8] sm:$0xff]
    %v7450 = vld [vmem:[#allocation2 + $0x8f0] sm:$0xff]
    %v7451 = vld [vmem:[#allocation2 + $0x8f8] sm:$0xff]
    %v7452 = vld [vmem:[#allocation2 + $0x900] sm:$0xff]
    %v7453 = vld [vmem:[#allocation2 + $0x908] sm:$0xff]
    %v7454 = vld [vmem:[#allocation2 + $0x910] sm:$0xff]
    %v7455 = vld [vmem:[#allocation2 + $0x918] sm:$0xff]
    %v7456 = vld [vmem:[#allocation2 + $0x920] sm:$0xff]
    %v7457 = vld [vmem:[#allocation2 + $0x928] sm:$0xff]
    %v7458 = vld [vmem:[#allocation2 + $0x930] sm:$0xff]
    %v7459 = vld [vmem:[#allocation2 + $0x938] sm:$0xff]
    %v7460 = vld [vmem:[#allocation2 + $0x940] sm:$0xff]
    %v7461 = vld [vmem:[#allocation2 + $0x948] sm:$0xff]
    %v7462 = vld [vmem:[#allocation2 + $0x950] sm:$0xff]
    %v7463 = vld [vmem:[#allocation2 + $0x958] sm:$0xff]
    %v7464 = vld [vmem:[#allocation2 + $0x960] sm:$0xff]
    %v7465 = vld [vmem:[#allocation2 + $0x968] sm:$0xff]
    %v7466 = vld [vmem:[#allocation2 + $0x970] sm:$0xff]
    %v7467 = vld [vmem:[#allocation2 + $0x978] sm:$0xff]
    %v7468 = vld [vmem:[#allocation2 + $0x980] sm:$0xff]
    %v7469 = vld [vmem:[#allocation2 + $0x988] sm:$0xff]
    %v7470 = vld [vmem:[#allocation2 + $0x990] sm:$0xff]
    %v7471 = vld [vmem:[#allocation2 + $0x998] sm:$0xff]
    %v7472 = vld [vmem:[#allocation2 + $0x9a0] sm:$0xff]
    %v7473 = vld [vmem:[#allocation2 + $0x9a8] sm:$0xff]
    %v7474 = vld [vmem:[#allocation2 + $0x9b0] sm:$0xff]
    %v7475 = vld [vmem:[#allocation2 + $0x9b8] sm:$0xff]
    %v7476 = vld [vmem:[#allocation2 + $0x9c0] sm:$0xff]
    %v7477 = vld [vmem:[#allocation2 + $0x9c8] sm:$0xff]
    %v7478 = vld [vmem:[#allocation2 + $0x9d0] sm:$0xff]
    %v7479 = vld [vmem:[#allocation2 + $0x9d8] sm:$0xff]
    %v7480 = vld [vmem:[#allocation2 + $0x9e0] sm:$0xff]
    %v7481 = vld [vmem:[#allocation2 + $0x9e8] sm:$0xff]
    %v7482 = vld [vmem:[#allocation2 + $0x9f0] sm:$0xff]
    %v7483 = vld [vmem:[#allocation2 + $0x9f8] sm:$0xff]
    %v7484 = vld [vmem:[#allocation2 + $0xa00] sm:$0xff]
    %v7485 = vld [vmem:[#allocation2 + $0xa08] sm:$0xff]
    %v7486 = vld [vmem:[#allocation2 + $0xa10] sm:$0xff]
    %v7487 = vld [vmem:[#allocation2 + $0xa18] sm:$0xff]
    %v7488 = vld [vmem:[#allocation2 + $0xa20] sm:$0xff]
    %v7489 = vld [vmem:[#allocation2 + $0xa28] sm:$0xff]
    %v7490 = vld [vmem:[#allocation2 + $0xa30] sm:$0xff]
    %v7491 = vld [vmem:[#allocation2 + $0xa38] sm:$0xff]
    %v7492 = vld [vmem:[#allocation2 + $0xa40] sm:$0xff]
    %v7493 = vld [vmem:[#allocation2 + $0xa48] sm:$0xff]
    %v7494 = vld [vmem:[#allocation2 + $0xa50] sm:$0xff]
    %v7495 = vld [vmem:[#allocation2 + $0xa58] sm:$0xff]
    %v7496 = vld [vmem:[#allocation2 + $0xa60] sm:$0xff]
    %v7497 = vld [vmem:[#allocation2 + $0xa68] sm:$0xff]
    %v7498 = vld [vmem:[#allocation2 + $0xa70] sm:$0xff]
    %v7499 = vld [vmem:[#allocation2 + $0xa78] sm:$0xff]
    %v7500 = vld [vmem:[#allocation2 + $0xa80] sm:$0xff]
    %v7501 = vld [vmem:[#allocation2 + $0xa88] sm:$0xff]
    %v7502 = vld [vmem:[#allocation2 + $0xa90] sm:$0xff]
    %v7503 = vld [vmem:[#allocation2 + $0xa98] sm:$0xff]
    %v7504 = vld [vmem:[#allocation2 + $0xaa0] sm:$0xff]
    %v7505 = vld [vmem:[#allocation2 + $0xaa8] sm:$0xff]
    %v7506 = vld [vmem:[#allocation2 + $0xab0] sm:$0xff]
    %v7507 = vld [vmem:[#allocation2 + $0xab8] sm:$0xff]
    %v7508 = vld [vmem:[#allocation2 + $0xac0] sm:$0xff]
    %v7509 = vld [vmem:[#allocation2 + $0xac8] sm:$0xff]
    %v7510 = vld [vmem:[#allocation2 + $0xad0] sm:$0xff]
    %v7511 = vld [vmem:[#allocation2 + $0xad8] sm:$0xff]
    %v7512 = vld [vmem:[#allocation2 + $0xae0] sm:$0xff]
    %v7513 = vld [vmem:[#allocation2 + $0xae8] sm:$0xff]
    %v7514 = vld [vmem:[#allocation2 + $0xaf0] sm:$0xff]
    %v7515 = vld [vmem:[#allocation2 + $0xaf8] sm:$0xff]
    %v7516 = vld [vmem:[#allocation2 + $0xb00] sm:$0xff]
    %v7517 = vld [vmem:[#allocation2 + $0xb08] sm:$0xff]
    %v7518 = vld [vmem:[#allocation2 + $0xb10] sm:$0xff]
    %v7519 = vld [vmem:[#allocation2 + $0xb18] sm:$0xff]
    %v7520 = vld [vmem:[#allocation2 + $0xb20] sm:$0xff]
    %v7521 = vld [vmem:[#allocation2 + $0xb28] sm:$0xff]
    %v7522 = vld [vmem:[#allocation2 + $0xb30] sm:$0xff]
    %v7523 = vld [vmem:[#allocation2 + $0xb38] sm:$0xff]
    %v7524 = vld [vmem:[#allocation2 + $0xb40] sm:$0xff]
    %v7525 = vld [vmem:[#allocation2 + $0xb48] sm:$0xff]
    %v7526 = vld [vmem:[#allocation2 + $0xb50] sm:$0xff]
    %v7527 = vld [vmem:[#allocation2 + $0xb58] sm:$0xff]
    %v7528 = vld [vmem:[#allocation2 + $0xb60] sm:$0xff]
    %v7529 = vld [vmem:[#allocation2 + $0xb68] sm:$0xff]
    %v7530 = vld [vmem:[#allocation2 + $0xb70] sm:$0xff]
    %v7531 = vld [vmem:[#allocation2 + $0xb78] sm:$0xff]
    %v7532 = vld [vmem:[#allocation2 + $0xb80] sm:$0xff]
    %v7533 = vld [vmem:[#allocation2 + $0xb88] sm:$0xff]
    %v7534 = vld [vmem:[#allocation2 + $0xb90] sm:$0xff]
    %v7535 = vld [vmem:[#allocation2 + $0xb98] sm:$0xff]
    %v7536 = vld [vmem:[#allocation2 + $0xba0] sm:$0xff]
    %v7537 = vld [vmem:[#allocation2 + $0xba8] sm:$0xff]
    %v7538 = vld [vmem:[#allocation2 + $0xbb0] sm:$0xff]
    %v7539 = vld [vmem:[#allocation2 + $0xbb8] sm:$0xff]
    %v7540 = vld [vmem:[#allocation2 + $0xbc0] sm:$0xff]
    %v7541 = vld [vmem:[#allocation2 + $0xbc8] sm:$0xff]
    %v7542 = vld [vmem:[#allocation2 + $0xbd0] sm:$0xff]
    %v7543 = vld [vmem:[#allocation2 + $0xbd8] sm:$0xff]
    %v7544 = vld [vmem:[#allocation2 + $0xbe0] sm:$0xff]
    %v7545 = vld [vmem:[#allocation2 + $0xbe8] sm:$0xff]
    %v7546 = vld [vmem:[#allocation2 + $0xbf0] sm:$0xff]
    %v7547 = vld [vmem:[#allocation2 + $0xbf8] sm:$0xff]
    %v7548 = vld [vmem:[#allocation2 + $0xc00] sm:$0xff]
    %v7549 = vld [vmem:[#allocation2 + $0xc08] sm:$0xff]
    %v7550 = vld [vmem:[#allocation2 + $0xc10] sm:$0xff]
    %v7551 = vld [vmem:[#allocation2 + $0xc18] sm:$0xff]
    %v7552 = vld [vmem:[#allocation2 + $0xc20] sm:$0xff]
    %v7553 = vld [vmem:[#allocation2 + $0xc28] sm:$0xff]
    %v7554 = vld [vmem:[#allocation2 + $0xc30] sm:$0xff]
    %v7555 = vld [vmem:[#allocation2 + $0xc38] sm:$0xff]
    %v7556 = vld [vmem:[#allocation2 + $0xc40] sm:$0xff]
    %v7557 = vld [vmem:[#allocation2 + $0xc48] sm:$0xff]
    %v7558 = vld [vmem:[#allocation2 + $0xc50] sm:$0xff]
    %v7559 = vld [vmem:[#allocation2 + $0xc58] sm:$0xff]
    %v7560 = vld [vmem:[#allocation2 + $0xc60] sm:$0xff]
    %v7561 = vld [vmem:[#allocation2 + $0xc68] sm:$0xff]
    %v7562 = vld [vmem:[#allocation2 + $0xc70] sm:$0xff]
    %v7563 = vld [vmem:[#allocation2 + $0xc78] sm:$0xff]
    %v7564 = vld [vmem:[#allocation2 + $0xc80] sm:$0xff]
    %v7565 = vld [vmem:[#allocation2 + $0xc88] sm:$0xff]
    %v7566 = vld [vmem:[#allocation2 + $0xc90] sm:$0xff]
    %v7567 = vld [vmem:[#allocation2 + $0xc98] sm:$0xff]
    %v7568 = vld [vmem:[#allocation2 + $0xca0] sm:$0xff]
    %v7569 = vld [vmem:[#allocation2 + $0xca8] sm:$0xff]
    %v7570 = vld [vmem:[#allocation2 + $0xcb0] sm:$0xff]
    %v7571 = vld [vmem:[#allocation2 + $0xcb8] sm:$0xff]
    %v7572 = vld [vmem:[#allocation2 + $0xcc0] sm:$0xff]
    %v7573 = vld [vmem:[#allocation2 + $0xcc8] sm:$0xff]
    %v7574 = vld [vmem:[#allocation2 + $0xcd0] sm:$0xff]
    %v7575 = vld [vmem:[#allocation2 + $0xcd8] sm:$0xff]
    %v7576 = vld [vmem:[#allocation2 + $0xce0] sm:$0xff]
    %v7577 = vld [vmem:[#allocation2 + $0xce8] sm:$0xff]
    %v7578 = vld [vmem:[#allocation2 + $0xcf0] sm:$0xff]
    %v7579 = vld [vmem:[#allocation2 + $0xcf8] sm:$0xff]
    %v7580 = vld [vmem:[#allocation2 + $0xd00] sm:$0xff]
    %v7581 = vld [vmem:[#allocation2 + $0xd08] sm:$0xff]
    %v7582 = vld [vmem:[#allocation2 + $0xd10] sm:$0xff]
    %v7583 = vld [vmem:[#allocation2 + $0xd18] sm:$0xff]
    %v7584 = vld [vmem:[#allocation2 + $0xd20] sm:$0xff]
    %v7585 = vld [vmem:[#allocation2 + $0xd28] sm:$0xff]
    %v7586 = vld [vmem:[#allocation2 + $0xd30] sm:$0xff]
    %v7587 = vld [vmem:[#allocation2 + $0xd38] sm:$0xff]
    %v7588 = vld [vmem:[#allocation2 + $0xd40] sm:$0xff]
    %v7589 = vld [vmem:[#allocation2 + $0xd48] sm:$0xff]
    %v7590 = vld [vmem:[#allocation2 + $0xd50] sm:$0xff]
    %v7591 = vld [vmem:[#allocation2 + $0xd58] sm:$0xff]
    %v7592 = vld [vmem:[#allocation2 + $0xd60] sm:$0xff]
    %v7593 = vld [vmem:[#allocation2 + $0xd68] sm:$0xff]
    %v7594 = vld [vmem:[#allocation2 + $0xd70] sm:$0xff]
    %v7595 = vld [vmem:[#allocation2 + $0xd78] sm:$0xff]
    %v7596 = vld [vmem:[#allocation2 + $0xd80] sm:$0xff]
    %v7597 = vld [vmem:[#allocation2 + $0xd88] sm:$0xff]
    %v7598 = vld [vmem:[#allocation2 + $0xd90] sm:$0xff]
    %v7599 = vld [vmem:[#allocation2 + $0xd98] sm:$0xff]
    %v7600 = vld [vmem:[#allocation2 + $0xda0] sm:$0xff]
    %v7601 = vld [vmem:[#allocation2 + $0xda8] sm:$0xff]
    %v7602 = vld [vmem:[#allocation2 + $0xdb0] sm:$0xff]
    %v7603 = vld [vmem:[#allocation2 + $0xdb8] sm:$0xff]
    %v7604 = vld [vmem:[#allocation2 + $0xdc0] sm:$0xff]
    %v7605 = vld [vmem:[#allocation2 + $0xdc8] sm:$0xff]
    %v7606 = vld [vmem:[#allocation2 + $0xdd0] sm:$0xff]
    %v7607 = vld [vmem:[#allocation2 + $0xdd8] sm:$0xff]
    %v7608 = vld [vmem:[#allocation2 + $0xde0] sm:$0xff]
    %v7609 = vld [vmem:[#allocation2 + $0xde8] sm:$0xff]
    %v7610 = vld [vmem:[#allocation2 + $0xdf0] sm:$0xff]
    %v7611 = vld [vmem:[#allocation2 + $0xdf8] sm:$0xff]
    %v7612 = vld [vmem:[#allocation2 + $0xe00] sm:$0xff]
    %v7613 = vld [vmem:[#allocation2 + $0xe08] sm:$0xff]
    %v7614 = vld [vmem:[#allocation2 + $0xe10] sm:$0xff]
    %v7615 = vld [vmem:[#allocation2 + $0xe18] sm:$0xff]
    %v7616 = vld [vmem:[#allocation2 + $0xe20] sm:$0xff]
    %v7617 = vld [vmem:[#allocation2 + $0xe28] sm:$0xff]
    %v7618 = vld [vmem:[#allocation2 + $0xe30] sm:$0xff]
    %v7619 = vld [vmem:[#allocation2 + $0xe38] sm:$0xff]
    %v7620 = vld [vmem:[#allocation2 + $0xe40] sm:$0xff]
    %v7621 = vld [vmem:[#allocation2 + $0xe48] sm:$0xff]
    %v7622 = vld [vmem:[#allocation2 + $0xe50] sm:$0xff]
    %v7623 = vld [vmem:[#allocation2 + $0xe58] sm:$0xff]
    %v7624 = vld [vmem:[#allocation2 + $0xe60] sm:$0xff]
    %v7625 = vld [vmem:[#allocation2 + $0xe68] sm:$0xff]
    %v7626 = vld [vmem:[#allocation2 + $0xe70] sm:$0xff]
    %v7627 = vld [vmem:[#allocation2 + $0xe78] sm:$0xff]
    %v7628 = vld [vmem:[#allocation2 + $0xe80] sm:$0xff]
    %v7629 = vld [vmem:[#allocation2 + $0xe88] sm:$0xff]
    %v7630 = vld [vmem:[#allocation2 + $0xe90] sm:$0xff]
    %v7631 = vld [vmem:[#allocation2 + $0xe98] sm:$0xff]
    %v7632 = vld [vmem:[#allocation2 + $0xea0] sm:$0xff]
    %v7633 = vld [vmem:[#allocation2 + $0xea8] sm:$0xff]
    %v7634 = vld [vmem:[#allocation2 + $0xeb0] sm:$0xff]
    %v7635 = vld [vmem:[#allocation2 + $0xeb8] sm:$0xff]
    %v7636 = vld [vmem:[#allocation2 + $0xec0] sm:$0xff]
    %v7637 = vld [vmem:[#allocation2 + $0xec8] sm:$0xff]
    %v7638 = vld [vmem:[#allocation2 + $0xed0] sm:$0xff]
    %v7639 = vld [vmem:[#allocation2 + $0xed8] sm:$0xff]
    %v7640 = vld [vmem:[#allocation2 + $0xee0] sm:$0xff]
    %v7641 = vld [vmem:[#allocation2 + $0xee8] sm:$0xff]
    %v7642 = vld [vmem:[#allocation2 + $0xef0] sm:$0xff]
    %v7643 = vld [vmem:[#allocation2 + $0xef8] sm:$0xff]
    %v7644 = vld [vmem:[#allocation2 + $0xf00] sm:$0xff]
    %v7645 = vld [vmem:[#allocation2 + $0xf08] sm:$0xff]
    %v7646 = vld [vmem:[#allocation2 + $0xf10] sm:$0xff]
    %v7647 = vld [vmem:[#allocation2 + $0xf18] sm:$0xff]
    %v7648 = vld [vmem:[#allocation2 + $0xf20] sm:$0xff]
    %v7649 = vld [vmem:[#allocation2 + $0xf28] sm:$0xff]
    %v7650 = vld [vmem:[#allocation2 + $0xf30] sm:$0xff]
    %v7651 = vld [vmem:[#allocation2 + $0xf38] sm:$0xff]
    %v7652 = vld [vmem:[#allocation2 + $0xf40] sm:$0xff]
    %v7653 = vld [vmem:[#allocation2 + $0xf48] sm:$0xff]
    %v7654 = vld [vmem:[#allocation2 + $0xf50] sm:$0xff]
    %v7655 = vld [vmem:[#allocation2 + $0xf58] sm:$0xff]
    %v7656 = vld [vmem:[#allocation2 + $0xf60] sm:$0xff]
    %v7657 = vld [vmem:[#allocation2 + $0xf68] sm:$0xff]
    %v7658 = vld [vmem:[#allocation2 + $0xf70] sm:$0xff]
    %v7659 = vld [vmem:[#allocation2 + $0xf78] sm:$0xff]
    %v7660 = vld [vmem:[#allocation2 + $0xf80] sm:$0xff]
    %v7661 = vld [vmem:[#allocation2 + $0xf88] sm:$0xff]
    %v7662 = vld [vmem:[#allocation2 + $0xf90] sm:$0xff]
    %v7663 = vld [vmem:[#allocation2 + $0xf98] sm:$0xff]
    %v7664 = vld [vmem:[#allocation2 + $0xfa0] sm:$0xff]
    %v7665 = vld [vmem:[#allocation2 + $0xfa8] sm:$0xff]
    %v7666 = vld [vmem:[#allocation2 + $0xfb0] sm:$0xff]
    %v7667 = vld [vmem:[#allocation2 + $0xfb8] sm:$0xff]
    %v7668 = vld [vmem:[#allocation2 + $0xfc0] sm:$0xff]
    %v7669 = vld [vmem:[#allocation2 + $0xfc8] sm:$0xff]
    %v7670 = vld [vmem:[#allocation2 + $0xfd0] sm:$0xff]
    %v7671 = vld [vmem:[#allocation2 + $0xfd8] sm:$0xff]
    %v7672 = vld [vmem:[#allocation2 + $0xfe0] sm:$0xff]
    %v7673 = vld [vmem:[#allocation2 + $0xfe8] sm:$0xff]
    %v7674 = vld [vmem:[#allocation2 + $0xff0] sm:$0xff]
    %v7675 = vld [vmem:[#allocation2 + $0xff8] sm:$0xff]
    %v7676 = vlaneseq
    %v7677 = vshrl.u32 %v7676, 7
    %v7678 = vsub.s32 4, %v7677
    %v7679 = vrot.slane %v138, %v7678
    %v7680 = vlaneseq
    %v7681 = vshrl.u32 %v7680, 7
    %v7682 = vsub.s32 4, %v7681
    %v7683 = vrot.slane %v139, %v7682
    %v7684 = vlaneseq
    %v7685 = vshrl.u32 %v7684, 7
    %v7686 = vsub.s32 4, %v7685
    %v7687 = vrot.slane %v140, %v7686
    %v7688 = vlaneseq
    %v7689 = vshrl.u32 %v7688, 7
    %v7690 = vsub.s32 4, %v7689
    %v7691 = vrot.slane %v141, %v7690
    %v8204 = vunpack.c.l.b16 %v7164
    %v8205 = vunpack.c.h.b16 %v7164
    %v8206 = vunpack.c.l.b16 %v7165
    %v8207 = vunpack.c.h.b16 %v7165
    %v8208 = vunpack.c.l.b16 %v7166
    %v8209 = vunpack.c.h.b16 %v7166
    %v8210 = vunpack.c.l.b16 %v7167
    %v8211 = vunpack.c.h.b16 %v7167
    %v8212 = vunpack.c.l.b16 %v7168
    %v8213 = vunpack.c.h.b16 %v7168
    %v8214 = vunpack.c.l.b16 %v7169
    %v8215 = vunpack.c.h.b16 %v7169
    %v8216 = vunpack.c.l.b16 %v7170
    %v8217 = vunpack.c.h.b16 %v7170
    %v8218 = vunpack.c.l.b16 %v7171
    %v8219 = vunpack.c.h.b16 %v7171
    %v8220 = vunpack.c.l.b16 %v7172
    %v8221 = vunpack.c.h.b16 %v7172
    %v8222 = vunpack.c.l.b16 %v7173
    %v8223 = vunpack.c.h.b16 %v7173
    %v8224 = vunpack.c.l.b16 %v7174
    %v8225 = vunpack.c.h.b16 %v7174
    %v8226 = vunpack.c.l.b16 %v7175
    %v8227 = vunpack.c.h.b16 %v7175
    %v8228 = vunpack.c.l.b16 %v7176
    %v8229 = vunpack.c.h.b16 %v7176
    %v8230 = vunpack.c.l.b16 %v7177
    %v8231 = vunpack.c.h.b16 %v7177
    %v8232 = vunpack.c.l.b16 %v7178
    %v8233 = vunpack.c.h.b16 %v7178
    %v8234 = vunpack.c.l.b16 %v7179
    %v8235 = vunpack.c.h.b16 %v7179
    %v8236 = vunpack.c.l.b16 %v7180
    %v8237 = vunpack.c.h.b16 %v7180
    %v8238 = vunpack.c.l.b16 %v7181
    %v8239 = vunpack.c.h.b16 %v7181
    %v8240 = vunpack.c.l.b16 %v7182
    %v8241 = vunpack.c.h.b16 %v7182
    %v8242 = vunpack.c.l.b16 %v7183
    %v8243 = vunpack.c.h.b16 %v7183
    %v8244 = vunpack.c.l.b16 %v7184
    %v8245 = vunpack.c.h.b16 %v7184
    %v8246 = vunpack.c.l.b16 %v7185
    %v8247 = vunpack.c.h.b16 %v7185
    %v8248 = vunpack.c.l.b16 %v7186
    %v8249 = vunpack.c.h.b16 %v7186
    %v8250 = vunpack.c.l.b16 %v7187
    %v8251 = vunpack.c.h.b16 %v7187
    %v8252 = vunpack.c.l.b16 %v7188
    %v8253 = vunpack.c.h.b16 %v7188
    %v8254 = vunpack.c.l.b16 %v7189
    %v8255 = vunpack.c.h.b16 %v7189
    %v8256 = vunpack.c.l.b16 %v7190
    %v8257 = vunpack.c.h.b16 %v7190
    %v8258 = vunpack.c.l.b16 %v7191
    %v8259 = vunpack.c.h.b16 %v7191
    %v8260 = vunpack.c.l.b16 %v7192
    %v8261 = vunpack.c.h.b16 %v7192
    %v8262 = vunpack.c.l.b16 %v7193
    %v8263 = vunpack.c.h.b16 %v7193
    %v8264 = vunpack.c.l.b16 %v7194
    %v8265 = vunpack.c.h.b16 %v7194
    %v8266 = vunpack.c.l.b16 %v7195
    %v8267 = vunpack.c.h.b16 %v7195
    %v8268 = vunpack.c.l.b16 %v7196
    %v8269 = vunpack.c.h.b16 %v7196
    %v8270 = vunpack.c.l.b16 %v7197
    %v8271 = vunpack.c.h.b16 %v7197
    %v8272 = vunpack.c.l.b16 %v7198
    %v8273 = vunpack.c.h.b16 %v7198
    %v8274 = vunpack.c.l.b16 %v7199
    %v8275 = vunpack.c.h.b16 %v7199
    %v8276 = vunpack.c.l.b16 %v7200
    %v8277 = vunpack.c.h.b16 %v7200
    %v8278 = vunpack.c.l.b16 %v7201
    %v8279 = vunpack.c.h.b16 %v7201
    %v8280 = vunpack.c.l.b16 %v7202
    %v8281 = vunpack.c.h.b16 %v7202
    %v8282 = vunpack.c.l.b16 %v7203
    %v8283 = vunpack.c.h.b16 %v7203
    %v8284 = vunpack.c.l.b16 %v7204
    %v8285 = vunpack.c.h.b16 %v7204
    %v8286 = vunpack.c.l.b16 %v7205
    %v8287 = vunpack.c.h.b16 %v7205
    %v8288 = vunpack.c.l.b16 %v7206
    %v8289 = vunpack.c.h.b16 %v7206
    %v8290 = vunpack.c.l.b16 %v7207
    %v8291 = vunpack.c.h.b16 %v7207
    %v8292 = vunpack.c.l.b16 %v7208
    %v8293 = vunpack.c.h.b16 %v7208
    %v8294 = vunpack.c.l.b16 %v7209
    %v8295 = vunpack.c.h.b16 %v7209
    %v8296 = vunpack.c.l.b16 %v7210
    %v8297 = vunpack.c.h.b16 %v7210
    %v8298 = vunpack.c.l.b16 %v7211
    %v8299 = vunpack.c.h.b16 %v7211
    %v8300 = vunpack.c.l.b16 %v7212
    %v8301 = vunpack.c.h.b16 %v7212
    %v8302 = vunpack.c.l.b16 %v7213
    %v8303 = vunpack.c.h.b16 %v7213
    %v8304 = vunpack.c.l.b16 %v7214
    %v8305 = vunpack.c.h.b16 %v7214
    %v8306 = vunpack.c.l.b16 %v7215
    %v8307 = vunpack.c.h.b16 %v7215
    %v8308 = vunpack.c.l.b16 %v7216
    %v8309 = vunpack.c.h.b16 %v7216
    %v8310 = vunpack.c.l.b16 %v7217
    %v8311 = vunpack.c.h.b16 %v7217
    %v8312 = vunpack.c.l.b16 %v7218
    %v8313 = vunpack.c.h.b16 %v7218
    %v8314 = vunpack.c.l.b16 %v7219
    %v8315 = vunpack.c.h.b16 %v7219
    %v8316 = vunpack.c.l.b16 %v7220
    %v8317 = vunpack.c.h.b16 %v7220
    %v8318 = vunpack.c.l.b16 %v7221
    %v8319 = vunpack.c.h.b16 %v7221
    %v8320 = vunpack.c.l.b16 %v7222
    %v8321 = vunpack.c.h.b16 %v7222
    %v8322 = vunpack.c.l.b16 %v7223
    %v8323 = vunpack.c.h.b16 %v7223
    %v8324 = vunpack.c.l.b16 %v7224
    %v8325 = vunpack.c.h.b16 %v7224
    %v8326 = vunpack.c.l.b16 %v7225
    %v8327 = vunpack.c.h.b16 %v7225
    %v8328 = vunpack.c.l.b16 %v7226
    %v8329 = vunpack.c.h.b16 %v7226
    %v8330 = vunpack.c.l.b16 %v7227
    %v8331 = vunpack.c.h.b16 %v7227
    %v8332 = vunpack.c.l.b16 %v7228
    %v8333 = vunpack.c.h.b16 %v7228
    %v8334 = vunpack.c.l.b16 %v7229
    %v8335 = vunpack.c.h.b16 %v7229
    %v8336 = vunpack.c.l.b16 %v7230
    %v8337 = vunpack.c.h.b16 %v7230
    %v8338 = vunpack.c.l.b16 %v7231
    %v8339 = vunpack.c.h.b16 %v7231
    %v8340 = vunpack.c.l.b16 %v7232
    %v8341 = vunpack.c.h.b16 %v7232
    %v8342 = vunpack.c.l.b16 %v7233
    %v8343 = vunpack.c.h.b16 %v7233
    %v8344 = vunpack.c.l.b16 %v7234
    %v8345 = vunpack.c.h.b16 %v7234
    %v8346 = vunpack.c.l.b16 %v7235
    %v8347 = vunpack.c.h.b16 %v7235
    %v8348 = vunpack.c.l.b16 %v7236
    %v8349 = vunpack.c.h.b16 %v7236
    %v8350 = vunpack.c.l.b16 %v7237
    %v8351 = vunpack.c.h.b16 %v7237
    %v8352 = vunpack.c.l.b16 %v7238
    %v8353 = vunpack.c.h.b16 %v7238
    %v8354 = vunpack.c.l.b16 %v7239
    %v8355 = vunpack.c.h.b16 %v7239
    %v8356 = vunpack.c.l.b16 %v7240
    %v8357 = vunpack.c.h.b16 %v7240
    %v8358 = vunpack.c.l.b16 %v7241
    %v8359 = vunpack.c.h.b16 %v7241
    %v8360 = vunpack.c.l.b16 %v7242
    %v8361 = vunpack.c.h.b16 %v7242
    %v8362 = vunpack.c.l.b16 %v7243
    %v8363 = vunpack.c.h.b16 %v7243
    %v8364 = vunpack.c.l.b16 %v7244
    %v8365 = vunpack.c.h.b16 %v7244
    %v8366 = vunpack.c.l.b16 %v7245
    %v8367 = vunpack.c.h.b16 %v7245
    %v8368 = vunpack.c.l.b16 %v7246
    %v8369 = vunpack.c.h.b16 %v7246
    %v8370 = vunpack.c.l.b16 %v7247
    %v8371 = vunpack.c.h.b16 %v7247
    %v8372 = vunpack.c.l.b16 %v7248
    %v8373 = vunpack.c.h.b16 %v7248
    %v8374 = vunpack.c.l.b16 %v7249
    %v8375 = vunpack.c.h.b16 %v7249
    %v8376 = vunpack.c.l.b16 %v7250
    %v8377 = vunpack.c.h.b16 %v7250
    %v8378 = vunpack.c.l.b16 %v7251
    %v8379 = vunpack.c.h.b16 %v7251
    %v8380 = vunpack.c.l.b16 %v7252
    %v8381 = vunpack.c.h.b16 %v7252
    %v8382 = vunpack.c.l.b16 %v7253
    %v8383 = vunpack.c.h.b16 %v7253
    %v8384 = vunpack.c.l.b16 %v7254
    %v8385 = vunpack.c.h.b16 %v7254
    %v8386 = vunpack.c.l.b16 %v7255
    %v8387 = vunpack.c.h.b16 %v7255
    %v8388 = vunpack.c.l.b16 %v7256
    %v8389 = vunpack.c.h.b16 %v7256
    %v8390 = vunpack.c.l.b16 %v7257
    %v8391 = vunpack.c.h.b16 %v7257
    %v8392 = vunpack.c.l.b16 %v7258
    %v8393 = vunpack.c.h.b16 %v7258
    %v8394 = vunpack.c.l.b16 %v7259
    %v8395 = vunpack.c.h.b16 %v7259
    %v8396 = vunpack.c.l.b16 %v7260
    %v8397 = vunpack.c.h.b16 %v7260
    %v8398 = vunpack.c.l.b16 %v7261
    %v8399 = vunpack.c.h.b16 %v7261
    %v8400 = vunpack.c.l.b16 %v7262
    %v8401 = vunpack.c.h.b16 %v7262
    %v8402 = vunpack.c.l.b16 %v7263
    %v8403 = vunpack.c.h.b16 %v7263
    %v8404 = vunpack.c.l.b16 %v7264
    %v8405 = vunpack.c.h.b16 %v7264
    %v8406 = vunpack.c.l.b16 %v7265
    %v8407 = vunpack.c.h.b16 %v7265
    %v8408 = vunpack.c.l.b16 %v7266
    %v8409 = vunpack.c.h.b16 %v7266
    %v8410 = vunpack.c.l.b16 %v7267
    %v8411 = vunpack.c.h.b16 %v7267
    %v8412 = vunpack.c.l.b16 %v7268
    %v8413 = vunpack.c.h.b16 %v7268
    %v8414 = vunpack.c.l.b16 %v7269
    %v8415 = vunpack.c.h.b16 %v7269
    %v8416 = vunpack.c.l.b16 %v7270
    %v8417 = vunpack.c.h.b16 %v7270
    %v8418 = vunpack.c.l.b16 %v7271
    %v8419 = vunpack.c.h.b16 %v7271
    %v8420 = vunpack.c.l.b16 %v7272
    %v8421 = vunpack.c.h.b16 %v7272
    %v8422 = vunpack.c.l.b16 %v7273
    %v8423 = vunpack.c.h.b16 %v7273
    %v8424 = vunpack.c.l.b16 %v7274
    %v8425 = vunpack.c.h.b16 %v7274
    %v8426 = vunpack.c.l.b16 %v7275
    %v8427 = vunpack.c.h.b16 %v7275
    %v8428 = vunpack.c.l.b16 %v7276
    %v8429 = vunpack.c.h.b16 %v7276
    %v8430 = vunpack.c.l.b16 %v7277
    %v8431 = vunpack.c.h.b16 %v7277
    %v8432 = vunpack.c.l.b16 %v7278
    %v8433 = vunpack.c.h.b16 %v7278
    %v8434 = vunpack.c.l.b16 %v7279
    %v8435 = vunpack.c.h.b16 %v7279
    %v8436 = vunpack.c.l.b16 %v7280
    %v8437 = vunpack.c.h.b16 %v7280
    %v8438 = vunpack.c.l.b16 %v7281
    %v8439 = vunpack.c.h.b16 %v7281
    %v8440 = vunpack.c.l.b16 %v7282
    %v8441 = vunpack.c.h.b16 %v7282
    %v8442 = vunpack.c.l.b16 %v7283
    %v8443 = vunpack.c.h.b16 %v7283
    %v8444 = vunpack.c.l.b16 %v7284
    %v8445 = vunpack.c.h.b16 %v7284
    %v8446 = vunpack.c.l.b16 %v7285
    %v8447 = vunpack.c.h.b16 %v7285
    %v8448 = vunpack.c.l.b16 %v7286
    %v8449 = vunpack.c.h.b16 %v7286
    %v8450 = vunpack.c.l.b16 %v7287
    %v8451 = vunpack.c.h.b16 %v7287
    %v8452 = vunpack.c.l.b16 %v7288
    %v8453 = vunpack.c.h.b16 %v7288
    %v8454 = vunpack.c.l.b16 %v7289
    %v8455 = vunpack.c.h.b16 %v7289
    %v8456 = vunpack.c.l.b16 %v7290
    %v8457 = vunpack.c.h.b16 %v7290
    %v8458 = vunpack.c.l.b16 %v7291
    %v8459 = vunpack.c.h.b16 %v7291
    %v8460 = vunpack.c.l.b16 %v7292
    %v8461 = vunpack.c.h.b16 %v7292
    %v8462 = vunpack.c.l.b16 %v7293
    %v8463 = vunpack.c.h.b16 %v7293
    %v8464 = vunpack.c.l.b16 %v7294
    %v8465 = vunpack.c.h.b16 %v7294
    %v8466 = vunpack.c.l.b16 %v7295
    %v8467 = vunpack.c.h.b16 %v7295
    %v8468 = vunpack.c.l.b16 %v7296
    %v8469 = vunpack.c.h.b16 %v7296
    %v8470 = vunpack.c.l.b16 %v7297
    %v8471 = vunpack.c.h.b16 %v7297
    %v8472 = vunpack.c.l.b16 %v7298
    %v8473 = vunpack.c.h.b16 %v7298
    %v8474 = vunpack.c.l.b16 %v7299
    %v8475 = vunpack.c.h.b16 %v7299
    %v8476 = vunpack.c.l.b16 %v7300
    %v8477 = vunpack.c.h.b16 %v7300
    %v8478 = vunpack.c.l.b16 %v7301
    %v8479 = vunpack.c.h.b16 %v7301
    %v8480 = vunpack.c.l.b16 %v7302
    %v8481 = vunpack.c.h.b16 %v7302
    %v8482 = vunpack.c.l.b16 %v7303
    %v8483 = vunpack.c.h.b16 %v7303
    %v8484 = vunpack.c.l.b16 %v7304
    %v8485 = vunpack.c.h.b16 %v7304
    %v8486 = vunpack.c.l.b16 %v7305
    %v8487 = vunpack.c.h.b16 %v7305
    %v8488 = vunpack.c.l.b16 %v7306
    %v8489 = vunpack.c.h.b16 %v7306
    %v8490 = vunpack.c.l.b16 %v7307
    %v8491 = vunpack.c.h.b16 %v7307
    %v8492 = vunpack.c.l.b16 %v7308
    %v8493 = vunpack.c.h.b16 %v7308
    %v8494 = vunpack.c.l.b16 %v7309
    %v8495 = vunpack.c.h.b16 %v7309
    %v8496 = vunpack.c.l.b16 %v7310
    %v8497 = vunpack.c.h.b16 %v7310
    %v8498 = vunpack.c.l.b16 %v7311
    %v8499 = vunpack.c.h.b16 %v7311
    %v8500 = vunpack.c.l.b16 %v7312
    %v8501 = vunpack.c.h.b16 %v7312
    %v8502 = vunpack.c.l.b16 %v7313
    %v8503 = vunpack.c.h.b16 %v7313
    %v8504 = vunpack.c.l.b16 %v7314
    %v8505 = vunpack.c.h.b16 %v7314
    %v8506 = vunpack.c.l.b16 %v7315
    %v8507 = vunpack.c.h.b16 %v7315
    %v8508 = vunpack.c.l.b16 %v7316
    %v8509 = vunpack.c.h.b16 %v7316
    %v8510 = vunpack.c.l.b16 %v7317
    %v8511 = vunpack.c.h.b16 %v7317
    %v8512 = vunpack.c.l.b16 %v7318
    %v8513 = vunpack.c.h.b16 %v7318
    %v8514 = vunpack.c.l.b16 %v7319
    %v8515 = vunpack.c.h.b16 %v7319
    %v8516 = vunpack.c.l.b16 %v7320
    %v8517 = vunpack.c.h.b16 %v7320
    %v8518 = vunpack.c.l.b16 %v7321
    %v8519 = vunpack.c.h.b16 %v7321
    %v8520 = vunpack.c.l.b16 %v7322
    %v8521 = vunpack.c.h.b16 %v7322
    %v8522 = vunpack.c.l.b16 %v7323
    %v8523 = vunpack.c.h.b16 %v7323
    %v8524 = vunpack.c.l.b16 %v7324
    %v8525 = vunpack.c.h.b16 %v7324
    %v8526 = vunpack.c.l.b16 %v7325
    %v8527 = vunpack.c.h.b16 %v7325
    %v8528 = vunpack.c.l.b16 %v7326
    %v8529 = vunpack.c.h.b16 %v7326
    %v8530 = vunpack.c.l.b16 %v7327
    %v8531 = vunpack.c.h.b16 %v7327
    %v8532 = vunpack.c.l.b16 %v7328
    %v8533 = vunpack.c.h.b16 %v7328
    %v8534 = vunpack.c.l.b16 %v7329
    %v8535 = vunpack.c.h.b16 %v7329
    %v8536 = vunpack.c.l.b16 %v7330
    %v8537 = vunpack.c.h.b16 %v7330
    %v8538 = vunpack.c.l.b16 %v7331
    %v8539 = vunpack.c.h.b16 %v7331
    %v8540 = vunpack.c.l.b16 %v7332
    %v8541 = vunpack.c.h.b16 %v7332
    %v8542 = vunpack.c.l.b16 %v7333
    %v8543 = vunpack.c.h.b16 %v7333
    %v8544 = vunpack.c.l.b16 %v7334
    %v8545 = vunpack.c.h.b16 %v7334
    %v8546 = vunpack.c.l.b16 %v7335
    %v8547 = vunpack.c.h.b16 %v7335
    %v8548 = vunpack.c.l.b16 %v7336
    %v8549 = vunpack.c.h.b16 %v7336
    %v8550 = vunpack.c.l.b16 %v7337
    %v8551 = vunpack.c.h.b16 %v7337
    %v8552 = vunpack.c.l.b16 %v7338
    %v8553 = vunpack.c.h.b16 %v7338
    %v8554 = vunpack.c.l.b16 %v7339
    %v8555 = vunpack.c.h.b16 %v7339
    %v8556 = vunpack.c.l.b16 %v7340
    %v8557 = vunpack.c.h.b16 %v7340
    %v8558 = vunpack.c.l.b16 %v7341
    %v8559 = vunpack.c.h.b16 %v7341
    %v8560 = vunpack.c.l.b16 %v7342
    %v8561 = vunpack.c.h.b16 %v7342
    %v8562 = vunpack.c.l.b16 %v7343
    %v8563 = vunpack.c.h.b16 %v7343
    %v8564 = vunpack.c.l.b16 %v7344
    %v8565 = vunpack.c.h.b16 %v7344
    %v8566 = vunpack.c.l.b16 %v7345
    %v8567 = vunpack.c.h.b16 %v7345
    %v8568 = vunpack.c.l.b16 %v7346
    %v8569 = vunpack.c.h.b16 %v7346
    %v8570 = vunpack.c.l.b16 %v7347
    %v8571 = vunpack.c.h.b16 %v7347
    %v8572 = vunpack.c.l.b16 %v7348
    %v8573 = vunpack.c.h.b16 %v7348
    %v8574 = vunpack.c.l.b16 %v7349
    %v8575 = vunpack.c.h.b16 %v7349
    %v8576 = vunpack.c.l.b16 %v7350
    %v8577 = vunpack.c.h.b16 %v7350
    %v8578 = vunpack.c.l.b16 %v7351
    %v8579 = vunpack.c.h.b16 %v7351
    %v8580 = vunpack.c.l.b16 %v7352
    %v8581 = vunpack.c.h.b16 %v7352
    %v8582 = vunpack.c.l.b16 %v7353
    %v8583 = vunpack.c.h.b16 %v7353
    %v8584 = vunpack.c.l.b16 %v7354
    %v8585 = vunpack.c.h.b16 %v7354
    %v8586 = vunpack.c.l.b16 %v7355
    %v8587 = vunpack.c.h.b16 %v7355
    %v8588 = vunpack.c.l.b16 %v7356
    %v8589 = vunpack.c.h.b16 %v7356
    %v8590 = vunpack.c.l.b16 %v7357
    %v8591 = vunpack.c.h.b16 %v7357
    %v8592 = vunpack.c.l.b16 %v7358
    %v8593 = vunpack.c.h.b16 %v7358
    %v8594 = vunpack.c.l.b16 %v7359
    %v8595 = vunpack.c.h.b16 %v7359
    %v8596 = vunpack.c.l.b16 %v7360
    %v8597 = vunpack.c.h.b16 %v7360
    %v8598 = vunpack.c.l.b16 %v7361
    %v8599 = vunpack.c.h.b16 %v7361
    %v8600 = vunpack.c.l.b16 %v7362
    %v8601 = vunpack.c.h.b16 %v7362
    %v8602 = vunpack.c.l.b16 %v7363
    %v8603 = vunpack.c.h.b16 %v7363
    %v8604 = vunpack.c.l.b16 %v7364
    %v8605 = vunpack.c.h.b16 %v7364
    %v8606 = vunpack.c.l.b16 %v7365
    %v8607 = vunpack.c.h.b16 %v7365
    %v8608 = vunpack.c.l.b16 %v7366
    %v8609 = vunpack.c.h.b16 %v7366
    %v8610 = vunpack.c.l.b16 %v7367
    %v8611 = vunpack.c.h.b16 %v7367
    %v8612 = vunpack.c.l.b16 %v7368
    %v8613 = vunpack.c.h.b16 %v7368
    %v8614 = vunpack.c.l.b16 %v7369
    %v8615 = vunpack.c.h.b16 %v7369
    %v8616 = vunpack.c.l.b16 %v7370
    %v8617 = vunpack.c.h.b16 %v7370
    %v8618 = vunpack.c.l.b16 %v7371
    %v8619 = vunpack.c.h.b16 %v7371
    %v8620 = vunpack.c.l.b16 %v7372
    %v8621 = vunpack.c.h.b16 %v7372
    %v8622 = vunpack.c.l.b16 %v7373
    %v8623 = vunpack.c.h.b16 %v7373
    %v8624 = vunpack.c.l.b16 %v7374
    %v8625 = vunpack.c.h.b16 %v7374
    %v8626 = vunpack.c.l.b16 %v7375
    %v8627 = vunpack.c.h.b16 %v7375
    %v8628 = vunpack.c.l.b16 %v7376
    %v8629 = vunpack.c.h.b16 %v7376
    %v8630 = vunpack.c.l.b16 %v7377
    %v8631 = vunpack.c.h.b16 %v7377
    %v8632 = vunpack.c.l.b16 %v7378
    %v8633 = vunpack.c.h.b16 %v7378
    %v8634 = vunpack.c.l.b16 %v7379
    %v8635 = vunpack.c.h.b16 %v7379
    %v8636 = vunpack.c.l.b16 %v7380
    %v8637 = vunpack.c.h.b16 %v7380
    %v8638 = vunpack.c.l.b16 %v7381
    %v8639 = vunpack.c.h.b16 %v7381
    %v8640 = vunpack.c.l.b16 %v7382
    %v8641 = vunpack.c.h.b16 %v7382
    %v8642 = vunpack.c.l.b16 %v7383
    %v8643 = vunpack.c.h.b16 %v7383
    %v8644 = vunpack.c.l.b16 %v7384
    %v8645 = vunpack.c.h.b16 %v7384
    %v8646 = vunpack.c.l.b16 %v7385
    %v8647 = vunpack.c.h.b16 %v7385
    %v8648 = vunpack.c.l.b16 %v7386
    %v8649 = vunpack.c.h.b16 %v7386
    %v8650 = vunpack.c.l.b16 %v7387
    %v8651 = vunpack.c.h.b16 %v7387
    %v8652 = vunpack.c.l.b16 %v7388
    %v8653 = vunpack.c.h.b16 %v7388
    %v8654 = vunpack.c.l.b16 %v7389
    %v8655 = vunpack.c.h.b16 %v7389
    %v8656 = vunpack.c.l.b16 %v7390
    %v8657 = vunpack.c.h.b16 %v7390
    %v8658 = vunpack.c.l.b16 %v7391
    %v8659 = vunpack.c.h.b16 %v7391
    %v8660 = vunpack.c.l.b16 %v7392
    %v8661 = vunpack.c.h.b16 %v7392
    %v8662 = vunpack.c.l.b16 %v7393
    %v8663 = vunpack.c.h.b16 %v7393
    %v8664 = vunpack.c.l.b16 %v7394
    %v8665 = vunpack.c.h.b16 %v7394
    %v8666 = vunpack.c.l.b16 %v7395
    %v8667 = vunpack.c.h.b16 %v7395
    %v8668 = vunpack.c.l.b16 %v7396
    %v8669 = vunpack.c.h.b16 %v7396
    %v8670 = vunpack.c.l.b16 %v7397
    %v8671 = vunpack.c.h.b16 %v7397
    %v8672 = vunpack.c.l.b16 %v7398
    %v8673 = vunpack.c.h.b16 %v7398
    %v8674 = vunpack.c.l.b16 %v7399
    %v8675 = vunpack.c.h.b16 %v7399
    %v8676 = vunpack.c.l.b16 %v7400
    %v8677 = vunpack.c.h.b16 %v7400
    %v8678 = vunpack.c.l.b16 %v7401
    %v8679 = vunpack.c.h.b16 %v7401
    %v8680 = vunpack.c.l.b16 %v7402
    %v8681 = vunpack.c.h.b16 %v7402
    %v8682 = vunpack.c.l.b16 %v7403
    %v8683 = vunpack.c.h.b16 %v7403
    %v8684 = vunpack.c.l.b16 %v7404
    %v8685 = vunpack.c.h.b16 %v7404
    %v8686 = vunpack.c.l.b16 %v7405
    %v8687 = vunpack.c.h.b16 %v7405
    %v8688 = vunpack.c.l.b16 %v7406
    %v8689 = vunpack.c.h.b16 %v7406
    %v8690 = vunpack.c.l.b16 %v7407
    %v8691 = vunpack.c.h.b16 %v7407
    %v8692 = vunpack.c.l.b16 %v7408
    %v8693 = vunpack.c.h.b16 %v7408
    %v8694 = vunpack.c.l.b16 %v7409
    %v8695 = vunpack.c.h.b16 %v7409
    %v8696 = vunpack.c.l.b16 %v7410
    %v8697 = vunpack.c.h.b16 %v7410
    %v8698 = vunpack.c.l.b16 %v7411
    %v8699 = vunpack.c.h.b16 %v7411
    %v8700 = vunpack.c.l.b16 %v7412
    %v8701 = vunpack.c.h.b16 %v7412
    %v8702 = vunpack.c.l.b16 %v7413
    %v8703 = vunpack.c.h.b16 %v7413
    %v8704 = vunpack.c.l.b16 %v7414
    %v8705 = vunpack.c.h.b16 %v7414
    %v8706 = vunpack.c.l.b16 %v7415
    %v8707 = vunpack.c.h.b16 %v7415
    %v8708 = vunpack.c.l.b16 %v7416
    %v8709 = vunpack.c.h.b16 %v7416
    %v8710 = vunpack.c.l.b16 %v7417
    %v8711 = vunpack.c.h.b16 %v7417
    %v8712 = vunpack.c.l.b16 %v7418
    %v8713 = vunpack.c.h.b16 %v7418
    %v8714 = vunpack.c.l.b16 %v7419
    %v8715 = vunpack.c.h.b16 %v7419
    %v8716 = vunpack.c.l.b16 %v7420
    %v8717 = vunpack.c.h.b16 %v7420
    %v8718 = vunpack.c.l.b16 %v7421
    %v8719 = vunpack.c.h.b16 %v7421
    %v8720 = vunpack.c.l.b16 %v7422
    %v8721 = vunpack.c.h.b16 %v7422
    %v8722 = vunpack.c.l.b16 %v7423
    %v8723 = vunpack.c.h.b16 %v7423
    %v8724 = vunpack.c.l.b16 %v7424
    %v8725 = vunpack.c.h.b16 %v7424
    %v8726 = vunpack.c.l.b16 %v7425
    %v8727 = vunpack.c.h.b16 %v7425
    %v8728 = vunpack.c.l.b16 %v7426
    %v8729 = vunpack.c.h.b16 %v7426
    %v8730 = vunpack.c.l.b16 %v7427
    %v8731 = vunpack.c.h.b16 %v7427
    %v8732 = vunpack.c.l.b16 %v7428
    %v8733 = vunpack.c.h.b16 %v7428
    %v8734 = vunpack.c.l.b16 %v7429
    %v8735 = vunpack.c.h.b16 %v7429
    %v8736 = vunpack.c.l.b16 %v7430
    %v8737 = vunpack.c.h.b16 %v7430
    %v8738 = vunpack.c.l.b16 %v7431
    %v8739 = vunpack.c.h.b16 %v7431
    %v8740 = vunpack.c.l.b16 %v7432
    %v8741 = vunpack.c.h.b16 %v7432
    %v8742 = vunpack.c.l.b16 %v7433
    %v8743 = vunpack.c.h.b16 %v7433
    %v8744 = vunpack.c.l.b16 %v7434
    %v8745 = vunpack.c.h.b16 %v7434
    %v8746 = vunpack.c.l.b16 %v7435
    %v8747 = vunpack.c.h.b16 %v7435
    %v8748 = vunpack.c.l.b16 %v7436
    %v8749 = vunpack.c.h.b16 %v7436
    %v8750 = vunpack.c.l.b16 %v7437
    %v8751 = vunpack.c.h.b16 %v7437
    %v8752 = vunpack.c.l.b16 %v7438
    %v8753 = vunpack.c.h.b16 %v7438
    %v8754 = vunpack.c.l.b16 %v7439
    %v8755 = vunpack.c.h.b16 %v7439
    %v8756 = vunpack.c.l.b16 %v7440
    %v8757 = vunpack.c.h.b16 %v7440
    %v8758 = vunpack.c.l.b16 %v7441
    %v8759 = vunpack.c.h.b16 %v7441
    %v8760 = vunpack.c.l.b16 %v7442
    %v8761 = vunpack.c.h.b16 %v7442
    %v8762 = vunpack.c.l.b16 %v7443
    %v8763 = vunpack.c.h.b16 %v7443
    %v8764 = vunpack.c.l.b16 %v7444
    %v8765 = vunpack.c.h.b16 %v7444
    %v8766 = vunpack.c.l.b16 %v7445
    %v8767 = vunpack.c.h.b16 %v7445
    %v8768 = vunpack.c.l.b16 %v7446
    %v8769 = vunpack.c.h.b16 %v7446
    %v8770 = vunpack.c.l.b16 %v7447
    %v8771 = vunpack.c.h.b16 %v7447
    %v8772 = vunpack.c.l.b16 %v7448
    %v8773 = vunpack.c.h.b16 %v7448
    %v8774 = vunpack.c.l.b16 %v7449
    %v8775 = vunpack.c.h.b16 %v7449
    %v8776 = vunpack.c.l.b16 %v7450
    %v8777 = vunpack.c.h.b16 %v7450
    %v8778 = vunpack.c.l.b16 %v7451
    %v8779 = vunpack.c.h.b16 %v7451
    %v8780 = vunpack.c.l.b16 %v7452
    %v8781 = vunpack.c.h.b16 %v7452
    %v8782 = vunpack.c.l.b16 %v7453
    %v8783 = vunpack.c.h.b16 %v7453
    %v8784 = vunpack.c.l.b16 %v7454
    %v8785 = vunpack.c.h.b16 %v7454
    %v8786 = vunpack.c.l.b16 %v7455
    %v8787 = vunpack.c.h.b16 %v7455
    %v8788 = vunpack.c.l.b16 %v7456
    %v8789 = vunpack.c.h.b16 %v7456
    %v8790 = vunpack.c.l.b16 %v7457
    %v8791 = vunpack.c.h.b16 %v7457
    %v8792 = vunpack.c.l.b16 %v7458
    %v8793 = vunpack.c.h.b16 %v7458
    %v8794 = vunpack.c.l.b16 %v7459
    %v8795 = vunpack.c.h.b16 %v7459
    %v8796 = vunpack.c.l.b16 %v7460
    %v8797 = vunpack.c.h.b16 %v7460
    %v8798 = vunpack.c.l.b16 %v7461
    %v8799 = vunpack.c.h.b16 %v7461
    %v8800 = vunpack.c.l.b16 %v7462
    %v8801 = vunpack.c.h.b16 %v7462
    %v8802 = vunpack.c.l.b16 %v7463
    %v8803 = vunpack.c.h.b16 %v7463
    %v8804 = vunpack.c.l.b16 %v7464
    %v8805 = vunpack.c.h.b16 %v7464
    %v8806 = vunpack.c.l.b16 %v7465
    %v8807 = vunpack.c.h.b16 %v7465
    %v8808 = vunpack.c.l.b16 %v7466
    %v8809 = vunpack.c.h.b16 %v7466
    %v8810 = vunpack.c.l.b16 %v7467
    %v8811 = vunpack.c.h.b16 %v7467
    %v8812 = vunpack.c.l.b16 %v7468
    %v8813 = vunpack.c.h.b16 %v7468
    %v8814 = vunpack.c.l.b16 %v7469
    %v8815 = vunpack.c.h.b16 %v7469
    %v8816 = vunpack.c.l.b16 %v7470
    %v8817 = vunpack.c.h.b16 %v7470
    %v8818 = vunpack.c.l.b16 %v7471
    %v8819 = vunpack.c.h.b16 %v7471
    %v8820 = vunpack.c.l.b16 %v7472
    %v8821 = vunpack.c.h.b16 %v7472
    %v8822 = vunpack.c.l.b16 %v7473
    %v8823 = vunpack.c.h.b16 %v7473
    %v8824 = vunpack.c.l.b16 %v7474
    %v8825 = vunpack.c.h.b16 %v7474
    %v8826 = vunpack.c.l.b16 %v7475
    %v8827 = vunpack.c.h.b16 %v7475
    %v8828 = vunpack.c.l.b16 %v7476
    %v8829 = vunpack.c.h.b16 %v7476
    %v8830 = vunpack.c.l.b16 %v7477
    %v8831 = vunpack.c.h.b16 %v7477
    %v8832 = vunpack.c.l.b16 %v7478
    %v8833 = vunpack.c.h.b16 %v7478
    %v8834 = vunpack.c.l.b16 %v7479
    %v8835 = vunpack.c.h.b16 %v7479
    %v8836 = vunpack.c.l.b16 %v7480
    %v8837 = vunpack.c.h.b16 %v7480
    %v8838 = vunpack.c.l.b16 %v7481
    %v8839 = vunpack.c.h.b16 %v7481
    %v8840 = vunpack.c.l.b16 %v7482
    %v8841 = vunpack.c.h.b16 %v7482
    %v8842 = vunpack.c.l.b16 %v7483
    %v8843 = vunpack.c.h.b16 %v7483
    %v8844 = vunpack.c.l.b16 %v7484
    %v8845 = vunpack.c.h.b16 %v7484
    %v8846 = vunpack.c.l.b16 %v7485
    %v8847 = vunpack.c.h.b16 %v7485
    %v8848 = vunpack.c.l.b16 %v7486
    %v8849 = vunpack.c.h.b16 %v7486
    %v8850 = vunpack.c.l.b16 %v7487
    %v8851 = vunpack.c.h.b16 %v7487
    %v8852 = vunpack.c.l.b16 %v7488
    %v8853 = vunpack.c.h.b16 %v7488
    %v8854 = vunpack.c.l.b16 %v7489
    %v8855 = vunpack.c.h.b16 %v7489
    %v8856 = vunpack.c.l.b16 %v7490
    %v8857 = vunpack.c.h.b16 %v7490
    %v8858 = vunpack.c.l.b16 %v7491
    %v8859 = vunpack.c.h.b16 %v7491
    %v8860 = vunpack.c.l.b16 %v7492
    %v8861 = vunpack.c.h.b16 %v7492
    %v8862 = vunpack.c.l.b16 %v7493
    %v8863 = vunpack.c.h.b16 %v7493
    %v8864 = vunpack.c.l.b16 %v7494
    %v8865 = vunpack.c.h.b16 %v7494
    %v8866 = vunpack.c.l.b16 %v7495
    %v8867 = vunpack.c.h.b16 %v7495
    %v8868 = vunpack.c.l.b16 %v7496
    %v8869 = vunpack.c.h.b16 %v7496
    %v8870 = vunpack.c.l.b16 %v7497
    %v8871 = vunpack.c.h.b16 %v7497
    %v8872 = vunpack.c.l.b16 %v7498
    %v8873 = vunpack.c.h.b16 %v7498
    %v8874 = vunpack.c.l.b16 %v7499
    %v8875 = vunpack.c.h.b16 %v7499
    %v8876 = vunpack.c.l.b16 %v7500
    %v8877 = vunpack.c.h.b16 %v7500
    %v8878 = vunpack.c.l.b16 %v7501
    %v8879 = vunpack.c.h.b16 %v7501
    %v8880 = vunpack.c.l.b16 %v7502
    %v8881 = vunpack.c.h.b16 %v7502
    %v8882 = vunpack.c.l.b16 %v7503
    %v8883 = vunpack.c.h.b16 %v7503
    %v8884 = vunpack.c.l.b16 %v7504
    %v8885 = vunpack.c.h.b16 %v7504
    %v8886 = vunpack.c.l.b16 %v7505
    %v8887 = vunpack.c.h.b16 %v7505
    %v8888 = vunpack.c.l.b16 %v7506
    %v8889 = vunpack.c.h.b16 %v7506
    %v8890 = vunpack.c.l.b16 %v7507
    %v8891 = vunpack.c.h.b16 %v7507
    %v8892 = vunpack.c.l.b16 %v7508
    %v8893 = vunpack.c.h.b16 %v7508
    %v8894 = vunpack.c.l.b16 %v7509
    %v8895 = vunpack.c.h.b16 %v7509
    %v8896 = vunpack.c.l.b16 %v7510
    %v8897 = vunpack.c.h.b16 %v7510
    %v8898 = vunpack.c.l.b16 %v7511
    %v8899 = vunpack.c.h.b16 %v7511
    %v8900 = vunpack.c.l.b16 %v7512
    %v8901 = vunpack.c.h.b16 %v7512
    %v8902 = vunpack.c.l.b16 %v7513
    %v8903 = vunpack.c.h.b16 %v7513
    %v8904 = vunpack.c.l.b16 %v7514
    %v8905 = vunpack.c.h.b16 %v7514
    %v8906 = vunpack.c.l.b16 %v7515
    %v8907 = vunpack.c.h.b16 %v7515
    %v8908 = vunpack.c.l.b16 %v7516
    %v8909 = vunpack.c.h.b16 %v7516
    %v8910 = vunpack.c.l.b16 %v7517
    %v8911 = vunpack.c.h.b16 %v7517
    %v8912 = vunpack.c.l.b16 %v7518
    %v8913 = vunpack.c.h.b16 %v7518
    %v8914 = vunpack.c.l.b16 %v7519
    %v8915 = vunpack.c.h.b16 %v7519
    %v8916 = vunpack.c.l.b16 %v7520
    %v8917 = vunpack.c.h.b16 %v7520
    %v8918 = vunpack.c.l.b16 %v7521
    %v8919 = vunpack.c.h.b16 %v7521
    %v8920 = vunpack.c.l.b16 %v7522
    %v8921 = vunpack.c.h.b16 %v7522
    %v8922 = vunpack.c.l.b16 %v7523
    %v8923 = vunpack.c.h.b16 %v7523
    %v8924 = vunpack.c.l.b16 %v7524
    %v8925 = vunpack.c.h.b16 %v7524
    %v8926 = vunpack.c.l.b16 %v7525
    %v8927 = vunpack.c.h.b16 %v7525
    %v8928 = vunpack.c.l.b16 %v7526
    %v8929 = vunpack.c.h.b16 %v7526
    %v8930 = vunpack.c.l.b16 %v7527
    %v8931 = vunpack.c.h.b16 %v7527
    %v8932 = vunpack.c.l.b16 %v7528
    %v8933 = vunpack.c.h.b16 %v7528
    %v8934 = vunpack.c.l.b16 %v7529
    %v8935 = vunpack.c.h.b16 %v7529
    %v8936 = vunpack.c.l.b16 %v7530
    %v8937 = vunpack.c.h.b16 %v7530
    %v8938 = vunpack.c.l.b16 %v7531
    %v8939 = vunpack.c.h.b16 %v7531
    %v8940 = vunpack.c.l.b16 %v7532
    %v8941 = vunpack.c.h.b16 %v7532
    %v8942 = vunpack.c.l.b16 %v7533
    %v8943 = vunpack.c.h.b16 %v7533
    %v8944 = vunpack.c.l.b16 %v7534
    %v8945 = vunpack.c.h.b16 %v7534
    %v8946 = vunpack.c.l.b16 %v7535
    %v8947 = vunpack.c.h.b16 %v7535
    %v8948 = vunpack.c.l.b16 %v7536
    %v8949 = vunpack.c.h.b16 %v7536
    %v8950 = vunpack.c.l.b16 %v7537
    %v8951 = vunpack.c.h.b16 %v7537
    %v8952 = vunpack.c.l.b16 %v7538
    %v8953 = vunpack.c.h.b16 %v7538
    %v8954 = vunpack.c.l.b16 %v7539
    %v8955 = vunpack.c.h.b16 %v7539
    %v8956 = vunpack.c.l.b16 %v7540
    %v8957 = vunpack.c.h.b16 %v7540
    %v8958 = vunpack.c.l.b16 %v7541
    %v8959 = vunpack.c.h.b16 %v7541
    %v8960 = vunpack.c.l.b16 %v7542
    %v8961 = vunpack.c.h.b16 %v7542
    %v8962 = vunpack.c.l.b16 %v7543
    %v8963 = vunpack.c.h.b16 %v7543
    %v8964 = vunpack.c.l.b16 %v7544
    %v8965 = vunpack.c.h.b16 %v7544
    %v8966 = vunpack.c.l.b16 %v7545
    %v8967 = vunpack.c.h.b16 %v7545
    %v8968 = vunpack.c.l.b16 %v7546
    %v8969 = vunpack.c.h.b16 %v7546
    %v8970 = vunpack.c.l.b16 %v7547
    %v8971 = vunpack.c.h.b16 %v7547
    %v8972 = vunpack.c.l.b16 %v7548
    %v8973 = vunpack.c.h.b16 %v7548
    %v8974 = vunpack.c.l.b16 %v7549
    %v8975 = vunpack.c.h.b16 %v7549
    %v8976 = vunpack.c.l.b16 %v7550
    %v8977 = vunpack.c.h.b16 %v7550
    %v8978 = vunpack.c.l.b16 %v7551
    %v8979 = vunpack.c.h.b16 %v7551
    %v8980 = vunpack.c.l.b16 %v7552
    %v8981 = vunpack.c.h.b16 %v7552
    %v8982 = vunpack.c.l.b16 %v7553
    %v8983 = vunpack.c.h.b16 %v7553
    %v8984 = vunpack.c.l.b16 %v7554
    %v8985 = vunpack.c.h.b16 %v7554
    %v8986 = vunpack.c.l.b16 %v7555
    %v8987 = vunpack.c.h.b16 %v7555
    %v8988 = vunpack.c.l.b16 %v7556
    %v8989 = vunpack.c.h.b16 %v7556
    %v8990 = vunpack.c.l.b16 %v7557
    %v8991 = vunpack.c.h.b16 %v7557
    %v8992 = vunpack.c.l.b16 %v7558
    %v8993 = vunpack.c.h.b16 %v7558
    %v8994 = vunpack.c.l.b16 %v7559
    %v8995 = vunpack.c.h.b16 %v7559
    %v8996 = vunpack.c.l.b16 %v7560
    %v8997 = vunpack.c.h.b16 %v7560
    %v8998 = vunpack.c.l.b16 %v7561
    %v8999 = vunpack.c.h.b16 %v7561
    %v9000 = vunpack.c.l.b16 %v7562
    %v9001 = vunpack.c.h.b16 %v7562
    %v9002 = vunpack.c.l.b16 %v7563
    %v9003 = vunpack.c.h.b16 %v7563
    %v9004 = vunpack.c.l.b16 %v7564
    %v9005 = vunpack.c.h.b16 %v7564
    %v9006 = vunpack.c.l.b16 %v7565
    %v9007 = vunpack.c.h.b16 %v7565
    %v9008 = vunpack.c.l.b16 %v7566
    %v9009 = vunpack.c.h.b16 %v7566
    %v9010 = vunpack.c.l.b16 %v7567
    %v9011 = vunpack.c.h.b16 %v7567
    %v9012 = vunpack.c.l.b16 %v7568
    %v9013 = vunpack.c.h.b16 %v7568
    %v9014 = vunpack.c.l.b16 %v7569
    %v9015 = vunpack.c.h.b16 %v7569
    %v9016 = vunpack.c.l.b16 %v7570
    %v9017 = vunpack.c.h.b16 %v7570
    %v9018 = vunpack.c.l.b16 %v7571
    %v9019 = vunpack.c.h.b16 %v7571
    %v9020 = vunpack.c.l.b16 %v7572
    %v9021 = vunpack.c.h.b16 %v7572
    %v9022 = vunpack.c.l.b16 %v7573
    %v9023 = vunpack.c.h.b16 %v7573
    %v9024 = vunpack.c.l.b16 %v7574
    %v9025 = vunpack.c.h.b16 %v7574
    %v9026 = vunpack.c.l.b16 %v7575
    %v9027 = vunpack.c.h.b16 %v7575
    %v9028 = vunpack.c.l.b16 %v7576
    %v9029 = vunpack.c.h.b16 %v7576
    %v9030 = vunpack.c.l.b16 %v7577
    %v9031 = vunpack.c.h.b16 %v7577
    %v9032 = vunpack.c.l.b16 %v7578
    %v9033 = vunpack.c.h.b16 %v7578
    %v9034 = vunpack.c.l.b16 %v7579
    %v9035 = vunpack.c.h.b16 %v7579
    %v9036 = vunpack.c.l.b16 %v7580
    %v9037 = vunpack.c.h.b16 %v7580
    %v9038 = vunpack.c.l.b16 %v7581
    %v9039 = vunpack.c.h.b16 %v7581
    %v9040 = vunpack.c.l.b16 %v7582
    %v9041 = vunpack.c.h.b16 %v7582
    %v9042 = vunpack.c.l.b16 %v7583
    %v9043 = vunpack.c.h.b16 %v7583
    %v9044 = vunpack.c.l.b16 %v7584
    %v9045 = vunpack.c.h.b16 %v7584
    %v9046 = vunpack.c.l.b16 %v7585
    %v9047 = vunpack.c.h.b16 %v7585
    %v9048 = vunpack.c.l.b16 %v7586
    %v9049 = vunpack.c.h.b16 %v7586
    %v9050 = vunpack.c.l.b16 %v7587
    %v9051 = vunpack.c.h.b16 %v7587
    %v9052 = vunpack.c.l.b16 %v7588
    %v9053 = vunpack.c.h.b16 %v7588
    %v9054 = vunpack.c.l.b16 %v7589
    %v9055 = vunpack.c.h.b16 %v7589
    %v9056 = vunpack.c.l.b16 %v7590
    %v9057 = vunpack.c.h.b16 %v7590
    %v9058 = vunpack.c.l.b16 %v7591
    %v9059 = vunpack.c.h.b16 %v7591
    %v9060 = vunpack.c.l.b16 %v7592
    %v9061 = vunpack.c.h.b16 %v7592
    %v9062 = vunpack.c.l.b16 %v7593
    %v9063 = vunpack.c.h.b16 %v7593
    %v9064 = vunpack.c.l.b16 %v7594
    %v9065 = vunpack.c.h.b16 %v7594
    %v9066 = vunpack.c.l.b16 %v7595
    %v9067 = vunpack.c.h.b16 %v7595
    %v9068 = vunpack.c.l.b16 %v7596
    %v9069 = vunpack.c.h.b16 %v7596
    %v9070 = vunpack.c.l.b16 %v7597
    %v9071 = vunpack.c.h.b16 %v7597
    %v9072 = vunpack.c.l.b16 %v7598
    %v9073 = vunpack.c.h.b16 %v7598
    %v9074 = vunpack.c.l.b16 %v7599
    %v9075 = vunpack.c.h.b16 %v7599
    %v9076 = vunpack.c.l.b16 %v7600
    %v9077 = vunpack.c.h.b16 %v7600
    %v9078 = vunpack.c.l.b16 %v7601
    %v9079 = vunpack.c.h.b16 %v7601
    %v9080 = vunpack.c.l.b16 %v7602
    %v9081 = vunpack.c.h.b16 %v7602
    %v9082 = vunpack.c.l.b16 %v7603
    %v9083 = vunpack.c.h.b16 %v7603
    %v9084 = vunpack.c.l.b16 %v7604
    %v9085 = vunpack.c.h.b16 %v7604
    %v9086 = vunpack.c.l.b16 %v7605
    %v9087 = vunpack.c.h.b16 %v7605
    %v9088 = vunpack.c.l.b16 %v7606
    %v9089 = vunpack.c.h.b16 %v7606
    %v9090 = vunpack.c.l.b16 %v7607
    %v9091 = vunpack.c.h.b16 %v7607
    %v9092 = vunpack.c.l.b16 %v7608
    %v9093 = vunpack.c.h.b16 %v7608
    %v9094 = vunpack.c.l.b16 %v7609
    %v9095 = vunpack.c.h.b16 %v7609
    %v9096 = vunpack.c.l.b16 %v7610
    %v9097 = vunpack.c.h.b16 %v7610
    %v9098 = vunpack.c.l.b16 %v7611
    %v9099 = vunpack.c.h.b16 %v7611
    %v9100 = vunpack.c.l.b16 %v7612
    %v9101 = vunpack.c.h.b16 %v7612
    %v9102 = vunpack.c.l.b16 %v7613
    %v9103 = vunpack.c.h.b16 %v7613
    %v9104 = vunpack.c.l.b16 %v7614
    %v9105 = vunpack.c.h.b16 %v7614
    %v9106 = vunpack.c.l.b16 %v7615
    %v9107 = vunpack.c.h.b16 %v7615
    %v9108 = vunpack.c.l.b16 %v7616
    %v9109 = vunpack.c.h.b16 %v7616
    %v9110 = vunpack.c.l.b16 %v7617
    %v9111 = vunpack.c.h.b16 %v7617
    %v9112 = vunpack.c.l.b16 %v7618
    %v9113 = vunpack.c.h.b16 %v7618
    %v9114 = vunpack.c.l.b16 %v7619
    %v9115 = vunpack.c.h.b16 %v7619
    %v9116 = vunpack.c.l.b16 %v7620
    %v9117 = vunpack.c.h.b16 %v7620
    %v9118 = vunpack.c.l.b16 %v7621
    %v9119 = vunpack.c.h.b16 %v7621
    %v9120 = vunpack.c.l.b16 %v7622
    %v9121 = vunpack.c.h.b16 %v7622
    %v9122 = vunpack.c.l.b16 %v7623
    %v9123 = vunpack.c.h.b16 %v7623
    %v9124 = vunpack.c.l.b16 %v7624
    %v9125 = vunpack.c.h.b16 %v7624
    %v9126 = vunpack.c.l.b16 %v7625
    %v9127 = vunpack.c.h.b16 %v7625
    %v9128 = vunpack.c.l.b16 %v7626
    %v9129 = vunpack.c.h.b16 %v7626
    %v9130 = vunpack.c.l.b16 %v7627
    %v9131 = vunpack.c.h.b16 %v7627
    %v9132 = vunpack.c.l.b16 %v7628
    %v9133 = vunpack.c.h.b16 %v7628
    %v9134 = vunpack.c.l.b16 %v7629
    %v9135 = vunpack.c.h.b16 %v7629
    %v9136 = vunpack.c.l.b16 %v7630
    %v9137 = vunpack.c.h.b16 %v7630
    %v9138 = vunpack.c.l.b16 %v7631
    %v9139 = vunpack.c.h.b16 %v7631
    %v9140 = vunpack.c.l.b16 %v7632
    %v9141 = vunpack.c.h.b16 %v7632
    %v9142 = vunpack.c.l.b16 %v7633
    %v9143 = vunpack.c.h.b16 %v7633
    %v9144 = vunpack.c.l.b16 %v7634
    %v9145 = vunpack.c.h.b16 %v7634
    %v9146 = vunpack.c.l.b16 %v7635
    %v9147 = vunpack.c.h.b16 %v7635
    %v9148 = vunpack.c.l.b16 %v7636
    %v9149 = vunpack.c.h.b16 %v7636
    %v9150 = vunpack.c.l.b16 %v7637
    %v9151 = vunpack.c.h.b16 %v7637
    %v9152 = vunpack.c.l.b16 %v7638
    %v9153 = vunpack.c.h.b16 %v7638
    %v9154 = vunpack.c.l.b16 %v7639
    %v9155 = vunpack.c.h.b16 %v7639
    %v9156 = vunpack.c.l.b16 %v7640
    %v9157 = vunpack.c.h.b16 %v7640
    %v9158 = vunpack.c.l.b16 %v7641
    %v9159 = vunpack.c.h.b16 %v7641
    %v9160 = vunpack.c.l.b16 %v7642
    %v9161 = vunpack.c.h.b16 %v7642
    %v9162 = vunpack.c.l.b16 %v7643
    %v9163 = vunpack.c.h.b16 %v7643
    %v9164 = vunpack.c.l.b16 %v7644
    %v9165 = vunpack.c.h.b16 %v7644
    %v9166 = vunpack.c.l.b16 %v7645
    %v9167 = vunpack.c.h.b16 %v7645
    %v9168 = vunpack.c.l.b16 %v7646
    %v9169 = vunpack.c.h.b16 %v7646
    %v9170 = vunpack.c.l.b16 %v7647
    %v9171 = vunpack.c.h.b16 %v7647
    %v9172 = vunpack.c.l.b16 %v7648
    %v9173 = vunpack.c.h.b16 %v7648
    %v9174 = vunpack.c.l.b16 %v7649
    %v9175 = vunpack.c.h.b16 %v7649
    %v9176 = vunpack.c.l.b16 %v7650
    %v9177 = vunpack.c.h.b16 %v7650
    %v9178 = vunpack.c.l.b16 %v7651
    %v9179 = vunpack.c.h.b16 %v7651
    %v9180 = vunpack.c.l.b16 %v7652
    %v9181 = vunpack.c.h.b16 %v7652
    %v9182 = vunpack.c.l.b16 %v7653
    %v9183 = vunpack.c.h.b16 %v7653
    %v9184 = vunpack.c.l.b16 %v7654
    %v9185 = vunpack.c.h.b16 %v7654
    %v9186 = vunpack.c.l.b16 %v7655
    %v9187 = vunpack.c.h.b16 %v7655
    %v9188 = vunpack.c.l.b16 %v7656
    %v9189 = vunpack.c.h.b16 %v7656
    %v9190 = vunpack.c.l.b16 %v7657
    %v9191 = vunpack.c.h.b16 %v7657
    %v9192 = vunpack.c.l.b16 %v7658
    %v9193 = vunpack.c.h.b16 %v7658
    %v9194 = vunpack.c.l.b16 %v7659
    %v9195 = vunpack.c.h.b16 %v7659
    %v9196 = vunpack.c.l.b16 %v7660
    %v9197 = vunpack.c.h.b16 %v7660
    %v9198 = vunpack.c.l.b16 %v7661
    %v9199 = vunpack.c.h.b16 %v7661
    %v9200 = vunpack.c.l.b16 %v7662
    %v9201 = vunpack.c.h.b16 %v7662
    %v9202 = vunpack.c.l.b16 %v7663
    %v9203 = vunpack.c.h.b16 %v7663
    %v9204 = vunpack.c.l.b16 %v7664
    %v9205 = vunpack.c.h.b16 %v7664
    %v9206 = vunpack.c.l.b16 %v7665
    %v9207 = vunpack.c.h.b16 %v7665
    %v9208 = vunpack.c.l.b16 %v7666
    %v9209 = vunpack.c.h.b16 %v7666
    %v9210 = vunpack.c.l.b16 %v7667
    %v9211 = vunpack.c.h.b16 %v7667
    %v9212 = vunpack.c.l.b16 %v7668
    %v9213 = vunpack.c.h.b16 %v7668
    %v9214 = vunpack.c.l.b16 %v7669
    %v9215 = vunpack.c.h.b16 %v7669
    %v9216 = vunpack.c.l.b16 %v7670
    %v9217 = vunpack.c.h.b16 %v7670
    %v9218 = vunpack.c.l.b16 %v7671
    %v9219 = vunpack.c.h.b16 %v7671
    %v9220 = vunpack.c.l.b16 %v7672
    %v9221 = vunpack.c.h.b16 %v7672
    %v9222 = vunpack.c.l.b16 %v7673
    %v9223 = vunpack.c.h.b16 %v7673
    %v9224 = vunpack.c.l.b16 %v7674
    %v9225 = vunpack.c.h.b16 %v7674
    %v9226 = vunpack.c.l.b16 %v7675
    %v9227 = vunpack.c.h.b16 %v7675
    %v9228 = vpack.c.b16 %v8208, %v8204
    %v9229 = vpack.c.b16 %v8209, %v8205
    %v9230 = vpack.c.b16 %v8210, %v8206
    %v9231 = vpack.c.b16 %v8211, %v8207
    %v9232 = vpack.c.b16 %v8216, %v8212
    %v9233 = vpack.c.b16 %v8217, %v8213
    %v9234 = vpack.c.b16 %v8218, %v8214
    %v9235 = vpack.c.b16 %v8219, %v8215
    %v9236 = vpack.c.b16 %v8224, %v8220
    %v9237 = vpack.c.b16 %v8225, %v8221
    %v9238 = vpack.c.b16 %v8226, %v8222
    %v9239 = vpack.c.b16 %v8227, %v8223
    %v9240 = vpack.c.b16 %v8232, %v8228
    %v9241 = vpack.c.b16 %v8233, %v8229
    %v9242 = vpack.c.b16 %v8234, %v8230
    %v9243 = vpack.c.b16 %v8235, %v8231
    %v9244 = vpack.c.b16 %v8240, %v8236
    %v9245 = vpack.c.b16 %v8241, %v8237
    %v9246 = vpack.c.b16 %v8242, %v8238
    %v9247 = vpack.c.b16 %v8243, %v8239
    %v9248 = vpack.c.b16 %v8248, %v8244
    %v9249 = vpack.c.b16 %v8249, %v8245
    %v9250 = vpack.c.b16 %v8250, %v8246
    %v9251 = vpack.c.b16 %v8251, %v8247
    %v9252 = vpack.c.b16 %v8256, %v8252
    %v9253 = vpack.c.b16 %v8257, %v8253
    %v9254 = vpack.c.b16 %v8258, %v8254
    %v9255 = vpack.c.b16 %v8259, %v8255
    %v9256 = vpack.c.b16 %v8264, %v8260
    %v9257 = vpack.c.b16 %v8265, %v8261
    %v9258 = vpack.c.b16 %v8266, %v8262
    %v9259 = vpack.c.b16 %v8267, %v8263
    %v9260 = vpack.c.b16 %v8272, %v8268
    %v9261 = vpack.c.b16 %v8273, %v8269
    %v9262 = vpack.c.b16 %v8274, %v8270
    %v9263 = vpack.c.b16 %v8275, %v8271
    %v9264 = vpack.c.b16 %v8280, %v8276
    %v9265 = vpack.c.b16 %v8281, %v8277
    %v9266 = vpack.c.b16 %v8282, %v8278
    %v9267 = vpack.c.b16 %v8283, %v8279
    %v9268 = vpack.c.b16 %v8288, %v8284
    %v9269 = vpack.c.b16 %v8289, %v8285
    %v9270 = vpack.c.b16 %v8290, %v8286
    %v9271 = vpack.c.b16 %v8291, %v8287
    %v9272 = vpack.c.b16 %v8296, %v8292
    %v9273 = vpack.c.b16 %v8297, %v8293
    %v9274 = vpack.c.b16 %v8298, %v8294
    %v9275 = vpack.c.b16 %v8299, %v8295
    %v9276 = vpack.c.b16 %v8304, %v8300
    %v9277 = vpack.c.b16 %v8305, %v8301
    %v9278 = vpack.c.b16 %v8306, %v8302
    %v9279 = vpack.c.b16 %v8307, %v8303
    %v9280 = vpack.c.b16 %v8312, %v8308
    %v9281 = vpack.c.b16 %v8313, %v8309
    %v9282 = vpack.c.b16 %v8314, %v8310
    %v9283 = vpack.c.b16 %v8315, %v8311
    %v9284 = vpack.c.b16 %v8320, %v8316
    %v9285 = vpack.c.b16 %v8321, %v8317
    %v9286 = vpack.c.b16 %v8322, %v8318
    %v9287 = vpack.c.b16 %v8323, %v8319
    %v9288 = vpack.c.b16 %v8328, %v8324
    %v9289 = vpack.c.b16 %v8329, %v8325
    %v9290 = vpack.c.b16 %v8330, %v8326
    %v9291 = vpack.c.b16 %v8331, %v8327
    %v9292 = vpack.c.b16 %v8336, %v8332
    %v9293 = vpack.c.b16 %v8337, %v8333
    %v9294 = vpack.c.b16 %v8338, %v8334
    %v9295 = vpack.c.b16 %v8339, %v8335
    %v9296 = vpack.c.b16 %v8344, %v8340
    %v9297 = vpack.c.b16 %v8345, %v8341
    %v9298 = vpack.c.b16 %v8346, %v8342
    %v9299 = vpack.c.b16 %v8347, %v8343
    %v9300 = vpack.c.b16 %v8352, %v8348
    %v9301 = vpack.c.b16 %v8353, %v8349
    %v9302 = vpack.c.b16 %v8354, %v8350
    %v9303 = vpack.c.b16 %v8355, %v8351
    %v9304 = vpack.c.b16 %v8360, %v8356
    %v9305 = vpack.c.b16 %v8361, %v8357
    %v9306 = vpack.c.b16 %v8362, %v8358
    %v9307 = vpack.c.b16 %v8363, %v8359
    %v9308 = vpack.c.b16 %v8368, %v8364
    %v9309 = vpack.c.b16 %v8369, %v8365
    %v9310 = vpack.c.b16 %v8370, %v8366
    %v9311 = vpack.c.b16 %v8371, %v8367
    %v9312 = vpack.c.b16 %v8376, %v8372
    %v9313 = vpack.c.b16 %v8377, %v8373
    %v9314 = vpack.c.b16 %v8378, %v8374
    %v9315 = vpack.c.b16 %v8379, %v8375
    %v9316 = vpack.c.b16 %v8384, %v8380
    %v9317 = vpack.c.b16 %v8385, %v8381
    %v9318 = vpack.c.b16 %v8386, %v8382
    %v9319 = vpack.c.b16 %v8387, %v8383
    %v9320 = vpack.c.b16 %v8392, %v8388
    %v9321 = vpack.c.b16 %v8393, %v8389
    %v9322 = vpack.c.b16 %v8394, %v8390
    %v9323 = vpack.c.b16 %v8395, %v8391
    %v9324 = vpack.c.b16 %v8400, %v8396
    %v9325 = vpack.c.b16 %v8401, %v8397
    %v9326 = vpack.c.b16 %v8402, %v8398
    %v9327 = vpack.c.b16 %v8403, %v8399
    %v9328 = vpack.c.b16 %v8408, %v8404
    %v9329 = vpack.c.b16 %v8409, %v8405
    %v9330 = vpack.c.b16 %v8410, %v8406
    %v9331 = vpack.c.b16 %v8411, %v8407
    %v9332 = vpack.c.b16 %v8416, %v8412
    %v9333 = vpack.c.b16 %v8417, %v8413
    %v9334 = vpack.c.b16 %v8418, %v8414
    %v9335 = vpack.c.b16 %v8419, %v8415
    %v9336 = vpack.c.b16 %v8424, %v8420
    %v9337 = vpack.c.b16 %v8425, %v8421
    %v9338 = vpack.c.b16 %v8426, %v8422
    %v9339 = vpack.c.b16 %v8427, %v8423
    %v9340 = vpack.c.b16 %v8432, %v8428
    %v9341 = vpack.c.b16 %v8433, %v8429
    %v9342 = vpack.c.b16 %v8434, %v8430
    %v9343 = vpack.c.b16 %v8435, %v8431
    %v9344 = vpack.c.b16 %v8440, %v8436
    %v9345 = vpack.c.b16 %v8441, %v8437
    %v9346 = vpack.c.b16 %v8442, %v8438
    %v9347 = vpack.c.b16 %v8443, %v8439
    %v9348 = vpack.c.b16 %v8448, %v8444
    %v9349 = vpack.c.b16 %v8449, %v8445
    %v9350 = vpack.c.b16 %v8450, %v8446
    %v9351 = vpack.c.b16 %v8451, %v8447
    %v9352 = vpack.c.b16 %v8456, %v8452
    %v9353 = vpack.c.b16 %v8457, %v8453
    %v9354 = vpack.c.b16 %v8458, %v8454
    %v9355 = vpack.c.b16 %v8459, %v8455
    %v9356 = vpack.c.b16 %v8464, %v8460
    %v9357 = vpack.c.b16 %v8465, %v8461
    %v9358 = vpack.c.b16 %v8466, %v8462
    %v9359 = vpack.c.b16 %v8467, %v8463
    %v9360 = vpack.c.b16 %v8472, %v8468
    %v9361 = vpack.c.b16 %v8473, %v8469
    %v9362 = vpack.c.b16 %v8474, %v8470
    %v9363 = vpack.c.b16 %v8475, %v8471
    %v9364 = vpack.c.b16 %v8480, %v8476
    %v9365 = vpack.c.b16 %v8481, %v8477
    %v9366 = vpack.c.b16 %v8482, %v8478
    %v9367 = vpack.c.b16 %v8483, %v8479
    %v9368 = vpack.c.b16 %v8488, %v8484
    %v9369 = vpack.c.b16 %v8489, %v8485
    %v9370 = vpack.c.b16 %v8490, %v8486
    %v9371 = vpack.c.b16 %v8491, %v8487
    %v9372 = vpack.c.b16 %v8496, %v8492
    %v9373 = vpack.c.b16 %v8497, %v8493
    %v9374 = vpack.c.b16 %v8498, %v8494
    %v9375 = vpack.c.b16 %v8499, %v8495
    %v9376 = vpack.c.b16 %v8504, %v8500
    %v9377 = vpack.c.b16 %v8505, %v8501
    %v9378 = vpack.c.b16 %v8506, %v8502
    %v9379 = vpack.c.b16 %v8507, %v8503
    %v9380 = vpack.c.b16 %v8512, %v8508
    %v9381 = vpack.c.b16 %v8513, %v8509
    %v9382 = vpack.c.b16 %v8514, %v8510
    %v9383 = vpack.c.b16 %v8515, %v8511
    %v9384 = vpack.c.b16 %v8520, %v8516
    %v9385 = vpack.c.b16 %v8521, %v8517
    %v9386 = vpack.c.b16 %v8522, %v8518
    %v9387 = vpack.c.b16 %v8523, %v8519
    %v9388 = vpack.c.b16 %v8528, %v8524
    %v9389 = vpack.c.b16 %v8529, %v8525
    %v9390 = vpack.c.b16 %v8530, %v8526
    %v9391 = vpack.c.b16 %v8531, %v8527
    %v9392 = vpack.c.b16 %v8536, %v8532
    %v9393 = vpack.c.b16 %v8537, %v8533
    %v9394 = vpack.c.b16 %v8538, %v8534
    %v9395 = vpack.c.b16 %v8539, %v8535
    %v9396 = vpack.c.b16 %v8544, %v8540
    %v9397 = vpack.c.b16 %v8545, %v8541
    %v9398 = vpack.c.b16 %v8546, %v8542
    %v9399 = vpack.c.b16 %v8547, %v8543
    %v9400 = vpack.c.b16 %v8552, %v8548
    %v9401 = vpack.c.b16 %v8553, %v8549
    %v9402 = vpack.c.b16 %v8554, %v8550
    %v9403 = vpack.c.b16 %v8555, %v8551
    %v9404 = vpack.c.b16 %v8560, %v8556
    %v9405 = vpack.c.b16 %v8561, %v8557
    %v9406 = vpack.c.b16 %v8562, %v8558
    %v9407 = vpack.c.b16 %v8563, %v8559
    %v9408 = vpack.c.b16 %v8568, %v8564
    %v9409 = vpack.c.b16 %v8569, %v8565
    %v9410 = vpack.c.b16 %v8570, %v8566
    %v9411 = vpack.c.b16 %v8571, %v8567
    %v9412 = vpack.c.b16 %v8576, %v8572
    %v9413 = vpack.c.b16 %v8577, %v8573
    %v9414 = vpack.c.b16 %v8578, %v8574
    %v9415 = vpack.c.b16 %v8579, %v8575
    %v9416 = vpack.c.b16 %v8584, %v8580
    %v9417 = vpack.c.b16 %v8585, %v8581
    %v9418 = vpack.c.b16 %v8586, %v8582
    %v9419 = vpack.c.b16 %v8587, %v8583
    %v9420 = vpack.c.b16 %v8592, %v8588
    %v9421 = vpack.c.b16 %v8593, %v8589
    %v9422 = vpack.c.b16 %v8594, %v8590
    %v9423 = vpack.c.b16 %v8595, %v8591
    %v9424 = vpack.c.b16 %v8600, %v8596
    %v9425 = vpack.c.b16 %v8601, %v8597
    %v9426 = vpack.c.b16 %v8602, %v8598
    %v9427 = vpack.c.b16 %v8603, %v8599
    %v9428 = vpack.c.b16 %v8608, %v8604
    %v9429 = vpack.c.b16 %v8609, %v8605
    %v9430 = vpack.c.b16 %v8610, %v8606
    %v9431 = vpack.c.b16 %v8611, %v8607
    %v9432 = vpack.c.b16 %v8616, %v8612
    %v9433 = vpack.c.b16 %v8617, %v8613
    %v9434 = vpack.c.b16 %v8618, %v8614
    %v9435 = vpack.c.b16 %v8619, %v8615
    %v9436 = vpack.c.b16 %v8624, %v8620
    %v9437 = vpack.c.b16 %v8625, %v8621
    %v9438 = vpack.c.b16 %v8626, %v8622
    %v9439 = vpack.c.b16 %v8627, %v8623
    %v9440 = vpack.c.b16 %v8632, %v8628
    %v9441 = vpack.c.b16 %v8633, %v8629
    %v9442 = vpack.c.b16 %v8634, %v8630
    %v9443 = vpack.c.b16 %v8635, %v8631
    %v9444 = vpack.c.b16 %v8640, %v8636
    %v9445 = vpack.c.b16 %v8641, %v8637
    %v9446 = vpack.c.b16 %v8642, %v8638
    %v9447 = vpack.c.b16 %v8643, %v8639
    %v9448 = vpack.c.b16 %v8648, %v8644
    %v9449 = vpack.c.b16 %v8649, %v8645
    %v9450 = vpack.c.b16 %v8650, %v8646
    %v9451 = vpack.c.b16 %v8651, %v8647
    %v9452 = vpack.c.b16 %v8656, %v8652
    %v9453 = vpack.c.b16 %v8657, %v8653
    %v9454 = vpack.c.b16 %v8658, %v8654
    %v9455 = vpack.c.b16 %v8659, %v8655
    %v9456 = vpack.c.b16 %v8664, %v8660
    %v9457 = vpack.c.b16 %v8665, %v8661
    %v9458 = vpack.c.b16 %v8666, %v8662
    %v9459 = vpack.c.b16 %v8667, %v8663
    %v9460 = vpack.c.b16 %v8672, %v8668
    %v9461 = vpack.c.b16 %v8673, %v8669
    %v9462 = vpack.c.b16 %v8674, %v8670
    %v9463 = vpack.c.b16 %v8675, %v8671
    %v9464 = vpack.c.b16 %v8680, %v8676
    %v9465 = vpack.c.b16 %v8681, %v8677
    %v9466 = vpack.c.b16 %v8682, %v8678
    %v9467 = vpack.c.b16 %v8683, %v8679
    %v9468 = vpack.c.b16 %v8688, %v8684
    %v9469 = vpack.c.b16 %v8689, %v8685
    %v9470 = vpack.c.b16 %v8690, %v8686
    %v9471 = vpack.c.b16 %v8691, %v8687
    %v9472 = vpack.c.b16 %v8696, %v8692
    %v9473 = vpack.c.b16 %v8697, %v8693
    %v9474 = vpack.c.b16 %v8698, %v8694
    %v9475 = vpack.c.b16 %v8699, %v8695
    %v9476 = vpack.c.b16 %v8704, %v8700
    %v9477 = vpack.c.b16 %v8705, %v8701
    %v9478 = vpack.c.b16 %v8706, %v8702
    %v9479 = vpack.c.b16 %v8707, %v8703
    %v9480 = vpack.c.b16 %v8712, %v8708
    %v9481 = vpack.c.b16 %v8713, %v8709
    %v9482 = vpack.c.b16 %v8714, %v8710
    %v9483 = vpack.c.b16 %v8715, %v8711
    %v9484 = vpack.c.b16 %v8720, %v8716
    %v9485 = vpack.c.b16 %v8721, %v8717
    %v9486 = vpack.c.b16 %v8722, %v8718
    %v9487 = vpack.c.b16 %v8723, %v8719
    %v9488 = vpack.c.b16 %v8728, %v8724
    %v9489 = vpack.c.b16 %v8729, %v8725
    %v9490 = vpack.c.b16 %v8730, %v8726
    %v9491 = vpack.c.b16 %v8731, %v8727
    %v9492 = vpack.c.b16 %v8736, %v8732
    %v9493 = vpack.c.b16 %v8737, %v8733
    %v9494 = vpack.c.b16 %v8738, %v8734
    %v9495 = vpack.c.b16 %v8739, %v8735
    %v9496 = vpack.c.b16 %v8744, %v8740
    %v9497 = vpack.c.b16 %v8745, %v8741
    %v9498 = vpack.c.b16 %v8746, %v8742
    %v9499 = vpack.c.b16 %v8747, %v8743
    %v9500 = vpack.c.b16 %v8752, %v8748
    %v9501 = vpack.c.b16 %v8753, %v8749
    %v9502 = vpack.c.b16 %v8754, %v8750
    %v9503 = vpack.c.b16 %v8755, %v8751
    %v9504 = vpack.c.b16 %v8760, %v8756
    %v9505 = vpack.c.b16 %v8761, %v8757
    %v9506 = vpack.c.b16 %v8762, %v8758
    %v9507 = vpack.c.b16 %v8763, %v8759
    %v9508 = vpack.c.b16 %v8768, %v8764
    %v9509 = vpack.c.b16 %v8769, %v8765
    %v9510 = vpack.c.b16 %v8770, %v8766
    %v9511 = vpack.c.b16 %v8771, %v8767
    %v9512 = vpack.c.b16 %v8776, %v8772
    %v9513 = vpack.c.b16 %v8777, %v8773
    %v9514 = vpack.c.b16 %v8778, %v8774
    %v9515 = vpack.c.b16 %v8779, %v8775
    %v9516 = vpack.c.b16 %v8784, %v8780
    %v9517 = vpack.c.b16 %v8785, %v8781
    %v9518 = vpack.c.b16 %v8786, %v8782
    %v9519 = vpack.c.b16 %v8787, %v8783
    %v9520 = vpack.c.b16 %v8792, %v8788
    %v9521 = vpack.c.b16 %v8793, %v8789
    %v9522 = vpack.c.b16 %v8794, %v8790
    %v9523 = vpack.c.b16 %v8795, %v8791
    %v9524 = vpack.c.b16 %v8800, %v8796
    %v9525 = vpack.c.b16 %v8801, %v8797
    %v9526 = vpack.c.b16 %v8802, %v8798
    %v9527 = vpack.c.b16 %v8803, %v8799
    %v9528 = vpack.c.b16 %v8808, %v8804
    %v9529 = vpack.c.b16 %v8809, %v8805
    %v9530 = vpack.c.b16 %v8810, %v8806
    %v9531 = vpack.c.b16 %v8811, %v8807
    %v9532 = vpack.c.b16 %v8816, %v8812
    %v9533 = vpack.c.b16 %v8817, %v8813
    %v9534 = vpack.c.b16 %v8818, %v8814
    %v9535 = vpack.c.b16 %v8819, %v8815
    %v9536 = vpack.c.b16 %v8824, %v8820
    %v9537 = vpack.c.b16 %v8825, %v8821
    %v9538 = vpack.c.b16 %v8826, %v8822
    %v9539 = vpack.c.b16 %v8827, %v8823
    %v9540 = vpack.c.b16 %v8832, %v8828
    %v9541 = vpack.c.b16 %v8833, %v8829
    %v9542 = vpack.c.b16 %v8834, %v8830
    %v9543 = vpack.c.b16 %v8835, %v8831
    %v9544 = vpack.c.b16 %v8840, %v8836
    %v9545 = vpack.c.b16 %v8841, %v8837
    %v9546 = vpack.c.b16 %v8842, %v8838
    %v9547 = vpack.c.b16 %v8843, %v8839
    %v9548 = vpack.c.b16 %v8848, %v8844
    %v9549 = vpack.c.b16 %v8849, %v8845
    %v9550 = vpack.c.b16 %v8850, %v8846
    %v9551 = vpack.c.b16 %v8851, %v8847
    %v9552 = vpack.c.b16 %v8856, %v8852
    %v9553 = vpack.c.b16 %v8857, %v8853
    %v9554 = vpack.c.b16 %v8858, %v8854
    %v9555 = vpack.c.b16 %v8859, %v8855
    %v9556 = vpack.c.b16 %v8864, %v8860
    %v9557 = vpack.c.b16 %v8865, %v8861
    %v9558 = vpack.c.b16 %v8866, %v8862
    %v9559 = vpack.c.b16 %v8867, %v8863
    %v9560 = vpack.c.b16 %v8872, %v8868
    %v9561 = vpack.c.b16 %v8873, %v8869
    %v9562 = vpack.c.b16 %v8874, %v8870
    %v9563 = vpack.c.b16 %v8875, %v8871
    %v9564 = vpack.c.b16 %v8880, %v8876
    %v9565 = vpack.c.b16 %v8881, %v8877
    %v9566 = vpack.c.b16 %v8882, %v8878
    %v9567 = vpack.c.b16 %v8883, %v8879
    %v9568 = vpack.c.b16 %v8888, %v8884
    %v9569 = vpack.c.b16 %v8889, %v8885
    %v9570 = vpack.c.b16 %v8890, %v8886
    %v9571 = vpack.c.b16 %v8891, %v8887
    %v9572 = vpack.c.b16 %v8896, %v8892
    %v9573 = vpack.c.b16 %v8897, %v8893
    %v9574 = vpack.c.b16 %v8898, %v8894
    %v9575 = vpack.c.b16 %v8899, %v8895
    %v9576 = vpack.c.b16 %v8904, %v8900
    %v9577 = vpack.c.b16 %v8905, %v8901
    %v9578 = vpack.c.b16 %v8906, %v8902
    %v9579 = vpack.c.b16 %v8907, %v8903
    %v9580 = vpack.c.b16 %v8912, %v8908
    %v9581 = vpack.c.b16 %v8913, %v8909
    %v9582 = vpack.c.b16 %v8914, %v8910
    %v9583 = vpack.c.b16 %v8915, %v8911
    %v9584 = vpack.c.b16 %v8920, %v8916
    %v9585 = vpack.c.b16 %v8921, %v8917
    %v9586 = vpack.c.b16 %v8922, %v8918
    %v9587 = vpack.c.b16 %v8923, %v8919
    %v9588 = vpack.c.b16 %v8928, %v8924
    %v9589 = vpack.c.b16 %v8929, %v8925
    %v9590 = vpack.c.b16 %v8930, %v8926
    %v9591 = vpack.c.b16 %v8931, %v8927
    %v9592 = vpack.c.b16 %v8936, %v8932
    %v9593 = vpack.c.b16 %v8937, %v8933
    %v9594 = vpack.c.b16 %v8938, %v8934
    %v9595 = vpack.c.b16 %v8939, %v8935
    %v9596 = vpack.c.b16 %v8944, %v8940
    %v9597 = vpack.c.b16 %v8945, %v8941
    %v9598 = vpack.c.b16 %v8946, %v8942
    %v9599 = vpack.c.b16 %v8947, %v8943
    %v9600 = vpack.c.b16 %v8952, %v8948
    %v9601 = vpack.c.b16 %v8953, %v8949
    %v9602 = vpack.c.b16 %v8954, %v8950
    %v9603 = vpack.c.b16 %v8955, %v8951
    %v9604 = vpack.c.b16 %v8960, %v8956
    %v9605 = vpack.c.b16 %v8961, %v8957
    %v9606 = vpack.c.b16 %v8962, %v8958
    %v9607 = vpack.c.b16 %v8963, %v8959
    %v9608 = vpack.c.b16 %v8968, %v8964
    %v9609 = vpack.c.b16 %v8969, %v8965
    %v9610 = vpack.c.b16 %v8970, %v8966
    %v9611 = vpack.c.b16 %v8971, %v8967
    %v9612 = vpack.c.b16 %v8976, %v8972
    %v9613 = vpack.c.b16 %v8977, %v8973
    %v9614 = vpack.c.b16 %v8978, %v8974
    %v9615 = vpack.c.b16 %v8979, %v8975
    %v9616 = vpack.c.b16 %v8984, %v8980
    %v9617 = vpack.c.b16 %v8985, %v8981
    %v9618 = vpack.c.b16 %v8986, %v8982
    %v9619 = vpack.c.b16 %v8987, %v8983
    %v9620 = vpack.c.b16 %v8992, %v8988
    %v9621 = vpack.c.b16 %v8993, %v8989
    %v9622 = vpack.c.b16 %v8994, %v8990
    %v9623 = vpack.c.b16 %v8995, %v8991
    %v9624 = vpack.c.b16 %v9000, %v8996
    %v9625 = vpack.c.b16 %v9001, %v8997
    %v9626 = vpack.c.b16 %v9002, %v8998
    %v9627 = vpack.c.b16 %v9003, %v8999
    %v9628 = vpack.c.b16 %v9008, %v9004
    %v9629 = vpack.c.b16 %v9009, %v9005
    %v9630 = vpack.c.b16 %v9010, %v9006
    %v9631 = vpack.c.b16 %v9011, %v9007
    %v9632 = vpack.c.b16 %v9016, %v9012
    %v9633 = vpack.c.b16 %v9017, %v9013
    %v9634 = vpack.c.b16 %v9018, %v9014
    %v9635 = vpack.c.b16 %v9019, %v9015
    %v9636 = vpack.c.b16 %v9024, %v9020
    %v9637 = vpack.c.b16 %v9025, %v9021
    %v9638 = vpack.c.b16 %v9026, %v9022
    %v9639 = vpack.c.b16 %v9027, %v9023
    %v9640 = vpack.c.b16 %v9032, %v9028
    %v9641 = vpack.c.b16 %v9033, %v9029
    %v9642 = vpack.c.b16 %v9034, %v9030
    %v9643 = vpack.c.b16 %v9035, %v9031
    %v9644 = vpack.c.b16 %v9040, %v9036
    %v9645 = vpack.c.b16 %v9041, %v9037
    %v9646 = vpack.c.b16 %v9042, %v9038
    %v9647 = vpack.c.b16 %v9043, %v9039
    %v9648 = vpack.c.b16 %v9048, %v9044
    %v9649 = vpack.c.b16 %v9049, %v9045
    %v9650 = vpack.c.b16 %v9050, %v9046
    %v9651 = vpack.c.b16 %v9051, %v9047
    %v9652 = vpack.c.b16 %v9056, %v9052
    %v9653 = vpack.c.b16 %v9057, %v9053
    %v9654 = vpack.c.b16 %v9058, %v9054
    %v9655 = vpack.c.b16 %v9059, %v9055
    %v9656 = vpack.c.b16 %v9064, %v9060
    %v9657 = vpack.c.b16 %v9065, %v9061
    %v9658 = vpack.c.b16 %v9066, %v9062
    %v9659 = vpack.c.b16 %v9067, %v9063
    %v9660 = vpack.c.b16 %v9072, %v9068
    %v9661 = vpack.c.b16 %v9073, %v9069
    %v9662 = vpack.c.b16 %v9074, %v9070
    %v9663 = vpack.c.b16 %v9075, %v9071
    %v9664 = vpack.c.b16 %v9080, %v9076
    %v9665 = vpack.c.b16 %v9081, %v9077
    %v9666 = vpack.c.b16 %v9082, %v9078
    %v9667 = vpack.c.b16 %v9083, %v9079
    %v9668 = vpack.c.b16 %v9088, %v9084
    %v9669 = vpack.c.b16 %v9089, %v9085
    %v9670 = vpack.c.b16 %v9090, %v9086
    %v9671 = vpack.c.b16 %v9091, %v9087
    %v9672 = vpack.c.b16 %v9096, %v9092
    %v9673 = vpack.c.b16 %v9097, %v9093
    %v9674 = vpack.c.b16 %v9098, %v9094
    %v9675 = vpack.c.b16 %v9099, %v9095
    %v9676 = vpack.c.b16 %v9104, %v9100
    %v9677 = vpack.c.b16 %v9105, %v9101
    %v9678 = vpack.c.b16 %v9106, %v9102
    %v9679 = vpack.c.b16 %v9107, %v9103
    %v9680 = vpack.c.b16 %v9112, %v9108
    %v9681 = vpack.c.b16 %v9113, %v9109
    %v9682 = vpack.c.b16 %v9114, %v9110
    %v9683 = vpack.c.b16 %v9115, %v9111
    %v9684 = vpack.c.b16 %v9120, %v9116
    %v9685 = vpack.c.b16 %v9121, %v9117
    %v9686 = vpack.c.b16 %v9122, %v9118
    %v9687 = vpack.c.b16 %v9123, %v9119
    %v9688 = vpack.c.b16 %v9128, %v9124
    %v9689 = vpack.c.b16 %v9129, %v9125
    %v9690 = vpack.c.b16 %v9130, %v9126
    %v9691 = vpack.c.b16 %v9131, %v9127
    %v9692 = vpack.c.b16 %v9136, %v9132
    %v9693 = vpack.c.b16 %v9137, %v9133
    %v9694 = vpack.c.b16 %v9138, %v9134
    %v9695 = vpack.c.b16 %v9139, %v9135
    %v9696 = vpack.c.b16 %v9144, %v9140
    %v9697 = vpack.c.b16 %v9145, %v9141
    %v9698 = vpack.c.b16 %v9146, %v9142
    %v9699 = vpack.c.b16 %v9147, %v9143
    %v9700 = vpack.c.b16 %v9152, %v9148
    %v9701 = vpack.c.b16 %v9153, %v9149
    %v9702 = vpack.c.b16 %v9154, %v9150
    %v9703 = vpack.c.b16 %v9155, %v9151
    %v9704 = vpack.c.b16 %v9160, %v9156
    %v9705 = vpack.c.b16 %v9161, %v9157
    %v9706 = vpack.c.b16 %v9162, %v9158
    %v9707 = vpack.c.b16 %v9163, %v9159
    %v9708 = vpack.c.b16 %v9168, %v9164
    %v9709 = vpack.c.b16 %v9169, %v9165
    %v9710 = vpack.c.b16 %v9170, %v9166
    %v9711 = vpack.c.b16 %v9171, %v9167
    %v9712 = vpack.c.b16 %v9176, %v9172
    %v9713 = vpack.c.b16 %v9177, %v9173
    %v9714 = vpack.c.b16 %v9178, %v9174
    %v9715 = vpack.c.b16 %v9179, %v9175
    %v9716 = vpack.c.b16 %v9184, %v9180
    %v9717 = vpack.c.b16 %v9185, %v9181
    %v9718 = vpack.c.b16 %v9186, %v9182
    %v9719 = vpack.c.b16 %v9187, %v9183
    %v9720 = vpack.c.b16 %v9192, %v9188
    %v9721 = vpack.c.b16 %v9193, %v9189
    %v9722 = vpack.c.b16 %v9194, %v9190
    %v9723 = vpack.c.b16 %v9195, %v9191
    %v9724 = vpack.c.b16 %v9200, %v9196
    %v9725 = vpack.c.b16 %v9201, %v9197
    %v9726 = vpack.c.b16 %v9202, %v9198
    %v9727 = vpack.c.b16 %v9203, %v9199
    %v9728 = vpack.c.b16 %v9208, %v9204
    %v9729 = vpack.c.b16 %v9209, %v9205
    %v9730 = vpack.c.b16 %v9210, %v9206
    %v9731 = vpack.c.b16 %v9211, %v9207
    %v9732 = vpack.c.b16 %v9216, %v9212
    %v9733 = vpack.c.b16 %v9217, %v9213
    %v9734 = vpack.c.b16 %v9218, %v9214
    %v9735 = vpack.c.b16 %v9219, %v9215
    %v9736 = vpack.c.b16 %v9224, %v9220
    %v9737 = vpack.c.b16 %v9225, %v9221
    %v9738 = vpack.c.b16 %v9226, %v9222
    %v9739 = vpack.c.b16 %v9227, %v9223
    %10252 = vmatprep.subr.bf16.mxu0 %v9257
    %10253 = vmatpush1.bf16.msra.mxu0 %v9256
    %10254 = vmatprep.subr.bf16.mxu0 %v9253
    %10255 = vmatpush1.bf16.msra.mxu0 %v9252
    %10256 = vmatprep.subr.bf16.mxu0 %v9249
    %10257 = vmatpush1.bf16.msra.mxu0 %v9248
    %10258 = vmatprep.subr.bf16.mxu0 %v9245
    %10259 = vmatpush1.bf16.msra.mxu0 %v9244
    %10260 = vmatprep.subr.bf16.mxu0 %v9241
    %10261 = vmatpush1.bf16.msra.mxu0 %v9240
    %10262 = vmatprep.subr.bf16.mxu0 %v9237
    %10263 = vmatpush1.bf16.msra.mxu0 %v9236
    %10264 = vmatprep.subr.bf16.mxu0 %v9233
    %10265 = vmatpush1.bf16.msra.mxu0 %v9232
    %10266 = vmatprep.subr.bf16.mxu0 %v9229
    %10267 = vmatpush1.bf16.msra.mxu0 %v9228
    %10268 = vmatprep.subr.bf16.mxu0 %v9289
    %10269 = vmatpush2.bf16.msra.mxu0 %v9288
    %10270 = vmatprep.subr.bf16.mxu0 %v9285
    %10271 = vmatpush2.bf16.msra.mxu0 %v9284
    %10272 = vmatprep.subr.bf16.mxu0 %v9281
    %10273 = vmatpush2.bf16.msra.mxu0 %v9280
    %10274 = vmatprep.subr.bf16.mxu0 %v9277
    %10275 = vmatpush2.bf16.msra.mxu0 %v9276
    %10276 = vmatprep.subr.bf16.mxu0 %v9273
    %10277 = vmatpush2.bf16.msra.mxu0 %v9272
    %10278 = vmatprep.subr.bf16.mxu0 %v9269
    %10279 = vmatpush2.bf16.msra.mxu0 %v9268
    %10280 = vmatprep.subr.bf16.mxu0 %v9265
    %10281 = vmatpush2.bf16.msra.mxu0 %v9264
    %10282 = vmatprep.subr.bf16.mxu0 %v9261
    %10283 = vmatpush2.bf16.msra.mxu0 %v9260
    %10284 = vmatprep.mubr.bf16.mxu0 %v7149
    %10285 = vmatmul.mubr.bf16.gmra.mxu0 %v7148
    %v10286 = vpop.f32.mrf.mxu0
    %v10287 = vadd.f32 %v7679, %v10286
    %v10288 = vpop.f32.mrf.mxu0
    %v10289 = vadd.f32 %v7683, %v10288
    %v10290 = vpop.f32.mrf.mxu0
    %v10291 = vpop.f32.mrf.mxu0
    %10292 = vdwg.mxu0
    %10293 = vmatprep.subr.bf16.mxu0 %v9321
    %10294 = vmatpush1.bf16.msra.mxu0 %v9320
    %10295 = vmatprep.subr.bf16.mxu0 %v9317
    %10296 = vmatpush1.bf16.msra.mxu0 %v9316
    %10297 = vmatprep.subr.bf16.mxu0 %v9313
    %10298 = vmatpush1.bf16.msra.mxu0 %v9312
    %10299 = vmatprep.subr.bf16.mxu0 %v9309
    %10300 = vmatpush1.bf16.msra.mxu0 %v9308
    %10301 = vmatprep.subr.bf16.mxu0 %v9305
    %10302 = vmatpush1.bf16.msra.mxu0 %v9304
    %10303 = vmatprep.subr.bf16.mxu0 %v9301
    %10304 = vmatpush1.bf16.msra.mxu0 %v9300
    %10305 = vmatprep.subr.bf16.mxu0 %v9297
    %10306 = vmatpush1.bf16.msra.mxu0 %v9296
    %10307 = vmatprep.subr.bf16.mxu0 %v9293
    %10308 = vmatpush1.bf16.msra.mxu0 %v9292
    %10309 = vmatprep.subr.bf16.mxu0 %v9353
    %10310 = vmatpush2.bf16.msra.mxu0 %v9352
    %10311 = vmatprep.subr.bf16.mxu0 %v9349
    %10312 = vmatpush2.bf16.msra.mxu0 %v9348
    %10313 = vmatprep.subr.bf16.mxu0 %v9345
    %10314 = vmatpush2.bf16.msra.mxu0 %v9344
    %10315 = vmatprep.subr.bf16.mxu0 %v9341
    %10316 = vmatpush2.bf16.msra.mxu0 %v9340
    %10317 = vmatprep.subr.bf16.mxu0 %v9337
    %10318 = vmatpush2.bf16.msra.mxu0 %v9336
    %10319 = vmatprep.subr.bf16.mxu0 %v9333
    %10320 = vmatpush2.bf16.msra.mxu0 %v9332
    %10321 = vmatprep.subr.bf16.mxu0 %v9329
    %10322 = vmatpush2.bf16.msra.mxu0 %v9328
    %10323 = vmatprep.subr.bf16.mxu0 %v9325
    %10324 = vmatpush2.bf16.msra.mxu0 %v9324
    %10325 = vmatprep.mubr.bf16.mxu0 %v7151
    %10326 = vmatmul.mubr.bf16.gmra.mxu0 %v7150
    %v10327 = vpop.f32.mrf.mxu0
    %v10328 = vadd.f32 %v10287, %v10327
    %v10329 = vpop.f32.mrf.mxu0
    %v10330 = vadd.f32 %v10289, %v10329
    %v10331 = vpop.f32.mrf.mxu0
    %v10332 = vpop.f32.mrf.mxu0
    %10333 = vdwg.mxu0
    %10334 = vmatprep.subr.bf16.mxu0 %v9385
    %10335 = vmatpush1.bf16.msra.mxu0 %v9384
    %10336 = vmatprep.subr.bf16.mxu0 %v9381
    %10337 = vmatpush1.bf16.msra.mxu0 %v9380
    %10338 = vmatprep.subr.bf16.mxu0 %v9377
    %10339 = vmatpush1.bf16.msra.mxu0 %v9376
    %10340 = vmatprep.subr.bf16.mxu0 %v9373
    %10341 = vmatpush1.bf16.msra.mxu0 %v9372
    %10342 = vmatprep.subr.bf16.mxu0 %v9369
    %10343 = vmatpush1.bf16.msra.mxu0 %v9368
    %10344 = vmatprep.subr.bf16.mxu0 %v9365
    %10345 = vmatpush1.bf16.msra.mxu0 %v9364
    %10346 = vmatprep.subr.bf16.mxu0 %v9361
    %10347 = vmatpush1.bf16.msra.mxu0 %v9360
    %10348 = vmatprep.subr.bf16.mxu0 %v9357
    %10349 = vmatpush1.bf16.msra.mxu0 %v9356
    %10350 = vmatprep.subr.bf16.mxu0 %v9417
    %10351 = vmatpush2.bf16.msra.mxu0 %v9416
    %10352 = vmatprep.subr.bf16.mxu0 %v9413
    %10353 = vmatpush2.bf16.msra.mxu0 %v9412
    %10354 = vmatprep.subr.bf16.mxu0 %v9409
    %10355 = vmatpush2.bf16.msra.mxu0 %v9408
    %10356 = vmatprep.subr.bf16.mxu0 %v9405
    %10357 = vmatpush2.bf16.msra.mxu0 %v9404
    %10358 = vmatprep.subr.bf16.mxu0 %v9401
    %10359 = vmatpush2.bf16.msra.mxu0 %v9400
    %10360 = vmatprep.subr.bf16.mxu0 %v9397
    %10361 = vmatpush2.bf16.msra.mxu0 %v9396
    %10362 = vmatprep.subr.bf16.mxu0 %v9393
    %10363 = vmatpush2.bf16.msra.mxu0 %v9392
    %10364 = vmatprep.subr.bf16.mxu0 %v9389
    %10365 = vmatpush2.bf16.msra.mxu0 %v9388
    %10366 = vmatprep.mubr.bf16.mxu0 %v7153
    %10367 = vmatmul.mubr.bf16.gmra.mxu0 %v7152
    %v10368 = vpop.f32.mrf.mxu0
    %v10369 = vadd.f32 %v10328, %v10368
    %v10370 = vpop.f32.mrf.mxu0
    %v10371 = vadd.f32 %v10330, %v10370
    %v10372 = vpop.f32.mrf.mxu0
    %v10373 = vpop.f32.mrf.mxu0
    %10374 = vdwg.mxu0
    %10375 = vmatprep.subr.bf16.mxu0 %v9449
    %10376 = vmatpush1.bf16.msra.mxu0 %v9448
    %10377 = vmatprep.subr.bf16.mxu0 %v9445
    %10378 = vmatpush1.bf16.msra.mxu0 %v9444
    %10379 = vmatprep.subr.bf16.mxu0 %v9441
    %10380 = vmatpush1.bf16.msra.mxu0 %v9440
    %10381 = vmatprep.subr.bf16.mxu0 %v9437
    %10382 = vmatpush1.bf16.msra.mxu0 %v9436
    %10383 = vmatprep.subr.bf16.mxu0 %v9433
    %10384 = vmatpush1.bf16.msra.mxu0 %v9432
    %10385 = vmatprep.subr.bf16.mxu0 %v9429
    %10386 = vmatpush1.bf16.msra.mxu0 %v9428
    %10387 = vmatprep.subr.bf16.mxu0 %v9425
    %10388 = vmatpush1.bf16.msra.mxu0 %v9424
    %10389 = vmatprep.subr.bf16.mxu0 %v9421
    %10390 = vmatpush1.bf16.msra.mxu0 %v9420
    %10391 = vmatprep.subr.bf16.mxu0 %v9481
    %10392 = vmatpush2.bf16.msra.mxu0 %v9480
    %10393 = vmatprep.subr.bf16.mxu0 %v9477
    %10394 = vmatpush2.bf16.msra.mxu0 %v9476
    %10395 = vmatprep.subr.bf16.mxu0 %v9473
    %10396 = vmatpush2.bf16.msra.mxu0 %v9472
    %10397 = vmatprep.subr.bf16.mxu0 %v9469
    %10398 = vmatpush2.bf16.msra.mxu0 %v9468
    %10399 = vmatprep.subr.bf16.mxu0 %v9465
    %10400 = vmatpush2.bf16.msra.mxu0 %v9464
    %10401 = vmatprep.subr.bf16.mxu0 %v9461
    %10402 = vmatpush2.bf16.msra.mxu0 %v9460
    %10403 = vmatprep.subr.bf16.mxu0 %v9457
    %10404 = vmatpush2.bf16.msra.mxu0 %v9456
    %10405 = vmatprep.subr.bf16.mxu0 %v9453
    %10406 = vmatpush2.bf16.msra.mxu0 %v9452
    %10407 = vmatprep.mubr.bf16.mxu0 %v7155
    %10408 = vmatmul.mubr.bf16.gmra.mxu0 %v7154
    %v10409 = vpop.f32.mrf.mxu0
    %v10410 = vadd.f32 %v10369, %v10409
    %v10411 = vpop.f32.mrf.mxu0
    %v10412 = vadd.f32 %v10371, %v10411
    %v10413 = vpop.f32.mrf.mxu0
    %v10414 = vpop.f32.mrf.mxu0
    %10415 = vdwg.mxu0
    %10416 = vmatprep.subr.bf16.mxu0 %v9513
    %10417 = vmatpush1.bf16.msra.mxu0 %v9512
    %10418 = vmatprep.subr.bf16.mxu0 %v9509
    %10419 = vmatpush1.bf16.msra.mxu0 %v9508
    %10420 = vmatprep.subr.bf16.mxu0 %v9505
    %10421 = vmatpush1.bf16.msra.mxu0 %v9504
    %10422 = vmatprep.subr.bf16.mxu0 %v9501
    %10423 = vmatpush1.bf16.msra.mxu0 %v9500
    %10424 = vmatprep.subr.bf16.mxu0 %v9497
    %10425 = vmatpush1.bf16.msra.mxu0 %v9496
    %10426 = vmatprep.subr.bf16.mxu0 %v9493
    %10427 = vmatpush1.bf16.msra.mxu0 %v9492
    %10428 = vmatprep.subr.bf16.mxu0 %v9489
    %10429 = vmatpush1.bf16.msra.mxu0 %v9488
    %10430 = vmatprep.subr.bf16.mxu0 %v9485
    %10431 = vmatpush1.bf16.msra.mxu0 %v9484
    %10432 = vmatprep.subr.bf16.mxu0 %v9545
    %10433 = vmatpush2.bf16.msra.mxu0 %v9544
    %10434 = vmatprep.subr.bf16.mxu0 %v9541
    %10435 = vmatpush2.bf16.msra.mxu0 %v9540
    %10436 = vmatprep.subr.bf16.mxu0 %v9537
    %10437 = vmatpush2.bf16.msra.mxu0 %v9536
    %10438 = vmatprep.subr.bf16.mxu0 %v9533
    %10439 = vmatpush2.bf16.msra.mxu0 %v9532
    %10440 = vmatprep.subr.bf16.mxu0 %v9529
    %10441 = vmatpush2.bf16.msra.mxu0 %v9528
    %10442 = vmatprep.subr.bf16.mxu0 %v9525
    %10443 = vmatpush2.bf16.msra.mxu0 %v9524
    %10444 = vmatprep.subr.bf16.mxu0 %v9521
    %10445 = vmatpush2.bf16.msra.mxu0 %v9520
    %10446 = vmatprep.subr.bf16.mxu0 %v9517
    %10447 = vmatpush2.bf16.msra.mxu0 %v9516
    %10448 = vmatprep.mubr.bf16.mxu0 %v7157
    %10449 = vmatmul.mubr.bf16.gmra.mxu0 %v7156
    %v10450 = vpop.f32.mrf.mxu0
    %v10451 = vadd.f32 %v10410, %v10450
    %v10452 = vpop.f32.mrf.mxu0
    %v10453 = vadd.f32 %v10412, %v10452
    %v10454 = vpop.f32.mrf.mxu0
    %v10455 = vpop.f32.mrf.mxu0
    %10456 = vdwg.mxu0
    %10457 = vmatprep.subr.bf16.mxu0 %v9577
    %10458 = vmatpush1.bf16.msra.mxu0 %v9576
    %10459 = vmatprep.subr.bf16.mxu0 %v9573
    %10460 = vmatpush1.bf16.msra.mxu0 %v9572
    %10461 = vmatprep.subr.bf16.mxu0 %v9569
    %10462 = vmatpush1.bf16.msra.mxu0 %v9568
    %10463 = vmatprep.subr.bf16.mxu0 %v9565
    %10464 = vmatpush1.bf16.msra.mxu0 %v9564
    %10465 = vmatprep.subr.bf16.mxu0 %v9561
    %10466 = vmatpush1.bf16.msra.mxu0 %v9560
    %10467 = vmatprep.subr.bf16.mxu0 %v9557
    %10468 = vmatpush1.bf16.msra.mxu0 %v9556
    %10469 = vmatprep.subr.bf16.mxu0 %v9553
    %10470 = vmatpush1.bf16.msra.mxu0 %v9552
    %10471 = vmatprep.subr.bf16.mxu0 %v9549
    %10472 = vmatpush1.bf16.msra.mxu0 %v9548
    %10473 = vmatprep.subr.bf16.mxu0 %v9609
    %10474 = vmatpush2.bf16.msra.mxu0 %v9608
    %10475 = vmatprep.subr.bf16.mxu0 %v9605
    %10476 = vmatpush2.bf16.msra.mxu0 %v9604
    %10477 = vmatprep.subr.bf16.mxu0 %v9601
    %10478 = vmatpush2.bf16.msra.mxu0 %v9600
    %10479 = vmatprep.subr.bf16.mxu0 %v9597
    %10480 = vmatpush2.bf16.msra.mxu0 %v9596
    %10481 = vmatprep.subr.bf16.mxu0 %v9593
    %10482 = vmatpush2.bf16.msra.mxu0 %v9592
    %10483 = vmatprep.subr.bf16.mxu0 %v9589
    %10484 = vmatpush2.bf16.msra.mxu0 %v9588
    %10485 = vmatprep.subr.bf16.mxu0 %v9585
    %10486 = vmatpush2.bf16.msra.mxu0 %v9584
    %10487 = vmatprep.subr.bf16.mxu0 %v9581
    %10488 = vmatpush2.bf16.msra.mxu0 %v9580
    %10489 = vmatprep.mubr.bf16.mxu0 %v7159
    %10490 = vmatmul.mubr.bf16.gmra.mxu0 %v7158
    %v10491 = vpop.f32.mrf.mxu0
    %v10492 = vadd.f32 %v10451, %v10491
    %v10493 = vpop.f32.mrf.mxu0
    %v10494 = vadd.f32 %v10453, %v10493
    %v10495 = vpop.f32.mrf.mxu0
    %v10496 = vpop.f32.mrf.mxu0
    %10497 = vdwg.mxu0
    %10498 = vmatprep.subr.bf16.mxu0 %v9641
    %10499 = vmatpush1.bf16.msra.mxu0 %v9640
    %10500 = vmatprep.subr.bf16.mxu0 %v9637
    %10501 = vmatpush1.bf16.msra.mxu0 %v9636
    %10502 = vmatprep.subr.bf16.mxu0 %v9633
    %10503 = vmatpush1.bf16.msra.mxu0 %v9632
    %10504 = vmatprep.subr.bf16.mxu0 %v9629
    %10505 = vmatpush1.bf16.msra.mxu0 %v9628
    %10506 = vmatprep.subr.bf16.mxu0 %v9625
    %10507 = vmatpush1.bf16.msra.mxu0 %v9624
    %10508 = vmatprep.subr.bf16.mxu0 %v9621
    %10509 = vmatpush1.bf16.msra.mxu0 %v9620
    %10510 = vmatprep.subr.bf16.mxu0 %v9617
    %10511 = vmatpush1.bf16.msra.mxu0 %v9616
    %10512 = vmatprep.subr.bf16.mxu0 %v9613
    %10513 = vmatpush1.bf16.msra.mxu0 %v9612
    %10514 = vmatprep.subr.bf16.mxu0 %v9673
    %10515 = vmatpush2.bf16.msra.mxu0 %v9672
    %10516 = vmatprep.subr.bf16.mxu0 %v9669
    %10517 = vmatpush2.bf16.msra.mxu0 %v9668
    %10518 = vmatprep.subr.bf16.mxu0 %v9665
    %10519 = vmatpush2.bf16.msra.mxu0 %v9664
    %10520 = vmatprep.subr.bf16.mxu0 %v9661
    %10521 = vmatpush2.bf16.msra.mxu0 %v9660
    %10522 = vmatprep.subr.bf16.mxu0 %v9657
    %10523 = vmatpush2.bf16.msra.mxu0 %v9656
    %10524 = vmatprep.subr.bf16.mxu0 %v9653
    %10525 = vmatpush2.bf16.msra.mxu0 %v9652
    %10526 = vmatprep.subr.bf16.mxu0 %v9649
    %10527 = vmatpush2.bf16.msra.mxu0 %v9648
    %10528 = vmatprep.subr.bf16.mxu0 %v9645
    %10529 = vmatpush2.bf16.msra.mxu0 %v9644
    %10530 = vmatprep.mubr.bf16.mxu0 %v7161
    %10531 = vmatmul.mubr.bf16.gmra.mxu0 %v7160
    %v10532 = vpop.f32.mrf.mxu0
    %v10533 = vadd.f32 %v10492, %v10532
    %v10534 = vpop.f32.mrf.mxu0
    %v10535 = vadd.f32 %v10494, %v10534
    %v10536 = vpop.f32.mrf.mxu0
    %v10537 = vpop.f32.mrf.mxu0
    %10538 = vdwg.mxu0
    %10539 = vmatprep.subr.bf16.mxu0 %v9705
    %10540 = vmatpush1.bf16.msra.mxu0 %v9704
    %10541 = vmatprep.subr.bf16.mxu0 %v9701
    %10542 = vmatpush1.bf16.msra.mxu0 %v9700
    %10543 = vmatprep.subr.bf16.mxu0 %v9697
    %10544 = vmatpush1.bf16.msra.mxu0 %v9696
    %10545 = vmatprep.subr.bf16.mxu0 %v9693
    %10546 = vmatpush1.bf16.msra.mxu0 %v9692
    %10547 = vmatprep.subr.bf16.mxu0 %v9689
    %10548 = vmatpush1.bf16.msra.mxu0 %v9688
    %10549 = vmatprep.subr.bf16.mxu0 %v9685
    %10550 = vmatpush1.bf16.msra.mxu0 %v9684
    %10551 = vmatprep.subr.bf16.mxu0 %v9681
    %10552 = vmatpush1.bf16.msra.mxu0 %v9680
    %10553 = vmatprep.subr.bf16.mxu0 %v9677
    %10554 = vmatpush1.bf16.msra.mxu0 %v9676
    %10555 = vmatprep.subr.bf16.mxu0 %v9737
    %10556 = vmatpush2.bf16.msra.mxu0 %v9736
    %10557 = vmatprep.subr.bf16.mxu0 %v9733
    %10558 = vmatpush2.bf16.msra.mxu0 %v9732
    %10559 = vmatprep.subr.bf16.mxu0 %v9729
    %10560 = vmatpush2.bf16.msra.mxu0 %v9728
    %10561 = vmatprep.subr.bf16.mxu0 %v9725
    %10562 = vmatpush2.bf16.msra.mxu0 %v9724
    %10563 = vmatprep.subr.bf16.mxu0 %v9721
    %10564 = vmatpush2.bf16.msra.mxu0 %v9720
    %10565 = vmatprep.subr.bf16.mxu0 %v9717
    %10566 = vmatpush2.bf16.msra.mxu0 %v9716
    %10567 = vmatprep.subr.bf16.mxu0 %v9713
    %10568 = vmatpush2.bf16.msra.mxu0 %v9712
    %10569 = vmatprep.subr.bf16.mxu0 %v9709
    %10570 = vmatpush2.bf16.msra.mxu0 %v9708
    %10571 = vmatprep.mubr.bf16.mxu0 %v7163
    %10572 = vmatmul.mubr.bf16.gmra.mxu0 %v7162
    %v10573 = vpop.f32.mrf.mxu0
    %v10574 = vadd.f32 %v10533, %v10573
    %v10575 = vpop.f32.mrf.mxu0
    %v10576 = vadd.f32 %v10535, %v10575
    %v10577 = vpop.f32.mrf.mxu0
    %v10578 = vpop.f32.mrf.mxu0
    %10579 = vdwg.mxu0
    %10580 = vmatprep.subr.bf16.mxu0 %v9259
    %10581 = vmatpush1.bf16.msra.mxu0 %v9258
    %10582 = vmatprep.subr.bf16.mxu0 %v9255
    %10583 = vmatpush1.bf16.msra.mxu0 %v9254
    %10584 = vmatprep.subr.bf16.mxu0 %v9251
    %10585 = vmatpush1.bf16.msra.mxu0 %v9250
    %10586 = vmatprep.subr.bf16.mxu0 %v9247
    %10587 = vmatpush1.bf16.msra.mxu0 %v9246
    %10588 = vmatprep.subr.bf16.mxu0 %v9243
    %10589 = vmatpush1.bf16.msra.mxu0 %v9242
    %10590 = vmatprep.subr.bf16.mxu0 %v9239
    %10591 = vmatpush1.bf16.msra.mxu0 %v9238
    %10592 = vmatprep.subr.bf16.mxu0 %v9235
    %10593 = vmatpush1.bf16.msra.mxu0 %v9234
    %10594 = vmatprep.subr.bf16.mxu0 %v9231
    %10595 = vmatpush1.bf16.msra.mxu0 %v9230
    %10596 = vmatprep.subr.bf16.mxu0 %v9291
    %10597 = vmatpush2.bf16.msra.mxu0 %v9290
    %10598 = vmatprep.subr.bf16.mxu0 %v9287
    %10599 = vmatpush2.bf16.msra.mxu0 %v9286
    %10600 = vmatprep.subr.bf16.mxu0 %v9283
    %10601 = vmatpush2.bf16.msra.mxu0 %v9282
    %10602 = vmatprep.subr.bf16.mxu0 %v9279
    %10603 = vmatpush2.bf16.msra.mxu0 %v9278
    %10604 = vmatprep.subr.bf16.mxu0 %v9275
    %10605 = vmatpush2.bf16.msra.mxu0 %v9274
    %10606 = vmatprep.subr.bf16.mxu0 %v9271
    %10607 = vmatpush2.bf16.msra.mxu0 %v9270
    %10608 = vmatprep.subr.bf16.mxu0 %v9267
    %10609 = vmatpush2.bf16.msra.mxu0 %v9266
    %10610 = vmatprep.subr.bf16.mxu0 %v9263
    %10611 = vmatpush2.bf16.msra.mxu0 %v9262
    %10612 = vmatprep.mubr.bf16.mxu0 %v7149
    %10613 = vmatmul.mubr.bf16.gmra.mxu0 %v7148
    %v10614 = vpop.f32.mrf.mxu0
    %v10615 = vadd.f32 %v7687, %v10614
    %v10616 = vpop.f32.mrf.mxu0
    %v10617 = vadd.f32 %v7691, %v10616
    %v10618 = vpop.f32.mrf.mxu0
    %v10619 = vpop.f32.mrf.mxu0
    %10620 = vdwg.mxu0
    %10621 = vmatprep.subr.bf16.mxu0 %v9323
    %10622 = vmatpush1.bf16.msra.mxu0 %v9322
    %10623 = vmatprep.subr.bf16.mxu0 %v9319
    %10624 = vmatpush1.bf16.msra.mxu0 %v9318
    %10625 = vmatprep.subr.bf16.mxu0 %v9315
    %10626 = vmatpush1.bf16.msra.mxu0 %v9314
    %10627 = vmatprep.subr.bf16.mxu0 %v9311
    %10628 = vmatpush1.bf16.msra.mxu0 %v9310
    %10629 = vmatprep.subr.bf16.mxu0 %v9307
    %10630 = vmatpush1.bf16.msra.mxu0 %v9306
    %10631 = vmatprep.subr.bf16.mxu0 %v9303
    %10632 = vmatpush1.bf16.msra.mxu0 %v9302
    %10633 = vmatprep.subr.bf16.mxu0 %v9299
    %10634 = vmatpush1.bf16.msra.mxu0 %v9298
    %10635 = vmatprep.subr.bf16.mxu0 %v9295
    %10636 = vmatpush1.bf16.msra.mxu0 %v9294
    %10637 = vmatprep.subr.bf16.mxu0 %v9355
    %10638 = vmatpush2.bf16.msra.mxu0 %v9354
    %10639 = vmatprep.subr.bf16.mxu0 %v9351
    %10640 = vmatpush2.bf16.msra.mxu0 %v9350
    %10641 = vmatprep.subr.bf16.mxu0 %v9347
    %10642 = vmatpush2.bf16.msra.mxu0 %v9346
    %10643 = vmatprep.subr.bf16.mxu0 %v9343
    %10644 = vmatpush2.bf16.msra.mxu0 %v9342
    %10645 = vmatprep.subr.bf16.mxu0 %v9339
    %10646 = vmatpush2.bf16.msra.mxu0 %v9338
    %10647 = vmatprep.subr.bf16.mxu0 %v9335
    %10648 = vmatpush2.bf16.msra.mxu0 %v9334
    %10649 = vmatprep.subr.bf16.mxu0 %v9331
    %10650 = vmatpush2.bf16.msra.mxu0 %v9330
    %10651 = vmatprep.subr.bf16.mxu0 %v9327
    %10652 = vmatpush2.bf16.msra.mxu0 %v9326
    %10653 = vmatprep.mubr.bf16.mxu0 %v7151
    %10654 = vmatmul.mubr.bf16.gmra.mxu0 %v7150
    %v10655 = vpop.f32.mrf.mxu0
    %v10656 = vadd.f32 %v10615, %v10655
    %v10657 = vpop.f32.mrf.mxu0
    %v10658 = vadd.f32 %v10617, %v10657
    %v10659 = vpop.f32.mrf.mxu0
    %v10660 = vpop.f32.mrf.mxu0
    %10661 = vdwg.mxu0
    %10662 = vmatprep.subr.bf16.mxu0 %v9387
    %10663 = vmatpush1.bf16.msra.mxu0 %v9386
    %10664 = vmatprep.subr.bf16.mxu0 %v9383
    %10665 = vmatpush1.bf16.msra.mxu0 %v9382
    %10666 = vmatprep.subr.bf16.mxu0 %v9379
    %10667 = vmatpush1.bf16.msra.mxu0 %v9378
    %10668 = vmatprep.subr.bf16.mxu0 %v9375
    %10669 = vmatpush1.bf16.msra.mxu0 %v9374
    %10670 = vmatprep.subr.bf16.mxu0 %v9371
    %10671 = vmatpush1.bf16.msra.mxu0 %v9370
    %10672 = vmatprep.subr.bf16.mxu0 %v9367
    %10673 = vmatpush1.bf16.msra.mxu0 %v9366
    %10674 = vmatprep.subr.bf16.mxu0 %v9363
    %10675 = vmatpush1.bf16.msra.mxu0 %v9362
    %10676 = vmatprep.subr.bf16.mxu0 %v9359
    %10677 = vmatpush1.bf16.msra.mxu0 %v9358
    %10678 = vmatprep.subr.bf16.mxu0 %v9419
    %10679 = vmatpush2.bf16.msra.mxu0 %v9418
    %10680 = vmatprep.subr.bf16.mxu0 %v9415
    %10681 = vmatpush2.bf16.msra.mxu0 %v9414
    %10682 = vmatprep.subr.bf16.mxu0 %v9411
    %10683 = vmatpush2.bf16.msra.mxu0 %v9410
    %10684 = vmatprep.subr.bf16.mxu0 %v9407
    %10685 = vmatpush2.bf16.msra.mxu0 %v9406
    %10686 = vmatprep.subr.bf16.mxu0 %v9403
    %10687 = vmatpush2.bf16.msra.mxu0 %v9402
    %10688 = vmatprep.subr.bf16.mxu0 %v9399
    %10689 = vmatpush2.bf16.msra.mxu0 %v9398
    %10690 = vmatprep.subr.bf16.mxu0 %v9395
    %10691 = vmatpush2.bf16.msra.mxu0 %v9394
    %10692 = vmatprep.subr.bf16.mxu0 %v9391
    %10693 = vmatpush2.bf16.msra.mxu0 %v9390
    %10694 = vmatprep.mubr.bf16.mxu0 %v7153
    %10695 = vmatmul.mubr.bf16.gmra.mxu0 %v7152
    %v10696 = vpop.f32.mrf.mxu0
    %v10697 = vadd.f32 %v10656, %v10696
    %v10698 = vpop.f32.mrf.mxu0
    %v10699 = vadd.f32 %v10658, %v10698
    %v10700 = vpop.f32.mrf.mxu0
    %v10701 = vpop.f32.mrf.mxu0
    %10702 = vdwg.mxu0
    %10703 = vmatprep.subr.bf16.mxu0 %v9451
    %10704 = vmatpush1.bf16.msra.mxu0 %v9450
    %10705 = vmatprep.subr.bf16.mxu0 %v9447
    %10706 = vmatpush1.bf16.msra.mxu0 %v9446
    %10707 = vmatprep.subr.bf16.mxu0 %v9443
    %10708 = vmatpush1.bf16.msra.mxu0 %v9442
    %10709 = vmatprep.subr.bf16.mxu0 %v9439
    %10710 = vmatpush1.bf16.msra.mxu0 %v9438
    %10711 = vmatprep.subr.bf16.mxu0 %v9435
    %10712 = vmatpush1.bf16.msra.mxu0 %v9434
    %10713 = vmatprep.subr.bf16.mxu0 %v9431
    %10714 = vmatpush1.bf16.msra.mxu0 %v9430
    %10715 = vmatprep.subr.bf16.mxu0 %v9427
    %10716 = vmatpush1.bf16.msra.mxu0 %v9426
    %10717 = vmatprep.subr.bf16.mxu0 %v9423
    %10718 = vmatpush1.bf16.msra.mxu0 %v9422
    %10719 = vmatprep.subr.bf16.mxu0 %v9483
    %10720 = vmatpush2.bf16.msra.mxu0 %v9482
    %10721 = vmatprep.subr.bf16.mxu0 %v9479
    %10722 = vmatpush2.bf16.msra.mxu0 %v9478
    %10723 = vmatprep.subr.bf16.mxu0 %v9475
    %10724 = vmatpush2.bf16.msra.mxu0 %v9474
    %10725 = vmatprep.subr.bf16.mxu0 %v9471
    %10726 = vmatpush2.bf16.msra.mxu0 %v9470
    %10727 = vmatprep.subr.bf16.mxu0 %v9467
    %10728 = vmatpush2.bf16.msra.mxu0 %v9466
    %10729 = vmatprep.subr.bf16.mxu0 %v9463
    %10730 = vmatpush2.bf16.msra.mxu0 %v9462
    %10731 = vmatprep.subr.bf16.mxu0 %v9459
    %10732 = vmatpush2.bf16.msra.mxu0 %v9458
    %10733 = vmatprep.subr.bf16.mxu0 %v9455
    %10734 = vmatpush2.bf16.msra.mxu0 %v9454
    %10735 = vmatprep.mubr.bf16.mxu0 %v7155
    %10736 = vmatmul.mubr.bf16.gmra.mxu0 %v7154
    %v10737 = vpop.f32.mrf.mxu0
    %v10738 = vadd.f32 %v10697, %v10737
    %v10739 = vpop.f32.mrf.mxu0
    %v10740 = vadd.f32 %v10699, %v10739
    %v10741 = vpop.f32.mrf.mxu0
    %v10742 = vpop.f32.mrf.mxu0
    %10743 = vdwg.mxu0
    %10744 = vmatprep.subr.bf16.mxu0 %v9515
    %10745 = vmatpush1.bf16.msra.mxu0 %v9514
    %10746 = vmatprep.subr.bf16.mxu0 %v9511
    %10747 = vmatpush1.bf16.msra.mxu0 %v9510
    %10748 = vmatprep.subr.bf16.mxu0 %v9507
    %10749 = vmatpush1.bf16.msra.mxu0 %v9506
    %10750 = vmatprep.subr.bf16.mxu0 %v9503
    %10751 = vmatpush1.bf16.msra.mxu0 %v9502
    %10752 = vmatprep.subr.bf16.mxu0 %v9499
    %10753 = vmatpush1.bf16.msra.mxu0 %v9498
    %10754 = vmatprep.subr.bf16.mxu0 %v9495
    %10755 = vmatpush1.bf16.msra.mxu0 %v9494
    %10756 = vmatprep.subr.bf16.mxu0 %v9491
    %10757 = vmatpush1.bf16.msra.mxu0 %v9490
    %10758 = vmatprep.subr.bf16.mxu0 %v9487
    %10759 = vmatpush1.bf16.msra.mxu0 %v9486
    %10760 = vmatprep.subr.bf16.mxu0 %v9547
    %10761 = vmatpush2.bf16.msra.mxu0 %v9546
    %10762 = vmatprep.subr.bf16.mxu0 %v9543
    %10763 = vmatpush2.bf16.msra.mxu0 %v9542
    %10764 = vmatprep.subr.bf16.mxu0 %v9539
    %10765 = vmatpush2.bf16.msra.mxu0 %v9538
    %10766 = vmatprep.subr.bf16.mxu0 %v9535
    %10767 = vmatpush2.bf16.msra.mxu0 %v9534
    %10768 = vmatprep.subr.bf16.mxu0 %v9531
    %10769 = vmatpush2.bf16.msra.mxu0 %v9530
    %10770 = vmatprep.subr.bf16.mxu0 %v9527
    %10771 = vmatpush2.bf16.msra.mxu0 %v9526
    %10772 = vmatprep.subr.bf16.mxu0 %v9523
    %10773 = vmatpush2.bf16.msra.mxu0 %v9522
    %10774 = vmatprep.subr.bf16.mxu0 %v9519
    %10775 = vmatpush2.bf16.msra.mxu0 %v9518
    %10776 = vmatprep.mubr.bf16.mxu0 %v7157
    %10777 = vmatmul.mubr.bf16.gmra.mxu0 %v7156
    %v10778 = vpop.f32.mrf.mxu0
    %v10779 = vadd.f32 %v10738, %v10778
    %v10780 = vpop.f32.mrf.mxu0
    %v10781 = vadd.f32 %v10740, %v10780
    %v10782 = vpop.f32.mrf.mxu0
    %v10783 = vpop.f32.mrf.mxu0
    %10784 = vdwg.mxu0
    %10785 = vmatprep.subr.bf16.mxu0 %v9579
    %10786 = vmatpush1.bf16.msra.mxu0 %v9578
    %10787 = vmatprep.subr.bf16.mxu0 %v9575
    %10788 = vmatpush1.bf16.msra.mxu0 %v9574
    %10789 = vmatprep.subr.bf16.mxu0 %v9571
    %10790 = vmatpush1.bf16.msra.mxu0 %v9570
    %10791 = vmatprep.subr.bf16.mxu0 %v9567
    %10792 = vmatpush1.bf16.msra.mxu0 %v9566
    %10793 = vmatprep.subr.bf16.mxu0 %v9563
    %10794 = vmatpush1.bf16.msra.mxu0 %v9562
    %10795 = vmatprep.subr.bf16.mxu0 %v9559
    %10796 = vmatpush1.bf16.msra.mxu0 %v9558
    %10797 = vmatprep.subr.bf16.mxu0 %v9555
    %10798 = vmatpush1.bf16.msra.mxu0 %v9554
    %10799 = vmatprep.subr.bf16.mxu0 %v9551
    %10800 = vmatpush1.bf16.msra.mxu0 %v9550
    %10801 = vmatprep.subr.bf16.mxu0 %v9611
    %10802 = vmatpush2.bf16.msra.mxu0 %v9610
    %10803 = vmatprep.subr.bf16.mxu0 %v9607
    %10804 = vmatpush2.bf16.msra.mxu0 %v9606
    %10805 = vmatprep.subr.bf16.mxu0 %v9603
    %10806 = vmatpush2.bf16.msra.mxu0 %v9602
    %10807 = vmatprep.subr.bf16.mxu0 %v9599
    %10808 = vmatpush2.bf16.msra.mxu0 %v9598
    %10809 = vmatprep.subr.bf16.mxu0 %v9595
    %10810 = vmatpush2.bf16.msra.mxu0 %v9594
    %10811 = vmatprep.subr.bf16.mxu0 %v9591
    %10812 = vmatpush2.bf16.msra.mxu0 %v9590
    %10813 = vmatprep.subr.bf16.mxu0 %v9587
    %10814 = vmatpush2.bf16.msra.mxu0 %v9586
    %10815 = vmatprep.subr.bf16.mxu0 %v9583
    %10816 = vmatpush2.bf16.msra.mxu0 %v9582
    %10817 = vmatprep.mubr.bf16.mxu0 %v7159
    %10818 = vmatmul.mubr.bf16.gmra.mxu0 %v7158
    %v10819 = vpop.f32.mrf.mxu0
    %v10820 = vadd.f32 %v10779, %v10819
    %v10821 = vpop.f32.mrf.mxu0
    %v10822 = vadd.f32 %v10781, %v10821
    %v10823 = vpop.f32.mrf.mxu0
    %v10824 = vpop.f32.mrf.mxu0
    %10825 = vdwg.mxu0
    %10826 = vmatprep.subr.bf16.mxu0 %v9643
    %10827 = vmatpush1.bf16.msra.mxu0 %v9642
    %10828 = vmatprep.subr.bf16.mxu0 %v9639
    %10829 = vmatpush1.bf16.msra.mxu0 %v9638
    %10830 = vmatprep.subr.bf16.mxu0 %v9635
    %10831 = vmatpush1.bf16.msra.mxu0 %v9634
    %10832 = vmatprep.subr.bf16.mxu0 %v9631
    %10833 = vmatpush1.bf16.msra.mxu0 %v9630
    %10834 = vmatprep.subr.bf16.mxu0 %v9627
    %10835 = vmatpush1.bf16.msra.mxu0 %v9626
    %10836 = vmatprep.subr.bf16.mxu0 %v9623
    %10837 = vmatpush1.bf16.msra.mxu0 %v9622
    %10838 = vmatprep.subr.bf16.mxu0 %v9619
    %10839 = vmatpush1.bf16.msra.mxu0 %v9618
    %10840 = vmatprep.subr.bf16.mxu0 %v9615
    %10841 = vmatpush1.bf16.msra.mxu0 %v9614
    %10842 = vmatprep.subr.bf16.mxu0 %v9675
    %10843 = vmatpush2.bf16.msra.mxu0 %v9674
    %10844 = vmatprep.subr.bf16.mxu0 %v9671
    %10845 = vmatpush2.bf16.msra.mxu0 %v9670
    %10846 = vmatprep.subr.bf16.mxu0 %v9667
    %10847 = vmatpush2.bf16.msra.mxu0 %v9666
    %10848 = vmatprep.subr.bf16.mxu0 %v9663
    %10849 = vmatpush2.bf16.msra.mxu0 %v9662
    %10850 = vmatprep.subr.bf16.mxu0 %v9659
    %10851 = vmatpush2.bf16.msra.mxu0 %v9658
    %10852 = vmatprep.subr.bf16.mxu0 %v9655
    %10853 = vmatpush2.bf16.msra.mxu0 %v9654
    %10854 = vmatprep.subr.bf16.mxu0 %v9651
    %10855 = vmatpush2.bf16.msra.mxu0 %v9650
    %10856 = vmatprep.subr.bf16.mxu0 %v9647
    %10857 = vmatpush2.bf16.msra.mxu0 %v9646
    %10858 = vmatprep.mubr.bf16.mxu0 %v7161
    %10859 = vmatmul.mubr.bf16.gmra.mxu0 %v7160
    %v10860 = vpop.f32.mrf.mxu0
    %v10861 = vadd.f32 %v10820, %v10860
    %v10862 = vpop.f32.mrf.mxu0
    %v10863 = vadd.f32 %v10822, %v10862
    %v10864 = vpop.f32.mrf.mxu0
    %v10865 = vpop.f32.mrf.mxu0
    %10866 = vdwg.mxu0
    %10867 = vmatprep.subr.bf16.mxu0 %v9707
    %10868 = vmatpush1.bf16.msra.mxu0 %v9706
    %10869 = vmatprep.subr.bf16.mxu0 %v9703
    %10870 = vmatpush1.bf16.msra.mxu0 %v9702
    %10871 = vmatprep.subr.bf16.mxu0 %v9699
    %10872 = vmatpush1.bf16.msra.mxu0 %v9698
    %10873 = vmatprep.subr.bf16.mxu0 %v9695
    %10874 = vmatpush1.bf16.msra.mxu0 %v9694
    %10875 = vmatprep.subr.bf16.mxu0 %v9691
    %10876 = vmatpush1.bf16.msra.mxu0 %v9690
    %10877 = vmatprep.subr.bf16.mxu0 %v9687
    %10878 = vmatpush1.bf16.msra.mxu0 %v9686
    %10879 = vmatprep.subr.bf16.mxu0 %v9683
    %10880 = vmatpush1.bf16.msra.mxu0 %v9682
    %10881 = vmatprep.subr.bf16.mxu0 %v9679
    %10882 = vmatpush1.bf16.msra.mxu0 %v9678
    %10883 = vmatprep.subr.bf16.mxu0 %v9739
    %10884 = vmatpush2.bf16.msra.mxu0 %v9738
    %10885 = vmatprep.subr.bf16.mxu0 %v9735
    %10886 = vmatpush2.bf16.msra.mxu0 %v9734
    %10887 = vmatprep.subr.bf16.mxu0 %v9731
    %10888 = vmatpush2.bf16.msra.mxu0 %v9730
    %10889 = vmatprep.subr.bf16.mxu0 %v9727
    %10890 = vmatpush2.bf16.msra.mxu0 %v9726
    %10891 = vmatprep.subr.bf16.mxu0 %v9723
    %10892 = vmatpush2.bf16.msra.mxu0 %v9722
    %10893 = vmatprep.subr.bf16.mxu0 %v9719
    %10894 = vmatpush2.bf16.msra.mxu0 %v9718
    %10895 = vmatprep.subr.bf16.mxu0 %v9715
    %10896 = vmatpush2.bf16.msra.mxu0 %v9714
    %10897 = vmatprep.subr.bf16.mxu0 %v9711
    %10898 = vmatpush2.bf16.msra.mxu0 %v9710
    %10899 = vmatprep.mubr.bf16.mxu0 %v7163
    %10900 = vmatmul.mubr.bf16.gmra.mxu0 %v7162
    %v10901 = vpop.f32.mrf.mxu0
    %v10902 = vadd.f32 %v10861, %v10901
    %v10903 = vpop.f32.mrf.mxu0
    %v10904 = vadd.f32 %v10863, %v10903
    %v10905 = vpop.f32.mrf.mxu0
    %v10906 = vpop.f32.mrf.mxu0
    %10907 = vdwg.mxu0
    %v10908 = vmax.f32 %v10574, 0.0
    %v10909 = vmax.f32 %v10576, 0.0
    %v10910 = vmax.f32 %v10902, 0.0
    %v10911 = vmax.f32 %v10904, 0.0
    %v10912 = vpack.c.bf16 %v10908, %v10908
    %v10913 = vpack.c.bf16 %v10909, %v10909
    %v10914 = vpack.c.bf16 %v10910, %v10910
    %v10915 = vpack.c.bf16 %v10911, %v10911
    %v10916 = vld [vmem:[#allocation14] sm:$0xf]
    %v10917 = vld [vmem:[#allocation14 + $0x4] sm:$0xf]
    %v10918 = vld [vmem:[#allocation14 + $0x8] sm:$0xf]
    %v10919 = vld [vmem:[#allocation14 + $0xc] sm:$0xf]
    %v10920 = vld [vmem:[#allocation14 + $0x10] sm:$0xf]
    %v10921 = vld [vmem:[#allocation14 + $0x14] sm:$0xf]
    %v10922 = vld [vmem:[#allocation14 + $0x18] sm:$0xf]
    %v10923 = vld [vmem:[#allocation14 + $0x1c] sm:$0xf]
    %v10924 = vld [vmem:[#allocation14 + $0x20] sm:$0xf]
    %v10925 = vld [vmem:[#allocation14 + $0x24] sm:$0xf]
    %v10926 = vld [vmem:[#allocation14 + $0x28] sm:$0xf]
    %v10927 = vld [vmem:[#allocation14 + $0x2c] sm:$0xf]
    %v10928 = vld [vmem:[#allocation14 + $0x30] sm:$0xf]
    %v10929 = vld [vmem:[#allocation14 + $0x34] sm:$0xf]
    %v10930 = vld [vmem:[#allocation14 + $0x38] sm:$0xf]
    %v10931 = vld [vmem:[#allocation14 + $0x3c] sm:$0xf]
    %v10932 = vld [vmem:[#allocation14 + $0x40] sm:$0xf]
    %v10933 = vld [vmem:[#allocation14 + $0x44] sm:$0xf]
    %v10934 = vld [vmem:[#allocation14 + $0x48] sm:$0xf]
    %v10935 = vld [vmem:[#allocation14 + $0x4c] sm:$0xf]
    %v10936 = vld [vmem:[#allocation14 + $0x50] sm:$0xf]
    %v10937 = vld [vmem:[#allocation14 + $0x54] sm:$0xf]
    %v10938 = vld [vmem:[#allocation14 + $0x58] sm:$0xf]
    %v10939 = vld [vmem:[#allocation14 + $0x5c] sm:$0xf]
    %v10940 = vld [vmem:[#allocation14 + $0x60] sm:$0xf]
    %v10941 = vld [vmem:[#allocation14 + $0x64] sm:$0xf]
    %v10942 = vld [vmem:[#allocation14 + $0x68] sm:$0xf]
    %v10943 = vld [vmem:[#allocation14 + $0x6c] sm:$0xf]
    %v10944 = vld [vmem:[#allocation14 + $0x70] sm:$0xf]
    %v10945 = vld [vmem:[#allocation14 + $0x74] sm:$0xf]
    %v10946 = vld [vmem:[#allocation14 + $0x78] sm:$0xf]
    %v10947 = vld [vmem:[#allocation14 + $0x7c] sm:$0xf]
    %v10948 = vld [vmem:[#allocation14 + $0x80] sm:$0xf]
    %v10949 = vld [vmem:[#allocation14 + $0x84] sm:$0xf]
    %v10950 = vld [vmem:[#allocation14 + $0x88] sm:$0xf]
    %v10951 = vld [vmem:[#allocation14 + $0x8c] sm:$0xf]
    %v10952 = vld [vmem:[#allocation14 + $0x90] sm:$0xf]
    %v10953 = vld [vmem:[#allocation14 + $0x94] sm:$0xf]
    %v10954 = vld [vmem:[#allocation14 + $0x98] sm:$0xf]
    %v10955 = vld [vmem:[#allocation14 + $0x9c] sm:$0xf]
    %v10956 = vld [vmem:[#allocation14 + $0xa0] sm:$0xf]
    %v10957 = vld [vmem:[#allocation14 + $0xa4] sm:$0xf]
    %v10958 = vld [vmem:[#allocation14 + $0xa8] sm:$0xf]
    %v10959 = vld [vmem:[#allocation14 + $0xac] sm:$0xf]
    %v10960 = vld [vmem:[#allocation14 + $0xb0] sm:$0xf]
    %v10961 = vld [vmem:[#allocation14 + $0xb4] sm:$0xf]
    %v10962 = vld [vmem:[#allocation14 + $0xb8] sm:$0xf]
    %v10963 = vld [vmem:[#allocation14 + $0xbc] sm:$0xf]
    %v10964 = vld [vmem:[#allocation14 + $0xc0] sm:$0xf]
    %v10965 = vld [vmem:[#allocation14 + $0xc4] sm:$0xf]
    %v10966 = vld [vmem:[#allocation14 + $0xc8] sm:$0xf]
    %v10967 = vld [vmem:[#allocation14 + $0xcc] sm:$0xf]
    %v10968 = vld [vmem:[#allocation14 + $0xd0] sm:$0xf]
    %v10969 = vld [vmem:[#allocation14 + $0xd4] sm:$0xf]
    %v10970 = vld [vmem:[#allocation14 + $0xd8] sm:$0xf]
    %v10971 = vld [vmem:[#allocation14 + $0xdc] sm:$0xf]
    %v10972 = vld [vmem:[#allocation14 + $0xe0] sm:$0xf]
    %v10973 = vld [vmem:[#allocation14 + $0xe4] sm:$0xf]
    %v10974 = vld [vmem:[#allocation14 + $0xe8] sm:$0xf]
    %v10975 = vld [vmem:[#allocation14 + $0xec] sm:$0xf]
    %v10976 = vld [vmem:[#allocation14 + $0xf0] sm:$0xf]
    %v10977 = vld [vmem:[#allocation14 + $0xf4] sm:$0xf]
    %v10978 = vld [vmem:[#allocation14 + $0xf8] sm:$0xf]
    %v10979 = vld [vmem:[#allocation14 + $0xfc] sm:$0xf]
    %v10980 = vlaneseq
    %v10981 = vshrl.u32 %v10980, 7
    %v10982 = vsub.s32 5, %v10981
    %v10983 = vrot.slane %v138, %v10982
    %v11048 = vunpack.c.l.b16 %v10916
    %v11049 = vunpack.c.l.b16 %v10917
    %v11050 = vunpack.c.l.b16 %v10918
    %v11051 = vunpack.c.l.b16 %v10919
    %v11052 = vunpack.c.l.b16 %v10920
    %v11053 = vunpack.c.l.b16 %v10921
    %v11054 = vunpack.c.l.b16 %v10922
    %v11055 = vunpack.c.l.b16 %v10923
    %v11056 = vunpack.c.l.b16 %v10924
    %v11057 = vunpack.c.l.b16 %v10925
    %v11058 = vunpack.c.l.b16 %v10926
    %v11059 = vunpack.c.l.b16 %v10927
    %v11060 = vunpack.c.l.b16 %v10928
    %v11061 = vunpack.c.l.b16 %v10929
    %v11062 = vunpack.c.l.b16 %v10930
    %v11063 = vunpack.c.l.b16 %v10931
    %v11064 = vunpack.c.l.b16 %v10932
    %v11065 = vunpack.c.l.b16 %v10933
    %v11066 = vunpack.c.l.b16 %v10934
    %v11067 = vunpack.c.l.b16 %v10935
    %v11068 = vunpack.c.l.b16 %v10936
    %v11069 = vunpack.c.l.b16 %v10937
    %v11070 = vunpack.c.l.b16 %v10938
    %v11071 = vunpack.c.l.b16 %v10939
    %v11072 = vunpack.c.l.b16 %v10940
    %v11073 = vunpack.c.l.b16 %v10941
    %v11074 = vunpack.c.l.b16 %v10942
    %v11075 = vunpack.c.l.b16 %v10943
    %v11076 = vunpack.c.l.b16 %v10944
    %v11077 = vunpack.c.l.b16 %v10945
    %v11078 = vunpack.c.l.b16 %v10946
    %v11079 = vunpack.c.l.b16 %v10947
    %v11080 = vunpack.c.l.b16 %v10948
    %v11081 = vunpack.c.l.b16 %v10949
    %v11082 = vunpack.c.l.b16 %v10950
    %v11083 = vunpack.c.l.b16 %v10951
    %v11084 = vunpack.c.l.b16 %v10952
    %v11085 = vunpack.c.l.b16 %v10953
    %v11086 = vunpack.c.l.b16 %v10954
    %v11087 = vunpack.c.l.b16 %v10955
    %v11088 = vunpack.c.l.b16 %v10956
    %v11089 = vunpack.c.l.b16 %v10957
    %v11090 = vunpack.c.l.b16 %v10958
    %v11091 = vunpack.c.l.b16 %v10959
    %v11092 = vunpack.c.l.b16 %v10960
    %v11093 = vunpack.c.l.b16 %v10961
    %v11094 = vunpack.c.l.b16 %v10962
    %v11095 = vunpack.c.l.b16 %v10963
    %v11096 = vunpack.c.l.b16 %v10964
    %v11097 = vunpack.c.l.b16 %v10965
    %v11098 = vunpack.c.l.b16 %v10966
    %v11099 = vunpack.c.l.b16 %v10967
    %v11100 = vunpack.c.l.b16 %v10968
    %v11101 = vunpack.c.l.b16 %v10969
    %v11102 = vunpack.c.l.b16 %v10970
    %v11103 = vunpack.c.l.b16 %v10971
    %v11104 = vunpack.c.l.b16 %v10972
    %v11105 = vunpack.c.l.b16 %v10973
    %v11106 = vunpack.c.l.b16 %v10974
    %v11107 = vunpack.c.l.b16 %v10975
    %v11108 = vunpack.c.l.b16 %v10976
    %v11109 = vunpack.c.l.b16 %v10977
    %v11110 = vunpack.c.l.b16 %v10978
    %v11111 = vunpack.c.l.b16 %v10979
    %v11112 = vpack.c.b16 %v11049, %v11048
    %v11113 = vpack.c.b16 %v11051, %v11050
    %v11114 = vpack.c.b16 %v11053, %v11052
    %v11115 = vpack.c.b16 %v11055, %v11054
    %v11116 = vpack.c.b16 %v11057, %v11056
    %v11117 = vpack.c.b16 %v11059, %v11058
    %v11118 = vpack.c.b16 %v11061, %v11060
    %v11119 = vpack.c.b16 %v11063, %v11062
    %v11120 = vpack.c.b16 %v11065, %v11064
    %v11121 = vpack.c.b16 %v11067, %v11066
    %v11122 = vpack.c.b16 %v11069, %v11068
    %v11123 = vpack.c.b16 %v11071, %v11070
    %v11124 = vpack.c.b16 %v11073, %v11072
    %v11125 = vpack.c.b16 %v11075, %v11074
    %v11126 = vpack.c.b16 %v11077, %v11076
    %v11127 = vpack.c.b16 %v11079, %v11078
    %v11128 = vpack.c.b16 %v11081, %v11080
    %v11129 = vpack.c.b16 %v11083, %v11082
    %v11130 = vpack.c.b16 %v11085, %v11084
    %v11131 = vpack.c.b16 %v11087, %v11086
    %v11132 = vpack.c.b16 %v11089, %v11088
    %v11133 = vpack.c.b16 %v11091, %v11090
    %v11134 = vpack.c.b16 %v11093, %v11092
    %v11135 = vpack.c.b16 %v11095, %v11094
    %v11136 = vpack.c.b16 %v11097, %v11096
    %v11137 = vpack.c.b16 %v11099, %v11098
    %v11138 = vpack.c.b16 %v11101, %v11100
    %v11139 = vpack.c.b16 %v11103, %v11102
    %v11140 = vpack.c.b16 %v11105, %v11104
    %v11141 = vpack.c.b16 %v11107, %v11106
    %v11142 = vpack.c.b16 %v11109, %v11108
    %v11143 = vpack.c.b16 %v11111, %v11110
    %11176 = vmatprep.subr.bf16.mxu0 0
    %11177 = vmatpush1.bf16.msra.mxu0 %v11119
    %11178 = vmatprep.subr.bf16.mxu0 0
    %11179 = vmatpush1.bf16.msra.mxu0 %v11118
    %11180 = vmatprep.subr.bf16.mxu0 0
    %11181 = vmatpush1.bf16.msra.mxu0 %v11117
    %11182 = vmatprep.subr.bf16.mxu0 0
    %11183 = vmatpush1.bf16.msra.mxu0 %v11116
    %11184 = vmatprep.subr.bf16.mxu0 0
    %11185 = vmatpush1.bf16.msra.mxu0 %v11115
    %11186 = vmatprep.subr.bf16.mxu0 0
    %11187 = vmatpush1.bf16.msra.mxu0 %v11114
    %11188 = vmatprep.subr.bf16.mxu0 0
    %11189 = vmatpush1.bf16.msra.mxu0 %v11113
    %11190 = vmatprep.subr.bf16.mxu0 0
    %11191 = vmatpush1.bf16.msra.mxu0 %v11112
    %11192 = vmatprep.subr.bf16.mxu0 0
    %11193 = vmatpush2.bf16.msra.mxu0 %v11127
    %11194 = vmatprep.subr.bf16.mxu0 0
    %11195 = vmatpush2.bf16.msra.mxu0 %v11126
    %11196 = vmatprep.subr.bf16.mxu0 0
    %11197 = vmatpush2.bf16.msra.mxu0 %v11125
    %11198 = vmatprep.subr.bf16.mxu0 0
    %11199 = vmatpush2.bf16.msra.mxu0 %v11124
    %11200 = vmatprep.subr.bf16.mxu0 0
    %11201 = vmatpush2.bf16.msra.mxu0 %v11123
    %11202 = vmatprep.subr.bf16.mxu0 0
    %11203 = vmatpush2.bf16.msra.mxu0 %v11122
    %11204 = vmatprep.subr.bf16.mxu0 0
    %11205 = vmatpush2.bf16.msra.mxu0 %v11121
    %11206 = vmatprep.subr.bf16.mxu0 0
    %11207 = vmatpush2.bf16.msra.mxu0 %v11120
    %11208 = vmatprep.mubr.bf16.mxu0 %v10913
    %11209 = vmatmul.mubr.bf16.gmra.mxu0 %v10912
    %v11210 = vpop.f32.mrf.mxu0
    %v11211 = vadd.f32 %v10983, %v11210
    %v11212 = vpop.f32.mrf.mxu0
    %v11213 = vpop.f32.mrf.mxu0
    %v11214 = vpop.f32.mrf.mxu0
    %11215 = vdwg.mxu0
    %11216 = vmatprep.subr.bf16.mxu0 0
    %11217 = vmatpush1.bf16.msra.mxu0 %v11135
    %11218 = vmatprep.subr.bf16.mxu0 0
    %11219 = vmatpush1.bf16.msra.mxu0 %v11134
    %11220 = vmatprep.subr.bf16.mxu0 0
    %11221 = vmatpush1.bf16.msra.mxu0 %v11133
    %11222 = vmatprep.subr.bf16.mxu0 0
    %11223 = vmatpush1.bf16.msra.mxu0 %v11132
    %11224 = vmatprep.subr.bf16.mxu0 0
    %11225 = vmatpush1.bf16.msra.mxu0 %v11131
    %11226 = vmatprep.subr.bf16.mxu0 0
    %11227 = vmatpush1.bf16.msra.mxu0 %v11130
    %11228 = vmatprep.subr.bf16.mxu0 0
    %11229 = vmatpush1.bf16.msra.mxu0 %v11129
    %11230 = vmatprep.subr.bf16.mxu0 0
    %11231 = vmatpush1.bf16.msra.mxu0 %v11128
    %11232 = vmatprep.subr.bf16.mxu0 0
    %11233 = vmatpush2.bf16.msra.mxu0 %v11143
    %11234 = vmatprep.subr.bf16.mxu0 0
    %11235 = vmatpush2.bf16.msra.mxu0 %v11142
    %11236 = vmatprep.subr.bf16.mxu0 0
    %11237 = vmatpush2.bf16.msra.mxu0 %v11141
    %11238 = vmatprep.subr.bf16.mxu0 0
    %11239 = vmatpush2.bf16.msra.mxu0 %v11140
    %11240 = vmatprep.subr.bf16.mxu0 0
    %11241 = vmatpush2.bf16.msra.mxu0 %v11139
    %11242 = vmatprep.subr.bf16.mxu0 0
    %11243 = vmatpush2.bf16.msra.mxu0 %v11138
    %11244 = vmatprep.subr.bf16.mxu0 0
    %11245 = vmatpush2.bf16.msra.mxu0 %v11137
    %11246 = vmatprep.subr.bf16.mxu0 0
    %11247 = vmatpush2.bf16.msra.mxu0 %v11136
    %11248 = vmatprep.mubr.bf16.mxu0 %v10915
    %11249 = vmatmul.mubr.bf16.gmra.mxu0 %v10914
    %v11250 = vpop.f32.mrf.mxu0
    %v11251 = vadd.f32 %v11211, %v11250
    %v11252 = vpop.f32.mrf.mxu0
    %v11253 = vpop.f32.mrf.mxu0
    %v11254 = vpop.f32.mrf.mxu0
    %11255 = vdwg.mxu0
    %v11256 = vsub.f32 0.0, %v11251
    %v11257 = vmul.f32 %v11256, 1.442695
    %v11258 = vpow.pop %v11257
    %v11259 = vadd.f32 %v11258, 1.0
    %v11260 = vrcp.pop %v11259
    %v11261 = vmul.f32 1.0, %v11260
    %11262 = vst [vmem:[%s9] sm:$0x3] %v11261
    // Predicated region
    $region66: #{graph_predictor_forward.1} parent=1 // pred_check
      _
    $region67: #{graph_predictor_forward.1} parent=1 // pred_check_branch
      %11264 = sbr.rel (0) target = $region69
    $region68: #{graph_predictor_forward.1} parent=1 // pred_region
      _
    $region69: #{graph_predictor_forward.1} parent=1 // pred_fallthru
      _
    // Predicated region
    $region70: #{graph_predictor_forward.1} parent=1 // pred_check
      _
    $region71: #{graph_predictor_forward.1} parent=1 // pred_check_branch
      %11266 = sbr.rel (0) target = $region73
    $region72: #{graph_predictor_forward.1} parent=1 // pred_region
      _
    $region73: #{graph_predictor_forward.1} parent=1 // pred_fallthru
      _
    %11267 = vsyncpa [#allocation5], 1
    %11268 = vsyncpa [#allocation7], 1
    %11269 = vsyncpa [#allocation10], 1
    %11270 = vsyncpa [#allocation13], 1
  %11271 = vsyncmov [#allocation3]
  %s11272 = vpop.sfrf %11271
  %p11273 = scmp.eq.s32.totalorder %s11272, 0
  %p11274 = pneg %p11273
  %11276 = shalt.err (%p11274)

</llo_original>
